<compile_context>
chip_gen: v7x
topology: tpu7x:2x2x1
jax: 0.10.0
libtpu: 0.0.40
codegen_flags: <defaults>
</compile_context>

<pallas_src>
import functools

import numpy as np
import jax
import jax.numpy as jnp
from jax import lax
from jax.experimental import pallas as pl
from jax.experimental.pallas import tpu as pltpu

_VMEM_LIMIT = 64 * 1024 * 1024          # compiler cap; actual tile budgets stay far below
_PAD_COORD = 1.0e4                       # sentinel coordinate for padded points
_NF_DTYPE = jnp.bfloat16                 # HBM dtype for gathered neighbour features
_F32_TINY = float(np.finfo(np.float32).tiny)   # smallest normal f32 (keeps packed keys normal)


# --------------------------------------------------------------------------- small helpers
def _cparams():
    return pltpu.CompilerParams(
        dimension_semantics=("parallel", "parallel"),
        vmem_limit_bytes=_VMEM_LIMIT,
    )


def _pick_tile(n, target):
    """Largest multiple of 128 <= target that divides n (n must be a multiple of 128)."""
    assert n % 128 == 0, n
    t = min(target, n)
    t = max(128, t - (t % 128))
    while n % t:
        t -= 128
    return t


def _lse_tile_target(c2):
    # Keep the online-softmax state (m, l, acc: 3 * 2C * T * 4B) vreg/VMEM friendly and the
    # (K, C, T) neighbour-feature block inside the VMEM budget (v7x has 64 MiB per TC).
    if c2 >= 512:
        return 128
    if c2 >= 256:
        return 256
    return 512


def _fold(p):
    """Fold BN scale (and conv bias) into the 1x1 conv:  y = W' x + b'."""
    w = (p["w"] * p["scale"][:, None]).astype(jnp.float32)
    b = p["shift"][:, None].astype(jnp.float32)
    return w, b


def _apply_act(y, act, slope):
    if act == "none":
        return y
    if act == "relu":
        return jnp.maximum(y, 0.0)
    if act == "lrelu":
        return jnp.where(y > 0, y, slope * y)
    raise ValueError(act)


def _sumsq_rows(x):
    # x: (3, M) -> (1, M), avoids a sublane reduction.
    return x[0:1, :] * x[0:1, :] + x[1:2, :] * x[1:2, :] + x[2:3, :] * x[2:3, :]


# ------------------------------------------------------------------------------- KNN kernel
def _knn_kernel(q_ref, c_ref, idx_ref, best_ref, *, k, idx_bits, chunk):
    """One (query-tile, candidate-chunk) step of chunked brute-force KNN."""
    ci = pl.program_id(2)

    @pl.when(ci == 0)
    def _():
        best_ref[...] = jnp.full(best_ref.shape, jnp.inf, dtype=jnp.float32)

    q = q_ref[...]                                        # (3, T)   query tile
    c = c_ref[...]                                        # (3, CH)  candidate chunk
    qq = _sumsq_rows(q)                                   # (1, T)
    cc = _sumsq_rows(c)                                   # (1, CH)
    # d2[p, t] = |c_p|^2 + |q_t|^2 - 2 c_p.q_t  as ONE MXU matmul via augmented operands.
    lhs = jnp.concatenate([c, jnp.ones_like(cc), cc], axis=0)            # (5, CH)
    rhs = jnp.concatenate([-2.0 * q, qq, jnp.ones_like(qq)], axis=0)     # (5, T)
    d2 = lax.dot_general(lhs, rhs, (((0,), (0,)), ((), ())),
                         preferred_element_type=jnp.float32)             # (CH, T)
    # Clamp to the smallest normal float so packed keys below are never denormal.
    d2 = jnp.maximum(d2, _F32_TINY)

    # Pack (distance, global candidate index) into one sortable positive f32 key: replace the
    # low `idx_bits` mantissa bits of d2 with the candidate index.  A single min per neighbour
    # then yields the value AND the argmin (ties -> lowest index) with RELATIVE distance
    # resolution 2^-(23 - idx_bits).
    row = lax.broadcasted_iota(jnp.int32, d2.shape, 0) + ci * chunk      # global index
    low = (1 << idx_bits) - 1
    keys = pltpu.bitcast(
        (pltpu.bitcast(d2, jnp.int32) & jnp.int32(~low)) | row, jnp.float32)   # (CH, T)

    # Merge this chunk's candidates with the running best-K and re-select the top K.
    work = jnp.concatenate([keys, best_ref[...]], axis=0)                # (CH+K, T)
    rows = []
    for _ in range(k):
        mn = jnp.min(work, axis=0, keepdims=True)                        # (1, T) single reduce
        rows.append(mn)
        work = jnp.where(work == mn, jnp.inf, work)                      # knock out the winner
    best_ref[...] = jnp.concatenate(rows, axis=0)                        # (K, T)

    @pl.when(ci == pl.num_programs(2) - 1)
    def _():
        idx_ref[...] = pltpu.bitcast(best_ref[...], jnp.int32) & low     # (K, T) int32


def knn_pallas(coords_cf, k, n_valid):
    """coords_cf: (B, 3, N_pad) -> (B, K, N_pad) int32 nearest-neighbour indices."""
    B, _, n = coords_cf.shape
    T = _pick_tile(n, 512)          # query tile (lanes)
    CH = _pick_tile(n, 1024)        # candidate chunk streamed through VMEM
    # Index bits sized from the number of REAL points: indices of padded points may alias a
    # few extra mantissa bits, but padded distances stay >> any real distance.
    idx_bits = max(1, int(np.ceil(np.log2(max(n_valid, 2)))))
    assert idx_bits <= 22, "packed KNN keys require ceil(log2(N)) < 23"
    kern = functools.partial(_knn_kernel, k=k, idx_bits=idx_bits, chunk=CH)
    return pl.pallas_call(
        kern,
        out_shape=jax.ShapeDtypeStruct((B, k, n), jnp.int32),
        grid=(n // T, B, n // CH),
        in_specs=[
            pl.BlockSpec((None, 3, T), lambda t, b, c: (b, 0, t)),     # query tile
            pl.BlockSpec((None, 3, CH), lambda t, b, c: (b, 0, c)),    # candidate chunk
        ],
        out_specs=pl.BlockSpec((None, k, T), lambda t, b, c: (b, 0, t)),
        scratch_shapes=[pltpu.VMEM((k, T), jnp.float32)],              # running best-K keys
        compiler_params=pltpu.CompilerParams(
            dimension_semantics=("parallel", "parallel", "arbitrary"),
            vmem_limit_bytes=_VMEM_LIMIT),
    )(coords_cf, coords_cf)


# ------------------------------------------------------------------------------- shared MLP
def _mlp_kernel(x_ref, w_ref, b_ref, o_ref, *, act, slope):
    y = jnp.dot(w_ref[...], x_ref[...], preferred_element_type=jnp.float32) + b_ref[...]
    o_ref[...] = _apply_act(y, act, slope)


def shared_mlp(x, p, act="none", slope=0.0):
    """x: (B, Cin, N_pad) -> (B, Cout, N_pad).  1x1 conv + folded BN + activation."""
    B, cin, n = x.shape
    w, b = _fold(p)
    cout = w.shape[0]
    T = _pick_tile(n, 1024)
    kern = functools.partial(_mlp_kernel, act=act, slope=slope)
    return pl.pallas_call(
        kern,
        out_shape=jax.ShapeDtypeStruct((B, cout, n), jnp.float32),
        grid=(n // T, B),
        in_specs=[
            pl.BlockSpec((None, cin, T), lambda t, b_: (b_, 0, t)),
            pl.BlockSpec((cout, cin), lambda t, b_: (0, 0)),
            pl.BlockSpec((cout, 1), lambda t, b_: (0, 0)),
        ],
        out_specs=pl.BlockSpec((None, cout, T), lambda t, b_: (b_, 0, t)),
        compiler_params=_cparams(),
    )(x, w, b)


# ----------------------------------- fused LSE + attentive pooling (+ optional residual tail)
def _lse_pool_kernel(ext_ref, nbr_ref, nf_ref,
                     wext_ref, wnd_ref, b1_ref, wsc_ref, wp_ref, bp_ref,
                     *rest, num_k, residual, slope):
    if residual:
        f_ref, w2_ref, b2_ref, ws_ref, bs_ref, o_ref = rest
    else:
        (o_ref,) = rest

    ext = ext_ref[...]                                      # (3, T)  centre coordinates
    wext = wext_ref[...]                                    # (C, 3)
    wnd = wnd_ref[...]                                      # (C, 4)  [w_nbr | w_dist]
    wsc = wsc_ref[...]                                      # (2C, 2C) attention weight
    # Centre-point contribution to the spatial MLP is constant over K -> hoist out of K loop.
    y_base = jnp.dot(wext, ext, preferred_element_type=jnp.float32) + b1_ref[...]   # (C, T)

    def step(j):
        nbr = nbr_ref[j].astype(jnp.float32)                # (3, T) neighbour coords
        diff = ext - nbr
        d = jnp.sqrt(diff[0:1, :] * diff[0:1, :]
                     + diff[1:2, :] * diff[1:2, :]
                     + diff[2:3, :] * diff[2:3, :])         # (1, T) exact neighbour distance
        sp = jnp.concatenate([nbr, d], axis=0)              # (4, T)
        y = y_base + jnp.dot(wnd, sp, preferred_element_type=jnp.float32)
        y = jnp.maximum(y, 0.0)                             # LSE mlp (conv+BN+ReLU), (C, T)
        v = jnp.concatenate([y, nf_ref[j].astype(jnp.float32)], axis=0)   # (2C, T)
        s = jnp.dot(wsc, v, preferred_element_type=jnp.float32)           # scores, (2C, T)
        return s, v

    # Online softmax over K: the (B, 2C, N, K) tensor never exists outside VMEM/vregs and
    # there are no narrow-lane reductions (points stay on the lane axis).
    s, v = step(0)
    m = s
    l = jnp.ones_like(s)
    acc = v
    for j in range(1, num_k):
        s, v = step(j)
        m_new = jnp.maximum(m, s)
        a = jnp.exp(m - m_new)
        p = jnp.exp(s - m_new)
        l = l * a + p
        acc = acc * a + p * v
        m = m_new
    pooled = acc / l                                                      # (2C, T)

    z = jnp.dot(wp_ref[...], pooled, preferred_element_type=jnp.float32) + bp_ref[...]
    z = jnp.maximum(z, 0.0)                                 # pool mlp + BN + ReLU, (Cp, T)
    if residual:
        y = (jnp.dot(w2_ref[...], z, preferred_element_type=jnp.float32) + b2_ref[...]
             + jnp.dot(ws_ref[...], f_ref[...], preferred_element_type=jnp.float32)
             + bs_ref[...])
        o_ref[...] = jnp.where(y > 0, y, slope * y)         # mlp2 + shortcut + LeakyReLU
    else:
        o_ref[...] = z


def lse_pool(coords_cf, nbr_cf, nf, p_lse, p_pool, residual=None, slope=0.01):
    """coords_cf (B,3,N), nbr_cf (B,K,3,N) f32, nf (B,K,C,N) bf16 -> (B, Cout, N)."""
    B, _, n = coords_cf.shape
    K = nbr_cf.shape[1]
    C = p_lse["w"].shape[0]
    cp = p_pool["w"].shape[0]

    w_lse, b_lse = _fold(p_lse)                     # (C, 10), (C, 1)
    # concat rows are [ext(3), nbr(3), ext-nbr(3), dist(1)] -> algebraically regroup so the
    # per-K spatial MLP is a single (C,4) x (4,T) MXU push.
    wext = w_lse[:, 0:3] + w_lse[:, 6:9]
    wnd = jnp.concatenate([w_lse[:, 3:6] - w_lse[:, 6:9], w_lse[:, 9:10]], axis=1)   # (C, 4)
    wp, bp = _fold(p_pool)                          # (cp, 2C), (cp, 1)
    wsc = p_pool["w_score"].astype(jnp.float32)     # (2C, 2C)

    T = _pick_tile(n, _lse_tile_target(2 * C))
    operands = [coords_cf, nbr_cf, nf, wext, wnd, b_lse, wsc, wp, bp]
    in_specs = [
        pl.BlockSpec((None, 3, T), lambda t, b: (b, 0, t)),
        pl.BlockSpec((None, K, 3, T), lambda t, b: (b, 0, 0, t)),
        pl.BlockSpec((None, K, C, T), lambda t, b: (b, 0, 0, t)),
        pl.BlockSpec((C, 3), lambda t, b: (0, 0)),
        pl.BlockSpec((C, 4), lambda t, b: (0, 0)),
        pl.BlockSpec((C, 1), lambda t, b: (0, 0)),
        pl.BlockSpec((2 * C, 2 * C), lambda t, b: (0, 0)),
        pl.BlockSpec((cp, 2 * C), lambda t, b: (0, 0)),
        pl.BlockSpec((cp, 1), lambda t, b: (0, 0)),
    ]
    if residual is None:
        cout = cp
    else:
        feats, p_mlp2, p_short = residual
        w2, b2 = _fold(p_mlp2)
        ws, bs = _fold(p_short)
        cout = w2.shape[0]
        din = feats.shape[1]
        operands += [feats, w2, b2, ws, bs]
        in_specs += [
            pl.BlockSpec((None, din, T), lambda t, b: (b, 0, t)),
            pl.BlockSpec((cout, cp), lambda t, b: (0, 0)),
            pl.BlockSpec((cout, 1), lambda t, b: (0, 0)),
            pl.BlockSpec((cout, din), lambda t, b: (0, 0)),
            pl.BlockSpec((cout, 1), lambda t, b: (0, 0)),
        ]

    kern = functools.partial(_lse_pool_kernel, num_k=K,
                             residual=residual is not None, slope=slope)
    return pl.pallas_call(
        kern,
        out_shape=jax.ShapeDtypeStruct((B, cout, n), jnp.float32),
        grid=(n // T, B),
        in_specs=in_specs,
        out_specs=pl.BlockSpec((None, cout, T), lambda t, b: (b, 0, t)),
        compiler_params=_cparams(),
    )(*operands)


# ----------------------------------------------------------------------- full module forward
def _gather_neighbors(x_cf, idx, dtype):
    """x_cf: (B, C, N), idx: (B, K, N) int32 -> (B, K, C, N) in `dtype` (N stays on lanes)."""
    g = jax.vmap(lambda f, i: f[:, i])(x_cf, idx)            # (B, C, K, N)
    return jnp.transpose(g, (0, 2, 1, 3)).astype(dtype)


def local_feature_aggregation(coords, features, params, k):
    """coords: (B, N, 3), features: (B, d_in, N, 1) -> (B, 2*d_out, N, 1)."""
    B, d_in, N, _ = features.shape
    feats = features.reshape(B, d_in, N)
    coords_cf = jnp.transpose(coords, (0, 2, 1))                      # (B, 3, N)

    # Pad the point axis to a multiple of 128 (lane-aligned blocks + pipelining); padded
    # points sit far away so they are never selected as neighbours of real points.
    n_pad = ((N + 127) // 128) * 128
    if n_pad != N:
        pad = n_pad - N
        coords_cf = jnp.pad(coords_cf, ((0, 0), (0, 0), (0, pad)),
                            constant_values=_PAD_COORD)
        feats = jnp.pad(feats, ((0, 0), (0, 0), (0, pad)))

    idx = knn_pallas(coords_cf, k, N)                                 # (B, K, n_pad) int32
    nbr_cf = _gather_neighbors(coords_cf, idx, jnp.float32)           # (B, K, 3, n_pad)

    x = shared_mlp(feats, params["mlp1"], act="lrelu", slope=0.2)     # (B, d_out//2, n_pad)
    x = lse_pool(coords_cf, nbr_cf, _gather_neighbors(x, idx, _NF_DTYPE),
                 params["lse1"], params["pool1"])                     # (B, d_out//2, n_pad)
    x = lse_pool(coords_cf, nbr_cf, _gather_neighbors(x, idx, _NF_DTYPE),
                 params["lse2"], params["pool2"],
                 residual=(feats, params["mlp2"], params["shortcut"]),
                 slope=0.01)                                          # (B, 2*d_out, n_pad)
    out = x[:, :, :N]
    return out.reshape(B, out.shape[1], N, 1)


# ----------------------------------------------------------------------- params (deterministic)
def init_params(key, d_in, d_out, eps=1e-6):
    def smlp(k, cin, cout, bn):
        kw, kb = jax.random.split(k)
        w = jax.random.normal(kw, (cout, cin), jnp.float32) / np.sqrt(cin).astype(np.float32)
        b = 0.1 * jax.random.normal(kb, (cout,), jnp.float32)
        if bn:
            gamma = jnp.ones((cout,), jnp.float32)
            beta = jnp.zeros((cout,), jnp.float32)
            mean = jnp.zeros((cout,), jnp.float32)
            var = jnp.ones((cout,), jnp.float32)
            g = gamma / jnp.sqrt(var + eps)
            scale, shift = g, beta + (b - mean) * g
        else:
            scale, shift = jnp.ones((cout,), jnp.float32), b
        return {"w": w, "scale": scale, "shift": shift}

    ks = jax.random.split(key, 9)
    dh = d_out // 2
    return {
        "mlp1": smlp(ks[0], d_in, dh, False),
        "lse1": smlp(ks[1], 10, dh, True),
        "lse2": smlp(ks[2], 10, dh, True),
        "pool1": dict(
            w_score=jax.random.normal(ks[3], (d_out, d_out), jnp.float32)
            / np.sqrt(d_out).astype(np.float32),
            **smlp(ks[4], d_out, dh, True)),
        "pool2": dict(
            w_score=jax.random.normal(ks[5], (d_out, d_out), jnp.float32)
            / np.sqrt(d_out).astype(np.float32),
            **smlp(ks[6], d_out, d_out, True)),
        "mlp2": smlp(ks[7], d_out, 2 * d_out, False),
        "shortcut": smlp(ks[8], d_in, 2 * d_out, True),
    }


# ----------------------------------------------------------------------- pure-JAX reference
def ref_forward(coords, features, P, K, nf_dtype=jnp.float32):
    def act(y, kind, slope=0.0):
        if kind == "none":
            return y
        if kind == "relu":
            return jnp.maximum(y, 0.0)
        return jnp.where(y > 0, y, slope * y)

    def smlp(x, p, kind, slope=0.0):
        y = jnp.einsum("oc,bcnk->bonk", p["w"], x)
        y = y * p["scale"][None, :, None, None] + p["shift"][None, :, None, None]
        return act(y, kind, slope)

    B, N, _ = coords.shape
    diff = coords[:, :, None, :] - coords[:, None, :, :]
    d2 = jnp.sum(diff * diff, axis=-1)
    idx = jnp.argsort(d2, axis=-1)[:, :, :K]
    dist = jnp.sqrt(jnp.take_along_axis(d2, idx, axis=-1))

    def lse(f, p):
        C = f.shape[1]
        ext = jnp.broadcast_to(jnp.transpose(coords, (0, 2, 1))[:, :, :, None], (B, 3, N, K))
        nbr = jnp.take_along_axis(ext, jnp.broadcast_to(idx[:, None], (B, 3, N, K)), axis=2)
        concat = jnp.concatenate([ext, nbr, ext - nbr, dist[:, None]], axis=1)
        nf = jnp.take_along_axis(jnp.broadcast_to(f, (B, C, N, K)),
                                 jnp.broadcast_to(idx[:, None], (B, C, N, K)), axis=2)
        nf = nf.astype(nf_dtype).astype(jnp.float32)   # mimic bf16 transport when requested
        return jnp.concatenate([smlp(concat, p, "relu"), nf], axis=1)

    def pool(x, p):
        s = jnp.einsum("oc,bcnk->bonk", p["w_score"], x)
        sc = jax.nn.softmax(s, axis=-1)
        feat = jnp.sum(sc * x, axis=-1, keepdims=True)
        return smlp(feat, p, "relu")

    x = smlp(features, P["mlp1"], "lrelu", 0.2)
    x = lse(x, P["lse1"])
    x = pool(x, P["pool1"])
    x = lse(x, P["lse2"])
    x = pool(x, P["pool2"])
    a = smlp(x, P["mlp2"], "none")
    s = smlp(features, P["shortcut"], "none")
    y = a + s
    return jnp.where(y > 0, y, 0.01 * y)


# ----------------------------------------------------------------------- main
if __name__ == "__main__":
    B, N, K = 2, 16, 8
    d_in, d_out = 8, 16

    key = jax.random.PRNGKey(0)
    kc, kf, kp = jax.random.split(key, 3)
    coords = jax.random.normal(kc, (B, N, 3), jnp.float32)
    features = jax.random.normal(kf, (B, d_in, N, 1), jnp.float32)
    params = init_params(kp, d_in, d_out)

    fwd = jax.jit(local_feature_aggregation, static_argnums=3)
    out = np.asarray(jax.block_until_ready(fwd(coords, features, params, K)))
    assert out.shape == (B, 2 * d_out, N, 1), out.shape

    # (a) Tight check against a reference that applies the same bf16 transport to gathered
    #     neighbour features (validates the kernel math itself).
    ref_bf16 = np.asarray(jax.block_until_ready(
        jax.jit(functools.partial(ref_forward, nf_dtype=_NF_DTYPE),
                static_argnums=3)(coords, features, params, K)))
    # (b) Loose check against the pure-f32 module (bounds the bf16 transport error).
    ref_f32 = np.asarray(jax.block_until_ready(
        jax.jit(functools.partial(ref_forward, nf_dtype=jnp.float32),
                static_argnums=3)(coords, features, params, K)))

    if not np.allclose(out, ref_bf16, atol=2e-3, rtol=2e-3):
        raise SystemExit("mismatch vs bf16-matched reference, max abs diff = %g"
                         % float(np.max(np.abs(out - ref_bf16))))
    if not np.allclose(out, ref_f32, atol=1e-1, rtol=1e-1):
        raise SystemExit("mismatch vs f32 reference, max abs diff = %g"
                         % float(np.max(np.abs(out - ref_f32))))
    print("KERNEL_OK")
</pallas_src>

<mosaic_0001>
module attributes {stable_mosaic.version = 11 : i64} {
  func.func @_knn_kernel(%arg0: i32, %arg1: i32, %arg2: i32, %arg3: memref<1x3x128xf32, #tpu.memory_space<vmem>>, %arg4: memref<1x3x128xf32, #tpu.memory_space<vmem>>, %arg5: memref<1x8x128xi32, #tpu.memory_space<vmem>>, %arg6: memref<8x128xf32, #tpu.memory_space<vmem>>) attributes {dimension_semantics = [#tpu.dimension_semantics<parallel>, #tpu.dimension_semantics<parallel>, #tpu.dimension_semantics<arbitrary>], iteration_bounds = array<i64: 1, 2, 1>, scalar_prefetch = 0 : i64, scratch_operands = 1 : i64, tpu.core_type = #tpu.core_type<tc>, window_params = [{transform_indices = @transform_0, window_bounds = array<i64: 1, 3, 128>}, {transform_indices = @transform_1, window_bounds = array<i64: 1, 3, 128>}, {transform_indices = @transform_2, window_bounds = array<i64: 1, 8, 128>}]} {
    %c0_i32 = arith.constant 0 : i32
    %0 = arith.cmpi eq, %arg2, %c0_i32 : i32
    %1 = arith.extui %0 : i1 to i32
    %c0_i32_0 = arith.constant 0 : i32
    %2 = arith.cmpi ne, %1, %c0_i32_0 : i32
    scf.if %2 {
      %cst_31 = arith.constant 0x7F800000 : f32
      %98 = vector.broadcast %cst_31 : f32 to vector<8x128xf32>
      %c0_32 = arith.constant 0 : index
      %c0_33 = arith.constant 0 : index
      %99 = vector.load %arg6[%c0_32, %c0_33] : memref<8x128xf32, #tpu.memory_space<vmem>>, vector<8x128xf32>
      tpu.vector_store %arg6[%c0_32, %c0_33], %98 {strides = array<i32>} : memref<8x128xf32, #tpu.memory_space<vmem>>, vector<8x128xf32>,
    } else {
    }
    %c0 = arith.constant 0 : index
    %c0_1 = arith.constant 0 : index
    %c0_2 = arith.constant 0 : index
    %3 = vector.load %arg3[%c0, %c0_1, %c0_2] : memref<1x3x128xf32, #tpu.memory_space<vmem>>, vector<1x3x128xf32>
    %4 = vector.shape_cast %3 : vector<1x3x128xf32> to vector<3x128xf32>
    %c0_3 = arith.constant 0 : index
    %c0_4 = arith.constant 0 : index
    %c0_5 = arith.constant 0 : index
    %5 = vector.load %arg4[%c0_3, %c0_4, %c0_5] : memref<1x3x128xf32, #tpu.memory_space<vmem>>, vector<1x3x128xf32>
    %6 = vector.shape_cast %5 : vector<1x3x128xf32> to vector<3x128xf32>
    %7 = vector.extract_strided_slice %4 {offsets = [0, 0], sizes = [1, 128], strides = [1, 1]} : vector<3x128xf32> to vector<1x128xf32>
    %8 = vector.extract_strided_slice %4 {offsets = [0, 0], sizes = [1, 128], strides = [1, 1]} : vector<3x128xf32> to vector<1x128xf32>
    %9 = arith.mulf %7, %8 : vector<1x128xf32>
    %10 = vector.extract_strided_slice %4 {offsets = [1, 0], sizes = [1, 128], strides = [1, 1]} : vector<3x128xf32> to vector<1x128xf32>
    %11 = vector.extract_strided_slice %4 {offsets = [1, 0], sizes = [1, 128], strides = [1, 1]} : vector<3x128xf32> to vector<1x128xf32>
    %12 = arith.mulf %10, %11 : vector<1x128xf32>
    %13 = arith.addf %9, %12 : vector<1x128xf32>
    %14 = vector.extract_strided_slice %4 {offsets = [2, 0], sizes = [1, 128], strides = [1, 1]} : vector<3x128xf32> to vector<1x128xf32>
    %15 = vector.extract_strided_slice %4 {offsets = [2, 0], sizes = [1, 128], strides = [1, 1]} : vector<3x128xf32> to vector<1x128xf32>
    %16 = arith.mulf %14, %15 : vector<1x128xf32>
    %17 = arith.addf %13, %16 : vector<1x128xf32>
    %18 = vector.extract_strided_slice %6 {offsets = [0, 0], sizes = [1, 128], strides = [1, 1]} : vector<3x128xf32> to vector<1x128xf32>
    %19 = vector.extract_strided_slice %6 {offsets = [0, 0], sizes = [1, 128], strides = [1, 1]} : vector<3x128xf32> to vector<1x128xf32>
    %20 = arith.mulf %18, %19 : vector<1x128xf32>
    %21 = vector.extract_strided_slice %6 {offsets = [1, 0], sizes = [1, 128], strides = [1, 1]} : vector<3x128xf32> to vector<1x128xf32>
    %22 = vector.extract_strided_slice %6 {offsets = [1, 0], sizes = [1, 128], strides = [1, 1]} : vector<3x128xf32> to vector<1x128xf32>
    %23 = arith.mulf %21, %22 : vector<1x128xf32>
    %24 = arith.addf %20, %23 : vector<1x128xf32>
    %25 = vector.extract_strided_slice %6 {offsets = [2, 0], sizes = [1, 128], strides = [1, 1]} : vector<3x128xf32> to vector<1x128xf32>
    %26 = vector.extract_strided_slice %6 {offsets = [2, 0], sizes = [1, 128], strides = [1, 1]} : vector<3x128xf32> to vector<1x128xf32>
    %27 = arith.mulf %25, %26 : vector<1x128xf32>
    %28 = arith.addf %24, %27 : vector<1x128xf32>
    %cst = arith.constant 1.000000e+00 : f32
    %29 = vector.broadcast %cst : f32 to vector<1x128xf32>
    %30 = tpu.concatenate %6, %29, %28 in 0 : vector<3x128xf32>, vector<1x128xf32>, vector<1x128xf32> -> vector<5x128xf32>
    %cst_6 = arith.constant -2.000000e+00 : f32
    %31 = vector.broadcast %cst_6 : f32 to vector<3x128xf32>
    %32 = arith.mulf %31, %4 : vector<3x128xf32>
    %cst_7 = arith.constant 1.000000e+00 : f32
    %33 = vector.broadcast %cst_7 : f32 to vector<1x128xf32>
    %34 = tpu.concatenate %32, %17, %33 in 0 : vector<3x128xf32>, vector<1x128xf32>, vector<1x128xf32> -> vector<5x128xf32>
    %cst_8 = arith.constant dense<0.000000e+00> : vector<128x128xf32>
    %35 = tpu.matmul %30, %34, %cst_8 {dimension_numbers = #tpu.dot_dimension_numbers<[0], [0], [1], [1], [0, 1, 1, 1], [], []>} : vector<5x128xf32>, vector<5x128xf32>, vector<128x128xf32> -> vector<128x128xf32>
    %cst_9 = arith.constant 1.17549435E-38 : f32
    %36 = vector.broadcast %cst_9 : f32 to vector<128x128xf32>
    %37 = arith.maximumf %35, %36 : vector<128x128xf32>
    %38 = tpu.iota {dimensions = array<i32: 0>} : vector<128x128xi32>
    %c128_i32 = arith.constant 128 : i32
    %39 = arith.muli %arg2, %c128_i32 : i32
    %40 = vector.broadcast %39 : i32 to vector<128x128xi32>
    %41 = arith.addi %38, %40 : vector<128x128xi32>
    %42 = tpu.bitcast %37 : vector<128x128xf32> -> vector<128x128xi32>
    %c-16_i32 = arith.constant -16 : i32
    %43 = vector.broadcast %c-16_i32 : i32 to vector<128x128xi32>
    %44 = arith.andi %42, %43 : vector<128x128xi32>
    %45 = arith.ori %44, %41 : vector<128x128xi32>
    %46 = tpu.bitcast %45 : vector<128x128xi32> -> vector<128x128xf32>
    %c0_10 = arith.constant 0 : index
    %c0_11 = arith.constant 0 : index
    %47 = vector.load %arg6[%c0_10, %c0_11] : memref<8x128xf32, #tpu.memory_space<vmem>>, vector<8x128xf32>
    %48 = tpu.concatenate %46, %47 in 0 : vector<128x128xf32>, vector<8x128xf32> -> vector<136x128xf32>
    %cst_12 = arith.constant dense<0x7F800000> : vector<128xf32>
    %49 = vector.multi_reduction <minimumf>, %48, %cst_12 [0] : vector<136x128xf32> to vector<128xf32>
    %50 = vector.shape_cast %49 : vector<128xf32> to vector<1x128xf32>
    %51 = vector.broadcast %50 : vector<1x128xf32> to vector<136x128xf32>
    %52 = arith.cmpf oeq, %48, %51 : vector<136x128xf32>
    %cst_13 = arith.constant 0x7F800000 : f32
    %53 = vector.broadcast %cst_13 : f32 to vector<136x128xf32>
    %54 = arith.select %52, %53, %48 : vector<136x128xi1>, vector<136x128xf32>
    %cst_14 = arith.constant dense<0x7F800000> : vector<128xf32>
    %55 = vector.multi_reduction <minimumf>, %54, %cst_14 [0] : vector<136x128xf32> to vector<128xf32>
    %56 = vector.shape_cast %55 : vector<128xf32> to vector<1x128xf32>
    %57 = vector.broadcast %56 : vector<1x128xf32> to vector<136x128xf32>
    %58 = arith.cmpf oeq, %54, %57 : vector<136x128xf32>
    %cst_15 = arith.constant 0x7F800000 : f32
    %59 = vector.broadcast %cst_15 : f32 to vector<136x128xf32>
    %60 = arith.select %58, %59, %54 : vector<136x128xi1>, vector<136x128xf32>
    %cst_16 = arith.constant dense<0x7F800000> : vector<128xf32>
    %61 = vector.multi_reduction <minimumf>, %60, %cst_16 [0] : vector<136x128xf32> to vector<128xf32>
    %62 = vector.shape_cast %61 : vector<128xf32> to vector<1x128xf32>
    %63 = vector.broadcast %62 : vector<1x128xf32> to vector<136x128xf32>
    %64 = arith.cmpf oeq, %60, %63 : vector<136x128xf32>
    %cst_17 = arith.constant 0x7F800000 : f32
    %65 = vector.broadcast %cst_17 : f32 to vector<136x128xf32>
    %66 = arith.select %64, %65, %60 : vector<136x128xi1>, vector<136x128xf32>
    %cst_18 = arith.constant dense<0x7F800000> : vector<128xf32>
    %67 = vector.multi_reduction <minimumf>, %66, %cst_18 [0] : vector<136x128xf32> to vector<128xf32>
    %68 = vector.shape_cast %67 : vector<128xf32> to vector<1x128xf32>
    %69 = vector.broadcast %68 : vector<1x128xf32> to vector<136x128xf32>
    %70 = arith.cmpf oeq, %66, %69 : vector<136x128xf32>
    %cst_19 = arith.constant 0x7F800000 : f32
    %71 = vector.broadcast %cst_19 : f32 to vector<136x128xf32>
    %72 = arith.select %70, %71, %66 : vector<136x128xi1>, vector<136x128xf32>
    %cst_20 = arith.constant dense<0x7F800000> : vector<128xf32>
    %73 = vector.multi_reduction <minimumf>, %72, %cst_20 [0] : vector<136x128xf32> to vector<128xf32>
    %74 = vector.shape_cast %73 : vector<128xf32> to vector<1x128xf32>
    %75 = vector.broadcast %74 : vector<1x128xf32> to vector<136x128xf32>
    %76 = arith.cmpf oeq, %72, %75 : vector<136x128xf32>
    %cst_21 = arith.constant 0x7F800000 : f32
    %77 = vector.broadcast %cst_21 : f32 to vector<136x128xf32>
    %78 = arith.select %76, %77, %72 : vector<136x128xi1>, vector<136x128xf32>
    %cst_22 = arith.constant dense<0x7F800000> : vector<128xf32>
    %79 = vector.multi_reduction <minimumf>, %78, %cst_22 [0] : vector<136x128xf32> to vector<128xf32>
    %80 = vector.shape_cast %79 : vector<128xf32> to vector<1x128xf32>
    %81 = vector.broadcast %80 : vector<1x128xf32> to vector<136x128xf32>
    %82 = arith.cmpf oeq, %78, %81 : vector<136x128xf32>
    %cst_23 = arith.constant 0x7F800000 : f32
    %83 = vector.broadcast %cst_23 : f32 to vector<136x128xf32>
    %84 = arith.select %82, %83, %78 : vector<136x128xi1>, vector<136x128xf32>
    %cst_24 = arith.constant dense<0x7F800000> : vector<128xf32>
    %85 = vector.multi_reduction <minimumf>, %84, %cst_24 [0] : vector<136x128xf32> to vector<128xf32>
    %86 = vector.shape_cast %85 : vector<128xf32> to vector<1x128xf32>
    %87 = vector.broadcast %86 : vector<1x128xf32> to vector<136x128xf32>
    %88 = arith.cmpf oeq, %84, %87 : vector<136x128xf32>
    %cst_25 = arith.constant 0x7F800000 : f32
    %89 = vector.broadcast %cst_25 : f32 to vector<136x128xf32>
    %90 = arith.select %88, %89, %84 : vector<136x128xi1>, vector<136x128xf32>
    %cst_26 = arith.constant dense<0x7F800000> : vector<128xf32>
    %91 = vector.multi_reduction <minimumf>, %90, %cst_26 [0] : vector<136x128xf32> to vector<128xf32>
    %92 = vector.shape_cast %91 : vector<128xf32> to vector<1x128xf32>
    %93 = tpu.concatenate %50, %56, %62, %68, %74, %80, %86, %92 in 0 : vector<1x128xf32>, vector<1x128xf32>, vector<1x128xf32>, vector<1x128xf32>, vector<1x128xf32>, vector<1x128xf32>, vector<1x128xf32>, vector<1x128xf32> -> vector<8x128xf32>
    %c0_27 = arith.constant 0 : index
    %c0_28 = arith.constant 0 : index
    %94 = vector.load %arg6[%c0_27, %c0_28] : memref<8x128xf32, #tpu.memory_space<vmem>>, vector<8x128xf32>
    tpu.vector_store %arg6[%c0_27, %c0_28], %93 {strides = array<i32>} : memref<8x128xf32, #tpu.memory_space<vmem>>, vector<8x128xf32>,
    %c0_i32_29 = arith.constant 0 : i32
    %95 = arith.cmpi eq, %arg2, %c0_i32_29 : i32
    %96 = arith.extui %95 : i1 to i32
    %c0_i32_30 = arith.constant 0 : i32
    %97 = arith.cmpi ne, %96, %c0_i32_30 : i32
    scf.if %97 {
      %c0_31 = arith.constant 0 : index
      %c0_32 = arith.constant 0 : index
      %98 = vector.load %arg6[%c0_31, %c0_32] : memref<8x128xf32, #tpu.memory_space<vmem>>, vector<8x128xf32>
      %99 = tpu.bitcast %98 : vector<8x128xf32> -> vector<8x128xi32>
      %c15_i32 = arith.constant 15 : i32
      %100 = vector.broadcast %c15_i32 : i32 to vector<8x128xi32>
      %101 = arith.andi %99, %100 : vector<8x128xi32>
      %c0_33 = arith.constant 0 : index
      %c0_34 = arith.constant 0 : index
      %c0_35 = arith.constant 0 : index
      %102 = vector.load %arg5[%c0_33, %c0_34, %c0_35] : memref<1x8x128xi32, #tpu.memory_space<vmem>>, vector<1x8x128xi32>
      %103 = vector.shape_cast %102 : vector<1x8x128xi32> to vector<8x128xi32>
      %104 = vector.shape_cast %101 : vector<8x128xi32> to vector<1x8x128xi32>
      tpu.vector_store %arg5[%c0_33, %c0_34, %c0_35], %104 {strides = array<i32>} : memref<1x8x128xi32, #tpu.memory_space<vmem>>, vector<1x8x128xi32>,
    } else {
    }
    return
  }
  func.func @transform_0(%arg0: i32, %arg1: i32, %arg2: i32) -> (i32, i32, i32) {
    %c0_i32 = arith.constant 0 : i32
    %c0_i32_0 = arith.constant 0 : i32
    return %arg1, %c0_i32, %arg0 : i32, i32, i32
  }
  func.func @transform_1(%arg0: i32, %arg1: i32, %arg2: i32) -> (i32, i32, i32) {
    %c0_i32 = arith.constant 0 : i32
    %c0_i32_0 = arith.constant 0 : i32
    return %arg1, %c0_i32, %arg2 : i32, i32, i32
  }
  func.func @transform_2(%arg0: i32, %arg1: i32, %arg2: i32) -> (i32, i32, i32) {
    %c0_i32 = arith.constant 0 : i32
    %c0_i32_0 = arith.constant 0 : i32
    return %arg1, %c0_i32, %arg0 : i32, i32, i32
  }
}

module attributes {stable_mosaic.version = 11 : i64} {
  func.func @_mlp_kernel(%arg0: i32, %arg1: i32, %arg2: memref<1x8x128xf32, #tpu.memory_space<vmem>>, %arg3: memref<8x8xf32, #tpu.memory_space<vmem>>, %arg4: memref<8x1xf32, #tpu.memory_space<vmem>>, %arg5: memref<1x8x128xf32, #tpu.memory_space<vmem>>) attributes {dimension_semantics = [#tpu.dimension_semantics<parallel>, #tpu.dimension_semantics<parallel>], iteration_bounds = array<i64: 1, 2>, scalar_prefetch = 0 : i64, scratch_operands = 0 : i64, tpu.core_type = #tpu.core_type<tc>, window_params = [{transform_indices = @transform_0, window_bounds = array<i64: 1, 8, 128>}, {pipeline_mode = #tpu.pipeline_mode<synchronous>, transform_indices = @transform_1, window_bounds = array<i64: 8, 8>}, {pipeline_mode = #tpu.pipeline_mode<synchronous>, transform_indices = @transform_2, window_bounds = array<i64: 8, 1>}, {transform_indices = @transform_3, window_bounds = array<i64: 1, 8, 128>}]} {
    %c0 = arith.constant 0 : index
    %c0_0 = arith.constant 0 : index
    %0 = vector.load %arg3[%c0, %c0_0] : memref<8x8xf32, #tpu.memory_space<vmem>>, vector<8x8xf32>
    %c0_1 = arith.constant 0 : index
    %c0_2 = arith.constant 0 : index
    %c0_3 = arith.constant 0 : index
    %1 = vector.load %arg2[%c0_1, %c0_2, %c0_3] : memref<1x8x128xf32, #tpu.memory_space<vmem>>, vector<1x8x128xf32>
    %2 = vector.shape_cast %1 : vector<1x8x128xf32> to vector<8x128xf32>
    %cst = arith.constant dense<0.000000e+00> : vector<8x128xf32>
    %3 = tpu.matmul %0, %2, %cst {dimension_numbers = #tpu.dot_dimension_numbers<[1], [0], [0], [1], [0, 0, 1, 1], [], []>} : vector<8x8xf32>, vector<8x128xf32>, vector<8x128xf32> -> vector<8x128xf32>
    %c0_4 = arith.constant 0 : index
    %c0_5 = arith.constant 0 : index
    %4 = vector.load %arg4[%c0_4, %c0_5] : memref<8x1xf32, #tpu.memory_space<vmem>>, vector<8x1xf32>
    %5 = vector.broadcast %4 : vector<8x1xf32> to vector<8x128xf32>
    %6 = arith.addf %3, %5 : vector<8x128xf32>
    %cst_6 = arith.constant 0.000000e+00 : f32
    %7 = vector.broadcast %cst_6 : f32 to vector<8x128xf32>
    %8 = arith.cmpf ogt, %6, %7 : vector<8x128xf32>
    %cst_7 = arith.constant 2.000000e-01 : f32
    %9 = vector.broadcast %cst_7 : f32 to vector<8x128xf32>
    %10 = arith.mulf %9, %6 : vector<8x128xf32>
    %11 = arith.select %8, %6, %10 : vector<8x128xi1>, vector<8x128xf32>
    %c0_8 = arith.constant 0 : index
    %c0_9 = arith.constant 0 : index
    %c0_10 = arith.constant 0 : index
    %12 = vector.load %arg5[%c0_8, %c0_9, %c0_10] : memref<1x8x128xf32, #tpu.memory_space<vmem>>, vector<1x8x128xf32>
    %13 = vector.shape_cast %12 : vector<1x8x128xf32> to vector<8x128xf32>
    %14 = vector.shape_cast %11 : vector<8x128xf32> to vector<1x8x128xf32>
    tpu.vector_store %arg5[%c0_8, %c0_9, %c0_10], %14 {strides = array<i32>} : memref<1x8x128xf32, #tpu.memory_space<vmem>>, vector<1x8x128xf32>,
    return
  }
  func.func @transform_0(%arg0: i32, %arg1: i32) -> (i32, i32, i32) {
    %c0_i32 = arith.constant 0 : i32
    %c0_i32_0 = arith.constant 0 : i32
    return %arg1, %c0_i32, %arg0 : i32, i32, i32
  }
  func.func @transform_1(%arg0: i32, %arg1: i32) -> (i32, i32) {
    %c0_i32 = arith.constant 0 : i32
    %c0_i32_0 = arith.constant 0 : i32
    %c0_i32_1 = arith.constant 0 : i32
    return %c0_i32, %c0_i32_0 : i32, i32
  }
  func.func @transform_2(%arg0: i32, %arg1: i32) -> (i32, i32) {
    %c0_i32 = arith.constant 0 : i32
    %c0_i32_0 = arith.constant 0 : i32
    %c0_i32_1 = arith.constant 0 : i32
    return %c0_i32, %c0_i32_0 : i32, i32
  }
  func.func @transform_3(%arg0: i32, %arg1: i32) -> (i32, i32, i32) {
    %c0_i32 = arith.constant 0 : i32
    %c0_i32_0 = arith.constant 0 : i32
    return %arg1, %c0_i32, %arg0 : i32, i32, i32
  }
}

module attributes {stable_mosaic.version = 11 : i64} {
  func.func @_lse_pool_kernel(%arg0: i32, %arg1: i32, %arg2: memref<1x3x128xf32, #tpu.memory_space<vmem>>, %arg3: memref<1x8x3x128xf32, #tpu.memory_space<vmem>>, %arg4: memref<1x8x8x128xbf16, #tpu.memory_space<vmem>>, %arg5: memref<8x3xf32, #tpu.memory_space<vmem>>, %arg6: memref<8x4xf32, #tpu.memory_space<vmem>>, %arg7: memref<8x1xf32, #tpu.memory_space<vmem>>, %arg8: memref<16x16xf32, #tpu.memory_space<vmem>>, %arg9: memref<8x16xf32, #tpu.memory_space<vmem>>, %arg10: memref<8x1xf32, #tpu.memory_space<vmem>>, %arg11: memref<1x8x128xf32, #tpu.memory_space<vmem>>) attributes {dimension_semantics = [#tpu.dimension_semantics<parallel>, #tpu.dimension_semantics<parallel>], iteration_bounds = array<i64: 1, 2>, scalar_prefetch = 0 : i64, scratch_operands = 0 : i64, tpu.core_type = #tpu.core_type<tc>, window_params = [{transform_indices = @transform_0, window_bounds = array<i64: 1, 3, 128>}, {transform_indices = @transform_1, window_bounds = array<i64: 1, 8, 3, 128>}, {transform_indices = @transform_2, window_bounds = array<i64: 1, 8, 8, 128>}, {pipeline_mode = #tpu.pipeline_mode<synchronous>, transform_indices = @transform_3, window_bounds = array<i64: 8, 3>}, {pipeline_mode = #tpu.pipeline_mode<synchronous>, transform_indices = @transform_4, window_bounds = array<i64: 8, 4>}, {pipeline_mode = #tpu.pipeline_mode<synchronous>, transform_indices = @transform_5, window_bounds = array<i64: 8, 1>}, {pipeline_mode = #tpu.pipeline_mode<synchronous>, transform_indices = @transform_6, window_bounds = array<i64: 16, 16>}, {pipeline_mode = #tpu.pipeline_mode<synchronous>, transform_indices = @transform_7, window_bounds = array<i64: 8, 16>}, {pipeline_mode = #tpu.pipeline_mode<synchronous>, transform_indices = @transform_8, window_bounds = array<i64: 8, 1>}, {transform_indices = @transform_9, window_bounds = array<i64: 1, 8, 128>}]} {
    %c0 = arith.constant 0 : index
    %c0_0 = arith.constant 0 : index
    %c0_1 = arith.constant 0 : index
    %0 = vector.load %arg2[%c0, %c0_0, %c0_1] : memref<1x3x128xf32, #tpu.memory_space<vmem>>, vector<1x3x128xf32>
    %1 = vector.shape_cast %0 : vector<1x3x128xf32> to vector<3x128xf32>
    %c0_2 = arith.constant 0 : index
    %c0_3 = arith.constant 0 : index
    %2 = vector.load %arg5[%c0_2, %c0_3] : memref<8x3xf32, #tpu.memory_space<vmem>>, vector<8x3xf32>
    %c0_4 = arith.constant 0 : index
    %c0_5 = arith.constant 0 : index
    %3 = vector.load %arg6[%c0_4, %c0_5] : memref<8x4xf32, #tpu.memory_space<vmem>>, vector<8x4xf32>
    %c0_6 = arith.constant 0 : index
    %c0_7 = arith.constant 0 : index
    %4 = vector.load %arg8[%c0_6, %c0_7] : memref<16x16xf32, #tpu.memory_space<vmem>>, vector<16x16xf32>
    %cst = arith.constant dense<0.000000e+00> : vector<8x128xf32>
    %5 = tpu.matmul %2, %1, %cst {dimension_numbers = #tpu.dot_dimension_numbers<[1], [0], [0], [1], [0, 0, 1, 1], [], []>} : vector<8x3xf32>, vector<3x128xf32>, vector<8x128xf32> -> vector<8x128xf32>
    %c0_8 = arith.constant 0 : index
    %c0_9 = arith.constant 0 : index
    %6 = vector.load %arg7[%c0_8, %c0_9] : memref<8x1xf32, #tpu.memory_space<vmem>>, vector<8x1xf32>
    %7 = vector.broadcast %6 : vector<8x1xf32> to vector<8x128xf32>
    %8 = arith.addf %5, %7 : vector<8x128xf32>
    %c0_10 = arith.constant 0 : index
    %c0_11 = arith.constant 0 : index
    %c0_12 = arith.constant 0 : index
    %c0_13 = arith.constant 0 : index
    %9 = vector.load %arg3[%c0_10, %c0_11, %c0_12, %c0_13] : memref<1x8x3x128xf32, #tpu.memory_space<vmem>>, vector<1x1x3x128xf32>
    %10 = vector.shape_cast %9 : vector<1x1x3x128xf32> to vector<3x128xf32>
    %11 = arith.subf %1, %10 : vector<3x128xf32>
    %12 = vector.extract_strided_slice %11 {offsets = [0, 0], sizes = [1, 128], strides = [1, 1]} : vector<3x128xf32> to vector<1x128xf32>
    %13 = vector.extract_strided_slice %11 {offsets = [0, 0], sizes = [1, 128], strides = [1, 1]} : vector<3x128xf32> to vector<1x128xf32>
    %14 = arith.mulf %12, %13 : vector<1x128xf32>
    %15 = vector.extract_strided_slice %11 {offsets = [1, 0], sizes = [1, 128], strides = [1, 1]} : vector<3x128xf32> to vector<1x128xf32>
    %16 = vector.extract_strided_slice %11 {offsets = [1, 0], sizes = [1, 128], strides = [1, 1]} : vector<3x128xf32> to vector<1x128xf32>
    %17 = arith.mulf %15, %16 : vector<1x128xf32>
    %18 = arith.addf %14, %17 : vector<1x128xf32>
    %19 = vector.extract_strided_slice %11 {offsets = [2, 0], sizes = [1, 128], strides = [1, 1]} : vector<3x128xf32> to vector<1x128xf32>
    %20 = vector.extract_strided_slice %11 {offsets = [2, 0], sizes = [1, 128], strides = [1, 1]} : vector<3x128xf32> to vector<1x128xf32>
    %21 = arith.mulf %19, %20 : vector<1x128xf32>
    %22 = arith.addf %18, %21 : vector<1x128xf32>
    %23 = math.sqrt %22 : vector<1x128xf32>
    %24 = tpu.concatenate %10, %23 in 0 : vector<3x128xf32>, vector<1x128xf32> -> vector<4x128xf32>
    %cst_14 = arith.constant dense<0.000000e+00> : vector<8x128xf32>
    %25 = tpu.matmul %3, %24, %cst_14 {dimension_numbers = #tpu.dot_dimension_numbers<[1], [0], [0], [1], [0, 0, 1, 1], [], []>} : vector<8x4xf32>, vector<4x128xf32>, vector<8x128xf32> -> vector<8x128xf32>
    %26 = arith.addf %8, %25 : vector<8x128xf32>
    %cst_15 = arith.constant 0.000000e+00 : f32
    %27 = vector.broadcast %cst_15 : f32 to vector<8x128xf32>
    %28 = arith.maximumf %26, %27 : vector<8x128xf32>
    %c0_16 = arith.constant 0 : index
    %c0_17 = arith.constant 0 : index
    %c0_18 = arith.constant 0 : index
    %c0_19 = arith.constant 0 : index
    %29 = vector.load %arg4[%c0_16, %c0_17, %c0_18, %c0_19] : memref<1x8x8x128xbf16, #tpu.memory_space<vmem>>, vector<1x1x8x128xbf16>
    %30 = vector.shape_cast %29 : vector<1x1x8x128xbf16> to vector<8x128xbf16>
    %31 = arith.extf %30 : vector<8x128xbf16> to vector<8x128xf32>
    %32 = tpu.concatenate %28, %31 in 0 : vector<8x128xf32>, vector<8x128xf32> -> vector<16x128xf32>
    %cst_20 = arith.constant dense<0.000000e+00> : vector<16x128xf32>
    %33 = tpu.matmul %4, %32, %cst_20 {dimension_numbers = #tpu.dot_dimension_numbers<[1], [0], [0], [1], [0, 0, 1, 1], [], []>} : vector<16x16xf32>, vector<16x128xf32>, vector<16x128xf32> -> vector<16x128xf32>
    %cst_21 = arith.constant 1.000000e+00 : f32
    %34 = vector.broadcast %cst_21 : f32 to vector<16x128xf32>
    %c0_22 = arith.constant 0 : index
    %c1 = arith.constant 1 : index
    %c0_23 = arith.constant 0 : index
    %c0_24 = arith.constant 0 : index
    %35 = vector.load %arg3[%c0_22, %c1, %c0_23, %c0_24] : memref<1x8x3x128xf32, #tpu.memory_space<vmem>>, vector<1x1x3x128xf32>
    %36 = vector.shape_cast %35 : vector<1x1x3x128xf32> to vector<3x128xf32>
    %37 = arith.subf %1, %36 : vector<3x128xf32>
    %38 = vector.extract_strided_slice %37 {offsets = [0, 0], sizes = [1, 128], strides = [1, 1]} : vector<3x128xf32> to vector<1x128xf32>
    %39 = vector.extract_strided_slice %37 {offsets = [0, 0], sizes = [1, 128], strides = [1, 1]} : vector<3x128xf32> to vector<1x128xf32>
    %40 = arith.mulf %38, %39 : vector<1x128xf32>
    %41 = vector.extract_strided_slice %37 {offsets = [1, 0], sizes = [1, 128], strides = [1, 1]} : vector<3x128xf32> to vector<1x128xf32>
    %42 = vector.extract_strided_slice %37 {offsets = [1, 0], sizes = [1, 128], strides = [1, 1]} : vector<3x128xf32> to vector<1x128xf32>
    %43 = arith.mulf %41, %42 : vector<1x128xf32>
    %44 = arith.addf %40, %43 : vector<1x128xf32>
    %45 = vector.extract_strided_slice %37 {offsets = [2, 0], sizes = [1, 128], strides = [1, 1]} : vector<3x128xf32> to vector<1x128xf32>
    %46 = vector.extract_strided_slice %37 {offsets = [2, 0], sizes = [1, 128], strides = [1, 1]} : vector<3x128xf32> to vector<1x128xf32>
    %47 = arith.mulf %45, %46 : vector<1x128xf32>
    %48 = arith.addf %44, %47 : vector<1x128xf32>
    %49 = math.sqrt %48 : vector<1x128xf32>
    %50 = tpu.concatenate %36, %49 in 0 : vector<3x128xf32>, vector<1x128xf32> -> vector<4x128xf32>
    %cst_25 = arith.constant dense<0.000000e+00> : vector<8x128xf32>
    %51 = tpu.matmul %3, %50, %cst_25 {dimension_numbers = #tpu.dot_dimension_numbers<[1], [0], [0], [1], [0, 0, 1, 1], [], []>} : vector<8x4xf32>, vector<4x128xf32>, vector<8x128xf32> -> vector<8x128xf32>
    %52 = arith.addf %8, %51 : vector<8x128xf32>
    %cst_26 = arith.constant 0.000000e+00 : f32
    %53 = vector.broadcast %cst_26 : f32 to vector<8x128xf32>
    %54 = arith.maximumf %52, %53 : vector<8x128xf32>
    %c0_27 = arith.constant 0 : index
    %c1_28 = arith.constant 1 : index
    %c0_29 = arith.constant 0 : index
    %c0_30 = arith.constant 0 : index
    %55 = vector.load %arg4[%c0_27, %c1_28, %c0_29, %c0_30] : memref<1x8x8x128xbf16, #tpu.memory_space<vmem>>, vector<1x1x8x128xbf16>
    %56 = vector.shape_cast %55 : vector<1x1x8x128xbf16> to vector<8x128xbf16>
    %57 = arith.extf %56 : vector<8x128xbf16> to vector<8x128xf32>
    %58 = tpu.concatenate %54, %57 in 0 : vector<8x128xf32>, vector<8x128xf32> -> vector<16x128xf32>
    %cst_31 = arith.constant dense<0.000000e+00> : vector<16x128xf32>
    %59 = tpu.matmul %4, %58, %cst_31 {dimension_numbers = #tpu.dot_dimension_numbers<[1], [0], [0], [1], [0, 0, 1, 1], [], []>} : vector<16x16xf32>, vector<16x128xf32>, vector<16x128xf32> -> vector<16x128xf32>
    %60 = arith.maximumf %33, %59 : vector<16x128xf32>
    %61 = arith.subf %33, %60 : vector<16x128xf32>
    %62 = math.exp %61 : vector<16x128xf32>
    %63 = arith.subf %59, %60 : vector<16x128xf32>
    %64 = math.exp %63 : vector<16x128xf32>
    %65 = arith.mulf %34, %62 : vector<16x128xf32>
    %66 = arith.addf %65, %64 : vector<16x128xf32>
    %67 = arith.mulf %32, %62 : vector<16x128xf32>
    %68 = arith.mulf %64, %58 : vector<16x128xf32>
    %69 = arith.addf %67, %68 : vector<16x128xf32>
    %c0_32 = arith.constant 0 : index
    %c2 = arith.constant 2 : index
    %c0_33 = arith.constant 0 : index
    %c0_34 = arith.constant 0 : index
    %70 = vector.load %arg3[%c0_32, %c2, %c0_33, %c0_34] : memref<1x8x3x128xf32, #tpu.memory_space<vmem>>, vector<1x1x3x128xf32>
    %71 = vector.shape_cast %70 : vector<1x1x3x128xf32> to vector<3x128xf32>
    %72 = arith.subf %1, %71 : vector<3x128xf32>
    %73 = vector.extract_strided_slice %72 {offsets = [0, 0], sizes = [1, 128], strides = [1, 1]} : vector<3x128xf32> to vector<1x128xf32>
    %74 = vector.extract_strided_slice %72 {offsets = [0, 0], sizes = [1, 128], strides = [1, 1]} : vector<3x128xf32> to vector<1x128xf32>
    %75 = arith.mulf %73, %74 : vector<1x128xf32>
    %76 = vector.extract_strided_slice %72 {offsets = [1, 0], sizes = [1, 128], strides = [1, 1]} : vector<3x128xf32> to vector<1x128xf32>
    %77 = vector.extract_strided_slice %72 {offsets = [1, 0], sizes = [1, 128], strides = [1, 1]} : vector<3x128xf32> to vector<1x128xf32>
    %78 = arith.mulf %76, %77 : vector<1x128xf32>
    %79 = arith.addf %75, %78 : vector<1x128xf32>
    %80 = vector.extract_strided_slice %72 {offsets = [2, 0], sizes = [1, 128], strides = [1, 1]} : vector<3x128xf32> to vector<1x128xf32>
    %81 = vector.extract_strided_slice %72 {offsets = [2, 0], sizes = [1, 128], strides = [1, 1]} : vector<3x128xf32> to vector<1x128xf32>
    %82 = arith.mulf %80, %81 : vector<1x128xf32>
    %83 = arith.addf %79, %82 : vector<1x128xf32>
    %84 = math.sqrt %83 : vector<1x128xf32>
    %85 = tpu.concatenate %71, %84 in 0 : vector<3x128xf32>, vector<1x128xf32> -> vector<4x128xf32>
    %cst_35 = arith.constant dense<0.000000e+00> : vector<8x128xf32>
    %86 = tpu.matmul %3, %85, %cst_35 {dimension_numbers = #tpu.dot_dimension_numbers<[1], [0], [0], [1], [0, 0, 1, 1], [], []>} : vector<8x4xf32>, vector<4x128xf32>, vector<8x128xf32> -> vector<8x128xf32>
    %87 = arith.addf %8, %86 : vector<8x128xf32>
    %cst_36 = arith.constant 0.000000e+00 : f32
    %88 = vector.broadcast %cst_36 : f32 to vector<8x128xf32>
    %89 = arith.maximumf %87, %88 : vector<8x128xf32>
    %c0_37 = arith.constant 0 : index
    %c2_38 = arith.constant 2 : index
    %c0_39 = arith.constant 0 : index
    %c0_40 = arith.constant 0 : index
    %90 = vector.load %arg4[%c0_37, %c2_38, %c0_39, %c0_40] : memref<1x8x8x128xbf16, #tpu.memory_space<vmem>>, vector<1x1x8x128xbf16>
    %91 = vector.shape_cast %90 : vector<1x1x8x128xbf16> to vector<8x128xbf16>
    %92 = arith.extf %91 : vector<8x128xbf16> to vector<8x128xf32>
    %93 = tpu.concatenate %89, %92 in 0 : vector<8x128xf32>, vector<8x128xf32> -> vector<16x128xf32>
    %cst_41 = arith.constant dense<0.000000e+00> : vector<16x128xf32>
    %94 = tpu.matmul %4, %93, %cst_41 {dimension_numbers = #tpu.dot_dimension_numbers<[1], [0], [0], [1], [0, 0, 1, 1], [], []>} : vector<16x16xf32>, vector<16x128xf32>, vector<16x128xf32> -> vector<16x128xf32>
    %95 = arith.maximumf %60, %94 : vector<16x128xf32>
    %96 = arith.subf %60, %95 : vector<16x128xf32>
    %97 = math.exp %96 : vector<16x128xf32>
    %98 = arith.subf %94, %95 : vector<16x128xf32>
    %99 = math.exp %98 : vector<16x128xf32>
    %100 = arith.mulf %66, %97 : vector<16x128xf32>
    %101 = arith.addf %100, %99 : vector<16x128xf32>
    %102 = arith.mulf %69, %97 : vector<16x128xf32>
    %103 = arith.mulf %99, %93 : vector<16x128xf32>
    %104 = arith.addf %102, %103 : vector<16x128xf32>
    %c0_42 = arith.constant 0 : index
    %c3 = arith.constant 3 : index
    %c0_43 = arith.constant 0 : index
    %c0_44 = arith.constant 0 : index
    %105 = vector.load %arg3[%c0_42, %c3, %c0_43, %c0_44] : memref<1x8x3x128xf32, #tpu.memory_space<vmem>>, vector<1x1x3x128xf32>
    %106 = vector.shape_cast %105 : vector<1x1x3x128xf32> to vector<3x128xf32>
    %107 = arith.subf %1, %106 : vector<3x128xf32>
    %108 = vector.extract_strided_slice %107 {offsets = [0, 0], sizes = [1, 128], strides = [1, 1]} : vector<3x128xf32> to vector<1x128xf32>
    %109 = vector.extract_strided_slice %107 {offsets = [0, 0], sizes = [1, 128], strides = [1, 1]} : vector<3x128xf32> to vector<1x128xf32>
    %110 = arith.mulf %108, %109 : vector<1x128xf32>
    %111 = vector.extract_strided_slice %107 {offsets = [1, 0], sizes = [1, 128], strides = [1, 1]} : vector<3x128xf32> to vector<1x128xf32>
    %112 = vector.extract_strided_slice %107 {offsets = [1, 0], sizes = [1, 128], strides = [1, 1]} : vector<3x128xf32> to vector<1x128xf32>
    %113 = arith.mulf %111, %112 : vector<1x128xf32>
    %114 = arith.addf %110, %113 : vector<1x128xf32>
    %115 = vector.extract_strided_slice %107 {offsets = [2, 0], sizes = [1, 128], strides = [1, 1]} : vector<3x128xf32> to vector<1x128xf32>
    %116 = vector.extract_strided_slice %107 {offsets = [2, 0], sizes = [1, 128], strides = [1, 1]} : vector<3x128xf32> to vector<1x128xf32>
    %117 = arith.mulf %115, %116 : vector<1x128xf32>
    %118 = arith.addf %114, %117 : vector<1x128xf32>
    %119 = math.sqrt %118 : vector<1x128xf32>
    %120 = tpu.concatenate %106, %119 in 0 : vector<3x128xf32>, vector<1x128xf32> -> vector<4x128xf32>
    %cst_45 = arith.constant dense<0.000000e+00> : vector<8x128xf32>
    %121 = tpu.matmul %3, %120, %cst_45 {dimension_numbers = #tpu.dot_dimension_numbers<[1], [0], [0], [1], [0, 0, 1, 1], [], []>} : vector<8x4xf32>, vector<4x128xf32>, vector<8x128xf32> -> vector<8x128xf32>
    %122 = arith.addf %8, %121 : vector<8x128xf32>
    %cst_46 = arith.constant 0.000000e+00 : f32
    %123 = vector.broadcast %cst_46 : f32 to vector<8x128xf32>
    %124 = arith.maximumf %122, %123 : vector<8x128xf32>
    %c0_47 = arith.constant 0 : index
    %c3_48 = arith.constant 3 : index
    %c0_49 = arith.constant 0 : index
    %c0_50 = arith.constant 0 : index
    %125 = vector.load %arg4[%c0_47, %c3_48, %c0_49, %c0_50] : memref<1x8x8x128xbf16, #tpu.memory_space<vmem>>, vector<1x1x8x128xbf16>
    %126 = vector.shape_cast %125 : vector<1x1x8x128xbf16> to vector<8x128xbf16>
    %127 = arith.extf %126 : vector<8x128xbf16> to vector<8x128xf32>
    %128 = tpu.concatenate %124, %127 in 0 : vector<8x128xf32>, vector<8x128xf32> -> vector<16x128xf32>
    %cst_51 = arith.constant dense<0.000000e+00> : vector<16x128xf32>
    %129 = tpu.matmul %4, %128, %cst_51 {dimension_numbers = #tpu.dot_dimension_numbers<[1], [0], [0], [1], [0, 0, 1, 1], [], []>} : vector<16x16xf32>, vector<16x128xf32>, vector<16x128xf32> -> vector<16x128xf32>
    %130 = arith.maximumf %95, %129 : vector<16x128xf32>
    %131 = arith.subf %95, %130 : vector<16x128xf32>
    %132 = math.exp %131 : vector<16x128xf32>
    %133 = arith.subf %129, %130 : vector<16x128xf32>
    %134 = math.exp %133 : vector<16x128xf32>
    %135 = arith.mulf %101, %132 : vector<16x128xf32>
    %136 = arith.addf %135, %134 : vector<16x128xf32>
    %137 = arith.mulf %104, %132 : vector<16x128xf32>
    %138 = arith.mulf %134, %128 : vector<16x128xf32>
    %139 = arith.addf %137, %138 : vector<16x128xf32>
    %c0_52 = arith.constant 0 : index
    %c4 = arith.constant 4 : index
    %c0_53 = arith.constant 0 : index
    %c0_54 = arith.constant 0 : index
    %140 = vector.load %arg3[%c0_52, %c4, %c0_53, %c0_54] : memref<1x8x3x128xf32, #tpu.memory_space<vmem>>, vector<1x1x3x128xf32>
    %141 = vector.shape_cast %140 : vector<1x1x3x128xf32> to vector<3x128xf32>
    %142 = arith.subf %1, %141 : vector<3x128xf32>
    %143 = vector.extract_strided_slice %142 {offsets = [0, 0], sizes = [1, 128], strides = [1, 1]} : vector<3x128xf32> to vector<1x128xf32>
    %144 = vector.extract_strided_slice %142 {offsets = [0, 0], sizes = [1, 128], strides = [1, 1]} : vector<3x128xf32> to vector<1x128xf32>
    %145 = arith.mulf %143, %144 : vector<1x128xf32>
    %146 = vector.extract_strided_slice %142 {offsets = [1, 0], sizes = [1, 128], strides = [1, 1]} : vector<3x128xf32> to vector<1x128xf32>
    %147 = vector.extract_strided_slice %142 {offsets = [1, 0], sizes = [1, 128], strides = [1, 1]} : vector<3x128xf32> to vector<1x128xf32>
    %148 = arith.mulf %146, %147 : vector<1x128xf32>
    %149 = arith.addf %145, %148 : vector<1x128xf32>
    %150 = vector.extract_strided_slice %142 {offsets = [2, 0], sizes = [1, 128], strides = [1, 1]} : vector<3x128xf32> to vector<1x128xf32>
    %151 = vector.extract_strided_slice %142 {offsets = [2, 0], sizes = [1, 128], strides = [1, 1]} : vector<3x128xf32> to vector<1x128xf32>
    %152 = arith.mulf %150, %151 : vector<1x128xf32>
    %153 = arith.addf %149, %152 : vector<1x128xf32>
    %154 = math.sqrt %153 : vector<1x128xf32>
    %155 = tpu.concatenate %141, %154 in 0 : vector<3x128xf32>, vector<1x128xf32> -> vector<4x128xf32>
    %cst_55 = arith.constant dense<0.000000e+00> : vector<8x128xf32>
    %156 = tpu.matmul %3, %155, %cst_55 {dimension_numbers = #tpu.dot_dimension_numbers<[1], [0], [0], [1], [0, 0, 1, 1], [], []>} : vector<8x4xf32>, vector<4x128xf32>, vector<8x128xf32> -> vector<8x128xf32>
    %157 = arith.addf %8, %156 : vector<8x128xf32>
    %cst_56 = arith.constant 0.000000e+00 : f32
    %158 = vector.broadcast %cst_56 : f32 to vector<8x128xf32>
    %159 = arith.maximumf %157, %158 : vector<8x128xf32>
    %c0_57 = arith.constant 0 : index
    %c4_58 = arith.constant 4 : index
    %c0_59 = arith.constant 0 : index
    %c0_60 = arith.constant 0 : index
    %160 = vector.load %arg4[%c0_57, %c4_58, %c0_59, %c0_60] : memref<1x8x8x128xbf16, #tpu.memory_space<vmem>>, vector<1x1x8x128xbf16>
    %161 = vector.shape_cast %160 : vector<1x1x8x128xbf16> to vector<8x128xbf16>
    %162 = arith.extf %161 : vector<8x128xbf16> to vector<8x128xf32>
    %163 = tpu.concatenate %159, %162 in 0 : vector<8x128xf32>, vector<8x128xf32> -> vector<16x128xf32>
    %cst_61 = arith.constant dense<0.000000e+00> : vector<16x128xf32>
    %164 = tpu.matmul %4, %163, %cst_61 {dimension_numbers = #tpu.dot_dimension_numbers<[1], [0], [0], [1], [0, 0, 1, 1], [], []>} : vector<16x16xf32>, vector<16x128xf32>, vector<16x128xf32> -> vector<16x128xf32>
    %165 = arith.maximumf %130, %164 : vector<16x128xf32>
    %166 = arith.subf %130, %165 : vector<16x128xf32>
    %167 = math.exp %166 : vector<16x128xf32>
    %168 = arith.subf %164, %165 : vector<16x128xf32>
    %169 = math.exp %168 : vector<16x128xf32>
    %170 = arith.mulf %136, %167 : vector<16x128xf32>
    %171 = arith.addf %170, %169 : vector<16x128xf32>
    %172 = arith.mulf %139, %167 : vector<16x128xf32>
    %173 = arith.mulf %169, %163 : vector<16x128xf32>
    %174 = arith.addf %172, %173 : vector<16x128xf32>
    %c0_62 = arith.constant 0 : index
    %c5 = arith.constant 5 : index
    %c0_63 = arith.constant 0 : index
    %c0_64 = arith.constant 0 : index
    %175 = vector.load %arg3[%c0_62, %c5, %c0_63, %c0_64] : memref<1x8x3x128xf32, #tpu.memory_space<vmem>>, vector<1x1x3x128xf32>
    %176 = vector.shape_cast %175 : vector<1x1x3x128xf32> to vector<3x128xf32>
    %177 = arith.subf %1, %176 : vector<3x128xf32>
    %178 = vector.extract_strided_slice %177 {offsets = [0, 0], sizes = [1, 128], strides = [1, 1]} : vector<3x128xf32> to vector<1x128xf32>
    %179 = vector.extract_strided_slice %177 {offsets = [0, 0], sizes = [1, 128], strides = [1, 1]} : vector<3x128xf32> to vector<1x128xf32>
    %180 = arith.mulf %178, %179 : vector<1x128xf32>
    %181 = vector.extract_strided_slice %177 {offsets = [1, 0], sizes = [1, 128], strides = [1, 1]} : vector<3x128xf32> to vector<1x128xf32>
    %182 = vector.extract_strided_slice %177 {offsets = [1, 0], sizes = [1, 128], strides = [1, 1]} : vector<3x128xf32> to vector<1x128xf32>
    %183 = arith.mulf %181, %182 : vector<1x128xf32>
    %184 = arith.addf %180, %183 : vector<1x128xf32>
    %185 = vector.extract_strided_slice %177 {offsets = [2, 0], sizes = [1, 128], strides = [1, 1]} : vector<3x128xf32> to vector<1x128xf32>
    %186 = vector.extract_strided_slice %177 {offsets = [2, 0], sizes = [1, 128], strides = [1, 1]} : vector<3x128xf32> to vector<1x128xf32>
    %187 = arith.mulf %185, %186 : vector<1x128xf32>
    %188 = arith.addf %184, %187 : vector<1x128xf32>
    %189 = math.sqrt %188 : vector<1x128xf32>
    %190 = tpu.concatenate %176, %189 in 0 : vector<3x128xf32>, vector<1x128xf32> -> vector<4x128xf32>
    %cst_65 = arith.constant dense<0.000000e+00> : vector<8x128xf32>
    %191 = tpu.matmul %3, %190, %cst_65 {dimension_numbers = #tpu.dot_dimension_numbers<[1], [0], [0], [1], [0, 0, 1, 1], [], []>} : vector<8x4xf32>, vector<4x128xf32>, vector<8x128xf32> -> vector<8x128xf32>
    %192 = arith.addf %8, %191 : vector<8x128xf32>
    %cst_66 = arith.constant 0.000000e+00 : f32
    %193 = vector.broadcast %cst_66 : f32 to vector<8x128xf32>
    %194 = arith.maximumf %192, %193 : vector<8x128xf32>
    %c0_67 = arith.constant 0 : index
    %c5_68 = arith.constant 5 : index
    %c0_69 = arith.constant 0 : index
    %c0_70 = arith.constant 0 : index
    %195 = vector.load %arg4[%c0_67, %c5_68, %c0_69, %c0_70] : memref<1x8x8x128xbf16, #tpu.memory_space<vmem>>, vector<1x1x8x128xbf16>
    %196 = vector.shape_cast %195 : vector<1x1x8x128xbf16> to vector<8x128xbf16>
    %197 = arith.extf %196 : vector<8x128xbf16> to vector<8x128xf32>
    %198 = tpu.concatenate %194, %197 in 0 : vector<8x128xf32>, vector<8x128xf32> -> vector<16x128xf32>
    %cst_71 = arith.constant dense<0.000000e+00> : vector<16x128xf32>
    %199 = tpu.matmul %4, %198, %cst_71 {dimension_numbers = #tpu.dot_dimension_numbers<[1], [0], [0], [1], [0, 0, 1, 1], [], []>} : vector<16x16xf32>, vector<16x128xf32>, vector<16x128xf32> -> vector<16x128xf32>
    %200 = arith.maximumf %165, %199 : vector<16x128xf32>
    %201 = arith.subf %165, %200 : vector<16x128xf32>
    %202 = math.exp %201 : vector<16x128xf32>
    %203 = arith.subf %199, %200 : vector<16x128xf32>
    %204 = math.exp %203 : vector<16x128xf32>
    %205 = arith.mulf %171, %202 : vector<16x128xf32>
    %206 = arith.addf %205, %204 : vector<16x128xf32>
    %207 = arith.mulf %174, %202 : vector<16x128xf32>
    %208 = arith.mulf %204, %198 : vector<16x128xf32>
    %209 = arith.addf %207, %208 : vector<16x128xf32>
    %c0_72 = arith.constant 0 : index
    %c6 = arith.constant 6 : index
    %c0_73 = arith.constant 0 : index
    %c0_74 = arith.constant 0 : index
    %210 = vector.load %arg3[%c0_72, %c6, %c0_73, %c0_74] : memref<1x8x3x128xf32, #tpu.memory_space<vmem>>, vector<1x1x3x128xf32>
    %211 = vector.shape_cast %210 : vector<1x1x3x128xf32> to vector<3x128xf32>
    %212 = arith.subf %1, %211 : vector<3x128xf32>
    %213 = vector.extract_strided_slice %212 {offsets = [0, 0], sizes = [1, 128], strides = [1, 1]} : vector<3x128xf32> to vector<1x128xf32>
    %214 = vector.extract_strided_slice %212 {offsets = [0, 0], sizes = [1, 128], strides = [1, 1]} : vector<3x128xf32> to vector<1x128xf32>
    %215 = arith.mulf %213, %214 : vector<1x128xf32>
    %216 = vector.extract_strided_slice %212 {offsets = [1, 0], sizes = [1, 128], strides = [1, 1]} : vector<3x128xf32> to vector<1x128xf32>
    %217 = vector.extract_strided_slice %212 {offsets = [1, 0], sizes = [1, 128], strides = [1, 1]} : vector<3x128xf32> to vector<1x128xf32>
    %218 = arith.mulf %216, %217 : vector<1x128xf32>
    %219 = arith.addf %215, %218 : vector<1x128xf32>
    %220 = vector.extract_strided_slice %212 {offsets = [2, 0], sizes = [1, 128], strides = [1, 1]} : vector<3x128xf32> to vector<1x128xf32>
    %221 = vector.extract_strided_slice %212 {offsets = [2, 0], sizes = [1, 128], strides = [1, 1]} : vector<3x128xf32> to vector<1x128xf32>
    %222 = arith.mulf %220, %221 : vector<1x128xf32>
    %223 = arith.addf %219, %222 : vector<1x128xf32>
    %224 = math.sqrt %223 : vector<1x128xf32>
    %225 = tpu.concatenate %211, %224 in 0 : vector<3x128xf32>, vector<1x128xf32> -> vector<4x128xf32>
    %cst_75 = arith.constant dense<0.000000e+00> : vector<8x128xf32>
    %226 = tpu.matmul %3, %225, %cst_75 {dimension_numbers = #tpu.dot_dimension_numbers<[1], [0], [0], [1], [0, 0, 1, 1], [], []>} : vector<8x4xf32>, vector<4x128xf32>, vector<8x128xf32> -> vector<8x128xf32>
    %227 = arith.addf %8, %226 : vector<8x128xf32>
    %cst_76 = arith.constant 0.000000e+00 : f32
    %228 = vector.broadcast %cst_76 : f32 to vector<8x128xf32>
    %229 = arith.maximumf %227, %228 : vector<8x128xf32>
    %c0_77 = arith.constant 0 : index
    %c6_78 = arith.constant 6 : index
    %c0_79 = arith.constant 0 : index
    %c0_80 = arith.constant 0 : index
    %230 = vector.load %arg4[%c0_77, %c6_78, %c0_79, %c0_80] : memref<1x8x8x128xbf16, #tpu.memory_space<vmem>>, vector<1x1x8x128xbf16>
    %231 = vector.shape_cast %230 : vector<1x1x8x128xbf16> to vector<8x128xbf16>
    %232 = arith.extf %231 : vector<8x128xbf16> to vector<8x128xf32>
    %233 = tpu.concatenate %229, %232 in 0 : vector<8x128xf32>, vector<8x128xf32> -> vector<16x128xf32>
    %cst_81 = arith.constant dense<0.000000e+00> : vector<16x128xf32>
    %234 = tpu.matmul %4, %233, %cst_81 {dimension_numbers = #tpu.dot_dimension_numbers<[1], [0], [0], [1], [0, 0, 1, 1], [], []>} : vector<16x16xf32>, vector<16x128xf32>, vector<16x128xf32> -> vector<16x128xf32>
    %235 = arith.maximumf %200, %234 : vector<16x128xf32>
    %236 = arith.subf %200, %235 : vector<16x128xf32>
    %237 = math.exp %236 : vector<16x128xf32>
    %238 = arith.subf %234, %235 : vector<16x128xf32>
    %239 = math.exp %238 : vector<16x128xf32>
    %240 = arith.mulf %206, %237 : vector<16x128xf32>
    %241 = arith.addf %240, %239 : vector<16x128xf32>
    %242 = arith.mulf %209, %237 : vector<16x128xf32>
    %243 = arith.mulf %239, %233 : vector<16x128xf32>
    %244 = arith.addf %242, %243 : vector<16x128xf32>
    %c0_82 = arith.constant 0 : index
    %c7 = arith.constant 7 : index
    %c0_83 = arith.constant 0 : index
    %c0_84 = arith.constant 0 : index
    %245 = vector.load %arg3[%c0_82, %c7, %c0_83, %c0_84] : memref<1x8x3x128xf32, #tpu.memory_space<vmem>>, vector<1x1x3x128xf32>
    %246 = vector.shape_cast %245 : vector<1x1x3x128xf32> to vector<3x128xf32>
    %247 = arith.subf %1, %246 : vector<3x128xf32>
    %248 = vector.extract_strided_slice %247 {offsets = [0, 0], sizes = [1, 128], strides = [1, 1]} : vector<3x128xf32> to vector<1x128xf32>
    %249 = vector.extract_strided_slice %247 {offsets = [0, 0], sizes = [1, 128], strides = [1, 1]} : vector<3x128xf32> to vector<1x128xf32>
    %250 = arith.mulf %248, %249 : vector<1x128xf32>
    %251 = vector.extract_strided_slice %247 {offsets = [1, 0], sizes = [1, 128], strides = [1, 1]} : vector<3x128xf32> to vector<1x128xf32>
    %252 = vector.extract_strided_slice %247 {offsets = [1, 0], sizes = [1, 128], strides = [1, 1]} : vector<3x128xf32> to vector<1x128xf32>
    %253 = arith.mulf %251, %252 : vector<1x128xf32>
    %254 = arith.addf %250, %253 : vector<1x128xf32>
    %255 = vector.extract_strided_slice %247 {offsets = [2, 0], sizes = [1, 128], strides = [1, 1]} : vector<3x128xf32> to vector<1x128xf32>
    %256 = vector.extract_strided_slice %247 {offsets = [2, 0], sizes = [1, 128], strides = [1, 1]} : vector<3x128xf32> to vector<1x128xf32>
    %257 = arith.mulf %255, %256 : vector<1x128xf32>
    %258 = arith.addf %254, %257 : vector<1x128xf32>
    %259 = math.sqrt %258 : vector<1x128xf32>
    %260 = tpu.concatenate %246, %259 in 0 : vector<3x128xf32>, vector<1x128xf32> -> vector<4x128xf32>
    %cst_85 = arith.constant dense<0.000000e+00> : vector<8x128xf32>
    %261 = tpu.matmul %3, %260, %cst_85 {dimension_numbers = #tpu.dot_dimension_numbers<[1], [0], [0], [1], [0, 0, 1, 1], [], []>} : vector<8x4xf32>, vector<4x128xf32>, vector<8x128xf32> -> vector<8x128xf32>
    %262 = arith.addf %8, %261 : vector<8x128xf32>
    %cst_86 = arith.constant 0.000000e+00 : f32
    %263 = vector.broadcast %cst_86 : f32 to vector<8x128xf32>
    %264 = arith.maximumf %262, %263 : vector<8x128xf32>
    %c0_87 = arith.constant 0 : index
    %c7_88 = arith.constant 7 : index
    %c0_89 = arith.constant 0 : index
    %c0_90 = arith.constant 0 : index
    %265 = vector.load %arg4[%c0_87, %c7_88, %c0_89, %c0_90] : memref<1x8x8x128xbf16, #tpu.memory_space<vmem>>, vector<1x1x8x128xbf16>
    %266 = vector.shape_cast %265 : vector<1x1x8x128xbf16> to vector<8x128xbf16>
    %267 = arith.extf %266 : vector<8x128xbf16> to vector<8x128xf32>
    %268 = tpu.concatenate %264, %267 in 0 : vector<8x128xf32>, vector<8x128xf32> -> vector<16x128xf32>
    %cst_91 = arith.constant dense<0.000000e+00> : vector<16x128xf32>
    %269 = tpu.matmul %4, %268, %cst_91 {dimension_numbers = #tpu.dot_dimension_numbers<[1], [0], [0], [1], [0, 0, 1, 1], [], []>} : vector<16x16xf32>, vector<16x128xf32>, vector<16x128xf32> -> vector<16x128xf32>
    %270 = arith.maximumf %235, %269 : vector<16x128xf32>
    %271 = arith.subf %235, %270 : vector<16x128xf32>
    %272 = math.exp %271 : vector<16x128xf32>
    %273 = arith.subf %269, %270 : vector<16x128xf32>
    %274 = math.exp %273 : vector<16x128xf32>
    %275 = arith.mulf %241, %272 : vector<16x128xf32>
    %276 = arith.addf %275, %274 : vector<16x128xf32>
    %277 = arith.mulf %244, %272 : vector<16x128xf32>
    %278 = arith.mulf %274, %268 : vector<16x128xf32>
    %279 = arith.addf %277, %278 : vector<16x128xf32>
    %280 = arith.divf %279, %276 : vector<16x128xf32>
    %c0_92 = arith.constant 0 : index
    %c0_93 = arith.constant 0 : index
    %281 = vector.load %arg9[%c0_92, %c0_93] : memref<8x16xf32, #tpu.memory_space<vmem>>, vector<8x16xf32>
    %cst_94 = arith.constant dense<0.000000e+00> : vector<8x128xf32>
    %282 = tpu.matmul %281, %280, %cst_94 {dimension_numbers = #tpu.dot_dimension_numbers<[1], [0], [0], [1], [0, 0, 1, 1], [], []>} : vector<8x16xf32>, vector<16x128xf32>, vector<8x128xf32> -> vector<8x128xf32>
    %c0_95 = arith.constant 0 : index
    %c0_96 = arith.constant 0 : index
    %283 = vector.load %arg10[%c0_95, %c0_96] : memref<8x1xf32, #tpu.memory_space<vmem>>, vector<8x1xf32>
    %284 = vector.broadcast %283 : vector<8x1xf32> to vector<8x128xf32>
    %285 = arith.addf %282, %284 : vector<8x128xf32>
    %cst_97 = arith.constant 0.000000e+00 : f32
    %286 = vector.broadcast %cst_97 : f32 to vector<8x128xf32>
    %287 = arith.maximumf %285, %286 : vector<8x128xf32>
    %c0_98 = arith.constant 0 : index
    %c0_99 = arith.constant 0 : index
    %c0_100 = arith.constant 0 : index
    %288 = vector.load %arg11[%c0_98, %c0_99, %c0_100] : memref<1x8x128xf32, #tpu.memory_space<vmem>>, vector<1x8x128xf32>
    %289 = vector.shape_cast %288 : vector<1x8x128xf32> to vector<8x128xf32>
    %290 = vector.shape_cast %287 : vector<8x128xf32> to vector<1x8x128xf32>
    tpu.vector_store %arg11[%c0_98, %c0_99, %c0_100], %290 {strides = array<i32>} : memref<1x8x128xf32, #tpu.memory_space<vmem>>, vector<1x8x128xf32>,
    return
  }
  func.func @transform_0(%arg0: i32, %arg1: i32) -> (i32, i32, i32) {
    %c0_i32 = arith.constant 0 : i32
    %c0_i32_0 = arith.constant 0 : i32
    return %arg1, %c0_i32, %arg0 : i32, i32, i32
  }
  func.func @transform_1(%arg0: i32, %arg1: i32) -> (i32, i32, i32, i32) {
    %c0_i32 = arith.constant 0 : i32
    %c0_i32_0 = arith.constant 0 : i32
    %c0_i32_1 = arith.constant 0 : i32
    return %arg1, %c0_i32, %c0_i32_0, %arg0 : i32, i32, i32, i32
  }
  func.func @transform_2(%arg0: i32, %arg1: i32) -> (i32, i32, i32, i32) {
    %c0_i32 = arith.constant 0 : i32
    %c0_i32_0 = arith.constant 0 : i32
    %c0_i32_1 = arith.constant 0 : i32
    return %arg1, %c0_i32, %c0_i32_0, %arg0 : i32, i32, i32, i32
  }
  func.func @transform_3(%arg0: i32, %arg1: i32) -> (i32, i32) {
    %c0_i32 = arith.constant 0 : i32
    %c0_i32_0 = arith.constant 0 : i32
    %c0_i32_1 = arith.constant 0 : i32
    return %c0_i32, %c0_i32_0 : i32, i32
  }
  func.func @transform_4(%arg0: i32, %arg1: i32) -> (i32, i32) {
    %c0_i32 = arith.constant 0 : i32
    %c0_i32_0 = arith.constant 0 : i32
    %c0_i32_1 = arith.constant 0 : i32
    return %c0_i32, %c0_i32_0 : i32, i32
  }
  func.func @transform_5(%arg0: i32, %arg1: i32) -> (i32, i32) {
    %c0_i32 = arith.constant 0 : i32
    %c0_i32_0 = arith.constant 0 : i32
    %c0_i32_1 = arith.constant 0 : i32
    return %c0_i32, %c0_i32_0 : i32, i32
  }
  func.func @transform_6(%arg0: i32, %arg1: i32) -> (i32, i32) {
    %c0_i32 = arith.constant 0 : i32
    %c0_i32_0 = arith.constant 0 : i32
    %c0_i32_1 = arith.constant 0 : i32
    return %c0_i32, %c0_i32_0 : i32, i32
  }
  func.func @transform_7(%arg0: i32, %arg1: i32) -> (i32, i32) {
    %c0_i32 = arith.constant 0 : i32
    %c0_i32_0 = arith.constant 0 : i32
    %c0_i32_1 = arith.constant 0 : i32
    return %c0_i32, %c0_i32_0 : i32, i32
  }
  func.func @transform_8(%arg0: i32, %arg1: i32) -> (i32, i32) {
    %c0_i32 = arith.constant 0 : i32
    %c0_i32_0 = arith.constant 0 : i32
    %c0_i32_1 = arith.constant 0 : i32
    return %c0_i32, %c0_i32_0 : i32, i32
  }
  func.func @transform_9(%arg0: i32, %arg1: i32) -> (i32, i32, i32) {
    %c0_i32 = arith.constant 0 : i32
    %c0_i32_0 = arith.constant 0 : i32
    return %arg1, %c0_i32, %arg0 : i32, i32, i32
  }
}

module attributes {stable_mosaic.version = 11 : i64} {
  func.func @_lse_pool_kernel(%arg0: i32, %arg1: i32, %arg2: memref<1x3x128xf32, #tpu.memory_space<vmem>>, %arg3: memref<1x8x3x128xf32, #tpu.memory_space<vmem>>, %arg4: memref<1x8x8x128xbf16, #tpu.memory_space<vmem>>, %arg5: memref<8x3xf32, #tpu.memory_space<vmem>>, %arg6: memref<8x4xf32, #tpu.memory_space<vmem>>, %arg7: memref<8x1xf32, #tpu.memory_space<vmem>>, %arg8: memref<16x16xf32, #tpu.memory_space<vmem>>, %arg9: memref<16x16xf32, #tpu.memory_space<vmem>>, %arg10: memref<16x1xf32, #tpu.memory_space<vmem>>, %arg11: memref<1x8x128xf32, #tpu.memory_space<vmem>>, %arg12: memref<32x16xf32, #tpu.memory_space<vmem>>, %arg13: memref<32x1xf32, #tpu.memory_space<vmem>>, %arg14: memref<32x8xf32, #tpu.memory_space<vmem>>, %arg15: memref<32x1xf32, #tpu.memory_space<vmem>>, %arg16: memref<1x32x128xf32, #tpu.memory_space<vmem>>) attributes {dimension_semantics = [#tpu.dimension_semantics<parallel>, #tpu.dimension_semantics<parallel>], iteration_bounds = array<i64: 1, 2>, scalar_prefetch = 0 : i64, scratch_operands = 0 : i64, tpu.core_type = #tpu.core_type<tc>, window_params = [{transform_indices = @transform_0, window_bounds = array<i64: 1, 3, 128>}, {transform_indices = @transform_1, window_bounds = array<i64: 1, 8, 3, 128>}, {transform_indices = @transform_2, window_bounds = array<i64: 1, 8, 8, 128>}, {pipeline_mode = #tpu.pipeline_mode<synchronous>, transform_indices = @transform_3, window_bounds = array<i64: 8, 3>}, {pipeline_mode = #tpu.pipeline_mode<synchronous>, transform_indices = @transform_4, window_bounds = array<i64: 8, 4>}, {pipeline_mode = #tpu.pipeline_mode<synchronous>, transform_indices = @transform_5, window_bounds = array<i64: 8, 1>}, {pipeline_mode = #tpu.pipeline_mode<synchronous>, transform_indices = @transform_6, window_bounds = array<i64: 16, 16>}, {pipeline_mode = #tpu.pipeline_mode<synchronous>, transform_indices = @transform_7, window_bounds = array<i64: 16, 16>}, {pipeline_mode = #tpu.pipeline_mode<synchronous>, transform_indices = @transform_8, window_bounds = array<i64: 16, 1>}, {transform_indices = @transform_9, window_bounds = array<i64: 1, 8, 128>}, {pipeline_mode = #tpu.pipeline_mode<synchronous>, transform_indices = @transform_10, window_bounds = array<i64: 32, 16>}, {pipeline_mode = #tpu.pipeline_mode<synchronous>, transform_indices = @transform_11, window_bounds = array<i64: 32, 1>}, {pipeline_mode = #tpu.pipeline_mode<synchronous>, transform_indices = @transform_12, window_bounds = array<i64: 32, 8>}, {pipeline_mode = #tpu.pipeline_mode<synchronous>, transform_indices = @transform_13, window_bounds = array<i64: 32, 1>}, {transform_indices = @transform_14, window_bounds = array<i64: 1, 32, 128>}]} {
    %c0 = arith.constant 0 : index
    %c0_0 = arith.constant 0 : index
    %c0_1 = arith.constant 0 : index
    %0 = vector.load %arg2[%c0, %c0_0, %c0_1] : memref<1x3x128xf32, #tpu.memory_space<vmem>>, vector<1x3x128xf32>
    %1 = vector.shape_cast %0 : vector<1x3x128xf32> to vector<3x128xf32>
    %c0_2 = arith.constant 0 : index
    %c0_3 = arith.constant 0 : index
    %2 = vector.load %arg5[%c0_2, %c0_3] : memref<8x3xf32, #tpu.memory_space<vmem>>, vector<8x3xf32>
    %c0_4 = arith.constant 0 : index
    %c0_5 = arith.constant 0 : index
    %3 = vector.load %arg6[%c0_4, %c0_5] : memref<8x4xf32, #tpu.memory_space<vmem>>, vector<8x4xf32>
    %c0_6 = arith.constant 0 : index
    %c0_7 = arith.constant 0 : index
    %4 = vector.load %arg8[%c0_6, %c0_7] : memref<16x16xf32, #tpu.memory_space<vmem>>, vector<16x16xf32>
    %cst = arith.constant dense<0.000000e+00> : vector<8x128xf32>
    %5 = tpu.matmul %2, %1, %cst {dimension_numbers = #tpu.dot_dimension_numbers<[1], [0], [0], [1], [0, 0, 1, 1], [], []>} : vector<8x3xf32>, vector<3x128xf32>, vector<8x128xf32> -> vector<8x128xf32>
    %c0_8 = arith.constant 0 : index
    %c0_9 = arith.constant 0 : index
    %6 = vector.load %arg7[%c0_8, %c0_9] : memref<8x1xf32, #tpu.memory_space<vmem>>, vector<8x1xf32>
    %7 = vector.broadcast %6 : vector<8x1xf32> to vector<8x128xf32>
    %8 = arith.addf %5, %7 : vector<8x128xf32>
    %c0_10 = arith.constant 0 : index
    %c0_11 = arith.constant 0 : index
    %c0_12 = arith.constant 0 : index
    %c0_13 = arith.constant 0 : index
    %9 = vector.load %arg3[%c0_10, %c0_11, %c0_12, %c0_13] : memref<1x8x3x128xf32, #tpu.memory_space<vmem>>, vector<1x1x3x128xf32>
    %10 = vector.shape_cast %9 : vector<1x1x3x128xf32> to vector<3x128xf32>
    %11 = arith.subf %1, %10 : vector<3x128xf32>
    %12 = vector.extract_strided_slice %11 {offsets = [0, 0], sizes = [1, 128], strides = [1, 1]} : vector<3x128xf32> to vector<1x128xf32>
    %13 = vector.extract_strided_slice %11 {offsets = [0, 0], sizes = [1, 128], strides = [1, 1]} : vector<3x128xf32> to vector<1x128xf32>
    %14 = arith.mulf %12, %13 : vector<1x128xf32>
    %15 = vector.extract_strided_slice %11 {offsets = [1, 0], sizes = [1, 128], strides = [1, 1]} : vector<3x128xf32> to vector<1x128xf32>
    %16 = vector.extract_strided_slice %11 {offsets = [1, 0], sizes = [1, 128], strides = [1, 1]} : vector<3x128xf32> to vector<1x128xf32>
    %17 = arith.mulf %15, %16 : vector<1x128xf32>
    %18 = arith.addf %14, %17 : vector<1x128xf32>
    %19 = vector.extract_strided_slice %11 {offsets = [2, 0], sizes = [1, 128], strides = [1, 1]} : vector<3x128xf32> to vector<1x128xf32>
    %20 = vector.extract_strided_slice %11 {offsets = [2, 0], sizes = [1, 128], strides = [1, 1]} : vector<3x128xf32> to vector<1x128xf32>
    %21 = arith.mulf %19, %20 : vector<1x128xf32>
    %22 = arith.addf %18, %21 : vector<1x128xf32>
    %23 = math.sqrt %22 : vector<1x128xf32>
    %24 = tpu.concatenate %10, %23 in 0 : vector<3x128xf32>, vector<1x128xf32> -> vector<4x128xf32>
    %cst_14 = arith.constant dense<0.000000e+00> : vector<8x128xf32>
    %25 = tpu.matmul %3, %24, %cst_14 {dimension_numbers = #tpu.dot_dimension_numbers<[1], [0], [0], [1], [0, 0, 1, 1], [], []>} : vector<8x4xf32>, vector<4x128xf32>, vector<8x128xf32> -> vector<8x128xf32>
    %26 = arith.addf %8, %25 : vector<8x128xf32>
    %cst_15 = arith.constant 0.000000e+00 : f32
    %27 = vector.broadcast %cst_15 : f32 to vector<8x128xf32>
    %28 = arith.maximumf %26, %27 : vector<8x128xf32>
    %c0_16 = arith.constant 0 : index
    %c0_17 = arith.constant 0 : index
    %c0_18 = arith.constant 0 : index
    %c0_19 = arith.constant 0 : index
    %29 = vector.load %arg4[%c0_16, %c0_17, %c0_18, %c0_19] : memref<1x8x8x128xbf16, #tpu.memory_space<vmem>>, vector<1x1x8x128xbf16>
    %30 = vector.shape_cast %29 : vector<1x1x8x128xbf16> to vector<8x128xbf16>
    %31 = arith.extf %30 : vector<8x128xbf16> to vector<8x128xf32>
    %32 = tpu.concatenate %28, %31 in 0 : vector<8x128xf32>, vector<8x128xf32> -> vector<16x128xf32>
    %cst_20 = arith.constant dense<0.000000e+00> : vector<16x128xf32>
    %33 = tpu.matmul %4, %32, %cst_20 {dimension_numbers = #tpu.dot_dimension_numbers<[1], [0], [0], [1], [0, 0, 1, 1], [], []>} : vector<16x16xf32>, vector<16x128xf32>, vector<16x128xf32> -> vector<16x128xf32>
    %cst_21 = arith.constant 1.000000e+00 : f32
    %34 = vector.broadcast %cst_21 : f32 to vector<16x128xf32>
    %c0_22 = arith.constant 0 : index
    %c1 = arith.constant 1 : index
    %c0_23 = arith.constant 0 : index
    %c0_24 = arith.constant 0 : index
    %35 = vector.load %arg3[%c0_22, %c1, %c0_23, %c0_24] : memref<1x8x3x128xf32, #tpu.memory_space<vmem>>, vector<1x1x3x128xf32>
    %36 = vector.shape_cast %35 : vector<1x1x3x128xf32> to vector<3x128xf32>
    %37 = arith.subf %1, %36 : vector<3x128xf32>
    %38 = vector.extract_strided_slice %37 {offsets = [0, 0], sizes = [1, 128], strides = [1, 1]} : vector<3x128xf32> to vector<1x128xf32>
    %39 = vector.extract_strided_slice %37 {offsets = [0, 0], sizes = [1, 128], strides = [1, 1]} : vector<3x128xf32> to vector<1x128xf32>
    %40 = arith.mulf %38, %39 : vector<1x128xf32>
    %41 = vector.extract_strided_slice %37 {offsets = [1, 0], sizes = [1, 128], strides = [1, 1]} : vector<3x128xf32> to vector<1x128xf32>
    %42 = vector.extract_strided_slice %37 {offsets = [1, 0], sizes = [1, 128], strides = [1, 1]} : vector<3x128xf32> to vector<1x128xf32>
    %43 = arith.mulf %41, %42 : vector<1x128xf32>
    %44 = arith.addf %40, %43 : vector<1x128xf32>
    %45 = vector.extract_strided_slice %37 {offsets = [2, 0], sizes = [1, 128], strides = [1, 1]} : vector<3x128xf32> to vector<1x128xf32>
    %46 = vector.extract_strided_slice %37 {offsets = [2, 0], sizes = [1, 128], strides = [1, 1]} : vector<3x128xf32> to vector<1x128xf32>
    %47 = arith.mulf %45, %46 : vector<1x128xf32>
    %48 = arith.addf %44, %47 : vector<1x128xf32>
    %49 = math.sqrt %48 : vector<1x128xf32>
    %50 = tpu.concatenate %36, %49 in 0 : vector<3x128xf32>, vector<1x128xf32> -> vector<4x128xf32>
    %cst_25 = arith.constant dense<0.000000e+00> : vector<8x128xf32>
    %51 = tpu.matmul %3, %50, %cst_25 {dimension_numbers = #tpu.dot_dimension_numbers<[1], [0], [0], [1], [0, 0, 1, 1], [], []>} : vector<8x4xf32>, vector<4x128xf32>, vector<8x128xf32> -> vector<8x128xf32>
    %52 = arith.addf %8, %51 : vector<8x128xf32>
    %cst_26 = arith.constant 0.000000e+00 : f32
    %53 = vector.broadcast %cst_26 : f32 to vector<8x128xf32>
    %54 = arith.maximumf %52, %53 : vector<8x128xf32>
    %c0_27 = arith.constant 0 : index
    %c1_28 = arith.constant 1 : index
    %c0_29 = arith.constant 0 : index
    %c0_30 = arith.constant 0 : index
    %55 = vector.load %arg4[%c0_27, %c1_28, %c0_29, %c0_30] : memref<1x8x8x128xbf16, #tpu.memory_space<vmem>>, vector<1x1x8x128xbf16>
    %56 = vector.shape_cast %55 : vector<1x1x8x128xbf16> to vector<8x128xbf16>
    %57 = arith.extf %56 : vector<8x128xbf16> to vector<8x128xf32>
    %58 = tpu.concatenate %54, %57 in 0 : vector<8x128xf32>, vector<8x128xf32> -> vector<16x128xf32>
    %cst_31 = arith.constant dense<0.000000e+00> : vector<16x128xf32>
    %59 = tpu.matmul %4, %58, %cst_31 {dimension_numbers = #tpu.dot_dimension_numbers<[1], [0], [0], [1], [0, 0, 1, 1], [], []>} : vector<16x16xf32>, vector<16x128xf32>, vector<16x128xf32> -> vector<16x128xf32>
    %60 = arith.maximumf %33, %59 : vector<16x128xf32>
    %61 = arith.subf %33, %60 : vector<16x128xf32>
    %62 = math.exp %61 : vector<16x128xf32>
    %63 = arith.subf %59, %60 : vector<16x128xf32>
    %64 = math.exp %63 : vector<16x128xf32>
    %65 = arith.mulf %34, %62 : vector<16x128xf32>
    %66 = arith.addf %65, %64 : vector<16x128xf32>
    %67 = arith.mulf %32, %62 : vector<16x128xf32>
    %68 = arith.mulf %64, %58 : vector<16x128xf32>
    %69 = arith.addf %67, %68 : vector<16x128xf32>
    %c0_32 = arith.constant 0 : index
    %c2 = arith.constant 2 : index
    %c0_33 = arith.constant 0 : index
    %c0_34 = arith.constant 0 : index
    %70 = vector.load %arg3[%c0_32, %c2, %c0_33, %c0_34] : memref<1x8x3x128xf32, #tpu.memory_space<vmem>>, vector<1x1x3x128xf32>
    %71 = vector.shape_cast %70 : vector<1x1x3x128xf32> to vector<3x128xf32>
    %72 = arith.subf %1, %71 : vector<3x128xf32>
    %73 = vector.extract_strided_slice %72 {offsets = [0, 0], sizes = [1, 128], strides = [1, 1]} : vector<3x128xf32> to vector<1x128xf32>
    %74 = vector.extract_strided_slice %72 {offsets = [0, 0], sizes = [1, 128], strides = [1, 1]} : vector<3x128xf32> to vector<1x128xf32>
    %75 = arith.mulf %73, %74 : vector<1x128xf32>
    %76 = vector.extract_strided_slice %72 {offsets = [1, 0], sizes = [1, 128], strides = [1, 1]} : vector<3x128xf32> to vector<1x128xf32>
    %77 = vector.extract_strided_slice %72 {offsets = [1, 0], sizes = [1, 128], strides = [1, 1]} : vector<3x128xf32> to vector<1x128xf32>
    %78 = arith.mulf %76, %77 : vector<1x128xf32>
    %79 = arith.addf %75, %78 : vector<1x128xf32>
    %80 = vector.extract_strided_slice %72 {offsets = [2, 0], sizes = [1, 128], strides = [1, 1]} : vector<3x128xf32> to vector<1x128xf32>
    %81 = vector.extract_strided_slice %72 {offsets = [2, 0], sizes = [1, 128], strides = [1, 1]} : vector<3x128xf32> to vector<1x128xf32>
    %82 = arith.mulf %80, %81 : vector<1x128xf32>
    %83 = arith.addf %79, %82 : vector<1x128xf32>
    %84 = math.sqrt %83 : vector<1x128xf32>
    %85 = tpu.concatenate %71, %84 in 0 : vector<3x128xf32>, vector<1x128xf32> -> vector<4x128xf32>
    %cst_35 = arith.constant dense<0.000000e+00> : vector<8x128xf32>
    %86 = tpu.matmul %3, %85, %cst_35 {dimension_numbers = #tpu.dot_dimension_numbers<[1], [0], [0], [1], [0, 0, 1, 1], [], []>} : vector<8x4xf32>, vector<4x128xf32>, vector<8x128xf32> -> vector<8x128xf32>
    %87 = arith.addf %8, %86 : vector<8x128xf32>
    %cst_36 = arith.constant 0.000000e+00 : f32
    %88 = vector.broadcast %cst_36 : f32 to vector<8x128xf32>
    %89 = arith.maximumf %87, %88 : vector<8x128xf32>
    %c0_37 = arith.constant 0 : index
    %c2_38 = arith.constant 2 : index
    %c0_39 = arith.constant 0 : index
    %c0_40 = arith.constant 0 : index
    %90 = vector.load %arg4[%c0_37, %c2_38, %c0_39, %c0_40] : memref<1x8x8x128xbf16, #tpu.memory_space<vmem>>, vector<1x1x8x128xbf16>
    %91 = vector.shape_cast %90 : vector<1x1x8x128xbf16> to vector<8x128xbf16>
    %92 = arith.extf %91 : vector<8x128xbf16> to vector<8x128xf32>
    %93 = tpu.concatenate %89, %92 in 0 : vector<8x128xf32>, vector<8x128xf32> -> vector<16x128xf32>
    %cst_41 = arith.constant dense<0.000000e+00> : vector<16x128xf32>
    %94 = tpu.matmul %4, %93, %cst_41 {dimension_numbers = #tpu.dot_dimension_numbers<[1], [0], [0], [1], [0, 0, 1, 1], [], []>} : vector<16x16xf32>, vector<16x128xf32>, vector<16x128xf32> -> vector<16x128xf32>
    %95 = arith.maximumf %60, %94 : vector<16x128xf32>
    %96 = arith.subf %60, %95 : vector<16x128xf32>
    %97 = math.exp %96 : vector<16x128xf32>
    %98 = arith.subf %94, %95 : vector<16x128xf32>
    %99 = math.exp %98 : vector<16x128xf32>
    %100 = arith.mulf %66, %97 : vector<16x128xf32>
    %101 = arith.addf %100, %99 : vector<16x128xf32>
    %102 = arith.mulf %69, %97 : vector<16x128xf32>
    %103 = arith.mulf %99, %93 : vector<16x128xf32>
    %104 = arith.addf %102, %103 : vector<16x128xf32>
    %c0_42 = arith.constant 0 : index
    %c3 = arith.constant 3 : index
    %c0_43 = arith.constant 0 : index
    %c0_44 = arith.constant 0 : index
    %105 = vector.load %arg3[%c0_42, %c3, %c0_43, %c0_44] : memref<1x8x3x128xf32, #tpu.memory_space<vmem>>, vector<1x1x3x128xf32>
    %106 = vector.shape_cast %105 : vector<1x1x3x128xf32> to vector<3x128xf32>
    %107 = arith.subf %1, %106 : vector<3x128xf32>
    %108 = vector.extract_strided_slice %107 {offsets = [0, 0], sizes = [1, 128], strides = [1, 1]} : vector<3x128xf32> to vector<1x128xf32>
    %109 = vector.extract_strided_slice %107 {offsets = [0, 0], sizes = [1, 128], strides = [1, 1]} : vector<3x128xf32> to vector<1x128xf32>
    %110 = arith.mulf %108, %109 : vector<1x128xf32>
    %111 = vector.extract_strided_slice %107 {offsets = [1, 0], sizes = [1, 128], strides = [1, 1]} : vector<3x128xf32> to vector<1x128xf32>
    %112 = vector.extract_strided_slice %107 {offsets = [1, 0], sizes = [1, 128], strides = [1, 1]} : vector<3x128xf32> to vector<1x128xf32>
    %113 = arith.mulf %111, %112 : vector<1x128xf32>
    %114 = arith.addf %110, %113 : vector<1x128xf32>
    %115 = vector.extract_strided_slice %107 {offsets = [2, 0], sizes = [1, 128], strides = [1, 1]} : vector<3x128xf32> to vector<1x128xf32>
    %116 = vector.extract_strided_slice %107 {offsets = [2, 0], sizes = [1, 128], strides = [1, 1]} : vector<3x128xf32> to vector<1x128xf32>
    %117 = arith.mulf %115, %116 : vector<1x128xf32>
    %118 = arith.addf %114, %117 : vector<1x128xf32>
    %119 = math.sqrt %118 : vector<1x128xf32>
    %120 = tpu.concatenate %106, %119 in 0 : vector<3x128xf32>, vector<1x128xf32> -> vector<4x128xf32>
    %cst_45 = arith.constant dense<0.000000e+00> : vector<8x128xf32>
    %121 = tpu.matmul %3, %120, %cst_45 {dimension_numbers = #tpu.dot_dimension_numbers<[1], [0], [0], [1], [0, 0, 1, 1], [], []>} : vector<8x4xf32>, vector<4x128xf32>, vector<8x128xf32> -> vector<8x128xf32>
    %122 = arith.addf %8, %121 : vector<8x128xf32>
    %cst_46 = arith.constant 0.000000e+00 : f32
    %123 = vector.broadcast %cst_46 : f32 to vector<8x128xf32>
    %124 = arith.maximumf %122, %123 : vector<8x128xf32>
    %c0_47 = arith.constant 0 : index
    %c3_48 = arith.constant 3 : index
    %c0_49 = arith.constant 0 : index
    %c0_50 = arith.constant 0 : index
    %125 = vector.load %arg4[%c0_47, %c3_48, %c0_49, %c0_50] : memref<1x8x8x128xbf16, #tpu.memory_space<vmem>>, vector<1x1x8x128xbf16>
    %126 = vector.shape_cast %125 : vector<1x1x8x128xbf16> to vector<8x128xbf16>
    %127 = arith.extf %126 : vector<8x128xbf16> to vector<8x128xf32>
    %128 = tpu.concatenate %124, %127 in 0 : vector<8x128xf32>, vector<8x128xf32> -> vector<16x128xf32>
    %cst_51 = arith.constant dense<0.000000e+00> : vector<16x128xf32>
    %129 = tpu.matmul %4, %128, %cst_51 {dimension_numbers = #tpu.dot_dimension_numbers<[1], [0], [0], [1], [0, 0, 1, 1], [], []>} : vector<16x16xf32>, vector<16x128xf32>, vector<16x128xf32> -> vector<16x128xf32>
    %130 = arith.maximumf %95, %129 : vector<16x128xf32>
    %131 = arith.subf %95, %130 : vector<16x128xf32>
    %132 = math.exp %131 : vector<16x128xf32>
    %133 = arith.subf %129, %130 : vector<16x128xf32>
    %134 = math.exp %133 : vector<16x128xf32>
    %135 = arith.mulf %101, %132 : vector<16x128xf32>
    %136 = arith.addf %135, %134 : vector<16x128xf32>
    %137 = arith.mulf %104, %132 : vector<16x128xf32>
    %138 = arith.mulf %134, %128 : vector<16x128xf32>
    %139 = arith.addf %137, %138 : vector<16x128xf32>
    %c0_52 = arith.constant 0 : index
    %c4 = arith.constant 4 : index
    %c0_53 = arith.constant 0 : index
    %c0_54 = arith.constant 0 : index
    %140 = vector.load %arg3[%c0_52, %c4, %c0_53, %c0_54] : memref<1x8x3x128xf32, #tpu.memory_space<vmem>>, vector<1x1x3x128xf32>
    %141 = vector.shape_cast %140 : vector<1x1x3x128xf32> to vector<3x128xf32>
    %142 = arith.subf %1, %141 : vector<3x128xf32>
    %143 = vector.extract_strided_slice %142 {offsets = [0, 0], sizes = [1, 128], strides = [1, 1]} : vector<3x128xf32> to vector<1x128xf32>
    %144 = vector.extract_strided_slice %142 {offsets = [0, 0], sizes = [1, 128], strides = [1, 1]} : vector<3x128xf32> to vector<1x128xf32>
    %145 = arith.mulf %143, %144 : vector<1x128xf32>
    %146 = vector.extract_strided_slice %142 {offsets = [1, 0], sizes = [1, 128], strides = [1, 1]} : vector<3x128xf32> to vector<1x128xf32>
    %147 = vector.extract_strided_slice %142 {offsets = [1, 0], sizes = [1, 128], strides = [1, 1]} : vector<3x128xf32> to vector<1x128xf32>
    %148 = arith.mulf %146, %147 : vector<1x128xf32>
    %149 = arith.addf %145, %148 : vector<1x128xf32>
    %150 = vector.extract_strided_slice %142 {offsets = [2, 0], sizes = [1, 128], strides = [1, 1]} : vector<3x128xf32> to vector<1x128xf32>
    %151 = vector.extract_strided_slice %142 {offsets = [2, 0], sizes = [1, 128], strides = [1, 1]} : vector<3x128xf32> to vector<1x128xf32>
    %152 = arith.mulf %150, %151 : vector<1x128xf32>
    %153 = arith.addf %149, %152 : vector<1x128xf32>
    %154 = math.sqrt %153 : vector<1x128xf32>
    %155 = tpu.concatenate %141, %154 in 0 : vector<3x128xf32>, vector<1x128xf32> -> vector<4x128xf32>
    %cst_55 = arith.constant dense<0.000000e+00> : vector<8x128xf32>
    %156 = tpu.matmul %3, %155, %cst_55 {dimension_numbers = #tpu.dot_dimension_numbers<[1], [0], [0], [1], [0, 0, 1, 1], [], []>} : vector<8x4xf32>, vector<4x128xf32>, vector<8x128xf32> -> vector<8x128xf32>
    %157 = arith.addf %8, %156 : vector<8x128xf32>
    %cst_56 = arith.constant 0.000000e+00 : f32
    %158 = vector.broadcast %cst_56 : f32 to vector<8x128xf32>
    %159 = arith.maximumf %157, %158 : vector<8x128xf32>
    %c0_57 = arith.constant 0 : index
    %c4_58 = arith.constant 4 : index
    %c0_59 = arith.constant 0 : index
    %c0_60 = arith.constant 0 : index
    %160 = vector.load %arg4[%c0_57, %c4_58, %c0_59, %c0_60] : memref<1x8x8x128xbf16, #tpu.memory_space<vmem>>, vector<1x1x8x128xbf16>
    %161 = vector.shape_cast %160 : vector<1x1x8x128xbf16> to vector<8x128xbf16>
    %162 = arith.extf %161 : vector<8x128xbf16> to vector<8x128xf32>
    %163 = tpu.concatenate %159, %162 in 0 : vector<8x128xf32>, vector<8x128xf32> -> vector<16x128xf32>
    %cst_61 = arith.constant dense<0.000000e+00> : vector<16x128xf32>
    %164 = tpu.matmul %4, %163, %cst_61 {dimension_numbers = #tpu.dot_dimension_numbers<[1], [0], [0], [1], [0, 0, 1, 1], [], []>} : vector<16x16xf32>, vector<16x128xf32>, vector<16x128xf32> -> vector<16x128xf32>
    %165 = arith.maximumf %130, %164 : vector<16x128xf32>
    %166 = arith.subf %130, %165 : vector<16x128xf32>
    %167 = math.exp %166 : vector<16x128xf32>
    %168 = arith.subf %164, %165 : vector<16x128xf32>
    %169 = math.exp %168 : vector<16x128xf32>
    %170 = arith.mulf %136, %167 : vector<16x128xf32>
    %171 = arith.addf %170, %169 : vector<16x128xf32>
    %172 = arith.mulf %139, %167 : vector<16x128xf32>
    %173 = arith.mulf %169, %163 : vector<16x128xf32>
    %174 = arith.addf %172, %173 : vector<16x128xf32>
    %c0_62 = arith.constant 0 : index
    %c5 = arith.constant 5 : index
    %c0_63 = arith.constant 0 : index
    %c0_64 = arith.constant 0 : index
    %175 = vector.load %arg3[%c0_62, %c5, %c0_63, %c0_64] : memref<1x8x3x128xf32, #tpu.memory_space<vmem>>, vector<1x1x3x128xf32>
    %176 = vector.shape_cast %175 : vector<1x1x3x128xf32> to vector<3x128xf32>
    %177 = arith.subf %1, %176 : vector<3x128xf32>
    %178 = vector.extract_strided_slice %177 {offsets = [0, 0], sizes = [1, 128], strides = [1, 1]} : vector<3x128xf32> to vector<1x128xf32>
    %179 = vector.extract_strided_slice %177 {offsets = [0, 0], sizes = [1, 128], strides = [1, 1]} : vector<3x128xf32> to vector<1x128xf32>
    %180 = arith.mulf %178, %179 : vector<1x128xf32>
    %181 = vector.extract_strided_slice %177 {offsets = [1, 0], sizes = [1, 128], strides = [1, 1]} : vector<3x128xf32> to vector<1x128xf32>
    %182 = vector.extract_strided_slice %177 {offsets = [1, 0], sizes = [1, 128], strides = [1, 1]} : vector<3x128xf32> to vector<1x128xf32>
    %183 = arith.mulf %181, %182 : vector<1x128xf32>
    %184 = arith.addf %180, %183 : vector<1x128xf32>
    %185 = vector.extract_strided_slice %177 {offsets = [2, 0], sizes = [1, 128], strides = [1, 1]} : vector<3x128xf32> to vector<1x128xf32>
    %186 = vector.extract_strided_slice %177 {offsets = [2, 0], sizes = [1, 128], strides = [1, 1]} : vector<3x128xf32> to vector<1x128xf32>
    %187 = arith.mulf %185, %186 : vector<1x128xf32>
    %188 = arith.addf %184, %187 : vector<1x128xf32>
    %189 = math.sqrt %188 : vector<1x128xf32>
    %190 = tpu.concatenate %176, %189 in 0 : vector<3x128xf32>, vector<1x128xf32> -> vector<4x128xf32>
    %cst_65 = arith.constant dense<0.000000e+00> : vector<8x128xf32>
    %191 = tpu.matmul %3, %190, %cst_65 {dimension_numbers = #tpu.dot_dimension_numbers<[1], [0], [0], [1], [0, 0, 1, 1], [], []>} : vector<8x4xf32>, vector<4x128xf32>, vector<8x128xf32> -> vector<8x128xf32>
    %192 = arith.addf %8, %191 : vector<8x128xf32>
    %cst_66 = arith.constant 0.000000e+00 : f32
    %193 = vector.broadcast %cst_66 : f32 to vector<8x128xf32>
    %194 = arith.maximumf %192, %193 : vector<8x128xf32>
    %c0_67 = arith.constant 0 : index
    %c5_68 = arith.constant 5 : index
    %c0_69 = arith.constant 0 : index
    %c0_70 = arith.constant 0 : index
    %195 = vector.load %arg4[%c0_67, %c5_68, %c0_69, %c0_70] : memref<1x8x8x128xbf16, #tpu.memory_space<vmem>>, vector<1x1x8x128xbf16>
    %196 = vector.shape_cast %195 : vector<1x1x8x128xbf16> to vector<8x128xbf16>
    %197 = arith.extf %196 : vector<8x128xbf16> to vector<8x128xf32>
    %198 = tpu.concatenate %194, %197 in 0 : vector<8x128xf32>, vector<8x128xf32> -> vector<16x128xf32>
    %cst_71 = arith.constant dense<0.000000e+00> : vector<16x128xf32>
    %199 = tpu.matmul %4, %198, %cst_71 {dimension_numbers = #tpu.dot_dimension_numbers<[1], [0], [0], [1], [0, 0, 1, 1], [], []>} : vector<16x16xf32>, vector<16x128xf32>, vector<16x128xf32> -> vector<16x128xf32>
    %200 = arith.maximumf %165, %199 : vector<16x128xf32>
    %201 = arith.subf %165, %200 : vector<16x128xf32>
    %202 = math.exp %201 : vector<16x128xf32>
    %203 = arith.subf %199, %200 : vector<16x128xf32>
    %204 = math.exp %203 : vector<16x128xf32>
    %205 = arith.mulf %171, %202 : vector<16x128xf32>
    %206 = arith.addf %205, %204 : vector<16x128xf32>
    %207 = arith.mulf %174, %202 : vector<16x128xf32>
    %208 = arith.mulf %204, %198 : vector<16x128xf32>
    %209 = arith.addf %207, %208 : vector<16x128xf32>
    %c0_72 = arith.constant 0 : index
    %c6 = arith.constant 6 : index
    %c0_73 = arith.constant 0 : index
    %c0_74 = arith.constant 0 : index
    %210 = vector.load %arg3[%c0_72, %c6, %c0_73, %c0_74] : memref<1x8x3x128xf32, #tpu.memory_space<vmem>>, vector<1x1x3x128xf32>
    %211 = vector.shape_cast %210 : vector<1x1x3x128xf32> to vector<3x128xf32>
    %212 = arith.subf %1, %211 : vector<3x128xf32>
    %213 = vector.extract_strided_slice %212 {offsets = [0, 0], sizes = [1, 128], strides = [1, 1]} : vector<3x128xf32> to vector<1x128xf32>
    %214 = vector.extract_strided_slice %212 {offsets = [0, 0], sizes = [1, 128], strides = [1, 1]} : vector<3x128xf32> to vector<1x128xf32>
    %215 = arith.mulf %213, %214 : vector<1x128xf32>
    %216 = vector.extract_strided_slice %212 {offsets = [1, 0], sizes = [1, 128], strides = [1, 1]} : vector<3x128xf32> to vector<1x128xf32>
    %217 = vector.extract_strided_slice %212 {offsets = [1, 0], sizes = [1, 128], strides = [1, 1]} : vector<3x128xf32> to vector<1x128xf32>
    %218 = arith.mulf %216, %217 : vector<1x128xf32>
    %219 = arith.addf %215, %218 : vector<1x128xf32>
    %220 = vector.extract_strided_slice %212 {offsets = [2, 0], sizes = [1, 128], strides = [1, 1]} : vector<3x128xf32> to vector<1x128xf32>
    %221 = vector.extract_strided_slice %212 {offsets = [2, 0], sizes = [1, 128], strides = [1, 1]} : vector<3x128xf32> to vector<1x128xf32>
    %222 = arith.mulf %220, %221 : vector<1x128xf32>
    %223 = arith.addf %219, %222 : vector<1x128xf32>
    %224 = math.sqrt %223 : vector<1x128xf32>
    %225 = tpu.concatenate %211, %224 in 0 : vector<3x128xf32>, vector<1x128xf32> -> vector<4x128xf32>
    %cst_75 = arith.constant dense<0.000000e+00> : vector<8x128xf32>
    %226 = tpu.matmul %3, %225, %cst_75 {dimension_numbers = #tpu.dot_dimension_numbers<[1], [0], [0], [1], [0, 0, 1, 1], [], []>} : vector<8x4xf32>, vector<4x128xf32>, vector<8x128xf32> -> vector<8x128xf32>
    %227 = arith.addf %8, %226 : vector<8x128xf32>
    %cst_76 = arith.constant 0.000000e+00 : f32
    %228 = vector.broadcast %cst_76 : f32 to vector<8x128xf32>
    %229 = arith.maximumf %227, %228 : vector<8x128xf32>
    %c0_77 = arith.constant 0 : index
    %c6_78 = arith.constant 6 : index
    %c0_79 = arith.constant 0 : index
    %c0_80 = arith.constant 0 : index
    %230 = vector.load %arg4[%c0_77, %c6_78, %c0_79, %c0_80] : memref<1x8x8x128xbf16, #tpu.memory_space<vmem>>, vector<1x1x8x128xbf16>
    %231 = vector.shape_cast %230 : vector<1x1x8x128xbf16> to vector<8x128xbf16>
    %232 = arith.extf %231 : vector<8x128xbf16> to vector<8x128xf32>
    %233 = tpu.concatenate %229, %232 in 0 : vector<8x128xf32>, vector<8x128xf32> -> vector<16x128xf32>
    %cst_81 = arith.constant dense<0.000000e+00> : vector<16x128xf32>
    %234 = tpu.matmul %4, %233, %cst_81 {dimension_numbers = #tpu.dot_dimension_numbers<[1], [0], [0], [1], [0, 0, 1, 1], [], []>} : vector<16x16xf32>, vector<16x128xf32>, vector<16x128xf32> -> vector<16x128xf32>
    %235 = arith.maximumf %200, %234 : vector<16x128xf32>
    %236 = arith.subf %200, %235 : vector<16x128xf32>
    %237 = math.exp %236 : vector<16x128xf32>
    %238 = arith.subf %234, %235 : vector<16x128xf32>
    %239 = math.exp %238 : vector<16x128xf32>
    %240 = arith.mulf %206, %237 : vector<16x128xf32>
    %241 = arith.addf %240, %239 : vector<16x128xf32>
    %242 = arith.mulf %209, %237 : vector<16x128xf32>
    %243 = arith.mulf %239, %233 : vector<16x128xf32>
    %244 = arith.addf %242, %243 : vector<16x128xf32>
    %c0_82 = arith.constant 0 : index
    %c7 = arith.constant 7 : index
    %c0_83 = arith.constant 0 : index
    %c0_84 = arith.constant 0 : index
    %245 = vector.load %arg3[%c0_82, %c7, %c0_83, %c0_84] : memref<1x8x3x128xf32, #tpu.memory_space<vmem>>, vector<1x1x3x128xf32>
    %246 = vector.shape_cast %245 : vector<1x1x3x128xf32> to vector<3x128xf32>
    %247 = arith.subf %1, %246 : vector<3x128xf32>
    %248 = vector.extract_strided_slice %247 {offsets = [0, 0], sizes = [1, 128], strides = [1, 1]} : vector<3x128xf32> to vector<1x128xf32>
    %249 = vector.extract_strided_slice %247 {offsets = [0, 0], sizes = [1, 128], strides = [1, 1]} : vector<3x128xf32> to vector<1x128xf32>
    %250 = arith.mulf %248, %249 : vector<1x128xf32>
    %251 = vector.extract_strided_slice %247 {offsets = [1, 0], sizes = [1, 128], strides = [1, 1]} : vector<3x128xf32> to vector<1x128xf32>
    %252 = vector.extract_strided_slice %247 {offsets = [1, 0], sizes = [1, 128], strides = [1, 1]} : vector<3x128xf32> to vector<1x128xf32>
    %253 = arith.mulf %251, %252 : vector<1x128xf32>
    %254 = arith.addf %250, %253 : vector<1x128xf32>
    %255 = vector.extract_strided_slice %247 {offsets = [2, 0], sizes = [1, 128], strides = [1, 1]} : vector<3x128xf32> to vector<1x128xf32>
    %256 = vector.extract_strided_slice %247 {offsets = [2, 0], sizes = [1, 128], strides = [1, 1]} : vector<3x128xf32> to vector<1x128xf32>
    %257 = arith.mulf %255, %256 : vector<1x128xf32>
    %258 = arith.addf %254, %257 : vector<1x128xf32>
    %259 = math.sqrt %258 : vector<1x128xf32>
    %260 = tpu.concatenate %246, %259 in 0 : vector<3x128xf32>, vector<1x128xf32> -> vector<4x128xf32>
    %cst_85 = arith.constant dense<0.000000e+00> : vector<8x128xf32>
    %261 = tpu.matmul %3, %260, %cst_85 {dimension_numbers = #tpu.dot_dimension_numbers<[1], [0], [0], [1], [0, 0, 1, 1], [], []>} : vector<8x4xf32>, vector<4x128xf32>, vector<8x128xf32> -> vector<8x128xf32>
    %262 = arith.addf %8, %261 : vector<8x128xf32>
    %cst_86 = arith.constant 0.000000e+00 : f32
    %263 = vector.broadcast %cst_86 : f32 to vector<8x128xf32>
    %264 = arith.maximumf %262, %263 : vector<8x128xf32>
    %c0_87 = arith.constant 0 : index
    %c7_88 = arith.constant 7 : index
    %c0_89 = arith.constant 0 : index
    %c0_90 = arith.constant 0 : index
    %265 = vector.load %arg4[%c0_87, %c7_88, %c0_89, %c0_90] : memref<1x8x8x128xbf16, #tpu.memory_space<vmem>>, vector<1x1x8x128xbf16>
    %266 = vector.shape_cast %265 : vector<1x1x8x128xbf16> to vector<8x128xbf16>
    %267 = arith.extf %266 : vector<8x128xbf16> to vector<8x128xf32>
    %268 = tpu.concatenate %264, %267 in 0 : vector<8x128xf32>, vector<8x128xf32> -> vector<16x128xf32>
    %cst_91 = arith.constant dense<0.000000e+00> : vector<16x128xf32>
    %269 = tpu.matmul %4, %268, %cst_91 {dimension_numbers = #tpu.dot_dimension_numbers<[1], [0], [0], [1], [0, 0, 1, 1], [], []>} : vector<16x16xf32>, vector<16x128xf32>, vector<16x128xf32> -> vector<16x128xf32>
    %270 = arith.maximumf %235, %269 : vector<16x128xf32>
    %271 = arith.subf %235, %270 : vector<16x128xf32>
    %272 = math.exp %271 : vector<16x128xf32>
    %273 = arith.subf %269, %270 : vector<16x128xf32>
    %274 = math.exp %273 : vector<16x128xf32>
    %275 = arith.mulf %241, %272 : vector<16x128xf32>
    %276 = arith.addf %275, %274 : vector<16x128xf32>
    %277 = arith.mulf %244, %272 : vector<16x128xf32>
    %278 = arith.mulf %274, %268 : vector<16x128xf32>
    %279 = arith.addf %277, %278 : vector<16x128xf32>
    %280 = arith.divf %279, %276 : vector<16x128xf32>
    %c0_92 = arith.constant 0 : index
    %c0_93 = arith.constant 0 : index
    %281 = vector.load %arg9[%c0_92, %c0_93] : memref<16x16xf32, #tpu.memory_space<vmem>>, vector<16x16xf32>
    %cst_94 = arith.constant dense<0.000000e+00> : vector<16x128xf32>
    %282 = tpu.matmul %281, %280, %cst_94 {dimension_numbers = #tpu.dot_dimension_numbers<[1], [0], [0], [1], [0, 0, 1, 1], [], []>} : vector<16x16xf32>, vector<16x128xf32>, vector<16x128xf32> -> vector<16x128xf32>
    %c0_95 = arith.constant 0 : index
    %c0_96 = arith.constant 0 : index
    %283 = vector.load %arg10[%c0_95, %c0_96] : memref<16x1xf32, #tpu.memory_space<vmem>>, vector<16x1xf32>
    %284 = vector.broadcast %283 : vector<16x1xf32> to vector<16x128xf32>
    %285 = arith.addf %282, %284 : vector<16x128xf32>
    %cst_97 = arith.constant 0.000000e+00 : f32
    %286 = vector.broadcast %cst_97 : f32 to vector<16x128xf32>
    %287 = arith.maximumf %285, %286 : vector<16x128xf32>
    %c0_98 = arith.constant 0 : index
    %c0_99 = arith.constant 0 : index
    %288 = vector.load %arg12[%c0_98, %c0_99] : memref<32x16xf32, #tpu.memory_space<vmem>>, vector<32x16xf32>
    %cst_100 = arith.constant dense<0.000000e+00> : vector<32x128xf32>
    %289 = tpu.matmul %288, %287, %cst_100 {dimension_numbers = #tpu.dot_dimension_numbers<[1], [0], [0], [1], [0, 0, 1, 1], [], []>} : vector<32x16xf32>, vector<16x128xf32>, vector<32x128xf32> -> vector<32x128xf32>
    %c0_101 = arith.constant 0 : index
    %c0_102 = arith.constant 0 : index
    %290 = vector.load %arg13[%c0_101, %c0_102] : memref<32x1xf32, #tpu.memory_space<vmem>>, vector<32x1xf32>
    %291 = vector.broadcast %290 : vector<32x1xf32> to vector<32x128xf32>
    %292 = arith.addf %289, %291 : vector<32x128xf32>
    %c0_103 = arith.constant 0 : index
    %c0_104 = arith.constant 0 : index
    %293 = vector.load %arg14[%c0_103, %c0_104] : memref<32x8xf32, #tpu.memory_space<vmem>>, vector<32x8xf32>
    %c0_105 = arith.constant 0 : index
    %c0_106 = arith.constant 0 : index
    %c0_107 = arith.constant 0 : index
    %294 = vector.load %arg11[%c0_105, %c0_106, %c0_107] : memref<1x8x128xf32, #tpu.memory_space<vmem>>, vector<1x8x128xf32>
    %295 = vector.shape_cast %294 : vector<1x8x128xf32> to vector<8x128xf32>
    %cst_108 = arith.constant dense<0.000000e+00> : vector<32x128xf32>
    %296 = tpu.matmul %293, %295, %cst_108 {dimension_numbers = #tpu.dot_dimension_numbers<[1], [0], [0], [1], [0, 0, 1, 1], [], []>} : vector<32x8xf32>, vector<8x128xf32>, vector<32x128xf32> -> vector<32x128xf32>
    %297 = arith.addf %292, %296 : vector<32x128xf32>
    %c0_109 = arith.constant 0 : index
    %c0_110 = arith.constant 0 : index
    %298 = vector.load %arg15[%c0_109, %c0_110] : memref<32x1xf32, #tpu.memory_space<vmem>>, vector<32x1xf32>
    %299 = vector.broadcast %298 : vector<32x1xf32> to vector<32x128xf32>
    %300 = arith.addf %297, %299 : vector<32x128xf32>
    %cst_111 = arith.constant 0.000000e+00 : f32
    %301 = vector.broadcast %cst_111 : f32 to vector<32x128xf32>
    %302 = arith.cmpf ogt, %300, %301 : vector<32x128xf32>
    %cst_112 = arith.constant 0.00999999977 : f32
    %303 = vector.broadcast %cst_112 : f32 to vector<32x128xf32>
    %304 = arith.mulf %303, %300 : vector<32x128xf32>
    %305 = arith.select %302, %300, %304 : vector<32x128xi1>, vector<32x128xf32>
    %c0_113 = arith.constant 0 : index
    %c0_114 = arith.constant 0 : index
    %c0_115 = arith.constant 0 : index
    %306 = vector.load %arg16[%c0_113, %c0_114, %c0_115] : memref<1x32x128xf32, #tpu.memory_space<vmem>>, vector<1x32x128xf32>
    %307 = vector.shape_cast %306 : vector<1x32x128xf32> to vector<32x128xf32>
    %308 = vector.shape_cast %305 : vector<32x128xf32> to vector<1x32x128xf32>
    tpu.vector_store %arg16[%c0_113, %c0_114, %c0_115], %308 {strides = array<i32>} : memref<1x32x128xf32, #tpu.memory_space<vmem>>, vector<1x32x128xf32>,
    return
  }
  func.func @transform_0(%arg0: i32, %arg1: i32) -> (i32, i32, i32) {
    %c0_i32 = arith.constant 0 : i32
    %c0_i32_0 = arith.constant 0 : i32
    return %arg1, %c0_i32, %arg0 : i32, i32, i32
  }
  func.func @transform_1(%arg0: i32, %arg1: i32) -> (i32, i32, i32, i32) {
    %c0_i32 = arith.constant 0 : i32
    %c0_i32_0 = arith.constant 0 : i32
    %c0_i32_1 = arith.constant 0 : i32
    return %arg1, %c0_i32, %c0_i32_0, %arg0 : i32, i32, i32, i32
  }
  func.func @transform_2(%arg0: i32, %arg1: i32) -> (i32, i32, i32, i32) {
    %c0_i32 = arith.constant 0 : i32
    %c0_i32_0 = arith.constant 0 : i32
    %c0_i32_1 = arith.constant 0 : i32
    return %arg1, %c0_i32, %c0_i32_0, %arg0 : i32, i32, i32, i32
  }
  func.func @transform_3(%arg0: i32, %arg1: i32) -> (i32, i32) {
    %c0_i32 = arith.constant 0 : i32
    %c0_i32_0 = arith.constant 0 : i32
    %c0_i32_1 = arith.constant 0 : i32
    return %c0_i32, %c0_i32_0 : i32, i32
  }
  func.func @transform_4(%arg0: i32, %arg1: i32) -> (i32, i32) {
    %c0_i32 = arith.constant 0 : i32
    %c0_i32_0 = arith.constant 0 : i32
    %c0_i32_1 = arith.constant 0 : i32
    return %c0_i32, %c0_i32_0 : i32, i32
  }
  func.func @transform_5(%arg0: i32, %arg1: i32) -> (i32, i32) {
    %c0_i32 = arith.constant 0 : i32
    %c0_i32_0 = arith.constant 0 : i32
    %c0_i32_1 = arith.constant 0 : i32
    return %c0_i32, %c0_i32_0 : i32, i32
  }
  func.func @transform_6(%arg0: i32, %arg1: i32) -> (i32, i32) {
    %c0_i32 = arith.constant 0 : i32
    %c0_i32_0 = arith.constant 0 : i32
    %c0_i32_1 = arith.constant 0 : i32
    return %c0_i32, %c0_i32_0 : i32, i32
  }
  func.func @transform_7(%arg0: i32, %arg1: i32) -> (i32, i32) {
    %c0_i32 = arith.constant 0 : i32
    %c0_i32_0 = arith.constant 0 : i32
    %c0_i32_1 = arith.constant 0 : i32
    return %c0_i32, %c0_i32_0 : i32, i32
  }
  func.func @transform_8(%arg0: i32, %arg1: i32) -> (i32, i32) {
    %c0_i32 = arith.constant 0 : i32
    %c0_i32_0 = arith.constant 0 : i32
    %c0_i32_1 = arith.constant 0 : i32
    return %c0_i32, %c0_i32_0 : i32, i32
  }
  func.func @transform_9(%arg0: i32, %arg1: i32) -> (i32, i32, i32) {
    %c0_i32 = arith.constant 0 : i32
    %c0_i32_0 = arith.constant 0 : i32
    return %arg1, %c0_i32, %arg0 : i32, i32, i32
  }
  func.func @transform_10(%arg0: i32, %arg1: i32) -> (i32, i32) {
    %c0_i32 = arith.constant 0 : i32
    %c0_i32_0 = arith.constant 0 : i32
    %c0_i32_1 = arith.constant 0 : i32
    return %c0_i32, %c0_i32_0 : i32, i32
  }
  func.func @transform_11(%arg0: i32, %arg1: i32) -> (i32, i32) {
    %c0_i32 = arith.constant 0 : i32
    %c0_i32_0 = arith.constant 0 : i32
    %c0_i32_1 = arith.constant 0 : i32
    return %c0_i32, %c0_i32_0 : i32, i32
  }
  func.func @transform_12(%arg0: i32, %arg1: i32) -> (i32, i32) {
    %c0_i32 = arith.constant 0 : i32
    %c0_i32_0 = arith.constant 0 : i32
    %c0_i32_1 = arith.constant 0 : i32
    return %c0_i32, %c0_i32_0 : i32, i32
  }
  func.func @transform_13(%arg0: i32, %arg1: i32) -> (i32, i32) {
    %c0_i32 = arith.constant 0 : i32
    %c0_i32_0 = arith.constant 0 : i32
    %c0_i32_1 = arith.constant 0 : i32
    return %c0_i32, %c0_i32_0 : i32, i32
  }
  func.func @transform_14(%arg0: i32, %arg1: i32) -> (i32, i32, i32) {
    %c0_i32 = arith.constant 0 : i32
    %c0_i32_0 = arith.constant 0 : i32
    return %arg1, %c0_i32, %arg0 : i32, i32, i32
  }
}

</mosaic_0001>

<llo_original>
// kernel: local_feature_aggregation.5
$region0: #{local_feature_aggregation.5}
  #allocation0 [shape = 'u32[]', space=smem, size = 0x4, offset = 0x4, fixed_abs, tag = 'smem constant byte address 0x4 - core index']
  #allocation1 [shape = 'u32[144,128]{1,0:T(1,128)}', space=vmem, size = 0x12000, scoped, tag = 'internal scratch']
  %s0 = inlined_call_operand.hbm [shape: f32[2,8,128], index: 0, kind: input, shape index: {}]
  %s1 = inlined_call_operand.hbm [shape: f32[8,8], index: 1, kind: input, shape index: {}]
  %s2 = inlined_call_operand.hbm [shape: f32[8,1], index: 2, kind: input, shape index: {}]
  %s3 = inlined_call_operand.hbm [shape: f32[2,8,128], index: 3, kind: output, shape index: {}]
  %s4 = sld [smem:[#allocation0]]
  $region57: #{local_feature_aggregation.5} parent=0
    _
  %s6 = ssub.s32 1, %s4
  %s7 = scalar_select 0, %s6, %s4
  $region1: #{local_feature_aggregation.5} parent=0
    #allocation2 [shape = 'u8[8192]{0}', space=vmem, size = 0x2000, scoped, tag = 'input window, operand 0']
    #allocation3 [shape = 's32[2]{0}', space=sflag, size = 0x8, scoped, tag = 'scoped memory for local_feature_aggregation.5']
    #allocation4 [shape = 's32[2]{0}', space=sflag, size = 0x8, scoped, tag = 'scoped memory for local_feature_aggregation.5']
    #allocation5 [shape = 'u8[4096]{0}', space=vmem, size = 0x1000, scoped, tag = 'input window, operand 1, single buffered']
    #allocation6 [shape = 's32[1]{0}', space=sflag, size = 0x4, scoped, tag = 'scoped memory for local_feature_aggregation.5']
    #allocation7 [shape = 'u8[4096]{0}', space=vmem, size = 0x1000, scoped, tag = 'input window, operand 2, single buffered']
    #allocation8 [shape = 'u8[8192]{0}', space=vmem, size = 0x2000, scoped, tag = 'output window, operand 0']
    %8 = vsyncpa [#allocation3], 0
    %s9 = scalar_lea.sflag [#allocation3], 1
    %10 = vsyncpa %s9, 0
    %11 = vsyncpa [#allocation6], 0
    %12 = vsyncpa [#allocation4], 0
    %s13 = scalar_lea.sflag [#allocation4], 1
    %14 = vsyncpa %s13, 0
    loop: start=0, step=1, limit=4
    $region2: #{local_feature_aggregation.5} parent=1 // loop_pre_header
      _
    $region3: #{local_feature_aggregation.5} parent=1 // loop_header
      %s16 = sphi 0, %s20
      %p17 = scmp.ge.s32.totalorder %s16, 4
      %s23 = sphi 0, %s35
      %s24 = sphi 0, %s31
      %s25 = sphi 0, %s23
      %s26 = sphi 0, %s24
      %s27 = sphi 0, %s25
      %s28 = sphi 0, %s26
      %s40 = sphi 0, %s42
      %s43 = sphi 0, %s40
      %s44 = sphi 0, %s43
      %s60 = sphi 0, %s44
      %s64 = sphi 0, %s64
      %s66 = sphi 0, %s64
      %s67 = sphi 0, %s66
      %s81 = sphi 0, %s67
      %s85 = sphi 0, %s85
      %s87 = sphi 0, %s85
      %s88 = sphi 0, %s87
      %s102 = sphi 0, %s88
      %s110 = sphi 0, %s112
      %s113 = sphi 0, %s110
      %s114 = sphi 0, %s113
      %s130 = sphi 0, %s114
    $region4: #{local_feature_aggregation.5} parent=1 // loop_header_branch
      %19 = sbr.rel (%p17) target = $region8
    $region5: #{local_feature_aggregation.5} parent=1 // loop_body
      %s21 = ssub.s32 %s16, 1
      %s22 = ssub.s32 %s16, 2
      %s29 = sadd.s32 1, %s24
      %p30 = scmp.ge.s32.totalorder %s29, 2
      %s31 = scalar_select %p30, 0, %s29
      %s32 = sadd.s32 1, %s23
      %s33 = scalar_select %p30, %s32, %s23
      %p34 = scmp.ge.s32.totalorder %s33, 1
      %s35 = scalar_select %p34, 0, %s33
      %s36 = ssub.s32 %s24, %s31
      %s37 = ssub.s32 %s23, %s35
      %s38 = sor.u32 %s36, %s37
      %p39 = scmp.eq.s32.totalorder %s38, 0
      %s41 = sadd.s32 %s40, 1
      %s42 = scalar_select %p39, %s40, %s41
      %p45 = pneg %p39
      %p46 = scmp.eq.s32.totalorder %s16, 1
      %p47 = por %p45, %p46
      %p48 = scmp.ne.s32.totalorder %s40, %s43
      %p49 = scmp.eq.s32.totalorder %s16, 0
      %p50 = por %p48, %p49
      %p51 = scmp.ne.s32.totalorder %s40, %s43
      %p52 = scmp.eq.s32.totalorder %s21, 1
      %p53 = por %p51, %p52
      %p54 = scmp.ne.s32.totalorder %s43, %s44
      %p55 = scmp.eq.s32.totalorder %s21, 0
      %p56 = por %p54, %p55
      %p57 = scmp.ne.s32.totalorder %s43, %s44
      %p58 = scmp.eq.s32.totalorder %s22, 1
      %p59 = por %p57, %p58
      %p61 = scmp.ne.s32.totalorder %s44, %s60
      %p62 = scmp.eq.s32.totalorder %s22, 0
      %p63 = por %p61, %p62
      %s65 = sadd.s32 %s64, 1
      %p68 = scmp.eq.s32.totalorder %s16, 1
      %p69 = scmp.ne.s32.totalorder %s64, %s66
      %p70 = scmp.eq.s32.totalorder %s16, 0
      %p71 = por %p69, %p70
      %p72 = scmp.ne.s32.totalorder %s64, %s66
      %p73 = scmp.eq.s32.totalorder %s21, 1
      %p74 = por %p72, %p73
      %p75 = scmp.ne.s32.totalorder %s66, %s67
      %p76 = scmp.eq.s32.totalorder %s21, 0
      %p77 = por %p75, %p76
      %p78 = scmp.ne.s32.totalorder %s66, %s67
      %p79 = scmp.eq.s32.totalorder %s22, 1
      %p80 = por %p78, %p79
      %p82 = scmp.ne.s32.totalorder %s67, %s81
      %p83 = scmp.eq.s32.totalorder %s22, 0
      %p84 = por %p82, %p83
      %s86 = sadd.s32 %s85, 1
      %p89 = scmp.eq.s32.totalorder %s16, 1
      %p90 = scmp.ne.s32.totalorder %s85, %s87
      %p91 = scmp.eq.s32.totalorder %s16, 0
      %p92 = por %p90, %p91
      %p93 = scmp.ne.s32.totalorder %s85, %s87
      %p94 = scmp.eq.s32.totalorder %s21, 1
      %p95 = por %p93, %p94
      %p96 = scmp.ne.s32.totalorder %s87, %s88
      %p97 = scmp.eq.s32.totalorder %s21, 0
      %p98 = por %p96, %p97
      %p99 = scmp.ne.s32.totalorder %s87, %s88
      %p100 = scmp.eq.s32.totalorder %s22, 1
      %p101 = por %p99, %p100
      %p103 = scmp.ne.s32.totalorder %s88, %s102
      %p104 = scmp.eq.s32.totalorder %s22, 0
      %p105 = por %p103, %p104
      %s106 = ssub.s32 %s24, %s31
      %s107 = ssub.s32 %s23, %s35
      %s108 = sor.u32 %s106, %s107
      %p109 = scmp.eq.s32.totalorder %s108, 0
      %s111 = sadd.s32 %s110, 1
      %s112 = scalar_select %p109, %s110, %s111
      %p115 = pneg %p109
      %p116 = scmp.eq.s32.totalorder %s16, 1
      %p117 = por %p115, %p116
      %p118 = scmp.ne.s32.totalorder %s110, %s113
      %p119 = scmp.eq.s32.totalorder %s16, 0
      %p120 = por %p118, %p119
      %p121 = scmp.ne.s32.totalorder %s110, %s113
      %p122 = scmp.eq.s32.totalorder %s21, 1
      %p123 = por %p121, %p122
      %p124 = scmp.ne.s32.totalorder %s113, %s114
      %p125 = scmp.eq.s32.totalorder %s21, 0
      %p126 = por %p124, %p125
      %p127 = scmp.ne.s32.totalorder %s113, %s114
      %p128 = scmp.eq.s32.totalorder %s22, 1
      %p129 = por %p127, %p128
      %p131 = scmp.ne.s32.totalorder %s114, %s130
      %p132 = scmp.eq.s32.totalorder %s22, 0
      %p133 = por %p131, %p132
      %p134 = scmp.le.s32.totalorder 1, %s16
      %p135 = scmp.lt.s32.totalorder %s16, 3
      %p136 = pnand %p134, %p135
      %p137 = pneg %p136
      // Predicated region
      $region9: #{local_feature_aggregation.5} parent=5 // pred_check
        _
      $region10: #{local_feature_aggregation.5} parent=5 // pred_check_branch
        %139 = sbr.rel (%p136) target = $region12
      $region11: #{local_feature_aggregation.5} parent=5 // pred_region
        %s140 = ssub.s32 %s16, 1
        // Predicated region
        $region13: #{local_feature_aggregation.5} parent=11 // pred_check
          %p141 = pneg %p77
        $region14: #{local_feature_aggregation.5} parent=11 // pred_check_branch
          %143 = sbr.rel (%p141) target = $region16
        $region15: #{local_feature_aggregation.5} parent=11 // pred_region
          %s145 = ssub.s32 128, 128
          %146 = vsyncadd [#allocation6], %s145
          %s148 = sshll.u32 [#allocation5], 4
          %s149 = int_to_ptr.vmem [resolvable:$true] %s148
          %151 = dma.hbm_to_vmem [thread:$0]  %s1, 128, %s149, [#allocation6]
        $region16: #{local_feature_aggregation.5} parent=11 // pred_fallthru
          _
        // Predicated region
        $region17: #{local_feature_aggregation.5} parent=11 // pred_check
          %p152 = pneg %p98
        $region18: #{local_feature_aggregation.5} parent=11 // pred_check_branch
          %154 = sbr.rel (%p152) target = $region20
        $region19: #{local_feature_aggregation.5} parent=11 // pred_region
          %s156 = ssub.s32 128, 128
          %157 = vsyncadd [#allocation6], %s156
          %s159 = sshll.u32 [#allocation7], 4
          %s160 = int_to_ptr.vmem [resolvable:$true] %s159
          %162 = dma.hbm_to_vmem [thread:$0]  %s2, 128, %s160, [#allocation6]
        $region20: #{local_feature_aggregation.5} parent=11 // pred_fallthru
          _
      $region12: #{local_feature_aggregation.5} parent=5 // pred_fallthru
        _
      %p163 = scmp.lt.s32.totalorder %s16, 2
      // Predicated region
      $region21: #{local_feature_aggregation.5} parent=5 // pred_check
        %p164 = pneg %p163
      $region22: #{local_feature_aggregation.5} parent=5 // pred_check_branch
        %166 = sbr.rel (%p164) target = $region24
      $region23: #{local_feature_aggregation.5} parent=5 // pred_region
        // Predicated region
        $region25: #{local_feature_aggregation.5} parent=23 // pred_check
          %p167 = pneg %p50
        $region26: #{local_feature_aggregation.5} parent=23 // pred_check_branch
          %169 = sbr.rel (%p167) target = $region28
        $region27: #{local_feature_aggregation.5} parent=23 // pred_region
          %s170 = sand.u32 %s40, 1
          %s171 = scalar_lea.sflag [#allocation3], %s170
          %s172 = sand.u32 %s40, 1
          %s173 = smul.addr %s172, 8
          %s174 = scalar_lea.vmem [#allocation2], %s173
          %s176 = ssub.s32 128, 128
          %177 = vsyncadd %s171, %s176
          %s178 = sadd.s32 %s23, %s24
          %s179 = smul.addr %s178, 128
          %s180 = scalar_lea.hbm %s0, %s179
          %s182 = sshll.u32 %s174, 4
          %s183 = int_to_ptr.vmem [resolvable:$true] %s182
          %185 = dma.hbm_to_vmem [thread:$0]  %s180, 128, %s183, %s171
        $region28: #{local_feature_aggregation.5} parent=23 // pred_fallthru
          _
      $region24: #{local_feature_aggregation.5} parent=5 // pred_fallthru
        _
      %p186 = scmp.le.s32.totalorder 1, %s16
      %p187 = scmp.lt.s32.totalorder %s16, 3
      %p188 = pnand %p186, %p187
      %p189 = pneg %p188
      // Predicated region
      $region29: #{local_feature_aggregation.5} parent=5 // pred_check
        _
      $region30: #{local_feature_aggregation.5} parent=5 // pred_check_branch
        %191 = sbr.rel (%p188) target = $region32
      $region31: #{local_feature_aggregation.5} parent=5 // pred_region
        %s192 = ssub.s32 %s16, 1
        %s193 = sand.u32 %s43, 1
        %s194 = scalar_lea.sflag [#allocation3], %s193
        %s195 = sand.u32 %s43, 1
        %s196 = smul.addr %s195, 8
        %s197 = scalar_lea.vmem [#allocation2], %s196
        // Predicated region
        $region33: #{local_feature_aggregation.5} parent=31 // pred_check
          %p198 = pneg %p56
        $region34: #{local_feature_aggregation.5} parent=31 // pred_check_branch
          %200 = sbr.rel (%p198) target = $region36
        $region35: #{local_feature_aggregation.5} parent=31 // pred_region
          %201 = dma.done %s194, 128
        $region36: #{local_feature_aggregation.5} parent=31 // pred_fallthru
          _
        // Predicated region
        $region37: #{local_feature_aggregation.5} parent=31 // pred_check
          %p202 = pneg %p77
        $region38: #{local_feature_aggregation.5} parent=31 // pred_check_branch
          %204 = sbr.rel (%p202) target = $region40
        $region39: #{local_feature_aggregation.5} parent=31 // pred_region
          %205 = dma.done [#allocation6], 128
        $region40: #{local_feature_aggregation.5} parent=31 // pred_fallthru
          _
        // Predicated region
        $region41: #{local_feature_aggregation.5} parent=31 // pred_check
          %p206 = pneg %p98
        $region42: #{local_feature_aggregation.5} parent=31 // pred_check_branch
          %208 = sbr.rel (%p206) target = $region44
        $region43: #{local_feature_aggregation.5} parent=31 // pred_region
          %209 = dma.done [#allocation6], 128
        $region44: #{local_feature_aggregation.5} parent=31 // pred_fallthru
          _
        %s210 = sand.u32 %s43, 1
        %s211 = scalar_lea.sflag [#allocation3], %s210
        %s212 = sand.u32 %s43, 1
        %s213 = smul.addr %s212, 8
        %s214 = scalar_lea.vmem [#allocation2], %s213
        %p215 = pneg %p56
        %p216 = pneg %p53
        %p217 = pneg %p77
        %p218 = pneg %p74
        %p219 = pneg %p98
        %p220 = pneg %p95
        %p221 = pneg %p126
        %p222 = pneg %p123
        %s223 = sand.u32 %s113, 1
        %s224 = scalar_lea.sflag [#allocation4], %s223
        %s225 = sand.u32 %s113, 1
        %s226 = smul.addr %s225, 8
        %s227 = scalar_lea.vmem [#allocation8], %s226
        %v228 = vld [vmem:[#allocation5] sm:$0xff]
        %v229 = vld [vmem:[%s197] sm:$0xff]
        %v230 = vld [vmem:[#allocation7] sm:$0xff]
        %232 = vset.pattern.permute.xlu0 0
        %233 = vperm.xlu0 %232, %v230
        %v234 = vpop.permute.xlu0 %233
        %vm236 = vcmask 64512
        %v238 = vsel %vm236, %v228, 0
        %240 = vmatprep.subr.mxu0 0.0
        %241 = vmatpush1.msra.mxu0 %v229
        %242 = vmatprep.subr.mxu0 0.0
        %243 = vmatpush1.msra.mxu0 0.0
        %244 = vmatprep.subr.mxu0 0.0
        %245 = vmatpush1.msra.mxu0 0.0
        %246 = vmatprep.subr.mxu0 0.0
        %247 = vmatpush1.msra.mxu0 0.0
        %248 = vmatprep.subr.mxu0 0.0
        %249 = vmatpush1.msra.mxu0 0.0
        %250 = vmatprep.subr.mxu0 0.0
        %251 = vmatpush1.msra.mxu0 0.0
        %252 = vmatprep.subr.mxu0 0.0
        %253 = vmatpush1.msra.mxu0 0.0
        %254 = vmatprep.subr.mxu0 0.0
        %255 = vmatpush1.msra.mxu0 0.0
        %256 = vmatprep.subr.mxu0 0.0
        %257 = vmatpush1.msra.mxu0 0.0
        %258 = vmatprep.subr.mxu0 0.0
        %259 = vmatpush1.msra.mxu0 0.0
        %260 = vmatprep.subr.mxu0 0.0
        %261 = vmatpush1.msra.mxu0 0.0
        %262 = vmatprep.subr.mxu0 0.0
        %263 = vmatpush1.msra.mxu0 0.0
        %264 = vmatprep.subr.mxu0 0.0
        %265 = vmatpush1.msra.mxu0 0.0
        %266 = vmatprep.subr.mxu0 0.0
        %267 = vmatpush1.msra.mxu0 0.0
        %268 = vmatprep.subr.mxu0 0.0
        %269 = vmatpush1.msra.mxu0 0.0
        %270 = vmatprep.subr.mxu0 0.0
        %271 = vmatpush1.msra.mxu0 0.0
        %272 = vmatprep.subr.mxu0 0.0
        %273 = vmatpush1.msra.mxu0 0.0
        %274 = vmatprep.subr.mxu0 0.0
        %275 = vmatpush1.msra.mxu0 0.0
        %276 = vmatprep.subr.mxu0 0.0
        %277 = vmatpush1.msra.mxu0 0.0
        %278 = vmatprep.subr.mxu0 0.0
        %279 = vmatpush1.msra.mxu0 0.0
        %280 = vmatprep.subr.mxu0 0.0
        %281 = vmatpush1.msra.mxu0 0.0
        %282 = vmatprep.subr.mxu0 0.0
        %283 = vmatpush1.msra.mxu0 0.0
        %284 = vmatprep.subr.mxu0 0.0
        %285 = vmatpush1.msra.mxu0 0.0
        %286 = vmatprep.subr.mxu0 0.0
        %287 = vmatpush1.msra.mxu0 0.0
        %288 = vmatprep.subr.mxu0 0.0
        %289 = vmatpush1.msra.mxu0 0.0
        %290 = vmatprep.subr.mxu0 0.0
        %291 = vmatpush1.msra.mxu0 0.0
        %292 = vmatprep.subr.mxu0 0.0
        %293 = vmatpush1.msra.mxu0 0.0
        %294 = vmatprep.subr.mxu0 0.0
        %295 = vmatpush1.msra.mxu0 0.0
        %296 = vmatprep.subr.mxu0 0.0
        %297 = vmatpush1.msra.mxu0 0.0
        %298 = vmatprep.subr.mxu0 0.0
        %299 = vmatpush1.msra.mxu0 0.0
        %300 = vmatprep.subr.mxu0 0.0
        %301 = vmatpush1.msra.mxu0 0.0
        %302 = vmatprep.subr.mxu0 0.0
        %303 = vmatpush1.msra.mxu0 0.0
        %304 = vmatprep.mubr.f32.mxu0 0.0
        %305 = vmatmul.mubr.f32.gmra.mrb[0].mxu0 %v238
        %v306 = vpop.f32.mrb[0].mxu0
        %v307 = vadd.f32 %v234, %v306
        %v308 = vpop.f32.mrb[0].mxu0
        %309 = vdwg.mxu0
        %vm310 = vcmp.gt.f32.partialorder %v307, 0.0
        %v311 = vmul.f32 %v307, 0.2
        %v312 = vsel %vm310, %v307, %v311
        %313 = vst [vmem:[%s227] sm:$0xff] %v312
        %s314 = sand.u32 %s113, 1
        %s315 = scalar_lea.sflag [#allocation4], %s314
        %s316 = sand.u32 %s113, 1
        %s317 = smul.addr %s316, 8
        %s318 = scalar_lea.vmem [#allocation8], %s317
        // Predicated region
        $region45: #{local_feature_aggregation.5} parent=31 // pred_check
          %p319 = pneg %p123
        $region46: #{local_feature_aggregation.5} parent=31 // pred_check_branch
          %321 = sbr.rel (%p319) target = $region48
        $region47: #{local_feature_aggregation.5} parent=31 // pred_region
          %s323 = ssub.s32 128, 128
          %324 = vsyncadd %s315, %s323
          %s325 = sadd.s32 %s25, %s26
          %s326 = smul.addr %s325, 128
          %s327 = scalar_lea.hbm %s3, %s326
          %s329 = sshll.u32 %s318, 4
          %s330 = int_to_ptr.vmem [resolvable:$true] %s329
          %332 = dma.vmem_to_hbm [thread:$0]  %s330, 128, %s327, %s315
        $region48: #{local_feature_aggregation.5} parent=31 // pred_fallthru
          _
      $region32: #{local_feature_aggregation.5} parent=5 // pred_fallthru
        _
      %p333 = scmp.le.s32.totalorder 2, %s16
      // Predicated region
      $region49: #{local_feature_aggregation.5} parent=5 // pred_check
        %p334 = pneg %p333
      $region50: #{local_feature_aggregation.5} parent=5 // pred_check_branch
        %336 = sbr.rel (%p334) target = $region52
      $region51: #{local_feature_aggregation.5} parent=5 // pred_region
        %s337 = ssub.s32 %s16, 2
        // Predicated region
        $region53: #{local_feature_aggregation.5} parent=51 // pred_check
          %p338 = pneg %p129
        $region54: #{local_feature_aggregation.5} parent=51 // pred_check_branch
          %340 = sbr.rel (%p338) target = $region56
        $region55: #{local_feature_aggregation.5} parent=51 // pred_region
          %s341 = sand.u32 %s114, 1
          %s342 = scalar_lea.sflag [#allocation4], %s341
          %s343 = sand.u32 %s114, 1
          %s344 = smul.addr %s343, 8
          %s345 = scalar_lea.vmem [#allocation8], %s344
          %346 = dma.done %s342, 128
        $region56: #{local_feature_aggregation.5} parent=51 // pred_fallthru
          _
      $region52: #{local_feature_aggregation.5} parent=5 // pred_fallthru
        _
    $region6: #{local_feature_aggregation.5} parent=1 // loop_footer
      %s20 = sadd.s32 1, %s16
    $region7: #{local_feature_aggregation.5} parent=1 // loop_footer_branch
      %15 = sbr.rel target = $region3
    $region8: #{local_feature_aggregation.5} parent=1 // loop_exit
      _
    %347 = vsyncpa [#allocation3], 1
    %s348 = scalar_lea.sflag [#allocation3], 1
    %349 = vsyncpa %s348, 1
    %350 = vsyncpa [#allocation6], 1
    %351 = vsyncpa [#allocation4], 1
    %s352 = scalar_lea.sflag [#allocation4], 1
    %353 = vsyncpa %s352, 1

// kernel: local_feature_aggregation.4
$region0: #{local_feature_aggregation.4}
  #allocation0 [shape = 'u32[]', space=smem, size = 0x4, offset = 0x4, fixed_abs, tag = 'smem constant byte address 0x4 - core index']
  #allocation1 [shape = 'u32[144,128]{1,0:T(1,128)}', space=vmem, size = 0x12000, scoped, tag = 'internal scratch']
  #allocation2 [shape = 'f32[8,128]{1,0:T(8,128)}', space=vmem, size = 0x1000, scoped, tag = 'scratch operand']
  %s0 = inlined_call_operand.hbm [shape: f32[2,3,128], index: 0, kind: input, shape index: {}, may-alias: {0,1}]
  %s1 = inlined_call_operand.hbm [shape: f32[2,3,128], index: 1, kind: input, shape index: {}, may-alias: {0,1}]
  %s2 = inlined_call_operand.hbm [shape: s32[2,8,128], index: 2, kind: output, shape index: {}]
  %s3 = sld [smem:[#allocation0]]
  $region57: #{local_feature_aggregation.4} parent=0
    _
  %s5 = ssub.s32 1, %s3
  %s6 = scalar_select 0, %s5, %s3
  $region1: #{local_feature_aggregation.4} parent=0
    #allocation3 [shape = 'u8[4096]{0}', space=vmem, size = 0x1000, scoped, tag = 'input window, operand 0']
    #allocation4 [shape = 's32[2]{0}', space=sflag, size = 0x8, scoped, tag = 'scoped memory for local_feature_aggregation.4']
    #allocation5 [shape = 's32[2]{0}', space=sflag, size = 0x8, scoped, tag = 'scoped memory for local_feature_aggregation.4']
    #allocation6 [shape = 'u8[4096]{0}', space=vmem, size = 0x1000, scoped, tag = 'input window, operand 1']
    #allocation7 [shape = 's32[2]{0}', space=sflag, size = 0x8, scoped, tag = 'scoped memory for local_feature_aggregation.4']
    #allocation8 [shape = 'u8[8192]{0}', space=vmem, size = 0x2000, scoped, tag = 'output window, operand 0']
    %7 = vsyncpa [#allocation4], 0
    %s8 = scalar_lea.sflag [#allocation4], 1
    %9 = vsyncpa %s8, 0
    %10 = vsyncpa [#allocation7], 0
    %s11 = scalar_lea.sflag [#allocation7], 1
    %12 = vsyncpa %s11, 0
    %13 = vsyncpa [#allocation5], 0
    %s14 = scalar_lea.sflag [#allocation5], 1
    %15 = vsyncpa %s14, 0
    loop: start=0, step=1, limit=4
    $region2: #{local_feature_aggregation.4} parent=1 // loop_pre_header
      _
    $region3: #{local_feature_aggregation.4} parent=1 // loop_header
      %s17 = sphi 0, %s21
      %p18 = scmp.ge.s32.totalorder %s17, 4
      %s24 = sphi 0, %s43
      %s25 = sphi 0, %s39
      %s26 = sphi 0, %s35
      %s27 = sphi 0, %s24
      %s28 = sphi 0, %s25
      %s29 = sphi 0, %s26
      %s30 = sphi 0, %s27
      %s31 = sphi 0, %s28
      %s32 = sphi 0, %s29
      %s48 = sphi 0, %s50
      %s51 = sphi 0, %s48
      %s52 = sphi 0, %s51
      %s68 = sphi 0, %s52
      %s76 = sphi 0, %s78
      %s79 = sphi 0, %s76
      %s80 = sphi 0, %s79
      %s96 = sphi 0, %s80
      %s104 = sphi 0, %s106
      %s107 = sphi 0, %s104
      %s108 = sphi 0, %s107
      %s124 = sphi 0, %s108
    $region4: #{local_feature_aggregation.4} parent=1 // loop_header_branch
      %20 = sbr.rel (%p18) target = $region8
    $region5: #{local_feature_aggregation.4} parent=1 // loop_body
      %s22 = ssub.s32 %s17, 1
      %s23 = ssub.s32 %s17, 2
      %s33 = sadd.s32 1, %s26
      %p34 = scmp.ge.s32.totalorder %s33, 1
      %s35 = scalar_select %p34, 0, %s33
      %s36 = sadd.s32 1, %s25
      %s37 = scalar_select %p34, %s36, %s25
      %p38 = scmp.ge.s32.totalorder %s37, 2
      %s39 = scalar_select %p38, 0, %s37
      %s40 = sadd.s32 1, %s24
      %s41 = scalar_select %p38, %s40, %s24
      %p42 = scmp.ge.s32.totalorder %s41, 1
      %s43 = scalar_select %p42, 0, %s41
      %s44 = ssub.s32 %s25, %s39
      %s45 = ssub.s32 %s24, %s43
      %s46 = sor.u32 %s44, %s45
      %p47 = scmp.eq.s32.totalorder %s46, 0
      %s49 = sadd.s32 %s48, 1
      %s50 = scalar_select %p47, %s48, %s49
      %p53 = pneg %p47
      %p54 = scmp.eq.s32.totalorder %s17, 1
      %p55 = por %p53, %p54
      %p56 = scmp.ne.s32.totalorder %s48, %s51
      %p57 = scmp.eq.s32.totalorder %s17, 0
      %p58 = por %p56, %p57
      %p59 = scmp.ne.s32.totalorder %s48, %s51
      %p60 = scmp.eq.s32.totalorder %s22, 1
      %p61 = por %p59, %p60
      %p62 = scmp.ne.s32.totalorder %s51, %s52
      %p63 = scmp.eq.s32.totalorder %s22, 0
      %p64 = por %p62, %p63
      %p65 = scmp.ne.s32.totalorder %s51, %s52
      %p66 = scmp.eq.s32.totalorder %s23, 1
      %p67 = por %p65, %p66
      %p69 = scmp.ne.s32.totalorder %s52, %s68
      %p70 = scmp.eq.s32.totalorder %s23, 0
      %p71 = por %p69, %p70
      %s72 = ssub.s32 %s25, %s39
      %s73 = ssub.s32 %s26, %s35
      %s74 = sor.u32 %s72, %s73
      %p75 = scmp.eq.s32.totalorder %s74, 0
      %s77 = sadd.s32 %s76, 1
      %s78 = scalar_select %p75, %s76, %s77
      %p81 = pneg %p75
      %p82 = scmp.eq.s32.totalorder %s17, 1
      %p83 = por %p81, %p82
      %p84 = scmp.ne.s32.totalorder %s76, %s79
      %p85 = scmp.eq.s32.totalorder %s17, 0
      %p86 = por %p84, %p85
      %p87 = scmp.ne.s32.totalorder %s76, %s79
      %p88 = scmp.eq.s32.totalorder %s22, 1
      %p89 = por %p87, %p88
      %p90 = scmp.ne.s32.totalorder %s79, %s80
      %p91 = scmp.eq.s32.totalorder %s22, 0
      %p92 = por %p90, %p91
      %p93 = scmp.ne.s32.totalorder %s79, %s80
      %p94 = scmp.eq.s32.totalorder %s23, 1
      %p95 = por %p93, %p94
      %p97 = scmp.ne.s32.totalorder %s80, %s96
      %p98 = scmp.eq.s32.totalorder %s23, 0
      %p99 = por %p97, %p98
      %s100 = ssub.s32 %s25, %s39
      %s101 = ssub.s32 %s24, %s43
      %s102 = sor.u32 %s100, %s101
      %p103 = scmp.eq.s32.totalorder %s102, 0
      %s105 = sadd.s32 %s104, 1
      %s106 = scalar_select %p103, %s104, %s105
      %p109 = pneg %p103
      %p110 = scmp.eq.s32.totalorder %s17, 1
      %p111 = por %p109, %p110
      %p112 = scmp.ne.s32.totalorder %s104, %s107
      %p113 = scmp.eq.s32.totalorder %s17, 0
      %p114 = por %p112, %p113
      %p115 = scmp.ne.s32.totalorder %s104, %s107
      %p116 = scmp.eq.s32.totalorder %s22, 1
      %p117 = por %p115, %p116
      %p118 = scmp.ne.s32.totalorder %s107, %s108
      %p119 = scmp.eq.s32.totalorder %s22, 0
      %p120 = por %p118, %p119
      %p121 = scmp.ne.s32.totalorder %s107, %s108
      %p122 = scmp.eq.s32.totalorder %s23, 1
      %p123 = por %p121, %p122
      %p125 = scmp.ne.s32.totalorder %s108, %s124
      %p126 = scmp.eq.s32.totalorder %s23, 0
      %p127 = por %p125, %p126
      %p128 = scmp.le.s32.totalorder 1, %s17
      %p129 = scmp.lt.s32.totalorder %s17, 3
      %p130 = pnand %p128, %p129
      %p131 = pneg %p130
      // Predicated region
      $region9: #{local_feature_aggregation.4} parent=5 // pred_check
        _
      $region10: #{local_feature_aggregation.4} parent=5 // pred_check_branch
        %133 = sbr.rel (%p130) target = $region12
      $region11: #{local_feature_aggregation.4} parent=5 // pred_region
        %s134 = ssub.s32 %s17, 1
      $region12: #{local_feature_aggregation.4} parent=5 // pred_fallthru
        _
      %p135 = scmp.lt.s32.totalorder %s17, 2
      // Predicated region
      $region13: #{local_feature_aggregation.4} parent=5 // pred_check
        %p136 = pneg %p135
      $region14: #{local_feature_aggregation.4} parent=5 // pred_check_branch
        %138 = sbr.rel (%p136) target = $region16
      $region15: #{local_feature_aggregation.4} parent=5 // pred_region
        // Predicated region
        $region17: #{local_feature_aggregation.4} parent=15 // pred_check
          %p139 = pneg %p58
        $region18: #{local_feature_aggregation.4} parent=15 // pred_check_branch
          %141 = sbr.rel (%p139) target = $region20
        $region19: #{local_feature_aggregation.4} parent=15 // pred_region
          %s142 = sand.u32 %s48, 1
          %s143 = scalar_lea.sflag [#allocation4], %s142
          %s144 = sand.u32 %s48, 1
          %s145 = smul.addr %s144, 4
          %s146 = scalar_lea.vmem [#allocation3], %s145
          %s148 = ssub.s32 64, 64
          %149 = vsyncadd %s143, %s148
          %s150 = sadd.s32 %s24, %s25
          %s151 = smul.addr %s150, 64
          %s152 = scalar_lea.hbm %s0, %s151
          %s154 = sshll.u32 %s146, 4
          %s155 = int_to_ptr.vmem [resolvable:$true] %s154
          %157 = dma.hbm_to_vmem [thread:$0]  %s152, 64, %s155, %s143
        $region20: #{local_feature_aggregation.4} parent=15 // pred_fallthru
          _
        // Predicated region
        $region21: #{local_feature_aggregation.4} parent=15 // pred_check
          %p158 = pneg %p86
        $region22: #{local_feature_aggregation.4} parent=15 // pred_check_branch
          %160 = sbr.rel (%p158) target = $region24
        $region23: #{local_feature_aggregation.4} parent=15 // pred_region
          %s161 = sand.u32 %s76, 1
          %s162 = scalar_lea.sflag [#allocation7], %s161
          %s163 = sand.u32 %s76, 1
          %s164 = smul.addr %s163, 4
          %s165 = scalar_lea.vmem [#allocation6], %s164
          %s167 = ssub.s32 64, 64
          %168 = vsyncadd %s162, %s167
          %s169 = sadd.s32 %s26, %s25
          %s170 = smul.addr %s169, 64
          %s171 = scalar_lea.hbm %s1, %s170
          %s173 = sshll.u32 %s165, 4
          %s174 = int_to_ptr.vmem [resolvable:$true] %s173
          %176 = dma.hbm_to_vmem [thread:$0]  %s171, 64, %s174, %s162
        $region24: #{local_feature_aggregation.4} parent=15 // pred_fallthru
          _
      $region16: #{local_feature_aggregation.4} parent=5 // pred_fallthru
        _
      %p177 = scmp.le.s32.totalorder 1, %s17
      %p178 = scmp.lt.s32.totalorder %s17, 3
      %p179 = pnand %p177, %p178
      %p180 = pneg %p179
      // Predicated region
      $region25: #{local_feature_aggregation.4} parent=5 // pred_check
        _
      $region26: #{local_feature_aggregation.4} parent=5 // pred_check_branch
        %182 = sbr.rel (%p179) target = $region28
      $region27: #{local_feature_aggregation.4} parent=5 // pred_region
        %s183 = ssub.s32 %s17, 1
        %s184 = sand.u32 %s51, 1
        %s185 = scalar_lea.sflag [#allocation4], %s184
        %s186 = sand.u32 %s51, 1
        %s187 = smul.addr %s186, 4
        %s188 = scalar_lea.vmem [#allocation3], %s187
        // Predicated region
        $region29: #{local_feature_aggregation.4} parent=27 // pred_check
          %p189 = pneg %p64
        $region30: #{local_feature_aggregation.4} parent=27 // pred_check_branch
          %191 = sbr.rel (%p189) target = $region32
        $region31: #{local_feature_aggregation.4} parent=27 // pred_region
          %192 = dma.done %s185, 64
        $region32: #{local_feature_aggregation.4} parent=27 // pred_fallthru
          _
        %s193 = sand.u32 %s79, 1
        %s194 = scalar_lea.sflag [#allocation7], %s193
        %s195 = sand.u32 %s79, 1
        %s196 = smul.addr %s195, 4
        %s197 = scalar_lea.vmem [#allocation6], %s196
        // Predicated region
        $region33: #{local_feature_aggregation.4} parent=27 // pred_check
          %p198 = pneg %p92
        $region34: #{local_feature_aggregation.4} parent=27 // pred_check_branch
          %200 = sbr.rel (%p198) target = $region36
        $region35: #{local_feature_aggregation.4} parent=27 // pred_region
          %201 = dma.done %s194, 64
        $region36: #{local_feature_aggregation.4} parent=27 // pred_fallthru
          _
        %s202 = sand.u32 %s51, 1
        %s203 = scalar_lea.sflag [#allocation4], %s202
        %s204 = sand.u32 %s51, 1
        %s205 = smul.addr %s204, 4
        %s206 = scalar_lea.vmem [#allocation3], %s205
        %p207 = pneg %p64
        %p208 = pneg %p61
        %s209 = sand.u32 %s79, 1
        %s210 = scalar_lea.sflag [#allocation7], %s209
        %s211 = sand.u32 %s79, 1
        %s212 = smul.addr %s211, 4
        %s213 = scalar_lea.vmem [#allocation6], %s212
        %p214 = pneg %p92
        %p215 = pneg %p89
        %p216 = pneg %p120
        %p217 = pneg %p117
        %s218 = sand.u32 %s107, 1
        %s219 = scalar_lea.sflag [#allocation5], %s218
        %s220 = sand.u32 %s107, 1
        %s221 = smul.addr %s220, 8
        %s222 = scalar_lea.vmem [#allocation8], %s221
        %p223 = scmp.eq.s32.totalorder %s29, 0
        // Predicated region
        $region37: #{local_feature_aggregation.4} parent=27 // pred_check
          %p224 = pneg %p223
        $region38: #{local_feature_aggregation.4} parent=27 // pred_check_branch
          %226 = sbr.rel (%p224) target = $region40
        $region39: #{local_feature_aggregation.4} parent=27 // pred_region
          %227 = vst [vmem:[#allocation2] sm:$0xff] inf
        $region40: #{local_feature_aggregation.4} parent=27 // pred_fallthru
          _
        %v228 = vld [vmem:[%s188] sm:$0x7]
        %v229 = vld [vmem:[%s197] sm:$0x7]
        %v230 = vmul.f32 %v228, %v228
        %v232 = vrot.slane %v230, 1
        %v234 = vadd.f32 %v230, %v232
        %v235 = vrot.slane %v230, 2
        %v237 = vadd.f32 %v234, %v235
        %v238 = vmul.f32 %v229, %v229
        %v240 = vrot.slane %v238, 1
        %v242 = vadd.f32 %v238, %v240
        %v243 = vrot.slane %v238, 2
        %v245 = vadd.f32 %v242, %v243
        %v247 = vrot.slane %v245, 4
        %vm249 = vcmask 1042432
        %v250 = vsel %vm249, %v229, 1.0
        %vm251 = vcmask 1043456
        %v252 = vsel %vm251, %v250, %v247
        %v253 = vmul.f32 %v228, -2.0
        %v255 = vrot.slane %v237, 5
        %v257 = vsel %vm249, %v253, %v255
        %v258 = vsel %vm251, %v257, 1.0
        %259 = vxpose.xlu0.b32.start [1/16] %v252, 128
        %260 = vxpose.xlu0.b32.cont [2/16] 0.0, 128
        %261 = vxpose.xlu0.b32.cont [3/16] 0.0, 128
        %262 = vxpose.xlu0.b32.cont [4/16] 0.0, 128
        %263 = vxpose.xlu0.b32.cont [5/16] 0.0, 128
        %264 = vxpose.xlu0.b32.cont [6/16] 0.0, 128
        %265 = vxpose.xlu0.b32.cont [7/16] 0.0, 128
        %266 = vxpose.xlu0.b32.cont [8/16] 0.0, 128
        %267 = vxpose.xlu0.b32.cont [9/16] 0.0, 128
        %268 = vxpose.xlu0.b32.cont [10/16] 0.0, 128
        %269 = vxpose.xlu0.b32.cont [11/16] 0.0, 128
        %270 = vxpose.xlu0.b32.cont [12/16] 0.0, 128
        %271 = vxpose.xlu0.b32.cont [13/16] 0.0, 128
        %272 = vxpose.xlu0.b32.cont [14/16] 0.0, 128
        %273 = vxpose.xlu0.b32.cont [15/16] 0.0, 128
        %274 = vxpose.xlu0.b32.end [16/16] 0.0, 128
        %v275 = vpop.trf.xlu0
        %v276 = vpop.trf.xlu0
        %v277 = vpop.trf.xlu0
        %v278 = vpop.trf.xlu0
        %v279 = vpop.trf.xlu0
        %v280 = vpop.trf.xlu0
        %v281 = vpop.trf.xlu0
        %v282 = vpop.trf.xlu0
        %v283 = vpop.trf.xlu0
        %v284 = vpop.trf.xlu0
        %v285 = vpop.trf.xlu0
        %v286 = vpop.trf.xlu0
        %v287 = vpop.trf.xlu0
        %v288 = vpop.trf.xlu0
        %v289 = vpop.trf.xlu0
        %v290 = vpop.trf.xlu0
        %vm291 = vcmask 39936
        %v293 = vsel %vm291, %v275, 0
        %v296 = vsel %vm291, %v276, 0
        %v299 = vsel %vm291, %v277, 0
        %v302 = vsel %vm291, %v278, 0
        %v305 = vsel %vm291, %v279, 0
        %v308 = vsel %vm291, %v280, 0
        %v311 = vsel %vm291, %v281, 0
        %v314 = vsel %vm291, %v282, 0
        %v317 = vsel %vm291, %v283, 0
        %v320 = vsel %vm291, %v284, 0
        %v323 = vsel %vm291, %v285, 0
        %v326 = vsel %vm291, %v286, 0
        %v329 = vsel %vm291, %v287, 0
        %v332 = vsel %vm291, %v288, 0
        %v335 = vsel %vm291, %v289, 0
        %v338 = vsel %vm291, %v290, 0
        %vm340 = vcmask 1044480
        %v342 = vsel %vm340, %v258, 0
        %344 = vmatprep.subr.mxu0 0.0
        %345 = vmatpush1.msra.mxu0 %v342
        %346 = vmatprep.subr.mxu0 0.0
        %347 = vmatpush1.msra.mxu0 0.0
        %348 = vmatprep.subr.mxu0 0.0
        %349 = vmatpush1.msra.mxu0 0.0
        %350 = vmatprep.subr.mxu0 0.0
        %351 = vmatpush1.msra.mxu0 0.0
        %352 = vmatprep.subr.mxu0 0.0
        %353 = vmatpush1.msra.mxu0 0.0
        %354 = vmatprep.subr.mxu0 0.0
        %355 = vmatpush1.msra.mxu0 0.0
        %356 = vmatprep.subr.mxu0 0.0
        %357 = vmatpush1.msra.mxu0 0.0
        %358 = vmatprep.subr.mxu0 0.0
        %359 = vmatpush1.msra.mxu0 0.0
        %360 = vmatprep.subr.mxu0 0.0
        %361 = vmatpush1.msra.mxu0 0.0
        %362 = vmatprep.subr.mxu0 0.0
        %363 = vmatpush1.msra.mxu0 0.0
        %364 = vmatprep.subr.mxu0 0.0
        %365 = vmatpush1.msra.mxu0 0.0
        %366 = vmatprep.subr.mxu0 0.0
        %367 = vmatpush1.msra.mxu0 0.0
        %368 = vmatprep.subr.mxu0 0.0
        %369 = vmatpush1.msra.mxu0 0.0
        %370 = vmatprep.subr.mxu0 0.0
        %371 = vmatpush1.msra.mxu0 0.0
        %372 = vmatprep.subr.mxu0 0.0
        %373 = vmatpush1.msra.mxu0 0.0
        %374 = vmatprep.subr.mxu0 0.0
        %375 = vmatpush1.msra.mxu0 0.0
        %376 = vmatprep.subr.mxu0 0.0
        %377 = vmatpush1.msra.mxu0 0.0
        %378 = vmatprep.subr.mxu0 0.0
        %379 = vmatpush1.msra.mxu0 0.0
        %380 = vmatprep.subr.mxu0 0.0
        %381 = vmatpush1.msra.mxu0 0.0
        %382 = vmatprep.subr.mxu0 0.0
        %383 = vmatpush1.msra.mxu0 0.0
        %384 = vmatprep.subr.mxu0 0.0
        %385 = vmatpush1.msra.mxu0 0.0
        %386 = vmatprep.subr.mxu0 0.0
        %387 = vmatpush1.msra.mxu0 0.0
        %388 = vmatprep.subr.mxu0 0.0
        %389 = vmatpush1.msra.mxu0 0.0
        %390 = vmatprep.subr.mxu0 0.0
        %391 = vmatpush1.msra.mxu0 0.0
        %392 = vmatprep.subr.mxu0 0.0
        %393 = vmatpush1.msra.mxu0 0.0
        %394 = vmatprep.subr.mxu0 0.0
        %395 = vmatpush1.msra.mxu0 0.0
        %396 = vmatprep.subr.mxu0 0.0
        %397 = vmatpush1.msra.mxu0 0.0
        %398 = vmatprep.subr.mxu0 0.0
        %399 = vmatpush1.msra.mxu0 0.0
        %400 = vmatprep.subr.mxu0 0.0
        %401 = vmatpush1.msra.mxu0 0.0
        %402 = vmatprep.subr.mxu0 0.0
        %403 = vmatpush1.msra.mxu0 0.0
        %404 = vmatprep.subr.mxu0 0.0
        %405 = vmatpush1.msra.mxu0 0.0
        %406 = vmatprep.subr.mxu0 0.0
        %407 = vmatpush1.msra.mxu0 0.0
        %408 = vmatprep.mubr.f32.mxu0 0.0
        %409 = vmatmul.mubr.f32.gmra.mrb[0].mxu0 %v293
        %v410 = vpop.f32.mrb[0].mxu0
        %v411 = vadd.f32 0.0, %v410
        %v412 = vpop.f32.mrb[0].mxu0
        %413 = vmatprep.mubr.f32.mxu0 0.0
        %414 = vmatmul.mubr.f32.gmra.mrb[0].mxu0 %v296
        %v415 = vpop.f32.mrb[0].mxu0
        %v416 = vadd.f32 0.0, %v415
        %v417 = vpop.f32.mrb[0].mxu0
        %418 = vmatprep.mubr.f32.mxu0 0.0
        %419 = vmatmul.mubr.f32.gmra.mrb[0].mxu0 %v299
        %v420 = vpop.f32.mrb[0].mxu0
        %v421 = vadd.f32 0.0, %v420
        %v422 = vpop.f32.mrb[0].mxu0
        %423 = vmatprep.mubr.f32.mxu0 0.0
        %424 = vmatmul.mubr.f32.gmra.mrb[0].mxu0 %v302
        %v425 = vpop.f32.mrb[0].mxu0
        %v426 = vadd.f32 0.0, %v425
        %v427 = vpop.f32.mrb[0].mxu0
        %428 = vmatprep.mubr.f32.mxu0 0.0
        %429 = vmatmul.mubr.f32.gmra.mrb[0].mxu0 %v305
        %v430 = vpop.f32.mrb[0].mxu0
        %v431 = vadd.f32 0.0, %v430
        %v432 = vpop.f32.mrb[0].mxu0
        %433 = vmatprep.mubr.f32.mxu0 0.0
        %434 = vmatmul.mubr.f32.gmra.mrb[0].mxu0 %v308
        %v435 = vpop.f32.mrb[0].mxu0
        %v436 = vadd.f32 0.0, %v435
        %v437 = vpop.f32.mrb[0].mxu0
        %438 = vmatprep.mubr.f32.mxu0 0.0
        %439 = vmatmul.mubr.f32.gmra.mrb[0].mxu0 %v311
        %v440 = vpop.f32.mrb[0].mxu0
        %v441 = vadd.f32 0.0, %v440
        %v442 = vpop.f32.mrb[0].mxu0
        %443 = vmatprep.mubr.f32.mxu0 0.0
        %444 = vmatmul.mubr.f32.gmra.mrb[0].mxu0 %v314
        %v445 = vpop.f32.mrb[0].mxu0
        %v446 = vadd.f32 0.0, %v445
        %v447 = vpop.f32.mrb[0].mxu0
        %448 = vmatprep.mubr.f32.mxu0 0.0
        %449 = vmatmul.mubr.f32.gmra.mrb[0].mxu0 %v317
        %v450 = vpop.f32.mrb[0].mxu0
        %v451 = vadd.f32 0.0, %v450
        %v452 = vpop.f32.mrb[0].mxu0
        %453 = vmatprep.mubr.f32.mxu0 0.0
        %454 = vmatmul.mubr.f32.gmra.mrb[0].mxu0 %v320
        %v455 = vpop.f32.mrb[0].mxu0
        %v456 = vadd.f32 0.0, %v455
        %v457 = vpop.f32.mrb[0].mxu0
        %458 = vmatprep.mubr.f32.mxu0 0.0
        %459 = vmatmul.mubr.f32.gmra.mrb[0].mxu0 %v323
        %v460 = vpop.f32.mrb[0].mxu0
        %v461 = vadd.f32 0.0, %v460
        %v462 = vpop.f32.mrb[0].mxu0
        %463 = vmatprep.mubr.f32.mxu0 0.0
        %464 = vmatmul.mubr.f32.gmra.mrb[0].mxu0 %v326
        %v465 = vpop.f32.mrb[0].mxu0
        %v466 = vadd.f32 0.0, %v465
        %v467 = vpop.f32.mrb[0].mxu0
        %468 = vmatprep.mubr.f32.mxu0 0.0
        %469 = vmatmul.mubr.f32.gmra.mrb[0].mxu0 %v329
        %v470 = vpop.f32.mrb[0].mxu0
        %v471 = vadd.f32 0.0, %v470
        %v472 = vpop.f32.mrb[0].mxu0
        %473 = vmatprep.mubr.f32.mxu0 0.0
        %474 = vmatmul.mubr.f32.gmra.mrb[0].mxu0 %v332
        %v475 = vpop.f32.mrb[0].mxu0
        %v476 = vadd.f32 0.0, %v475
        %v477 = vpop.f32.mrb[0].mxu0
        %478 = vmatprep.mubr.f32.mxu0 0.0
        %479 = vmatmul.mubr.f32.gmra.mrb[0].mxu0 %v335
        %v480 = vpop.f32.mrb[0].mxu0
        %v481 = vadd.f32 0.0, %v480
        %v482 = vpop.f32.mrb[0].mxu0
        %483 = vmatprep.mubr.f32.mxu0 0.0
        %484 = vmatmul.mubr.f32.gmra.mrb[0].mxu0 %v338
        %v485 = vpop.f32.mrb[0].mxu0
        %v486 = vadd.f32 0.0, %v485
        %v487 = vpop.f32.mrb[0].mxu0
        %488 = vdwg.mxu0
        %v489 = vmax.f32 %v411, 1.1754944e-38
        %v490 = vmax.f32 %v416, 1.1754944e-38
        %v491 = vmax.f32 %v421, 1.1754944e-38
        %v492 = vmax.f32 %v426, 1.1754944e-38
        %v493 = vmax.f32 %v431, 1.1754944e-38
        %v494 = vmax.f32 %v436, 1.1754944e-38
        %v495 = vmax.f32 %v441, 1.1754944e-38
        %v496 = vmax.f32 %v446, 1.1754944e-38
        %v497 = vmax.f32 %v451, 1.1754944e-38
        %v498 = vmax.f32 %v456, 1.1754944e-38
        %v499 = vmax.f32 %v461, 1.1754944e-38
        %v500 = vmax.f32 %v466, 1.1754944e-38
        %v501 = vmax.f32 %v471, 1.1754944e-38
        %v502 = vmax.f32 %v476, 1.1754944e-38
        %v503 = vmax.f32 %v481, 1.1754944e-38
        %v504 = vmax.f32 %v486, 1.1754944e-38
        %v505 = vlaneseq
        %v506 = vshrl.u32 %v505, 7
        %v507 = vadd.s32 %v506, 8
        %v508 = vadd.s32 %v506, 16
        %v509 = vadd.s32 %v506, 24
        %v510 = vadd.s32 %v506, 32
        %v511 = vadd.s32 %v506, 40
        %v512 = vadd.s32 %v506, 48
        %v513 = vadd.s32 %v506, 56
        %v514 = vadd.s32 %v506, 64
        %v515 = vadd.s32 %v506, 72
        %v516 = vadd.s32 %v506, 80
        %v517 = vadd.s32 %v506, 88
        %v518 = vadd.s32 %v506, 96
        %v519 = vadd.s32 %v506, 104
        %v520 = vadd.s32 %v506, 112
        %v521 = vadd.s32 %v506, 120
        %s522 = smul.u32 %s29, 128
        %v523 = vstv %s522
        %v524 = vadd.s32 %v506, %v523
        %v525 = vadd.s32 %v507, %v523
        %v526 = vadd.s32 %v508, %v523
        %v527 = vadd.s32 %v509, %v523
        %v528 = vadd.s32 %v510, %v523
        %v529 = vadd.s32 %v511, %v523
        %v530 = vadd.s32 %v512, %v523
        %v531 = vadd.s32 %v513, %v523
        %v532 = vadd.s32 %v514, %v523
        %v533 = vadd.s32 %v515, %v523
        %v534 = vadd.s32 %v516, %v523
        %v535 = vadd.s32 %v517, %v523
        %v536 = vadd.s32 %v518, %v523
        %v537 = vadd.s32 %v519, %v523
        %v538 = vadd.s32 %v520, %v523
        %v539 = vadd.s32 %v521, %v523
        %v556 = vand.u32 %v489, 4294967280
        %v557 = vand.u32 %v490, 4294967280
        %v558 = vand.u32 %v491, 4294967280
        %v559 = vand.u32 %v492, 4294967280
        %v560 = vand.u32 %v493, 4294967280
        %v561 = vand.u32 %v494, 4294967280
        %v562 = vand.u32 %v495, 4294967280
        %v563 = vand.u32 %v496, 4294967280
        %v564 = vand.u32 %v497, 4294967280
        %v565 = vand.u32 %v498, 4294967280
        %v566 = vand.u32 %v499, 4294967280
        %v567 = vand.u32 %v500, 4294967280
        %v568 = vand.u32 %v501, 4294967280
        %v569 = vand.u32 %v502, 4294967280
        %v570 = vand.u32 %v503, 4294967280
        %v571 = vand.u32 %v504, 4294967280
        %v572 = vor.u32 %v556, %v524
        %v573 = vor.u32 %v557, %v525
        %v574 = vor.u32 %v558, %v526
        %v575 = vor.u32 %v559, %v527
        %v576 = vor.u32 %v560, %v528
        %v577 = vor.u32 %v561, %v529
        %v578 = vor.u32 %v562, %v530
        %v579 = vor.u32 %v563, %v531
        %v580 = vor.u32 %v564, %v532
        %v581 = vor.u32 %v565, %v533
        %v582 = vor.u32 %v566, %v534
        %v583 = vor.u32 %v567, %v535
        %v584 = vor.u32 %v568, %v536
        %v585 = vor.u32 %v569, %v537
        %v586 = vor.u32 %v570, %v538
        %v587 = vor.u32 %v571, %v539
        %v604 = vld [vmem:[#allocation2] sm:$0xff]
        %v605 = vmin.f32 %v572, %v576
        %v606 = vmin.f32 %v573, %v577
        %v607 = vmin.f32 %v574, %v578
        %v608 = vmin.f32 %v575, %v579
        %v609 = vmin.f32 %v605, %v580
        %v610 = vmin.f32 %v606, %v581
        %v611 = vmin.f32 %v607, %v582
        %v612 = vmin.f32 %v608, %v583
        %v613 = vmin.f32 %v609, %v584
        %v614 = vmin.f32 %v610, %v585
        %v615 = vmin.f32 %v611, %v586
        %v616 = vmin.f32 %v612, %v587
        %v617 = vmin.f32 %v613, %v604
        %v618 = vmin.f32 %v617, %v614
        %v619 = vmin.f32 %v615, %v616
        %v620 = vmin.f32 %v618, %v619
        %v621 = vrot.slane %v620, 4
        %v622 = vmin.f32 %v620, %v621
        %v623 = vrot.slane %v622, 2
        %v624 = vmin.f32 %v622, %v623
        %v625 = vrot.slane %v624, 1
        %v626 = vmin.f32 %v624, %v625
        %vm627 = vcmp.eq.f32.partialorder %v572, %v626
        %vm628 = vcmp.eq.f32.partialorder %v573, %v626
        %vm629 = vcmp.eq.f32.partialorder %v574, %v626
        %vm630 = vcmp.eq.f32.partialorder %v575, %v626
        %vm631 = vcmp.eq.f32.partialorder %v576, %v626
        %vm632 = vcmp.eq.f32.partialorder %v577, %v626
        %vm633 = vcmp.eq.f32.partialorder %v578, %v626
        %vm634 = vcmp.eq.f32.partialorder %v579, %v626
        %vm635 = vcmp.eq.f32.partialorder %v580, %v626
        %vm636 = vcmp.eq.f32.partialorder %v581, %v626
        %vm637 = vcmp.eq.f32.partialorder %v582, %v626
        %vm638 = vcmp.eq.f32.partialorder %v583, %v626
        %vm639 = vcmp.eq.f32.partialorder %v584, %v626
        %vm640 = vcmp.eq.f32.partialorder %v585, %v626
        %vm641 = vcmp.eq.f32.partialorder %v586, %v626
        %vm642 = vcmp.eq.f32.partialorder %v587, %v626
        %vm643 = vcmp.eq.f32.partialorder %v604, %v626
        %v644 = vsel %vm627, inf, %v572
        %v645 = vsel %vm628, inf, %v573
        %v646 = vsel %vm629, inf, %v574
        %v647 = vsel %vm630, inf, %v575
        %v648 = vsel %vm631, inf, %v576
        %v649 = vsel %vm632, inf, %v577
        %v650 = vsel %vm633, inf, %v578
        %v651 = vsel %vm634, inf, %v579
        %v652 = vsel %vm635, inf, %v580
        %v653 = vsel %vm636, inf, %v581
        %v654 = vsel %vm637, inf, %v582
        %v655 = vsel %vm638, inf, %v583
        %v656 = vsel %vm639, inf, %v584
        %v657 = vsel %vm640, inf, %v585
        %v658 = vsel %vm641, inf, %v586
        %v659 = vsel %vm642, inf, %v587
        %v660 = vsel %vm643, inf, %v604
        %v661 = vmin.f32 %v644, %v648
        %v662 = vmin.f32 %v645, %v649
        %v663 = vmin.f32 %v646, %v650
        %v664 = vmin.f32 %v647, %v651
        %v665 = vmin.f32 %v661, %v652
        %v666 = vmin.f32 %v662, %v653
        %v667 = vmin.f32 %v663, %v654
        %v668 = vmin.f32 %v664, %v655
        %v669 = vmin.f32 %v665, %v656
        %v670 = vmin.f32 %v666, %v657
        %v671 = vmin.f32 %v667, %v658
        %v672 = vmin.f32 %v668, %v659
        %v673 = vmin.f32 %v669, %v660
        %v674 = vmin.f32 %v673, %v670
        %v675 = vmin.f32 %v671, %v672
        %v676 = vmin.f32 %v674, %v675
        %v677 = vrot.slane %v676, 4
        %v678 = vmin.f32 %v676, %v677
        %v679 = vrot.slane %v678, 2
        %v680 = vmin.f32 %v678, %v679
        %v681 = vrot.slane %v680, 1
        %v682 = vmin.f32 %v680, %v681
        %vm683 = vcmp.eq.f32.partialorder %v644, %v682
        %vm684 = vcmp.eq.f32.partialorder %v645, %v682
        %vm685 = vcmp.eq.f32.partialorder %v646, %v682
        %vm686 = vcmp.eq.f32.partialorder %v647, %v682
        %vm687 = vcmp.eq.f32.partialorder %v648, %v682
        %vm688 = vcmp.eq.f32.partialorder %v649, %v682
        %vm689 = vcmp.eq.f32.partialorder %v650, %v682
        %vm690 = vcmp.eq.f32.partialorder %v651, %v682
        %vm691 = vcmp.eq.f32.partialorder %v652, %v682
        %vm692 = vcmp.eq.f32.partialorder %v653, %v682
        %vm693 = vcmp.eq.f32.partialorder %v654, %v682
        %vm694 = vcmp.eq.f32.partialorder %v655, %v682
        %vm695 = vcmp.eq.f32.partialorder %v656, %v682
        %vm696 = vcmp.eq.f32.partialorder %v657, %v682
        %vm697 = vcmp.eq.f32.partialorder %v658, %v682
        %vm698 = vcmp.eq.f32.partialorder %v659, %v682
        %vm699 = vcmp.eq.f32.partialorder %v660, %v682
        %v700 = vsel %vm683, inf, %v644
        %v701 = vsel %vm684, inf, %v645
        %v702 = vsel %vm685, inf, %v646
        %v703 = vsel %vm686, inf, %v647
        %v704 = vsel %vm687, inf, %v648
        %v705 = vsel %vm688, inf, %v649
        %v706 = vsel %vm689, inf, %v650
        %v707 = vsel %vm690, inf, %v651
        %v708 = vsel %vm691, inf, %v652
        %v709 = vsel %vm692, inf, %v653
        %v710 = vsel %vm693, inf, %v654
        %v711 = vsel %vm694, inf, %v655
        %v712 = vsel %vm695, inf, %v656
        %v713 = vsel %vm696, inf, %v657
        %v714 = vsel %vm697, inf, %v658
        %v715 = vsel %vm698, inf, %v659
        %v716 = vsel %vm699, inf, %v660
        %v717 = vmin.f32 %v700, %v704
        %v718 = vmin.f32 %v701, %v705
        %v719 = vmin.f32 %v702, %v706
        %v720 = vmin.f32 %v703, %v707
        %v721 = vmin.f32 %v717, %v708
        %v722 = vmin.f32 %v718, %v709
        %v723 = vmin.f32 %v719, %v710
        %v724 = vmin.f32 %v720, %v711
        %v725 = vmin.f32 %v721, %v712
        %v726 = vmin.f32 %v722, %v713
        %v727 = vmin.f32 %v723, %v714
        %v728 = vmin.f32 %v724, %v715
        %v729 = vmin.f32 %v725, %v716
        %v730 = vmin.f32 %v729, %v726
        %v731 = vmin.f32 %v727, %v728
        %v732 = vmin.f32 %v730, %v731
        %v733 = vrot.slane %v732, 4
        %v734 = vmin.f32 %v732, %v733
        %v735 = vrot.slane %v734, 2
        %v736 = vmin.f32 %v734, %v735
        %v737 = vrot.slane %v736, 1
        %v738 = vmin.f32 %v736, %v737
        %vm739 = vcmp.eq.f32.partialorder %v700, %v738
        %vm740 = vcmp.eq.f32.partialorder %v701, %v738
        %vm741 = vcmp.eq.f32.partialorder %v702, %v738
        %vm742 = vcmp.eq.f32.partialorder %v703, %v738
        %vm743 = vcmp.eq.f32.partialorder %v704, %v738
        %vm744 = vcmp.eq.f32.partialorder %v705, %v738
        %vm745 = vcmp.eq.f32.partialorder %v706, %v738
        %vm746 = vcmp.eq.f32.partialorder %v707, %v738
        %vm747 = vcmp.eq.f32.partialorder %v708, %v738
        %vm748 = vcmp.eq.f32.partialorder %v709, %v738
        %vm749 = vcmp.eq.f32.partialorder %v710, %v738
        %vm750 = vcmp.eq.f32.partialorder %v711, %v738
        %vm751 = vcmp.eq.f32.partialorder %v712, %v738
        %vm752 = vcmp.eq.f32.partialorder %v713, %v738
        %vm753 = vcmp.eq.f32.partialorder %v714, %v738
        %vm754 = vcmp.eq.f32.partialorder %v715, %v738
        %vm755 = vcmp.eq.f32.partialorder %v716, %v738
        %v756 = vsel %vm739, inf, %v700
        %v757 = vsel %vm740, inf, %v701
        %v758 = vsel %vm741, inf, %v702
        %v759 = vsel %vm742, inf, %v703
        %v760 = vsel %vm743, inf, %v704
        %v761 = vsel %vm744, inf, %v705
        %v762 = vsel %vm745, inf, %v706
        %v763 = vsel %vm746, inf, %v707
        %v764 = vsel %vm747, inf, %v708
        %v765 = vsel %vm748, inf, %v709
        %v766 = vsel %vm749, inf, %v710
        %v767 = vsel %vm750, inf, %v711
        %v768 = vsel %vm751, inf, %v712
        %v769 = vsel %vm752, inf, %v713
        %v770 = vsel %vm753, inf, %v714
        %v771 = vsel %vm754, inf, %v715
        %v772 = vsel %vm755, inf, %v716
        %v773 = vmin.f32 %v756, %v760
        %v774 = vmin.f32 %v757, %v761
        %v775 = vmin.f32 %v758, %v762
        %v776 = vmin.f32 %v759, %v763
        %v777 = vmin.f32 %v773, %v764
        %v778 = vmin.f32 %v774, %v765
        %v779 = vmin.f32 %v775, %v766
        %v780 = vmin.f32 %v776, %v767
        %v781 = vmin.f32 %v777, %v768
        %v782 = vmin.f32 %v778, %v769
        %v783 = vmin.f32 %v779, %v770
        %v784 = vmin.f32 %v780, %v771
        %v785 = vmin.f32 %v781, %v772
        %v786 = vmin.f32 %v785, %v782
        %v787 = vmin.f32 %v783, %v784
        %v788 = vmin.f32 %v786, %v787
        %v789 = vrot.slane %v788, 4
        %v790 = vmin.f32 %v788, %v789
        %v791 = vrot.slane %v790, 2
        %v792 = vmin.f32 %v790, %v791
        %v793 = vrot.slane %v792, 1
        %v794 = vmin.f32 %v792, %v793
        %vm795 = vcmp.eq.f32.partialorder %v756, %v794
        %vm796 = vcmp.eq.f32.partialorder %v757, %v794
        %vm797 = vcmp.eq.f32.partialorder %v758, %v794
        %vm798 = vcmp.eq.f32.partialorder %v759, %v794
        %vm799 = vcmp.eq.f32.partialorder %v760, %v794
        %vm800 = vcmp.eq.f32.partialorder %v761, %v794
        %vm801 = vcmp.eq.f32.partialorder %v762, %v794
        %vm802 = vcmp.eq.f32.partialorder %v763, %v794
        %vm803 = vcmp.eq.f32.partialorder %v764, %v794
        %vm804 = vcmp.eq.f32.partialorder %v765, %v794
        %vm805 = vcmp.eq.f32.partialorder %v766, %v794
        %vm806 = vcmp.eq.f32.partialorder %v767, %v794
        %vm807 = vcmp.eq.f32.partialorder %v768, %v794
        %vm808 = vcmp.eq.f32.partialorder %v769, %v794
        %vm809 = vcmp.eq.f32.partialorder %v770, %v794
        %vm810 = vcmp.eq.f32.partialorder %v771, %v794
        %vm811 = vcmp.eq.f32.partialorder %v772, %v794
        %v812 = vsel %vm795, inf, %v756
        %v813 = vsel %vm796, inf, %v757
        %v814 = vsel %vm797, inf, %v758
        %v815 = vsel %vm798, inf, %v759
        %v816 = vsel %vm799, inf, %v760
        %v817 = vsel %vm800, inf, %v761
        %v818 = vsel %vm801, inf, %v762
        %v819 = vsel %vm802, inf, %v763
        %v820 = vsel %vm803, inf, %v764
        %v821 = vsel %vm804, inf, %v765
        %v822 = vsel %vm805, inf, %v766
        %v823 = vsel %vm806, inf, %v767
        %v824 = vsel %vm807, inf, %v768
        %v825 = vsel %vm808, inf, %v769
        %v826 = vsel %vm809, inf, %v770
        %v827 = vsel %vm810, inf, %v771
        %v828 = vsel %vm811, inf, %v772
        %v829 = vmin.f32 %v812, %v816
        %v830 = vmin.f32 %v813, %v817
        %v831 = vmin.f32 %v814, %v818
        %v832 = vmin.f32 %v815, %v819
        %v833 = vmin.f32 %v829, %v820
        %v834 = vmin.f32 %v830, %v821
        %v835 = vmin.f32 %v831, %v822
        %v836 = vmin.f32 %v832, %v823
        %v837 = vmin.f32 %v833, %v824
        %v838 = vmin.f32 %v834, %v825
        %v839 = vmin.f32 %v835, %v826
        %v840 = vmin.f32 %v836, %v827
        %v841 = vmin.f32 %v837, %v828
        %v842 = vmin.f32 %v841, %v838
        %v843 = vmin.f32 %v839, %v840
        %v844 = vmin.f32 %v842, %v843
        %v845 = vrot.slane %v844, 4
        %v846 = vmin.f32 %v844, %v845
        %v847 = vrot.slane %v846, 2
        %v848 = vmin.f32 %v846, %v847
        %v849 = vrot.slane %v848, 1
        %v850 = vmin.f32 %v848, %v849
        %vm851 = vcmp.eq.f32.partialorder %v812, %v850
        %vm852 = vcmp.eq.f32.partialorder %v813, %v850
        %vm853 = vcmp.eq.f32.partialorder %v814, %v850
        %vm854 = vcmp.eq.f32.partialorder %v815, %v850
        %vm855 = vcmp.eq.f32.partialorder %v816, %v850
        %vm856 = vcmp.eq.f32.partialorder %v817, %v850
        %vm857 = vcmp.eq.f32.partialorder %v818, %v850
        %vm858 = vcmp.eq.f32.partialorder %v819, %v850
        %vm859 = vcmp.eq.f32.partialorder %v820, %v850
        %vm860 = vcmp.eq.f32.partialorder %v821, %v850
        %vm861 = vcmp.eq.f32.partialorder %v822, %v850
        %vm862 = vcmp.eq.f32.partialorder %v823, %v850
        %vm863 = vcmp.eq.f32.partialorder %v824, %v850
        %vm864 = vcmp.eq.f32.partialorder %v825, %v850
        %vm865 = vcmp.eq.f32.partialorder %v826, %v850
        %vm866 = vcmp.eq.f32.partialorder %v827, %v850
        %vm867 = vcmp.eq.f32.partialorder %v828, %v850
        %v868 = vsel %vm851, inf, %v812
        %v869 = vsel %vm852, inf, %v813
        %v870 = vsel %vm853, inf, %v814
        %v871 = vsel %vm854, inf, %v815
        %v872 = vsel %vm855, inf, %v816
        %v873 = vsel %vm856, inf, %v817
        %v874 = vsel %vm857, inf, %v818
        %v875 = vsel %vm858, inf, %v819
        %v876 = vsel %vm859, inf, %v820
        %v877 = vsel %vm860, inf, %v821
        %v878 = vsel %vm861, inf, %v822
        %v879 = vsel %vm862, inf, %v823
        %v880 = vsel %vm863, inf, %v824
        %v881 = vsel %vm864, inf, %v825
        %v882 = vsel %vm865, inf, %v826
        %v883 = vsel %vm866, inf, %v827
        %v884 = vsel %vm867, inf, %v828
        %v885 = vmin.f32 %v868, %v872
        %v886 = vmin.f32 %v869, %v873
        %v887 = vmin.f32 %v870, %v874
        %v888 = vmin.f32 %v871, %v875
        %v889 = vmin.f32 %v885, %v876
        %v890 = vmin.f32 %v886, %v877
        %v891 = vmin.f32 %v887, %v878
        %v892 = vmin.f32 %v888, %v879
        %v893 = vmin.f32 %v889, %v880
        %v894 = vmin.f32 %v890, %v881
        %v895 = vmin.f32 %v891, %v882
        %v896 = vmin.f32 %v892, %v883
        %v897 = vmin.f32 %v893, %v884
        %v898 = vmin.f32 %v897, %v894
        %v899 = vmin.f32 %v895, %v896
        %v900 = vmin.f32 %v898, %v899
        %v901 = vrot.slane %v900, 4
        %v902 = vmin.f32 %v900, %v901
        %v903 = vrot.slane %v902, 2
        %v904 = vmin.f32 %v902, %v903
        %v905 = vrot.slane %v904, 1
        %v906 = vmin.f32 %v904, %v905
        %vm907 = vcmp.eq.f32.partialorder %v868, %v906
        %vm908 = vcmp.eq.f32.partialorder %v869, %v906
        %vm909 = vcmp.eq.f32.partialorder %v870, %v906
        %vm910 = vcmp.eq.f32.partialorder %v871, %v906
        %vm911 = vcmp.eq.f32.partialorder %v872, %v906
        %vm912 = vcmp.eq.f32.partialorder %v873, %v906
        %vm913 = vcmp.eq.f32.partialorder %v874, %v906
        %vm914 = vcmp.eq.f32.partialorder %v875, %v906
        %vm915 = vcmp.eq.f32.partialorder %v876, %v906
        %vm916 = vcmp.eq.f32.partialorder %v877, %v906
        %vm917 = vcmp.eq.f32.partialorder %v878, %v906
        %vm918 = vcmp.eq.f32.partialorder %v879, %v906
        %vm919 = vcmp.eq.f32.partialorder %v880, %v906
        %vm920 = vcmp.eq.f32.partialorder %v881, %v906
        %vm921 = vcmp.eq.f32.partialorder %v882, %v906
        %vm922 = vcmp.eq.f32.partialorder %v883, %v906
        %vm923 = vcmp.eq.f32.partialorder %v884, %v906
        %v924 = vsel %vm907, inf, %v868
        %v925 = vsel %vm908, inf, %v869
        %v926 = vsel %vm909, inf, %v870
        %v927 = vsel %vm910, inf, %v871
        %v928 = vsel %vm911, inf, %v872
        %v929 = vsel %vm912, inf, %v873
        %v930 = vsel %vm913, inf, %v874
        %v931 = vsel %vm914, inf, %v875
        %v932 = vsel %vm915, inf, %v876
        %v933 = vsel %vm916, inf, %v877
        %v934 = vsel %vm917, inf, %v878
        %v935 = vsel %vm918, inf, %v879
        %v936 = vsel %vm919, inf, %v880
        %v937 = vsel %vm920, inf, %v881
        %v938 = vsel %vm921, inf, %v882
        %v939 = vsel %vm922, inf, %v883
        %v940 = vsel %vm923, inf, %v884
        %v941 = vmin.f32 %v924, %v928
        %v942 = vmin.f32 %v925, %v929
        %v943 = vmin.f32 %v926, %v930
        %v944 = vmin.f32 %v927, %v931
        %v945 = vmin.f32 %v941, %v932
        %v946 = vmin.f32 %v942, %v933
        %v947 = vmin.f32 %v943, %v934
        %v948 = vmin.f32 %v944, %v935
        %v949 = vmin.f32 %v945, %v936
        %v950 = vmin.f32 %v946, %v937
        %v951 = vmin.f32 %v947, %v938
        %v952 = vmin.f32 %v948, %v939
        %v953 = vmin.f32 %v949, %v940
        %v954 = vmin.f32 %v953, %v950
        %v955 = vmin.f32 %v951, %v952
        %v956 = vmin.f32 %v954, %v955
        %v957 = vrot.slane %v956, 4
        %v958 = vmin.f32 %v956, %v957
        %v959 = vrot.slane %v958, 2
        %v960 = vmin.f32 %v958, %v959
        %v961 = vrot.slane %v960, 1
        %v962 = vmin.f32 %v960, %v961
        %vm963 = vcmp.eq.f32.partialorder %v924, %v962
        %vm964 = vcmp.eq.f32.partialorder %v925, %v962
        %vm965 = vcmp.eq.f32.partialorder %v926, %v962
        %vm966 = vcmp.eq.f32.partialorder %v927, %v962
        %vm967 = vcmp.eq.f32.partialorder %v928, %v962
        %vm968 = vcmp.eq.f32.partialorder %v929, %v962
        %vm969 = vcmp.eq.f32.partialorder %v930, %v962
        %vm970 = vcmp.eq.f32.partialorder %v931, %v962
        %vm971 = vcmp.eq.f32.partialorder %v932, %v962
        %vm972 = vcmp.eq.f32.partialorder %v933, %v962
        %vm973 = vcmp.eq.f32.partialorder %v934, %v962
        %vm974 = vcmp.eq.f32.partialorder %v935, %v962
        %vm975 = vcmp.eq.f32.partialorder %v936, %v962
        %vm976 = vcmp.eq.f32.partialorder %v937, %v962
        %vm977 = vcmp.eq.f32.partialorder %v938, %v962
        %vm978 = vcmp.eq.f32.partialorder %v939, %v962
        %vm979 = vcmp.eq.f32.partialorder %v940, %v962
        %v980 = vsel %vm963, inf, %v924
        %v981 = vsel %vm964, inf, %v925
        %v982 = vsel %vm965, inf, %v926
        %v983 = vsel %vm966, inf, %v927
        %v984 = vsel %vm967, inf, %v928
        %v985 = vsel %vm968, inf, %v929
        %v986 = vsel %vm969, inf, %v930
        %v987 = vsel %vm970, inf, %v931
        %v988 = vsel %vm971, inf, %v932
        %v989 = vsel %vm972, inf, %v933
        %v990 = vsel %vm973, inf, %v934
        %v991 = vsel %vm974, inf, %v935
        %v992 = vsel %vm975, inf, %v936
        %v993 = vsel %vm976, inf, %v937
        %v994 = vsel %vm977, inf, %v938
        %v995 = vsel %vm978, inf, %v939
        %v996 = vsel %vm979, inf, %v940
        %v997 = vmin.f32 %v980, %v984
        %v998 = vmin.f32 %v981, %v985
        %v999 = vmin.f32 %v982, %v986
        %v1000 = vmin.f32 %v983, %v987
        %v1001 = vmin.f32 %v997, %v988
        %v1002 = vmin.f32 %v998, %v989
        %v1003 = vmin.f32 %v999, %v990
        %v1004 = vmin.f32 %v1000, %v991
        %v1005 = vmin.f32 %v1001, %v992
        %v1006 = vmin.f32 %v1002, %v993
        %v1007 = vmin.f32 %v1003, %v994
        %v1008 = vmin.f32 %v1004, %v995
        %v1009 = vmin.f32 %v1005, %v996
        %v1010 = vmin.f32 %v1009, %v1006
        %v1011 = vmin.f32 %v1007, %v1008
        %v1012 = vmin.f32 %v1010, %v1011
        %v1013 = vrot.slane %v1012, 4
        %v1014 = vmin.f32 %v1012, %v1013
        %v1015 = vrot.slane %v1014, 2
        %v1016 = vmin.f32 %v1014, %v1015
        %v1017 = vrot.slane %v1016, 1
        %v1018 = vmin.f32 %v1016, %v1017
        %vm1019 = vcmask 1040384
        %v1020 = vsel %vm1019, %v626, %v682
        %vm1021 = vcmask 1041408
        %v1022 = vsel %vm1021, %v1020, %v738
        %v1023 = vsel %vm249, %v1022, %v794
        %v1024 = vsel %vm251, %v1023, %v850
        %v1025 = vsel %vm340, %v1024, %v906
        %vm1026 = vcmask 1045504
        %v1027 = vsel %vm1026, %v1025, %v962
        %vm1028 = vcmask 1046528
        %v1029 = vsel %vm1028, %v1027, %v1018
        %1030 = vst [vmem:[#allocation2] sm:$0xff] %v1029
        // Predicated region
        $region41: #{local_feature_aggregation.4} parent=27 // pred_check
          %p1031 = pneg %p223
        $region42: #{local_feature_aggregation.4} parent=27 // pred_check_branch
          %1033 = sbr.rel (%p1031) target = $region44
        $region43: #{local_feature_aggregation.4} parent=27 // pred_region
          %v1034 = vld [vmem:[#allocation2] sm:$0xff]
          %v1036 = vand.u32 %v1034, 15
          %1037 = vst [vmem:[%s222] sm:$0xff] %v1036
        $region44: #{local_feature_aggregation.4} parent=27 // pred_fallthru
          _
        %s1038 = sand.u32 %s107, 1
        %s1039 = scalar_lea.sflag [#allocation5], %s1038
        %s1040 = sand.u32 %s107, 1
        %s1041 = smul.addr %s1040, 8
        %s1042 = scalar_lea.vmem [#allocation8], %s1041
        // Predicated region
        $region45: #{local_feature_aggregation.4} parent=27 // pred_check
          %p1043 = pneg %p117
        $region46: #{local_feature_aggregation.4} parent=27 // pred_check_branch
          %1045 = sbr.rel (%p1043) target = $region48
        $region47: #{local_feature_aggregation.4} parent=27 // pred_region
          %s1047 = ssub.s32 128, 128
          %1048 = vsyncadd %s1039, %s1047
          %s1049 = sadd.s32 %s27, %s28
          %s1050 = smul.addr %s1049, 128
          %s1051 = scalar_lea.hbm %s2, %s1050
          %s1053 = sshll.u32 %s1042, 4
          %s1054 = int_to_ptr.vmem [resolvable:$true] %s1053
          %1056 = dma.vmem_to_hbm [thread:$0]  %s1054, 128, %s1051, %s1039
        $region48: #{local_feature_aggregation.4} parent=27 // pred_fallthru
          _
      $region28: #{local_feature_aggregation.4} parent=5 // pred_fallthru
        _
      %p1057 = scmp.le.s32.totalorder 2, %s17
      // Predicated region
      $region49: #{local_feature_aggregation.4} parent=5 // pred_check
        %p1058 = pneg %p1057
      $region50: #{local_feature_aggregation.4} parent=5 // pred_check_branch
        %1060 = sbr.rel (%p1058) target = $region52
      $region51: #{local_feature_aggregation.4} parent=5 // pred_region
        %s1061 = ssub.s32 %s17, 2
        // Predicated region
        $region53: #{local_feature_aggregation.4} parent=51 // pred_check
          %p1062 = pneg %p123
        $region54: #{local_feature_aggregation.4} parent=51 // pred_check_branch
          %1064 = sbr.rel (%p1062) target = $region56
        $region55: #{local_feature_aggregation.4} parent=51 // pred_region
          %s1065 = sand.u32 %s108, 1
          %s1066 = scalar_lea.sflag [#allocation5], %s1065
          %s1067 = sand.u32 %s108, 1
          %s1068 = smul.addr %s1067, 8
          %s1069 = scalar_lea.vmem [#allocation8], %s1068
          %1070 = dma.done %s1066, 128
        $region56: #{local_feature_aggregation.4} parent=51 // pred_fallthru
          _
      $region52: #{local_feature_aggregation.4} parent=5 // pred_fallthru
        _
    $region6: #{local_feature_aggregation.4} parent=1 // loop_footer
      %s21 = sadd.s32 1, %s17
    $region7: #{local_feature_aggregation.4} parent=1 // loop_footer_branch
      %16 = sbr.rel target = $region3
    $region8: #{local_feature_aggregation.4} parent=1 // loop_exit
      _
    %1071 = vsyncpa [#allocation4], 1
    %s1072 = scalar_lea.sflag [#allocation4], 1
    %1073 = vsyncpa %s1072, 1
    %1074 = vsyncpa [#allocation7], 1
    %s1075 = scalar_lea.sflag [#allocation7], 1
    %1076 = vsyncpa %s1075, 1
    %1077 = vsyncpa [#allocation5], 1
    %s1078 = scalar_lea.sflag [#allocation5], 1
    %1079 = vsyncpa %s1078, 1

// kernel: local_feature_aggregation.6
$region0: #{local_feature_aggregation.6}
  #allocation0 [shape = 'u32[]', space=smem, size = 0x4, offset = 0x4, fixed_abs, tag = 'smem constant byte address 0x4 - core index']
  #allocation1 [shape = 'u32[144,128]{1,0:T(1,128)}', space=vmem, size = 0x12000, scoped, tag = 'internal scratch']
  %s0 = inlined_call_operand.hbm [shape: f32[2,3,128], index: 0, kind: input, shape index: {}]
  %s1 = inlined_call_operand.hbm [shape: f32[2,8,3,128], index: 1, kind: input, shape index: {}]
  %s2 = inlined_call_operand.hbm [shape: bf16[2,8,8,128], index: 2, kind: input, shape index: {}]
  %s3 = inlined_call_operand.hbm [shape: f32[8,3], index: 3, kind: input, shape index: {}]
  %s4 = inlined_call_operand.hbm [shape: f32[8,4], index: 4, kind: input, shape index: {}]
  %s5 = inlined_call_operand.hbm [shape: f32[8,1], index: 5, kind: input, shape index: {}]
  %s6 = inlined_call_operand.hbm [shape: f32[16,16], index: 6, kind: input, shape index: {}]
  %s7 = inlined_call_operand.hbm [shape: f32[8,16], index: 7, kind: input, shape index: {}]
  %s8 = inlined_call_operand.hbm [shape: f32[8,1], index: 8, kind: input, shape index: {}]
  %s9 = inlined_call_operand.hbm [shape: f32[2,8,128], index: 9, kind: output, shape index: {}]
  %s10 = sld [smem:[#allocation0]]
  $region105: #{local_feature_aggregation.6} parent=0
    _
  %s12 = ssub.s32 1, %s10
  %s13 = scalar_select 0, %s12, %s10
  $region1: #{local_feature_aggregation.6} parent=0
    #allocation2 [shape = 'u8[4096]{0}', space=vmem, size = 0x1000, scoped, tag = 'input window, operand 0']
    #allocation3 [shape = 's32[2]{0}', space=sflag, size = 0x8, scoped, tag = 'scoped memory for local_feature_aggregation.6']
    #allocation4 [shape = 's32[2]{0}', space=sflag, size = 0x8, scoped, tag = 'scoped memory for local_feature_aggregation.6']
    #allocation5 [shape = 'u8[32768]{0}', space=vmem, size = 0x8000, scoped, tag = 'input window, operand 1']
    #allocation6 [shape = 's32[2]{0}', space=sflag, size = 0x8, scoped, tag = 'scoped memory for local_feature_aggregation.6']
    #allocation7 [shape = 'u8[32768]{0}', space=vmem, size = 0x8000, scoped, tag = 'input window, operand 2']
    #allocation8 [shape = 'u8[4096]{0}', space=vmem, size = 0x1000, scoped, tag = 'input window, operand 3, single buffered']
    #allocation9 [shape = 's32[1]{0}', space=sflag, size = 0x4, scoped, tag = 'scoped memory for local_feature_aggregation.6']
    #allocation10 [shape = 'u8[4096]{0}', space=vmem, size = 0x1000, scoped, tag = 'input window, operand 4, single buffered']
    #allocation11 [shape = 'u8[4096]{0}', space=vmem, size = 0x1000, scoped, tag = 'input window, operand 5, single buffered']
    #allocation12 [shape = 's32[1]{0}', space=sflag, size = 0x4, scoped, tag = 'scoped memory for local_feature_aggregation.6']
    #allocation13 [shape = 'u8[8192]{0}', space=vmem, size = 0x2000, scoped, tag = 'input window, operand 6, single buffered']
    #allocation14 [shape = 'u8[4096]{0}', space=vmem, size = 0x1000, scoped, tag = 'input window, operand 7, single buffered']
    #allocation15 [shape = 's32[1]{0}', space=sflag, size = 0x4, scoped, tag = 'scoped memory for local_feature_aggregation.6']
    #allocation16 [shape = 'u8[4096]{0}', space=vmem, size = 0x1000, scoped, tag = 'input window, operand 8, single buffered']
    #allocation17 [shape = 'u8[8192]{0}', space=vmem, size = 0x2000, scoped, tag = 'output window, operand 0']
    %14 = vsyncpa [#allocation3], 0
    %s15 = scalar_lea.sflag [#allocation3], 1
    %16 = vsyncpa %s15, 0
    %17 = vsyncpa [#allocation6], 0
    %s18 = scalar_lea.sflag [#allocation6], 1
    %19 = vsyncpa %s18, 0
    %20 = vsyncpa [#allocation9], 0
    %21 = vsyncpa [#allocation12], 0
    %22 = vsyncpa [#allocation15], 0
    %23 = vsyncpa [#allocation4], 0
    %s24 = scalar_lea.sflag [#allocation4], 1
    %25 = vsyncpa %s24, 0
    loop: start=0, step=1, limit=4
    $region2: #{local_feature_aggregation.6} parent=1 // loop_pre_header
      _
    $region3: #{local_feature_aggregation.6} parent=1 // loop_header
      %s27 = sphi 0, %s31
      %p28 = scmp.ge.s32.totalorder %s27, 4
      %s34 = sphi 0, %s46
      %s35 = sphi 0, %s42
      %s36 = sphi 0, %s34
      %s37 = sphi 0, %s35
      %s38 = sphi 0, %s36
      %s39 = sphi 0, %s37
      %s51 = sphi 0, %s53
      %s54 = sphi 0, %s51
      %s55 = sphi 0, %s54
      %s71 = sphi 0, %s55
      %s79 = sphi 0, %s81
      %s82 = sphi 0, %s79
      %s83 = sphi 0, %s82
      %s99 = sphi 0, %s83
      %s107 = sphi 0, %s109
      %s110 = sphi 0, %s107
      %s111 = sphi 0, %s110
      %s127 = sphi 0, %s111
      %s131 = sphi 0, %s131
      %s133 = sphi 0, %s131
      %s134 = sphi 0, %s133
      %s148 = sphi 0, %s134
      %s152 = sphi 0, %s152
      %s154 = sphi 0, %s152
      %s155 = sphi 0, %s154
      %s169 = sphi 0, %s155
      %s173 = sphi 0, %s173
      %s175 = sphi 0, %s173
      %s176 = sphi 0, %s175
      %s190 = sphi 0, %s176
      %s194 = sphi 0, %s194
      %s196 = sphi 0, %s194
      %s197 = sphi 0, %s196
      %s211 = sphi 0, %s197
      %s215 = sphi 0, %s215
      %s217 = sphi 0, %s215
      %s218 = sphi 0, %s217
      %s232 = sphi 0, %s218
      %s236 = sphi 0, %s236
      %s238 = sphi 0, %s236
      %s239 = sphi 0, %s238
      %s253 = sphi 0, %s239
      %s261 = sphi 0, %s263
      %s264 = sphi 0, %s261
      %s265 = sphi 0, %s264
      %s281 = sphi 0, %s265
    $region4: #{local_feature_aggregation.6} parent=1 // loop_header_branch
      %30 = sbr.rel (%p28) target = $region8
    $region5: #{local_feature_aggregation.6} parent=1 // loop_body
      %s32 = ssub.s32 %s27, 1
      %s33 = ssub.s32 %s27, 2
      %s40 = sadd.s32 1, %s35
      %p41 = scmp.ge.s32.totalorder %s40, 2
      %s42 = scalar_select %p41, 0, %s40
      %s43 = sadd.s32 1, %s34
      %s44 = scalar_select %p41, %s43, %s34
      %p45 = scmp.ge.s32.totalorder %s44, 1
      %s46 = scalar_select %p45, 0, %s44
      %s47 = ssub.s32 %s35, %s42
      %s48 = ssub.s32 %s34, %s46
      %s49 = sor.u32 %s47, %s48
      %p50 = scmp.eq.s32.totalorder %s49, 0
      %s52 = sadd.s32 %s51, 1
      %s53 = scalar_select %p50, %s51, %s52
      %p56 = pneg %p50
      %p57 = scmp.eq.s32.totalorder %s27, 1
      %p58 = por %p56, %p57
      %p59 = scmp.ne.s32.totalorder %s51, %s54
      %p60 = scmp.eq.s32.totalorder %s27, 0
      %p61 = por %p59, %p60
      %p62 = scmp.ne.s32.totalorder %s51, %s54
      %p63 = scmp.eq.s32.totalorder %s32, 1
      %p64 = por %p62, %p63
      %p65 = scmp.ne.s32.totalorder %s54, %s55
      %p66 = scmp.eq.s32.totalorder %s32, 0
      %p67 = por %p65, %p66
      %p68 = scmp.ne.s32.totalorder %s54, %s55
      %p69 = scmp.eq.s32.totalorder %s33, 1
      %p70 = por %p68, %p69
      %p72 = scmp.ne.s32.totalorder %s55, %s71
      %p73 = scmp.eq.s32.totalorder %s33, 0
      %p74 = por %p72, %p73
      %s75 = ssub.s32 %s35, %s42
      %s76 = ssub.s32 %s34, %s46
      %s77 = sor.u32 %s75, %s76
      %p78 = scmp.eq.s32.totalorder %s77, 0
      %s80 = sadd.s32 %s79, 1
      %s81 = scalar_select %p78, %s79, %s80
      %p84 = pneg %p78
      %p85 = scmp.eq.s32.totalorder %s27, 1
      %p86 = por %p84, %p85
      %p87 = scmp.ne.s32.totalorder %s79, %s82
      %p88 = scmp.eq.s32.totalorder %s27, 0
      %p89 = por %p87, %p88
      %p90 = scmp.ne.s32.totalorder %s79, %s82
      %p91 = scmp.eq.s32.totalorder %s32, 1
      %p92 = por %p90, %p91
      %p93 = scmp.ne.s32.totalorder %s82, %s83
      %p94 = scmp.eq.s32.totalorder %s32, 0
      %p95 = por %p93, %p94
      %p96 = scmp.ne.s32.totalorder %s82, %s83
      %p97 = scmp.eq.s32.totalorder %s33, 1
      %p98 = por %p96, %p97
      %p100 = scmp.ne.s32.totalorder %s83, %s99
      %p101 = scmp.eq.s32.totalorder %s33, 0
      %p102 = por %p100, %p101
      %s103 = ssub.s32 %s35, %s42
      %s104 = ssub.s32 %s34, %s46
      %s105 = sor.u32 %s103, %s104
      %p106 = scmp.eq.s32.totalorder %s105, 0
      %s108 = sadd.s32 %s107, 1
      %s109 = scalar_select %p106, %s107, %s108
      %p112 = pneg %p106
      %p113 = scmp.eq.s32.totalorder %s27, 1
      %p114 = por %p112, %p113
      %p115 = scmp.ne.s32.totalorder %s107, %s110
      %p116 = scmp.eq.s32.totalorder %s27, 0
      %p117 = por %p115, %p116
      %p118 = scmp.ne.s32.totalorder %s107, %s110
      %p119 = scmp.eq.s32.totalorder %s32, 1
      %p120 = por %p118, %p119
      %p121 = scmp.ne.s32.totalorder %s110, %s111
      %p122 = scmp.eq.s32.totalorder %s32, 0
      %p123 = por %p121, %p122
      %p124 = scmp.ne.s32.totalorder %s110, %s111
      %p125 = scmp.eq.s32.totalorder %s33, 1
      %p126 = por %p124, %p125
      %p128 = scmp.ne.s32.totalorder %s111, %s127
      %p129 = scmp.eq.s32.totalorder %s33, 0
      %p130 = por %p128, %p129
      %s132 = sadd.s32 %s131, 1
      %p135 = scmp.eq.s32.totalorder %s27, 1
      %p136 = scmp.ne.s32.totalorder %s131, %s133
      %p137 = scmp.eq.s32.totalorder %s27, 0
      %p138 = por %p136, %p137
      %p139 = scmp.ne.s32.totalorder %s131, %s133
      %p140 = scmp.eq.s32.totalorder %s32, 1
      %p141 = por %p139, %p140
      %p142 = scmp.ne.s32.totalorder %s133, %s134
      %p143 = scmp.eq.s32.totalorder %s32, 0
      %p144 = por %p142, %p143
      %p145 = scmp.ne.s32.totalorder %s133, %s134
      %p146 = scmp.eq.s32.totalorder %s33, 1
      %p147 = por %p145, %p146
      %p149 = scmp.ne.s32.totalorder %s134, %s148
      %p150 = scmp.eq.s32.totalorder %s33, 0
      %p151 = por %p149, %p150
      %s153 = sadd.s32 %s152, 1
      %p156 = scmp.eq.s32.totalorder %s27, 1
      %p157 = scmp.ne.s32.totalorder %s152, %s154
      %p158 = scmp.eq.s32.totalorder %s27, 0
      %p159 = por %p157, %p158
      %p160 = scmp.ne.s32.totalorder %s152, %s154
      %p161 = scmp.eq.s32.totalorder %s32, 1
      %p162 = por %p160, %p161
      %p163 = scmp.ne.s32.totalorder %s154, %s155
      %p164 = scmp.eq.s32.totalorder %s32, 0
      %p165 = por %p163, %p164
      %p166 = scmp.ne.s32.totalorder %s154, %s155
      %p167 = scmp.eq.s32.totalorder %s33, 1
      %p168 = por %p166, %p167
      %p170 = scmp.ne.s32.totalorder %s155, %s169
      %p171 = scmp.eq.s32.totalorder %s33, 0
      %p172 = por %p170, %p171
      %s174 = sadd.s32 %s173, 1
      %p177 = scmp.eq.s32.totalorder %s27, 1
      %p178 = scmp.ne.s32.totalorder %s173, %s175
      %p179 = scmp.eq.s32.totalorder %s27, 0
      %p180 = por %p178, %p179
      %p181 = scmp.ne.s32.totalorder %s173, %s175
      %p182 = scmp.eq.s32.totalorder %s32, 1
      %p183 = por %p181, %p182
      %p184 = scmp.ne.s32.totalorder %s175, %s176
      %p185 = scmp.eq.s32.totalorder %s32, 0
      %p186 = por %p184, %p185
      %p187 = scmp.ne.s32.totalorder %s175, %s176
      %p188 = scmp.eq.s32.totalorder %s33, 1
      %p189 = por %p187, %p188
      %p191 = scmp.ne.s32.totalorder %s176, %s190
      %p192 = scmp.eq.s32.totalorder %s33, 0
      %p193 = por %p191, %p192
      %s195 = sadd.s32 %s194, 1
      %p198 = scmp.eq.s32.totalorder %s27, 1
      %p199 = scmp.ne.s32.totalorder %s194, %s196
      %p200 = scmp.eq.s32.totalorder %s27, 0
      %p201 = por %p199, %p200
      %p202 = scmp.ne.s32.totalorder %s194, %s196
      %p203 = scmp.eq.s32.totalorder %s32, 1
      %p204 = por %p202, %p203
      %p205 = scmp.ne.s32.totalorder %s196, %s197
      %p206 = scmp.eq.s32.totalorder %s32, 0
      %p207 = por %p205, %p206
      %p208 = scmp.ne.s32.totalorder %s196, %s197
      %p209 = scmp.eq.s32.totalorder %s33, 1
      %p210 = por %p208, %p209
      %p212 = scmp.ne.s32.totalorder %s197, %s211
      %p213 = scmp.eq.s32.totalorder %s33, 0
      %p214 = por %p212, %p213
      %s216 = sadd.s32 %s215, 1
      %p219 = scmp.eq.s32.totalorder %s27, 1
      %p220 = scmp.ne.s32.totalorder %s215, %s217
      %p221 = scmp.eq.s32.totalorder %s27, 0
      %p222 = por %p220, %p221
      %p223 = scmp.ne.s32.totalorder %s215, %s217
      %p224 = scmp.eq.s32.totalorder %s32, 1
      %p225 = por %p223, %p224
      %p226 = scmp.ne.s32.totalorder %s217, %s218
      %p227 = scmp.eq.s32.totalorder %s32, 0
      %p228 = por %p226, %p227
      %p229 = scmp.ne.s32.totalorder %s217, %s218
      %p230 = scmp.eq.s32.totalorder %s33, 1
      %p231 = por %p229, %p230
      %p233 = scmp.ne.s32.totalorder %s218, %s232
      %p234 = scmp.eq.s32.totalorder %s33, 0
      %p235 = por %p233, %p234
      %s237 = sadd.s32 %s236, 1
      %p240 = scmp.eq.s32.totalorder %s27, 1
      %p241 = scmp.ne.s32.totalorder %s236, %s238
      %p242 = scmp.eq.s32.totalorder %s27, 0
      %p243 = por %p241, %p242
      %p244 = scmp.ne.s32.totalorder %s236, %s238
      %p245 = scmp.eq.s32.totalorder %s32, 1
      %p246 = por %p244, %p245
      %p247 = scmp.ne.s32.totalorder %s238, %s239
      %p248 = scmp.eq.s32.totalorder %s32, 0
      %p249 = por %p247, %p248
      %p250 = scmp.ne.s32.totalorder %s238, %s239
      %p251 = scmp.eq.s32.totalorder %s33, 1
      %p252 = por %p250, %p251
      %p254 = scmp.ne.s32.totalorder %s239, %s253
      %p255 = scmp.eq.s32.totalorder %s33, 0
      %p256 = por %p254, %p255
      %s257 = ssub.s32 %s35, %s42
      %s258 = ssub.s32 %s34, %s46
      %s259 = sor.u32 %s257, %s258
      %p260 = scmp.eq.s32.totalorder %s259, 0
      %s262 = sadd.s32 %s261, 1
      %s263 = scalar_select %p260, %s261, %s262
      %p266 = pneg %p260
      %p267 = scmp.eq.s32.totalorder %s27, 1
      %p268 = por %p266, %p267
      %p269 = scmp.ne.s32.totalorder %s261, %s264
      %p270 = scmp.eq.s32.totalorder %s27, 0
      %p271 = por %p269, %p270
      %p272 = scmp.ne.s32.totalorder %s261, %s264
      %p273 = scmp.eq.s32.totalorder %s32, 1
      %p274 = por %p272, %p273
      %p275 = scmp.ne.s32.totalorder %s264, %s265
      %p276 = scmp.eq.s32.totalorder %s32, 0
      %p277 = por %p275, %p276
      %p278 = scmp.ne.s32.totalorder %s264, %s265
      %p279 = scmp.eq.s32.totalorder %s33, 1
      %p280 = por %p278, %p279
      %p282 = scmp.ne.s32.totalorder %s265, %s281
      %p283 = scmp.eq.s32.totalorder %s33, 0
      %p284 = por %p282, %p283
      %p285 = scmp.le.s32.totalorder 1, %s27
      %p286 = scmp.lt.s32.totalorder %s27, 3
      %p287 = pnand %p285, %p286
      %p288 = pneg %p287
      // Predicated region
      $region9: #{local_feature_aggregation.6} parent=5 // pred_check
        _
      $region10: #{local_feature_aggregation.6} parent=5 // pred_check_branch
        %290 = sbr.rel (%p287) target = $region12
      $region11: #{local_feature_aggregation.6} parent=5 // pred_region
        %s291 = ssub.s32 %s27, 1
        // Predicated region
        $region13: #{local_feature_aggregation.6} parent=11 // pred_check
          %p292 = pneg %p144
        $region14: #{local_feature_aggregation.6} parent=11 // pred_check_branch
          %294 = sbr.rel (%p292) target = $region16
        $region15: #{local_feature_aggregation.6} parent=11 // pred_region
          %s296 = ssub.s32 128, 128
          %297 = vsyncadd [#allocation9], %s296
          %s299 = sshll.u32 [#allocation8], 4
          %s300 = int_to_ptr.vmem [resolvable:$true] %s299
          %302 = dma.hbm_to_vmem [thread:$0]  %s3, 128, %s300, [#allocation9]
        $region16: #{local_feature_aggregation.6} parent=11 // pred_fallthru
          _
        // Predicated region
        $region17: #{local_feature_aggregation.6} parent=11 // pred_check
          %p303 = pneg %p165
        $region18: #{local_feature_aggregation.6} parent=11 // pred_check_branch
          %305 = sbr.rel (%p303) target = $region20
        $region19: #{local_feature_aggregation.6} parent=11 // pred_region
          %s307 = ssub.s32 128, 128
          %308 = vsyncadd [#allocation9], %s307
          %s310 = sshll.u32 [#allocation10], 4
          %s311 = int_to_ptr.vmem [resolvable:$true] %s310
          %313 = dma.hbm_to_vmem [thread:$0]  %s4, 128, %s311, [#allocation9]
        $region20: #{local_feature_aggregation.6} parent=11 // pred_fallthru
          _
        // Predicated region
        $region21: #{local_feature_aggregation.6} parent=11 // pred_check
          %p314 = pneg %p186
        $region22: #{local_feature_aggregation.6} parent=11 // pred_check_branch
          %316 = sbr.rel (%p314) target = $region24
        $region23: #{local_feature_aggregation.6} parent=11 // pred_region
          %s318 = ssub.s32 128, 128
          %319 = vsyncadd [#allocation12], %s318
          %s321 = sshll.u32 [#allocation11], 4
          %s322 = int_to_ptr.vmem [resolvable:$true] %s321
          %324 = dma.hbm_to_vmem [thread:$0]  %s5, 128, %s322, [#allocation12]
        $region24: #{local_feature_aggregation.6} parent=11 // pred_fallthru
          _
        // Predicated region
        $region25: #{local_feature_aggregation.6} parent=11 // pred_check
          %p325 = pneg %p207
        $region26: #{local_feature_aggregation.6} parent=11 // pred_check_branch
          %327 = sbr.rel (%p325) target = $region28
        $region27: #{local_feature_aggregation.6} parent=11 // pred_region
          %s329 = ssub.s32 256, 256
          %330 = vsyncadd [#allocation12], %s329
          %s331 = sshll.u32 [#allocation13], 4
          %s332 = int_to_ptr.vmem [resolvable:$true] %s331
          %337 = dma.hbm_to_vmem [thread:$0]  %s6, 256, %s332, [#allocation12], 128, 128, 8
        $region28: #{local_feature_aggregation.6} parent=11 // pred_fallthru
          _
        // Predicated region
        $region29: #{local_feature_aggregation.6} parent=11 // pred_check
          %p338 = pneg %p228
        $region30: #{local_feature_aggregation.6} parent=11 // pred_check_branch
          %340 = sbr.rel (%p338) target = $region32
        $region31: #{local_feature_aggregation.6} parent=11 // pred_region
          %s342 = ssub.s32 128, 128
          %343 = vsyncadd [#allocation15], %s342
          %s345 = sshll.u32 [#allocation14], 4
          %s346 = int_to_ptr.vmem [resolvable:$true] %s345
          %348 = dma.hbm_to_vmem [thread:$0]  %s7, 128, %s346, [#allocation15]
        $region32: #{local_feature_aggregation.6} parent=11 // pred_fallthru
          _
        // Predicated region
        $region33: #{local_feature_aggregation.6} parent=11 // pred_check
          %p349 = pneg %p249
        $region34: #{local_feature_aggregation.6} parent=11 // pred_check_branch
          %351 = sbr.rel (%p349) target = $region36
        $region35: #{local_feature_aggregation.6} parent=11 // pred_region
          %s353 = ssub.s32 128, 128
          %354 = vsyncadd [#allocation15], %s353
          %s356 = sshll.u32 [#allocation16], 4
          %s357 = int_to_ptr.vmem [resolvable:$true] %s356
          %359 = dma.hbm_to_vmem [thread:$0]  %s8, 128, %s357, [#allocation15]
        $region36: #{local_feature_aggregation.6} parent=11 // pred_fallthru
          _
      $region12: #{local_feature_aggregation.6} parent=5 // pred_fallthru
        _
      %p360 = scmp.lt.s32.totalorder %s27, 2
      // Predicated region
      $region37: #{local_feature_aggregation.6} parent=5 // pred_check
        %p361 = pneg %p360
      $region38: #{local_feature_aggregation.6} parent=5 // pred_check_branch
        %363 = sbr.rel (%p361) target = $region40
      $region39: #{local_feature_aggregation.6} parent=5 // pred_region
        // Predicated region
        $region41: #{local_feature_aggregation.6} parent=39 // pred_check
          %p364 = pneg %p61
        $region42: #{local_feature_aggregation.6} parent=39 // pred_check_branch
          %366 = sbr.rel (%p364) target = $region44
        $region43: #{local_feature_aggregation.6} parent=39 // pred_region
          %s367 = sand.u32 %s51, 1
          %s368 = scalar_lea.sflag [#allocation3], %s367
          %s369 = sand.u32 %s51, 1
          %s370 = smul.addr %s369, 4
          %s371 = scalar_lea.vmem [#allocation2], %s370
          %s373 = ssub.s32 64, 64
          %374 = vsyncadd %s368, %s373
          %s375 = sadd.s32 %s34, %s35
          %s376 = smul.addr %s375, 64
          %s377 = scalar_lea.hbm %s0, %s376
          %s379 = sshll.u32 %s371, 4
          %s380 = int_to_ptr.vmem [resolvable:$true] %s379
          %382 = dma.hbm_to_vmem [thread:$0]  %s377, 64, %s380, %s368
        $region44: #{local_feature_aggregation.6} parent=39 // pred_fallthru
          _
        // Predicated region
        $region45: #{local_feature_aggregation.6} parent=39 // pred_check
          %p383 = pneg %p89
        $region46: #{local_feature_aggregation.6} parent=39 // pred_check_branch
          %385 = sbr.rel (%p383) target = $region48
        $region47: #{local_feature_aggregation.6} parent=39 // pred_region
          %s386 = sand.u32 %s27, 1
          %s387 = scalar_lea.sflag [#allocation6], %s386
          %s388 = sand.u32 %s79, 1
          %s389 = smul.addr %s388, 32
          %s390 = scalar_lea.vmem [#allocation5], %s389
          %s392 = ssub.s32 512, 512
          %393 = vsyncadd %s387, %s392
          %s394 = smul.addr %s35, 8
          %s395 = sadd.s32 %s34, %s394
          %s396 = smul.addr %s395, 64
          %s397 = scalar_lea.hbm %s1, %s396
          %s398 = sshll.u32 %s390, 4
          %s399 = int_to_ptr.vmem [resolvable:$true] %s398
          %404 = dma.hbm_to_vmem [thread:$0]  %s397, 512, %s399, %s387, 64, 64, 4
        $region48: #{local_feature_aggregation.6} parent=39 // pred_fallthru
          _
        // Predicated region
        $region49: #{local_feature_aggregation.6} parent=39 // pred_check
          %p405 = pneg %p117
        $region50: #{local_feature_aggregation.6} parent=39 // pred_check_branch
          %407 = sbr.rel (%p405) target = $region52
        $region51: #{local_feature_aggregation.6} parent=39 // pred_region
          %s408 = sand.u32 %s27, 1
          %s409 = scalar_lea.sflag [#allocation6], %s408
          %s410 = sand.u32 %s107, 1
          %s411 = smul.addr %s410, 32
          %s412 = scalar_lea.vmem [#allocation7], %s411
          %s414 = ssub.s32 512, 512
          %415 = vsyncadd %s409, %s414
          %s416 = smul.addr %s35, 8
          %s417 = sadd.s32 %s34, %s416
          %s418 = smul.addr %s417, 64
          %s419 = scalar_lea.hbm %s2, %s418
          %s420 = sshll.u32 %s412, 4
          %s421 = int_to_ptr.vmem [resolvable:$true] %s420
          %426 = dma.hbm_to_vmem [thread:$0]  %s419, 512, %s421, %s409, 64, 64, 4
        $region52: #{local_feature_aggregation.6} parent=39 // pred_fallthru
          _
      $region40: #{local_feature_aggregation.6} parent=5 // pred_fallthru
        _
      %p427 = scmp.le.s32.totalorder 1, %s27
      %p428 = scmp.lt.s32.totalorder %s27, 3
      %p429 = pnand %p427, %p428
      %p430 = pneg %p429
      // Predicated region
      $region53: #{local_feature_aggregation.6} parent=5 // pred_check
        _
      $region54: #{local_feature_aggregation.6} parent=5 // pred_check_branch
        %432 = sbr.rel (%p429) target = $region56
      $region55: #{local_feature_aggregation.6} parent=5 // pred_region
        %s433 = ssub.s32 %s27, 1
        %s434 = sand.u32 %s54, 1
        %s435 = scalar_lea.sflag [#allocation3], %s434
        %s436 = sand.u32 %s54, 1
        %s437 = smul.addr %s436, 4
        %s438 = scalar_lea.vmem [#allocation2], %s437
        // Predicated region
        $region57: #{local_feature_aggregation.6} parent=55 // pred_check
          %p439 = pneg %p67
        $region58: #{local_feature_aggregation.6} parent=55 // pred_check_branch
          %441 = sbr.rel (%p439) target = $region60
        $region59: #{local_feature_aggregation.6} parent=55 // pred_region
          %442 = dma.done %s435, 64
        $region60: #{local_feature_aggregation.6} parent=55 // pred_fallthru
          _
        %s443 = sand.u32 %s32, 1
        %s444 = scalar_lea.sflag [#allocation6], %s443
        %s445 = sand.u32 %s82, 1
        %s446 = smul.addr %s445, 32
        %s447 = scalar_lea.vmem [#allocation5], %s446
        // Predicated region
        $region61: #{local_feature_aggregation.6} parent=55 // pred_check
          %p448 = pneg %p95
        $region62: #{local_feature_aggregation.6} parent=55 // pred_check_branch
          %450 = sbr.rel (%p448) target = $region64
        $region63: #{local_feature_aggregation.6} parent=55 // pred_region
          %451 = dma.done %s444, 512
        $region64: #{local_feature_aggregation.6} parent=55 // pred_fallthru
          _
        %s452 = sand.u32 %s32, 1
        %s453 = scalar_lea.sflag [#allocation6], %s452
        %s454 = sand.u32 %s110, 1
        %s455 = smul.addr %s454, 32
        %s456 = scalar_lea.vmem [#allocation7], %s455
        // Predicated region
        $region65: #{local_feature_aggregation.6} parent=55 // pred_check
          %p457 = pneg %p123
        $region66: #{local_feature_aggregation.6} parent=55 // pred_check_branch
          %459 = sbr.rel (%p457) target = $region68
        $region67: #{local_feature_aggregation.6} parent=55 // pred_region
          %460 = dma.done %s453, 512
        $region68: #{local_feature_aggregation.6} parent=55 // pred_fallthru
          _
        // Predicated region
        $region69: #{local_feature_aggregation.6} parent=55 // pred_check
          %p461 = pneg %p144
        $region70: #{local_feature_aggregation.6} parent=55 // pred_check_branch
          %463 = sbr.rel (%p461) target = $region72
        $region71: #{local_feature_aggregation.6} parent=55 // pred_region
          %464 = dma.done [#allocation9], 128
        $region72: #{local_feature_aggregation.6} parent=55 // pred_fallthru
          _
        // Predicated region
        $region73: #{local_feature_aggregation.6} parent=55 // pred_check
          %p465 = pneg %p165
        $region74: #{local_feature_aggregation.6} parent=55 // pred_check_branch
          %467 = sbr.rel (%p465) target = $region76
        $region75: #{local_feature_aggregation.6} parent=55 // pred_region
          %468 = dma.done [#allocation9], 128
        $region76: #{local_feature_aggregation.6} parent=55 // pred_fallthru
          _
        // Predicated region
        $region77: #{local_feature_aggregation.6} parent=55 // pred_check
          %p469 = pneg %p186
        $region78: #{local_feature_aggregation.6} parent=55 // pred_check_branch
          %471 = sbr.rel (%p469) target = $region80
        $region79: #{local_feature_aggregation.6} parent=55 // pred_region
          %472 = dma.done [#allocation12], 128
        $region80: #{local_feature_aggregation.6} parent=55 // pred_fallthru
          _
        // Predicated region
        $region81: #{local_feature_aggregation.6} parent=55 // pred_check
          %p473 = pneg %p207
        $region82: #{local_feature_aggregation.6} parent=55 // pred_check_branch
          %475 = sbr.rel (%p473) target = $region84
        $region83: #{local_feature_aggregation.6} parent=55 // pred_region
          %476 = dma.done [#allocation12], 256
        $region84: #{local_feature_aggregation.6} parent=55 // pred_fallthru
          _
        // Predicated region
        $region85: #{local_feature_aggregation.6} parent=55 // pred_check
          %p477 = pneg %p228
        $region86: #{local_feature_aggregation.6} parent=55 // pred_check_branch
          %479 = sbr.rel (%p477) target = $region88
        $region87: #{local_feature_aggregation.6} parent=55 // pred_region
          %480 = dma.done [#allocation15], 128
        $region88: #{local_feature_aggregation.6} parent=55 // pred_fallthru
          _
        // Predicated region
        $region89: #{local_feature_aggregation.6} parent=55 // pred_check
          %p481 = pneg %p249
        $region90: #{local_feature_aggregation.6} parent=55 // pred_check_branch
          %483 = sbr.rel (%p481) target = $region92
        $region91: #{local_feature_aggregation.6} parent=55 // pred_region
          %484 = dma.done [#allocation15], 128
        $region92: #{local_feature_aggregation.6} parent=55 // pred_fallthru
          _
        %s485 = sand.u32 %s54, 1
        %s486 = scalar_lea.sflag [#allocation3], %s485
        %s487 = sand.u32 %s54, 1
        %s488 = smul.addr %s487, 4
        %s489 = scalar_lea.vmem [#allocation2], %s488
        %p490 = pneg %p67
        %p491 = pneg %p64
        %s492 = sand.u32 %s32, 1
        %s493 = scalar_lea.sflag [#allocation6], %s492
        %s494 = sand.u32 %s82, 1
        %s495 = smul.addr %s494, 32
        %s496 = scalar_lea.vmem [#allocation5], %s495
        %p497 = pneg %p95
        %p498 = pneg %p92
        %s499 = sand.u32 %s32, 1
        %s500 = scalar_lea.sflag [#allocation6], %s499
        %s501 = sand.u32 %s110, 1
        %s502 = smul.addr %s501, 32
        %s503 = scalar_lea.vmem [#allocation7], %s502
        %p504 = pneg %p123
        %p505 = pneg %p120
        %p506 = pneg %p144
        %p507 = pneg %p141
        %p508 = pneg %p165
        %p509 = pneg %p162
        %p510 = pneg %p186
        %p511 = pneg %p183
        %p512 = pneg %p207
        %p513 = pneg %p204
        %p514 = pneg %p228
        %p515 = pneg %p225
        %p516 = pneg %p249
        %p517 = pneg %p246
        %p518 = pneg %p277
        %p519 = pneg %p274
        %s520 = sand.u32 %s264, 1
        %s521 = scalar_lea.sflag [#allocation4], %s520
        %s522 = sand.u32 %s264, 1
        %s523 = smul.addr %s522, 8
        %s524 = scalar_lea.vmem [#allocation17], %s523
        %v525 = vld [vmem:[%s438] sm:$0x7]
        %v526 = vld [vmem:[#allocation8] sm:$0xff]
        %v527 = vld [vmem:[#allocation10] sm:$0xff]
        %v528 = vld [vmem:[#allocation13] sm:$0xff]
        %v529 = vld [vmem:[#allocation13 + $0x8] sm:$0xff]
        %v530 = vld [vmem:[#allocation11] sm:$0xff]
        %532 = vset.pattern.permute.xlu0 0
        %533 = vperm.xlu0 %532, %v530
        %v534 = vpop.permute.xlu0 %533
        %vm536 = vcmask 23552
        %v538 = vsel %vm536, %v526, 0
        %vm540 = vcmask 1042432
        %v542 = vsel %vm540, %v525, 0
        %544 = vmatprep.subr.mxu0 0.0
        %545 = vmatpush1.msra.mxu0 %v542
        %546 = vmatprep.subr.mxu0 0.0
        %547 = vmatpush1.msra.mxu0 0.0
        %548 = vmatprep.subr.mxu0 0.0
        %549 = vmatpush1.msra.mxu0 0.0
        %550 = vmatprep.subr.mxu0 0.0
        %551 = vmatpush1.msra.mxu0 0.0
        %552 = vmatprep.subr.mxu0 0.0
        %553 = vmatpush1.msra.mxu0 0.0
        %554 = vmatprep.subr.mxu0 0.0
        %555 = vmatpush1.msra.mxu0 0.0
        %556 = vmatprep.subr.mxu0 0.0
        %557 = vmatpush1.msra.mxu0 0.0
        %558 = vmatprep.subr.mxu0 0.0
        %559 = vmatpush1.msra.mxu0 0.0
        %560 = vmatprep.subr.mxu0 0.0
        %561 = vmatpush1.msra.mxu0 0.0
        %562 = vmatprep.subr.mxu0 0.0
        %563 = vmatpush1.msra.mxu0 0.0
        %564 = vmatprep.subr.mxu0 0.0
        %565 = vmatpush1.msra.mxu0 0.0
        %566 = vmatprep.subr.mxu0 0.0
        %567 = vmatpush1.msra.mxu0 0.0
        %568 = vmatprep.subr.mxu0 0.0
        %569 = vmatpush1.msra.mxu0 0.0
        %570 = vmatprep.subr.mxu0 0.0
        %571 = vmatpush1.msra.mxu0 0.0
        %572 = vmatprep.subr.mxu0 0.0
        %573 = vmatpush1.msra.mxu0 0.0
        %574 = vmatprep.subr.mxu0 0.0
        %575 = vmatpush1.msra.mxu0 0.0
        %576 = vmatprep.subr.mxu0 0.0
        %577 = vmatpush1.msra.mxu0 0.0
        %578 = vmatprep.subr.mxu0 0.0
        %579 = vmatpush1.msra.mxu0 0.0
        %580 = vmatprep.subr.mxu0 0.0
        %581 = vmatpush1.msra.mxu0 0.0
        %582 = vmatprep.subr.mxu0 0.0
        %583 = vmatpush1.msra.mxu0 0.0
        %584 = vmatprep.subr.mxu0 0.0
        %585 = vmatpush1.msra.mxu0 0.0
        %586 = vmatprep.subr.mxu0 0.0
        %587 = vmatpush1.msra.mxu0 0.0
        %588 = vmatprep.subr.mxu0 0.0
        %589 = vmatpush1.msra.mxu0 0.0
        %590 = vmatprep.subr.mxu0 0.0
        %591 = vmatpush1.msra.mxu0 0.0
        %592 = vmatprep.subr.mxu0 0.0
        %593 = vmatpush1.msra.mxu0 0.0
        %594 = vmatprep.subr.mxu0 0.0
        %595 = vmatpush1.msra.mxu0 0.0
        %596 = vmatprep.subr.mxu0 0.0
        %597 = vmatpush1.msra.mxu0 0.0
        %598 = vmatprep.subr.mxu0 0.0
        %599 = vmatpush1.msra.mxu0 0.0
        %600 = vmatprep.subr.mxu0 0.0
        %601 = vmatpush1.msra.mxu0 0.0
        %602 = vmatprep.subr.mxu0 0.0
        %603 = vmatpush1.msra.mxu0 0.0
        %604 = vmatprep.subr.mxu0 0.0
        %605 = vmatpush1.msra.mxu0 0.0
        %606 = vmatprep.subr.mxu0 0.0
        %607 = vmatpush1.msra.mxu0 0.0
        %608 = vmatprep.mubr.f32.mxu0 0.0
        %609 = vmatmul.mubr.f32.gmra.mrb[0].mxu0 %v538
        %v610 = vpop.f32.mrb[0].mxu0
        %v611 = vadd.f32 %v534, %v610
        %v612 = vpop.f32.mrb[0].mxu0
        %613 = vdwg.mxu0
        %v614 = vld [vmem:[%s447] sm:$0x7]
        %v615 = vsub.f32 %v525, %v614
        %v616 = vmul.f32 %v615, %v615
        %v618 = vrot.slane %v616, 1
        %v620 = vadd.f32 %v616, %v618
        %v621 = vrot.slane %v616, 2
        %v623 = vadd.f32 %v620, %v621
        %v624 = vrsqrt.pop %v623
        %v625 = vmul.f32 %v623, %v624
        %vm626 = vcmp.eq.f32.partialorder %v623, inf
        %v627 = vsel %vm626, %v623, %v625
        %vm628 = vcmp.eq.f32.partialorder %v623, 0.0
        %v629 = vand.u32 %v623, 2147483648
        %v630 = vsel %vm628, %v629, %v627
        %v632 = vrot.slane %v630, 5
        %v634 = vsel %vm540, %v614, %v632
        %vm635 = vcmask 31744
        %v637 = vsel %vm635, %v527, 0
        %vm639 = vcmask 1043456
        %v641 = vsel %vm639, %v634, 0
        %643 = vmatprep.subr.mxu0 0.0
        %644 = vmatpush1.msra.mxu0 %v641
        %645 = vmatprep.subr.mxu0 0.0
        %646 = vmatpush1.msra.mxu0 0.0
        %647 = vmatprep.subr.mxu0 0.0
        %648 = vmatpush1.msra.mxu0 0.0
        %649 = vmatprep.subr.mxu0 0.0
        %650 = vmatpush1.msra.mxu0 0.0
        %651 = vmatprep.subr.mxu0 0.0
        %652 = vmatpush1.msra.mxu0 0.0
        %653 = vmatprep.subr.mxu0 0.0
        %654 = vmatpush1.msra.mxu0 0.0
        %655 = vmatprep.subr.mxu0 0.0
        %656 = vmatpush1.msra.mxu0 0.0
        %657 = vmatprep.subr.mxu0 0.0
        %658 = vmatpush1.msra.mxu0 0.0
        %659 = vmatprep.subr.mxu0 0.0
        %660 = vmatpush1.msra.mxu0 0.0
        %661 = vmatprep.subr.mxu0 0.0
        %662 = vmatpush1.msra.mxu0 0.0
        %663 = vmatprep.subr.mxu0 0.0
        %664 = vmatpush1.msra.mxu0 0.0
        %665 = vmatprep.subr.mxu0 0.0
        %666 = vmatpush1.msra.mxu0 0.0
        %667 = vmatprep.subr.mxu0 0.0
        %668 = vmatpush1.msra.mxu0 0.0
        %669 = vmatprep.subr.mxu0 0.0
        %670 = vmatpush1.msra.mxu0 0.0
        %671 = vmatprep.subr.mxu0 0.0
        %672 = vmatpush1.msra.mxu0 0.0
        %673 = vmatprep.subr.mxu0 0.0
        %674 = vmatpush1.msra.mxu0 0.0
        %675 = vmatprep.subr.mxu0 0.0
        %676 = vmatpush1.msra.mxu0 0.0
        %677 = vmatprep.subr.mxu0 0.0
        %678 = vmatpush1.msra.mxu0 0.0
        %679 = vmatprep.subr.mxu0 0.0
        %680 = vmatpush1.msra.mxu0 0.0
        %681 = vmatprep.subr.mxu0 0.0
        %682 = vmatpush1.msra.mxu0 0.0
        %683 = vmatprep.subr.mxu0 0.0
        %684 = vmatpush1.msra.mxu0 0.0
        %685 = vmatprep.subr.mxu0 0.0
        %686 = vmatpush1.msra.mxu0 0.0
        %687 = vmatprep.subr.mxu0 0.0
        %688 = vmatpush1.msra.mxu0 0.0
        %689 = vmatprep.subr.mxu0 0.0
        %690 = vmatpush1.msra.mxu0 0.0
        %691 = vmatprep.subr.mxu0 0.0
        %692 = vmatpush1.msra.mxu0 0.0
        %693 = vmatprep.subr.mxu0 0.0
        %694 = vmatpush1.msra.mxu0 0.0
        %695 = vmatprep.subr.mxu0 0.0
        %696 = vmatpush1.msra.mxu0 0.0
        %697 = vmatprep.subr.mxu0 0.0
        %698 = vmatpush1.msra.mxu0 0.0
        %699 = vmatprep.subr.mxu0 0.0
        %700 = vmatpush1.msra.mxu0 0.0
        %701 = vmatprep.subr.mxu0 0.0
        %702 = vmatpush1.msra.mxu0 0.0
        %703 = vmatprep.subr.mxu0 0.0
        %704 = vmatpush1.msra.mxu0 0.0
        %705 = vmatprep.subr.mxu0 0.0
        %706 = vmatpush1.msra.mxu0 0.0
        %707 = vmatprep.mubr.f32.mxu0 0.0
        %708 = vmatmul.mubr.f32.gmra.mrb[0].mxu0 %v637
        %v709 = vpop.f32.mrb[0].mxu0
        %v710 = vadd.f32 0.0, %v709
        %v711 = vpop.f32.mrb[0].mxu0
        %712 = vdwg.mxu0
        %v713 = vadd.f32 %v611, %v710
        %v714 = vmax.f32 %v713, 0.0
        %v715 = vld [vmem:[%s456] sm:$0xf]
        %v716 = vunpack.c.l.bf16 %v715
        %vm717 = vcmask 130048
        %v719 = vsel %vm717, %v528, 0
        %v722 = vsel %vm717, %v529, 0
        %724 = vmatprep.subr.mxu0 0.0
        %725 = vmatpush1.msra.mxu0 %v714
        %726 = vmatprep.subr.mxu0 0.0
        %727 = vmatpush1.msra.mxu0 %v716
        %728 = vmatprep.subr.mxu0 0.0
        %729 = vmatpush1.msra.mxu0 0.0
        %730 = vmatprep.subr.mxu0 0.0
        %731 = vmatpush1.msra.mxu0 0.0
        %732 = vmatprep.subr.mxu0 0.0
        %733 = vmatpush1.msra.mxu0 0.0
        %734 = vmatprep.subr.mxu0 0.0
        %735 = vmatpush1.msra.mxu0 0.0
        %736 = vmatprep.subr.mxu0 0.0
        %737 = vmatpush1.msra.mxu0 0.0
        %738 = vmatprep.subr.mxu0 0.0
        %739 = vmatpush1.msra.mxu0 0.0
        %740 = vmatprep.subr.mxu0 0.0
        %741 = vmatpush1.msra.mxu0 0.0
        %742 = vmatprep.subr.mxu0 0.0
        %743 = vmatpush1.msra.mxu0 0.0
        %744 = vmatprep.subr.mxu0 0.0
        %745 = vmatpush1.msra.mxu0 0.0
        %746 = vmatprep.subr.mxu0 0.0
        %747 = vmatpush1.msra.mxu0 0.0
        %748 = vmatprep.subr.mxu0 0.0
        %749 = vmatpush1.msra.mxu0 0.0
        %750 = vmatprep.subr.mxu0 0.0
        %751 = vmatpush1.msra.mxu0 0.0
        %752 = vmatprep.subr.mxu0 0.0
        %753 = vmatpush1.msra.mxu0 0.0
        %754 = vmatprep.subr.mxu0 0.0
        %755 = vmatpush1.msra.mxu0 0.0
        %756 = vmatprep.subr.mxu0 0.0
        %757 = vmatpush1.msra.mxu0 0.0
        %758 = vmatprep.subr.mxu0 0.0
        %759 = vmatpush1.msra.mxu0 0.0
        %760 = vmatprep.subr.mxu0 0.0
        %761 = vmatpush1.msra.mxu0 0.0
        %762 = vmatprep.subr.mxu0 0.0
        %763 = vmatpush1.msra.mxu0 0.0
        %764 = vmatprep.subr.mxu0 0.0
        %765 = vmatpush1.msra.mxu0 0.0
        %766 = vmatprep.subr.mxu0 0.0
        %767 = vmatpush1.msra.mxu0 0.0
        %768 = vmatprep.subr.mxu0 0.0
        %769 = vmatpush1.msra.mxu0 0.0
        %770 = vmatprep.subr.mxu0 0.0
        %771 = vmatpush1.msra.mxu0 0.0
        %772 = vmatprep.subr.mxu0 0.0
        %773 = vmatpush1.msra.mxu0 0.0
        %774 = vmatprep.subr.mxu0 0.0
        %775 = vmatpush1.msra.mxu0 0.0
        %776 = vmatprep.subr.mxu0 0.0
        %777 = vmatpush1.msra.mxu0 0.0
        %778 = vmatprep.subr.mxu0 0.0
        %779 = vmatpush1.msra.mxu0 0.0
        %780 = vmatprep.subr.mxu0 0.0
        %781 = vmatpush1.msra.mxu0 0.0
        %782 = vmatprep.subr.mxu0 0.0
        %783 = vmatpush1.msra.mxu0 0.0
        %784 = vmatprep.subr.mxu0 0.0
        %785 = vmatpush1.msra.mxu0 0.0
        %786 = vmatprep.subr.mxu0 0.0
        %787 = vmatpush1.msra.mxu0 0.0
        %788 = vmatprep.mubr.f32.mxu0 0.0
        %789 = vmatmul.mubr.f32.gmra.mrb[0].mxu0 %v719
        %v790 = vpop.f32.mrb[0].mxu0
        %v791 = vadd.f32 0.0, %v790
        %v792 = vpop.f32.mrb[0].mxu0
        %793 = vmatprep.mubr.f32.mxu0 0.0
        %794 = vmatmul.mubr.f32.gmra.mrb[0].mxu0 %v722
        %v795 = vpop.f32.mrb[0].mxu0
        %v796 = vadd.f32 0.0, %v795
        %v797 = vpop.f32.mrb[0].mxu0
        %798 = vdwg.mxu0
        %s799 = scalar_lea.vmem %s447, 4 [#allocation5]
        %v800 = vld [vmem:[%s799] sm:$0x7]
        %v801 = vsub.f32 %v525, %v800
        %v802 = vmul.f32 %v801, %v801
        %v804 = vrot.slane %v802, 1
        %v806 = vadd.f32 %v802, %v804
        %v807 = vrot.slane %v802, 2
        %v809 = vadd.f32 %v806, %v807
        %v810 = vrsqrt.pop %v809
        %v811 = vmul.f32 %v809, %v810
        %vm812 = vcmp.eq.f32.partialorder %v809, inf
        %v813 = vsel %vm812, %v809, %v811
        %vm814 = vcmp.eq.f32.partialorder %v809, 0.0
        %v815 = vand.u32 %v809, 2147483648
        %v816 = vsel %vm814, %v815, %v813
        %v818 = vrot.slane %v816, 5
        %v820 = vsel %vm540, %v800, %v818
        %v822 = vsel %vm639, %v820, 0
        %824 = vmatprep.subr.mxu0 0.0
        %825 = vmatpush1.msra.mxu0 %v822
        %826 = vmatprep.subr.mxu0 0.0
        %827 = vmatpush1.msra.mxu0 0.0
        %828 = vmatprep.subr.mxu0 0.0
        %829 = vmatpush1.msra.mxu0 0.0
        %830 = vmatprep.subr.mxu0 0.0
        %831 = vmatpush1.msra.mxu0 0.0
        %832 = vmatprep.subr.mxu0 0.0
        %833 = vmatpush1.msra.mxu0 0.0
        %834 = vmatprep.subr.mxu0 0.0
        %835 = vmatpush1.msra.mxu0 0.0
        %836 = vmatprep.subr.mxu0 0.0
        %837 = vmatpush1.msra.mxu0 0.0
        %838 = vmatprep.subr.mxu0 0.0
        %839 = vmatpush1.msra.mxu0 0.0
        %840 = vmatprep.subr.mxu0 0.0
        %841 = vmatpush1.msra.mxu0 0.0
        %842 = vmatprep.subr.mxu0 0.0
        %843 = vmatpush1.msra.mxu0 0.0
        %844 = vmatprep.subr.mxu0 0.0
        %845 = vmatpush1.msra.mxu0 0.0
        %846 = vmatprep.subr.mxu0 0.0
        %847 = vmatpush1.msra.mxu0 0.0
        %848 = vmatprep.subr.mxu0 0.0
        %849 = vmatpush1.msra.mxu0 0.0
        %850 = vmatprep.subr.mxu0 0.0
        %851 = vmatpush1.msra.mxu0 0.0
        %852 = vmatprep.subr.mxu0 0.0
        %853 = vmatpush1.msra.mxu0 0.0
        %854 = vmatprep.subr.mxu0 0.0
        %855 = vmatpush1.msra.mxu0 0.0
        %856 = vmatprep.subr.mxu0 0.0
        %857 = vmatpush1.msra.mxu0 0.0
        %858 = vmatprep.subr.mxu0 0.0
        %859 = vmatpush1.msra.mxu0 0.0
        %860 = vmatprep.subr.mxu0 0.0
        %861 = vmatpush1.msra.mxu0 0.0
        %862 = vmatprep.subr.mxu0 0.0
        %863 = vmatpush1.msra.mxu0 0.0
        %864 = vmatprep.subr.mxu0 0.0
        %865 = vmatpush1.msra.mxu0 0.0
        %866 = vmatprep.subr.mxu0 0.0
        %867 = vmatpush1.msra.mxu0 0.0
        %868 = vmatprep.subr.mxu0 0.0
        %869 = vmatpush1.msra.mxu0 0.0
        %870 = vmatprep.subr.mxu0 0.0
        %871 = vmatpush1.msra.mxu0 0.0
        %872 = vmatprep.subr.mxu0 0.0
        %873 = vmatpush1.msra.mxu0 0.0
        %874 = vmatprep.subr.mxu0 0.0
        %875 = vmatpush1.msra.mxu0 0.0
        %876 = vmatprep.subr.mxu0 0.0
        %877 = vmatpush1.msra.mxu0 0.0
        %878 = vmatprep.subr.mxu0 0.0
        %879 = vmatpush1.msra.mxu0 0.0
        %880 = vmatprep.subr.mxu0 0.0
        %881 = vmatpush1.msra.mxu0 0.0
        %882 = vmatprep.subr.mxu0 0.0
        %883 = vmatpush1.msra.mxu0 0.0
        %884 = vmatprep.subr.mxu0 0.0
        %885 = vmatpush1.msra.mxu0 0.0
        %886 = vmatprep.subr.mxu0 0.0
        %887 = vmatpush1.msra.mxu0 0.0
        %888 = vmatprep.mubr.f32.mxu0 0.0
        %889 = vmatmul.mubr.f32.gmra.mrb[0].mxu0 %v637
        %v890 = vpop.f32.mrb[0].mxu0
        %v891 = vadd.f32 0.0, %v890
        %v892 = vpop.f32.mrb[0].mxu0
        %893 = vdwg.mxu0
        %v894 = vadd.f32 %v611, %v891
        %v895 = vmax.f32 %v894, 0.0
        %s896 = scalar_lea.vmem %s456, 4 [#allocation7]
        %v897 = vld [vmem:[%s896] sm:$0xf]
        %v898 = vunpack.c.l.bf16 %v897
        %899 = vmatprep.subr.mxu0 0.0
        %900 = vmatpush1.msra.mxu0 %v895
        %901 = vmatprep.subr.mxu0 0.0
        %902 = vmatpush1.msra.mxu0 %v898
        %903 = vmatprep.subr.mxu0 0.0
        %904 = vmatpush1.msra.mxu0 0.0
        %905 = vmatprep.subr.mxu0 0.0
        %906 = vmatpush1.msra.mxu0 0.0
        %907 = vmatprep.subr.mxu0 0.0
        %908 = vmatpush1.msra.mxu0 0.0
        %909 = vmatprep.subr.mxu0 0.0
        %910 = vmatpush1.msra.mxu0 0.0
        %911 = vmatprep.subr.mxu0 0.0
        %912 = vmatpush1.msra.mxu0 0.0
        %913 = vmatprep.subr.mxu0 0.0
        %914 = vmatpush1.msra.mxu0 0.0
        %915 = vmatprep.subr.mxu0 0.0
        %916 = vmatpush1.msra.mxu0 0.0
        %917 = vmatprep.subr.mxu0 0.0
        %918 = vmatpush1.msra.mxu0 0.0
        %919 = vmatprep.subr.mxu0 0.0
        %920 = vmatpush1.msra.mxu0 0.0
        %921 = vmatprep.subr.mxu0 0.0
        %922 = vmatpush1.msra.mxu0 0.0
        %923 = vmatprep.subr.mxu0 0.0
        %924 = vmatpush1.msra.mxu0 0.0
        %925 = vmatprep.subr.mxu0 0.0
        %926 = vmatpush1.msra.mxu0 0.0
        %927 = vmatprep.subr.mxu0 0.0
        %928 = vmatpush1.msra.mxu0 0.0
        %929 = vmatprep.subr.mxu0 0.0
        %930 = vmatpush1.msra.mxu0 0.0
        %931 = vmatprep.subr.mxu0 0.0
        %932 = vmatpush1.msra.mxu0 0.0
        %933 = vmatprep.subr.mxu0 0.0
        %934 = vmatpush1.msra.mxu0 0.0
        %935 = vmatprep.subr.mxu0 0.0
        %936 = vmatpush1.msra.mxu0 0.0
        %937 = vmatprep.subr.mxu0 0.0
        %938 = vmatpush1.msra.mxu0 0.0
        %939 = vmatprep.subr.mxu0 0.0
        %940 = vmatpush1.msra.mxu0 0.0
        %941 = vmatprep.subr.mxu0 0.0
        %942 = vmatpush1.msra.mxu0 0.0
        %943 = vmatprep.subr.mxu0 0.0
        %944 = vmatpush1.msra.mxu0 0.0
        %945 = vmatprep.subr.mxu0 0.0
        %946 = vmatpush1.msra.mxu0 0.0
        %947 = vmatprep.subr.mxu0 0.0
        %948 = vmatpush1.msra.mxu0 0.0
        %949 = vmatprep.subr.mxu0 0.0
        %950 = vmatpush1.msra.mxu0 0.0
        %951 = vmatprep.subr.mxu0 0.0
        %952 = vmatpush1.msra.mxu0 0.0
        %953 = vmatprep.subr.mxu0 0.0
        %954 = vmatpush1.msra.mxu0 0.0
        %955 = vmatprep.subr.mxu0 0.0
        %956 = vmatpush1.msra.mxu0 0.0
        %957 = vmatprep.subr.mxu0 0.0
        %958 = vmatpush1.msra.mxu0 0.0
        %959 = vmatprep.subr.mxu0 0.0
        %960 = vmatpush1.msra.mxu0 0.0
        %961 = vmatprep.subr.mxu0 0.0
        %962 = vmatpush1.msra.mxu0 0.0
        %963 = vmatprep.mubr.f32.mxu0 0.0
        %964 = vmatmul.mubr.f32.gmra.mrb[0].mxu0 %v719
        %v965 = vpop.f32.mrb[0].mxu0
        %v966 = vadd.f32 0.0, %v965
        %v967 = vpop.f32.mrb[0].mxu0
        %968 = vmatprep.mubr.f32.mxu0 0.0
        %969 = vmatmul.mubr.f32.gmra.mrb[0].mxu0 %v722
        %v970 = vpop.f32.mrb[0].mxu0
        %v971 = vadd.f32 0.0, %v970
        %v972 = vpop.f32.mrb[0].mxu0
        %973 = vdwg.mxu0
        %v974 = vmax.f32 %v791, %v966
        %v975 = vmax.f32 %v796, %v971
        %v976 = vsub.f32 %v791, %v974
        %v977 = vsub.f32 %v796, %v975
        %v978 = vmul.f32 %v976, 1.442695
        %v979 = vpow.pop %v978
        %v980 = vmul.f32 %v977, 1.442695
        %v981 = vpow.pop %v980
        %v982 = vsub.f32 %v966, %v974
        %v983 = vsub.f32 %v971, %v975
        %v984 = vmul.f32 %v982, 1.442695
        %v985 = vpow.pop %v984
        %v986 = vmul.f32 %v983, 1.442695
        %v987 = vpow.pop %v986
        %v988 = vadd.f32 %v979, %v985
        %v989 = vadd.f32 %v981, %v987
        %v990 = vmul.f32 %v714, %v979
        %v991 = vmul.f32 %v716, %v981
        %v992 = vmul.f32 %v985, %v895
        %v993 = vmul.f32 %v987, %v898
        %v994 = vadd.f32 %v990, %v992
        %v995 = vadd.f32 %v991, %v993
        %s996 = scalar_lea.vmem %s447, 8 [#allocation5]
        %v997 = vld [vmem:[%s996] sm:$0x7]
        %v998 = vsub.f32 %v525, %v997
        %v999 = vmul.f32 %v998, %v998
        %v1001 = vrot.slane %v999, 1
        %v1003 = vadd.f32 %v999, %v1001
        %v1004 = vrot.slane %v999, 2
        %v1006 = vadd.f32 %v1003, %v1004
        %v1007 = vrsqrt.pop %v1006
        %v1008 = vmul.f32 %v1006, %v1007
        %vm1009 = vcmp.eq.f32.partialorder %v1006, inf
        %v1010 = vsel %vm1009, %v1006, %v1008
        %vm1011 = vcmp.eq.f32.partialorder %v1006, 0.0
        %v1012 = vand.u32 %v1006, 2147483648
        %v1013 = vsel %vm1011, %v1012, %v1010
        %v1015 = vrot.slane %v1013, 5
        %v1017 = vsel %vm540, %v997, %v1015
        %v1019 = vsel %vm639, %v1017, 0
        %1021 = vmatprep.subr.mxu0 0.0
        %1022 = vmatpush1.msra.mxu0 %v1019
        %1023 = vmatprep.subr.mxu0 0.0
        %1024 = vmatpush1.msra.mxu0 0.0
        %1025 = vmatprep.subr.mxu0 0.0
        %1026 = vmatpush1.msra.mxu0 0.0
        %1027 = vmatprep.subr.mxu0 0.0
        %1028 = vmatpush1.msra.mxu0 0.0
        %1029 = vmatprep.subr.mxu0 0.0
        %1030 = vmatpush1.msra.mxu0 0.0
        %1031 = vmatprep.subr.mxu0 0.0
        %1032 = vmatpush1.msra.mxu0 0.0
        %1033 = vmatprep.subr.mxu0 0.0
        %1034 = vmatpush1.msra.mxu0 0.0
        %1035 = vmatprep.subr.mxu0 0.0
        %1036 = vmatpush1.msra.mxu0 0.0
        %1037 = vmatprep.subr.mxu0 0.0
        %1038 = vmatpush1.msra.mxu0 0.0
        %1039 = vmatprep.subr.mxu0 0.0
        %1040 = vmatpush1.msra.mxu0 0.0
        %1041 = vmatprep.subr.mxu0 0.0
        %1042 = vmatpush1.msra.mxu0 0.0
        %1043 = vmatprep.subr.mxu0 0.0
        %1044 = vmatpush1.msra.mxu0 0.0
        %1045 = vmatprep.subr.mxu0 0.0
        %1046 = vmatpush1.msra.mxu0 0.0
        %1047 = vmatprep.subr.mxu0 0.0
        %1048 = vmatpush1.msra.mxu0 0.0
        %1049 = vmatprep.subr.mxu0 0.0
        %1050 = vmatpush1.msra.mxu0 0.0
        %1051 = vmatprep.subr.mxu0 0.0
        %1052 = vmatpush1.msra.mxu0 0.0
        %1053 = vmatprep.subr.mxu0 0.0
        %1054 = vmatpush1.msra.mxu0 0.0
        %1055 = vmatprep.subr.mxu0 0.0
        %1056 = vmatpush1.msra.mxu0 0.0
        %1057 = vmatprep.subr.mxu0 0.0
        %1058 = vmatpush1.msra.mxu0 0.0
        %1059 = vmatprep.subr.mxu0 0.0
        %1060 = vmatpush1.msra.mxu0 0.0
        %1061 = vmatprep.subr.mxu0 0.0
        %1062 = vmatpush1.msra.mxu0 0.0
        %1063 = vmatprep.subr.mxu0 0.0
        %1064 = vmatpush1.msra.mxu0 0.0
        %1065 = vmatprep.subr.mxu0 0.0
        %1066 = vmatpush1.msra.mxu0 0.0
        %1067 = vmatprep.subr.mxu0 0.0
        %1068 = vmatpush1.msra.mxu0 0.0
        %1069 = vmatprep.subr.mxu0 0.0
        %1070 = vmatpush1.msra.mxu0 0.0
        %1071 = vmatprep.subr.mxu0 0.0
        %1072 = vmatpush1.msra.mxu0 0.0
        %1073 = vmatprep.subr.mxu0 0.0
        %1074 = vmatpush1.msra.mxu0 0.0
        %1075 = vmatprep.subr.mxu0 0.0
        %1076 = vmatpush1.msra.mxu0 0.0
        %1077 = vmatprep.subr.mxu0 0.0
        %1078 = vmatpush1.msra.mxu0 0.0
        %1079 = vmatprep.subr.mxu0 0.0
        %1080 = vmatpush1.msra.mxu0 0.0
        %1081 = vmatprep.subr.mxu0 0.0
        %1082 = vmatpush1.msra.mxu0 0.0
        %1083 = vmatprep.subr.mxu0 0.0
        %1084 = vmatpush1.msra.mxu0 0.0
        %1085 = vmatprep.mubr.f32.mxu0 0.0
        %1086 = vmatmul.mubr.f32.gmra.mrb[0].mxu0 %v637
        %v1087 = vpop.f32.mrb[0].mxu0
        %v1088 = vadd.f32 0.0, %v1087
        %v1089 = vpop.f32.mrb[0].mxu0
        %1090 = vdwg.mxu0
        %v1091 = vadd.f32 %v611, %v1088
        %v1092 = vmax.f32 %v1091, 0.0
        %s1093 = scalar_lea.vmem %s456, 8 [#allocation7]
        %v1094 = vld [vmem:[%s1093] sm:$0xf]
        %v1095 = vunpack.c.l.bf16 %v1094
        %1096 = vmatprep.subr.mxu0 0.0
        %1097 = vmatpush1.msra.mxu0 %v1092
        %1098 = vmatprep.subr.mxu0 0.0
        %1099 = vmatpush1.msra.mxu0 %v1095
        %1100 = vmatprep.subr.mxu0 0.0
        %1101 = vmatpush1.msra.mxu0 0.0
        %1102 = vmatprep.subr.mxu0 0.0
        %1103 = vmatpush1.msra.mxu0 0.0
        %1104 = vmatprep.subr.mxu0 0.0
        %1105 = vmatpush1.msra.mxu0 0.0
        %1106 = vmatprep.subr.mxu0 0.0
        %1107 = vmatpush1.msra.mxu0 0.0
        %1108 = vmatprep.subr.mxu0 0.0
        %1109 = vmatpush1.msra.mxu0 0.0
        %1110 = vmatprep.subr.mxu0 0.0
        %1111 = vmatpush1.msra.mxu0 0.0
        %1112 = vmatprep.subr.mxu0 0.0
        %1113 = vmatpush1.msra.mxu0 0.0
        %1114 = vmatprep.subr.mxu0 0.0
        %1115 = vmatpush1.msra.mxu0 0.0
        %1116 = vmatprep.subr.mxu0 0.0
        %1117 = vmatpush1.msra.mxu0 0.0
        %1118 = vmatprep.subr.mxu0 0.0
        %1119 = vmatpush1.msra.mxu0 0.0
        %1120 = vmatprep.subr.mxu0 0.0
        %1121 = vmatpush1.msra.mxu0 0.0
        %1122 = vmatprep.subr.mxu0 0.0
        %1123 = vmatpush1.msra.mxu0 0.0
        %1124 = vmatprep.subr.mxu0 0.0
        %1125 = vmatpush1.msra.mxu0 0.0
        %1126 = vmatprep.subr.mxu0 0.0
        %1127 = vmatpush1.msra.mxu0 0.0
        %1128 = vmatprep.subr.mxu0 0.0
        %1129 = vmatpush1.msra.mxu0 0.0
        %1130 = vmatprep.subr.mxu0 0.0
        %1131 = vmatpush1.msra.mxu0 0.0
        %1132 = vmatprep.subr.mxu0 0.0
        %1133 = vmatpush1.msra.mxu0 0.0
        %1134 = vmatprep.subr.mxu0 0.0
        %1135 = vmatpush1.msra.mxu0 0.0
        %1136 = vmatprep.subr.mxu0 0.0
        %1137 = vmatpush1.msra.mxu0 0.0
        %1138 = vmatprep.subr.mxu0 0.0
        %1139 = vmatpush1.msra.mxu0 0.0
        %1140 = vmatprep.subr.mxu0 0.0
        %1141 = vmatpush1.msra.mxu0 0.0
        %1142 = vmatprep.subr.mxu0 0.0
        %1143 = vmatpush1.msra.mxu0 0.0
        %1144 = vmatprep.subr.mxu0 0.0
        %1145 = vmatpush1.msra.mxu0 0.0
        %1146 = vmatprep.subr.mxu0 0.0
        %1147 = vmatpush1.msra.mxu0 0.0
        %1148 = vmatprep.subr.mxu0 0.0
        %1149 = vmatpush1.msra.mxu0 0.0
        %1150 = vmatprep.subr.mxu0 0.0
        %1151 = vmatpush1.msra.mxu0 0.0
        %1152 = vmatprep.subr.mxu0 0.0
        %1153 = vmatpush1.msra.mxu0 0.0
        %1154 = vmatprep.subr.mxu0 0.0
        %1155 = vmatpush1.msra.mxu0 0.0
        %1156 = vmatprep.subr.mxu0 0.0
        %1157 = vmatpush1.msra.mxu0 0.0
        %1158 = vmatprep.subr.mxu0 0.0
        %1159 = vmatpush1.msra.mxu0 0.0
        %1160 = vmatprep.mubr.f32.mxu0 0.0
        %1161 = vmatmul.mubr.f32.gmra.mrb[0].mxu0 %v719
        %v1162 = vpop.f32.mrb[0].mxu0
        %v1163 = vadd.f32 0.0, %v1162
        %v1164 = vpop.f32.mrb[0].mxu0
        %1165 = vmatprep.mubr.f32.mxu0 0.0
        %1166 = vmatmul.mubr.f32.gmra.mrb[0].mxu0 %v722
        %v1167 = vpop.f32.mrb[0].mxu0
        %v1168 = vadd.f32 0.0, %v1167
        %v1169 = vpop.f32.mrb[0].mxu0
        %1170 = vdwg.mxu0
        %v1171 = vmax.f32 %v974, %v1163
        %v1172 = vmax.f32 %v975, %v1168
        %v1173 = vsub.f32 %v974, %v1171
        %v1174 = vsub.f32 %v975, %v1172
        %v1175 = vmul.f32 %v1173, 1.442695
        %v1176 = vpow.pop %v1175
        %v1177 = vmul.f32 %v1174, 1.442695
        %v1178 = vpow.pop %v1177
        %v1179 = vsub.f32 %v1163, %v1171
        %v1180 = vsub.f32 %v1168, %v1172
        %v1181 = vmul.f32 %v1179, 1.442695
        %v1182 = vpow.pop %v1181
        %v1183 = vmul.f32 %v1180, 1.442695
        %v1184 = vpow.pop %v1183
        %v1185 = vmul.f32 %v988, %v1176
        %v1186 = vmul.f32 %v989, %v1178
        %v1187 = vadd.f32 %v1185, %v1182
        %v1188 = vadd.f32 %v1186, %v1184
        %v1189 = vmul.f32 %v994, %v1176
        %v1190 = vmul.f32 %v995, %v1178
        %v1191 = vmul.f32 %v1182, %v1092
        %v1192 = vmul.f32 %v1184, %v1095
        %v1193 = vadd.f32 %v1189, %v1191
        %v1194 = vadd.f32 %v1190, %v1192
        %s1195 = scalar_lea.vmem %s447, 12 [#allocation5]
        %v1196 = vld [vmem:[%s1195] sm:$0x7]
        %v1197 = vsub.f32 %v525, %v1196
        %v1198 = vmul.f32 %v1197, %v1197
        %v1200 = vrot.slane %v1198, 1
        %v1202 = vadd.f32 %v1198, %v1200
        %v1203 = vrot.slane %v1198, 2
        %v1205 = vadd.f32 %v1202, %v1203
        %v1206 = vrsqrt.pop %v1205
        %v1207 = vmul.f32 %v1205, %v1206
        %vm1208 = vcmp.eq.f32.partialorder %v1205, inf
        %v1209 = vsel %vm1208, %v1205, %v1207
        %vm1210 = vcmp.eq.f32.partialorder %v1205, 0.0
        %v1211 = vand.u32 %v1205, 2147483648
        %v1212 = vsel %vm1210, %v1211, %v1209
        %v1214 = vrot.slane %v1212, 5
        %v1216 = vsel %vm540, %v1196, %v1214
        %v1218 = vsel %vm639, %v1216, 0
        %1220 = vmatprep.subr.mxu0 0.0
        %1221 = vmatpush1.msra.mxu0 %v1218
        %1222 = vmatprep.subr.mxu0 0.0
        %1223 = vmatpush1.msra.mxu0 0.0
        %1224 = vmatprep.subr.mxu0 0.0
        %1225 = vmatpush1.msra.mxu0 0.0
        %1226 = vmatprep.subr.mxu0 0.0
        %1227 = vmatpush1.msra.mxu0 0.0
        %1228 = vmatprep.subr.mxu0 0.0
        %1229 = vmatpush1.msra.mxu0 0.0
        %1230 = vmatprep.subr.mxu0 0.0
        %1231 = vmatpush1.msra.mxu0 0.0
        %1232 = vmatprep.subr.mxu0 0.0
        %1233 = vmatpush1.msra.mxu0 0.0
        %1234 = vmatprep.subr.mxu0 0.0
        %1235 = vmatpush1.msra.mxu0 0.0
        %1236 = vmatprep.subr.mxu0 0.0
        %1237 = vmatpush1.msra.mxu0 0.0
        %1238 = vmatprep.subr.mxu0 0.0
        %1239 = vmatpush1.msra.mxu0 0.0
        %1240 = vmatprep.subr.mxu0 0.0
        %1241 = vmatpush1.msra.mxu0 0.0
        %1242 = vmatprep.subr.mxu0 0.0
        %1243 = vmatpush1.msra.mxu0 0.0
        %1244 = vmatprep.subr.mxu0 0.0
        %1245 = vmatpush1.msra.mxu0 0.0
        %1246 = vmatprep.subr.mxu0 0.0
        %1247 = vmatpush1.msra.mxu0 0.0
        %1248 = vmatprep.subr.mxu0 0.0
        %1249 = vmatpush1.msra.mxu0 0.0
        %1250 = vmatprep.subr.mxu0 0.0
        %1251 = vmatpush1.msra.mxu0 0.0
        %1252 = vmatprep.subr.mxu0 0.0
        %1253 = vmatpush1.msra.mxu0 0.0
        %1254 = vmatprep.subr.mxu0 0.0
        %1255 = vmatpush1.msra.mxu0 0.0
        %1256 = vmatprep.subr.mxu0 0.0
        %1257 = vmatpush1.msra.mxu0 0.0
        %1258 = vmatprep.subr.mxu0 0.0
        %1259 = vmatpush1.msra.mxu0 0.0
        %1260 = vmatprep.subr.mxu0 0.0
        %1261 = vmatpush1.msra.mxu0 0.0
        %1262 = vmatprep.subr.mxu0 0.0
        %1263 = vmatpush1.msra.mxu0 0.0
        %1264 = vmatprep.subr.mxu0 0.0
        %1265 = vmatpush1.msra.mxu0 0.0
        %1266 = vmatprep.subr.mxu0 0.0
        %1267 = vmatpush1.msra.mxu0 0.0
        %1268 = vmatprep.subr.mxu0 0.0
        %1269 = vmatpush1.msra.mxu0 0.0
        %1270 = vmatprep.subr.mxu0 0.0
        %1271 = vmatpush1.msra.mxu0 0.0
        %1272 = vmatprep.subr.mxu0 0.0
        %1273 = vmatpush1.msra.mxu0 0.0
        %1274 = vmatprep.subr.mxu0 0.0
        %1275 = vmatpush1.msra.mxu0 0.0
        %1276 = vmatprep.subr.mxu0 0.0
        %1277 = vmatpush1.msra.mxu0 0.0
        %1278 = vmatprep.subr.mxu0 0.0
        %1279 = vmatpush1.msra.mxu0 0.0
        %1280 = vmatprep.subr.mxu0 0.0
        %1281 = vmatpush1.msra.mxu0 0.0
        %1282 = vmatprep.subr.mxu0 0.0
        %1283 = vmatpush1.msra.mxu0 0.0
        %1284 = vmatprep.mubr.f32.mxu0 0.0
        %1285 = vmatmul.mubr.f32.gmra.mrb[0].mxu0 %v637
        %v1286 = vpop.f32.mrb[0].mxu0
        %v1287 = vadd.f32 0.0, %v1286
        %v1288 = vpop.f32.mrb[0].mxu0
        %1289 = vdwg.mxu0
        %v1290 = vadd.f32 %v611, %v1287
        %v1291 = vmax.f32 %v1290, 0.0
        %s1292 = scalar_lea.vmem %s456, 12 [#allocation7]
        %v1293 = vld [vmem:[%s1292] sm:$0xf]
        %v1294 = vunpack.c.l.bf16 %v1293
        %1295 = vmatprep.subr.mxu0 0.0
        %1296 = vmatpush1.msra.mxu0 %v1291
        %1297 = vmatprep.subr.mxu0 0.0
        %1298 = vmatpush1.msra.mxu0 %v1294
        %1299 = vmatprep.subr.mxu0 0.0
        %1300 = vmatpush1.msra.mxu0 0.0
        %1301 = vmatprep.subr.mxu0 0.0
        %1302 = vmatpush1.msra.mxu0 0.0
        %1303 = vmatprep.subr.mxu0 0.0
        %1304 = vmatpush1.msra.mxu0 0.0
        %1305 = vmatprep.subr.mxu0 0.0
        %1306 = vmatpush1.msra.mxu0 0.0
        %1307 = vmatprep.subr.mxu0 0.0
        %1308 = vmatpush1.msra.mxu0 0.0
        %1309 = vmatprep.subr.mxu0 0.0
        %1310 = vmatpush1.msra.mxu0 0.0
        %1311 = vmatprep.subr.mxu0 0.0
        %1312 = vmatpush1.msra.mxu0 0.0
        %1313 = vmatprep.subr.mxu0 0.0
        %1314 = vmatpush1.msra.mxu0 0.0
        %1315 = vmatprep.subr.mxu0 0.0
        %1316 = vmatpush1.msra.mxu0 0.0
        %1317 = vmatprep.subr.mxu0 0.0
        %1318 = vmatpush1.msra.mxu0 0.0
        %1319 = vmatprep.subr.mxu0 0.0
        %1320 = vmatpush1.msra.mxu0 0.0
        %1321 = vmatprep.subr.mxu0 0.0
        %1322 = vmatpush1.msra.mxu0 0.0
        %1323 = vmatprep.subr.mxu0 0.0
        %1324 = vmatpush1.msra.mxu0 0.0
        %1325 = vmatprep.subr.mxu0 0.0
        %1326 = vmatpush1.msra.mxu0 0.0
        %1327 = vmatprep.subr.mxu0 0.0
        %1328 = vmatpush1.msra.mxu0 0.0
        %1329 = vmatprep.subr.mxu0 0.0
        %1330 = vmatpush1.msra.mxu0 0.0
        %1331 = vmatprep.subr.mxu0 0.0
        %1332 = vmatpush1.msra.mxu0 0.0
        %1333 = vmatprep.subr.mxu0 0.0
        %1334 = vmatpush1.msra.mxu0 0.0
        %1335 = vmatprep.subr.mxu0 0.0
        %1336 = vmatpush1.msra.mxu0 0.0
        %1337 = vmatprep.subr.mxu0 0.0
        %1338 = vmatpush1.msra.mxu0 0.0
        %1339 = vmatprep.subr.mxu0 0.0
        %1340 = vmatpush1.msra.mxu0 0.0
        %1341 = vmatprep.subr.mxu0 0.0
        %1342 = vmatpush1.msra.mxu0 0.0
        %1343 = vmatprep.subr.mxu0 0.0
        %1344 = vmatpush1.msra.mxu0 0.0
        %1345 = vmatprep.subr.mxu0 0.0
        %1346 = vmatpush1.msra.mxu0 0.0
        %1347 = vmatprep.subr.mxu0 0.0
        %1348 = vmatpush1.msra.mxu0 0.0
        %1349 = vmatprep.subr.mxu0 0.0
        %1350 = vmatpush1.msra.mxu0 0.0
        %1351 = vmatprep.subr.mxu0 0.0
        %1352 = vmatpush1.msra.mxu0 0.0
        %1353 = vmatprep.subr.mxu0 0.0
        %1354 = vmatpush1.msra.mxu0 0.0
        %1355 = vmatprep.subr.mxu0 0.0
        %1356 = vmatpush1.msra.mxu0 0.0
        %1357 = vmatprep.subr.mxu0 0.0
        %1358 = vmatpush1.msra.mxu0 0.0
        %1359 = vmatprep.mubr.f32.mxu0 0.0
        %1360 = vmatmul.mubr.f32.gmra.mrb[0].mxu0 %v719
        %v1361 = vpop.f32.mrb[0].mxu0
        %v1362 = vadd.f32 0.0, %v1361
        %v1363 = vpop.f32.mrb[0].mxu0
        %1364 = vmatprep.mubr.f32.mxu0 0.0
        %1365 = vmatmul.mubr.f32.gmra.mrb[0].mxu0 %v722
        %v1366 = vpop.f32.mrb[0].mxu0
        %v1367 = vadd.f32 0.0, %v1366
        %v1368 = vpop.f32.mrb[0].mxu0
        %1369 = vdwg.mxu0
        %v1370 = vmax.f32 %v1171, %v1362
        %v1371 = vmax.f32 %v1172, %v1367
        %v1372 = vsub.f32 %v1171, %v1370
        %v1373 = vsub.f32 %v1172, %v1371
        %v1374 = vmul.f32 %v1372, 1.442695
        %v1375 = vpow.pop %v1374
        %v1376 = vmul.f32 %v1373, 1.442695
        %v1377 = vpow.pop %v1376
        %v1378 = vsub.f32 %v1362, %v1370
        %v1379 = vsub.f32 %v1367, %v1371
        %v1380 = vmul.f32 %v1378, 1.442695
        %v1381 = vpow.pop %v1380
        %v1382 = vmul.f32 %v1379, 1.442695
        %v1383 = vpow.pop %v1382
        %v1384 = vmul.f32 %v1187, %v1375
        %v1385 = vmul.f32 %v1188, %v1377
        %v1386 = vadd.f32 %v1384, %v1381
        %v1387 = vadd.f32 %v1385, %v1383
        %v1388 = vmul.f32 %v1193, %v1375
        %v1389 = vmul.f32 %v1194, %v1377
        %v1390 = vmul.f32 %v1381, %v1291
        %v1391 = vmul.f32 %v1383, %v1294
        %v1392 = vadd.f32 %v1388, %v1390
        %v1393 = vadd.f32 %v1389, %v1391
        %s1394 = scalar_lea.vmem %s447, 16 [#allocation5]
        %v1395 = vld [vmem:[%s1394] sm:$0x7]
        %v1396 = vsub.f32 %v525, %v1395
        %v1397 = vmul.f32 %v1396, %v1396
        %v1399 = vrot.slane %v1397, 1
        %v1401 = vadd.f32 %v1397, %v1399
        %v1402 = vrot.slane %v1397, 2
        %v1404 = vadd.f32 %v1401, %v1402
        %v1405 = vrsqrt.pop %v1404
        %v1406 = vmul.f32 %v1404, %v1405
        %vm1407 = vcmp.eq.f32.partialorder %v1404, inf
        %v1408 = vsel %vm1407, %v1404, %v1406
        %vm1409 = vcmp.eq.f32.partialorder %v1404, 0.0
        %v1410 = vand.u32 %v1404, 2147483648
        %v1411 = vsel %vm1409, %v1410, %v1408
        %v1413 = vrot.slane %v1411, 5
        %v1415 = vsel %vm540, %v1395, %v1413
        %v1417 = vsel %vm639, %v1415, 0
        %1419 = vmatprep.subr.mxu0 0.0
        %1420 = vmatpush1.msra.mxu0 %v1417
        %1421 = vmatprep.subr.mxu0 0.0
        %1422 = vmatpush1.msra.mxu0 0.0
        %1423 = vmatprep.subr.mxu0 0.0
        %1424 = vmatpush1.msra.mxu0 0.0
        %1425 = vmatprep.subr.mxu0 0.0
        %1426 = vmatpush1.msra.mxu0 0.0
        %1427 = vmatprep.subr.mxu0 0.0
        %1428 = vmatpush1.msra.mxu0 0.0
        %1429 = vmatprep.subr.mxu0 0.0
        %1430 = vmatpush1.msra.mxu0 0.0
        %1431 = vmatprep.subr.mxu0 0.0
        %1432 = vmatpush1.msra.mxu0 0.0
        %1433 = vmatprep.subr.mxu0 0.0
        %1434 = vmatpush1.msra.mxu0 0.0
        %1435 = vmatprep.subr.mxu0 0.0
        %1436 = vmatpush1.msra.mxu0 0.0
        %1437 = vmatprep.subr.mxu0 0.0
        %1438 = vmatpush1.msra.mxu0 0.0
        %1439 = vmatprep.subr.mxu0 0.0
        %1440 = vmatpush1.msra.mxu0 0.0
        %1441 = vmatprep.subr.mxu0 0.0
        %1442 = vmatpush1.msra.mxu0 0.0
        %1443 = vmatprep.subr.mxu0 0.0
        %1444 = vmatpush1.msra.mxu0 0.0
        %1445 = vmatprep.subr.mxu0 0.0
        %1446 = vmatpush1.msra.mxu0 0.0
        %1447 = vmatprep.subr.mxu0 0.0
        %1448 = vmatpush1.msra.mxu0 0.0
        %1449 = vmatprep.subr.mxu0 0.0
        %1450 = vmatpush1.msra.mxu0 0.0
        %1451 = vmatprep.subr.mxu0 0.0
        %1452 = vmatpush1.msra.mxu0 0.0
        %1453 = vmatprep.subr.mxu0 0.0
        %1454 = vmatpush1.msra.mxu0 0.0
        %1455 = vmatprep.subr.mxu0 0.0
        %1456 = vmatpush1.msra.mxu0 0.0
        %1457 = vmatprep.subr.mxu0 0.0
        %1458 = vmatpush1.msra.mxu0 0.0
        %1459 = vmatprep.subr.mxu0 0.0
        %1460 = vmatpush1.msra.mxu0 0.0
        %1461 = vmatprep.subr.mxu0 0.0
        %1462 = vmatpush1.msra.mxu0 0.0
        %1463 = vmatprep.subr.mxu0 0.0
        %1464 = vmatpush1.msra.mxu0 0.0
        %1465 = vmatprep.subr.mxu0 0.0
        %1466 = vmatpush1.msra.mxu0 0.0
        %1467 = vmatprep.subr.mxu0 0.0
        %1468 = vmatpush1.msra.mxu0 0.0
        %1469 = vmatprep.subr.mxu0 0.0
        %1470 = vmatpush1.msra.mxu0 0.0
        %1471 = vmatprep.subr.mxu0 0.0
        %1472 = vmatpush1.msra.mxu0 0.0
        %1473 = vmatprep.subr.mxu0 0.0
        %1474 = vmatpush1.msra.mxu0 0.0
        %1475 = vmatprep.subr.mxu0 0.0
        %1476 = vmatpush1.msra.mxu0 0.0
        %1477 = vmatprep.subr.mxu0 0.0
        %1478 = vmatpush1.msra.mxu0 0.0
        %1479 = vmatprep.subr.mxu0 0.0
        %1480 = vmatpush1.msra.mxu0 0.0
        %1481 = vmatprep.subr.mxu0 0.0
        %1482 = vmatpush1.msra.mxu0 0.0
        %1483 = vmatprep.mubr.f32.mxu0 0.0
        %1484 = vmatmul.mubr.f32.gmra.mrb[0].mxu0 %v637
        %v1485 = vpop.f32.mrb[0].mxu0
        %v1486 = vadd.f32 0.0, %v1485
        %v1487 = vpop.f32.mrb[0].mxu0
        %1488 = vdwg.mxu0
        %v1489 = vadd.f32 %v611, %v1486
        %v1490 = vmax.f32 %v1489, 0.0
        %s1491 = scalar_lea.vmem %s456, 16 [#allocation7]
        %v1492 = vld [vmem:[%s1491] sm:$0xf]
        %v1493 = vunpack.c.l.bf16 %v1492
        %1494 = vmatprep.subr.mxu0 0.0
        %1495 = vmatpush1.msra.mxu0 %v1490
        %1496 = vmatprep.subr.mxu0 0.0
        %1497 = vmatpush1.msra.mxu0 %v1493
        %1498 = vmatprep.subr.mxu0 0.0
        %1499 = vmatpush1.msra.mxu0 0.0
        %1500 = vmatprep.subr.mxu0 0.0
        %1501 = vmatpush1.msra.mxu0 0.0
        %1502 = vmatprep.subr.mxu0 0.0
        %1503 = vmatpush1.msra.mxu0 0.0
        %1504 = vmatprep.subr.mxu0 0.0
        %1505 = vmatpush1.msra.mxu0 0.0
        %1506 = vmatprep.subr.mxu0 0.0
        %1507 = vmatpush1.msra.mxu0 0.0
        %1508 = vmatprep.subr.mxu0 0.0
        %1509 = vmatpush1.msra.mxu0 0.0
        %1510 = vmatprep.subr.mxu0 0.0
        %1511 = vmatpush1.msra.mxu0 0.0
        %1512 = vmatprep.subr.mxu0 0.0
        %1513 = vmatpush1.msra.mxu0 0.0
        %1514 = vmatprep.subr.mxu0 0.0
        %1515 = vmatpush1.msra.mxu0 0.0
        %1516 = vmatprep.subr.mxu0 0.0
        %1517 = vmatpush1.msra.mxu0 0.0
        %1518 = vmatprep.subr.mxu0 0.0
        %1519 = vmatpush1.msra.mxu0 0.0
        %1520 = vmatprep.subr.mxu0 0.0
        %1521 = vmatpush1.msra.mxu0 0.0
        %1522 = vmatprep.subr.mxu0 0.0
        %1523 = vmatpush1.msra.mxu0 0.0
        %1524 = vmatprep.subr.mxu0 0.0
        %1525 = vmatpush1.msra.mxu0 0.0
        %1526 = vmatprep.subr.mxu0 0.0
        %1527 = vmatpush1.msra.mxu0 0.0
        %1528 = vmatprep.subr.mxu0 0.0
        %1529 = vmatpush1.msra.mxu0 0.0
        %1530 = vmatprep.subr.mxu0 0.0
        %1531 = vmatpush1.msra.mxu0 0.0
        %1532 = vmatprep.subr.mxu0 0.0
        %1533 = vmatpush1.msra.mxu0 0.0
        %1534 = vmatprep.subr.mxu0 0.0
        %1535 = vmatpush1.msra.mxu0 0.0
        %1536 = vmatprep.subr.mxu0 0.0
        %1537 = vmatpush1.msra.mxu0 0.0
        %1538 = vmatprep.subr.mxu0 0.0
        %1539 = vmatpush1.msra.mxu0 0.0
        %1540 = vmatprep.subr.mxu0 0.0
        %1541 = vmatpush1.msra.mxu0 0.0
        %1542 = vmatprep.subr.mxu0 0.0
        %1543 = vmatpush1.msra.mxu0 0.0
        %1544 = vmatprep.subr.mxu0 0.0
        %1545 = vmatpush1.msra.mxu0 0.0
        %1546 = vmatprep.subr.mxu0 0.0
        %1547 = vmatpush1.msra.mxu0 0.0
        %1548 = vmatprep.subr.mxu0 0.0
        %1549 = vmatpush1.msra.mxu0 0.0
        %1550 = vmatprep.subr.mxu0 0.0
        %1551 = vmatpush1.msra.mxu0 0.0
        %1552 = vmatprep.subr.mxu0 0.0
        %1553 = vmatpush1.msra.mxu0 0.0
        %1554 = vmatprep.subr.mxu0 0.0
        %1555 = vmatpush1.msra.mxu0 0.0
        %1556 = vmatprep.subr.mxu0 0.0
        %1557 = vmatpush1.msra.mxu0 0.0
        %1558 = vmatprep.mubr.f32.mxu0 0.0
        %1559 = vmatmul.mubr.f32.gmra.mrb[0].mxu0 %v719
        %v1560 = vpop.f32.mrb[0].mxu0
        %v1561 = vadd.f32 0.0, %v1560
        %v1562 = vpop.f32.mrb[0].mxu0
        %1563 = vmatprep.mubr.f32.mxu0 0.0
        %1564 = vmatmul.mubr.f32.gmra.mrb[0].mxu0 %v722
        %v1565 = vpop.f32.mrb[0].mxu0
        %v1566 = vadd.f32 0.0, %v1565
        %v1567 = vpop.f32.mrb[0].mxu0
        %1568 = vdwg.mxu0
        %v1569 = vmax.f32 %v1370, %v1561
        %v1570 = vmax.f32 %v1371, %v1566
        %v1571 = vsub.f32 %v1370, %v1569
        %v1572 = vsub.f32 %v1371, %v1570
        %v1573 = vmul.f32 %v1571, 1.442695
        %v1574 = vpow.pop %v1573
        %v1575 = vmul.f32 %v1572, 1.442695
        %v1576 = vpow.pop %v1575
        %v1577 = vsub.f32 %v1561, %v1569
        %v1578 = vsub.f32 %v1566, %v1570
        %v1579 = vmul.f32 %v1577, 1.442695
        %v1580 = vpow.pop %v1579
        %v1581 = vmul.f32 %v1578, 1.442695
        %v1582 = vpow.pop %v1581
        %v1583 = vmul.f32 %v1386, %v1574
        %v1584 = vmul.f32 %v1387, %v1576
        %v1585 = vadd.f32 %v1583, %v1580
        %v1586 = vadd.f32 %v1584, %v1582
        %v1587 = vmul.f32 %v1392, %v1574
        %v1588 = vmul.f32 %v1393, %v1576
        %v1589 = vmul.f32 %v1580, %v1490
        %v1590 = vmul.f32 %v1582, %v1493
        %v1591 = vadd.f32 %v1587, %v1589
        %v1592 = vadd.f32 %v1588, %v1590
        %s1593 = scalar_lea.vmem %s447, 20 [#allocation5]
        %v1594 = vld [vmem:[%s1593] sm:$0x7]
        %v1595 = vsub.f32 %v525, %v1594
        %v1596 = vmul.f32 %v1595, %v1595
        %v1598 = vrot.slane %v1596, 1
        %v1600 = vadd.f32 %v1596, %v1598
        %v1601 = vrot.slane %v1596, 2
        %v1603 = vadd.f32 %v1600, %v1601
        %v1604 = vrsqrt.pop %v1603
        %v1605 = vmul.f32 %v1603, %v1604
        %vm1606 = vcmp.eq.f32.partialorder %v1603, inf
        %v1607 = vsel %vm1606, %v1603, %v1605
        %vm1608 = vcmp.eq.f32.partialorder %v1603, 0.0
        %v1609 = vand.u32 %v1603, 2147483648
        %v1610 = vsel %vm1608, %v1609, %v1607
        %v1612 = vrot.slane %v1610, 5
        %v1614 = vsel %vm540, %v1594, %v1612
        %v1616 = vsel %vm639, %v1614, 0
        %1618 = vmatprep.subr.mxu0 0.0
        %1619 = vmatpush1.msra.mxu0 %v1616
        %1620 = vmatprep.subr.mxu0 0.0
        %1621 = vmatpush1.msra.mxu0 0.0
        %1622 = vmatprep.subr.mxu0 0.0
        %1623 = vmatpush1.msra.mxu0 0.0
        %1624 = vmatprep.subr.mxu0 0.0
        %1625 = vmatpush1.msra.mxu0 0.0
        %1626 = vmatprep.subr.mxu0 0.0
        %1627 = vmatpush1.msra.mxu0 0.0
        %1628 = vmatprep.subr.mxu0 0.0
        %1629 = vmatpush1.msra.mxu0 0.0
        %1630 = vmatprep.subr.mxu0 0.0
        %1631 = vmatpush1.msra.mxu0 0.0
        %1632 = vmatprep.subr.mxu0 0.0
        %1633 = vmatpush1.msra.mxu0 0.0
        %1634 = vmatprep.subr.mxu0 0.0
        %1635 = vmatpush1.msra.mxu0 0.0
        %1636 = vmatprep.subr.mxu0 0.0
        %1637 = vmatpush1.msra.mxu0 0.0
        %1638 = vmatprep.subr.mxu0 0.0
        %1639 = vmatpush1.msra.mxu0 0.0
        %1640 = vmatprep.subr.mxu0 0.0
        %1641 = vmatpush1.msra.mxu0 0.0
        %1642 = vmatprep.subr.mxu0 0.0
        %1643 = vmatpush1.msra.mxu0 0.0
        %1644 = vmatprep.subr.mxu0 0.0
        %1645 = vmatpush1.msra.mxu0 0.0
        %1646 = vmatprep.subr.mxu0 0.0
        %1647 = vmatpush1.msra.mxu0 0.0
        %1648 = vmatprep.subr.mxu0 0.0
        %1649 = vmatpush1.msra.mxu0 0.0
        %1650 = vmatprep.subr.mxu0 0.0
        %1651 = vmatpush1.msra.mxu0 0.0
        %1652 = vmatprep.subr.mxu0 0.0
        %1653 = vmatpush1.msra.mxu0 0.0
        %1654 = vmatprep.subr.mxu0 0.0
        %1655 = vmatpush1.msra.mxu0 0.0
        %1656 = vmatprep.subr.mxu0 0.0
        %1657 = vmatpush1.msra.mxu0 0.0
        %1658 = vmatprep.subr.mxu0 0.0
        %1659 = vmatpush1.msra.mxu0 0.0
        %1660 = vmatprep.subr.mxu0 0.0
        %1661 = vmatpush1.msra.mxu0 0.0
        %1662 = vmatprep.subr.mxu0 0.0
        %1663 = vmatpush1.msra.mxu0 0.0
        %1664 = vmatprep.subr.mxu0 0.0
        %1665 = vmatpush1.msra.mxu0 0.0
        %1666 = vmatprep.subr.mxu0 0.0
        %1667 = vmatpush1.msra.mxu0 0.0
        %1668 = vmatprep.subr.mxu0 0.0
        %1669 = vmatpush1.msra.mxu0 0.0
        %1670 = vmatprep.subr.mxu0 0.0
        %1671 = vmatpush1.msra.mxu0 0.0
        %1672 = vmatprep.subr.mxu0 0.0
        %1673 = vmatpush1.msra.mxu0 0.0
        %1674 = vmatprep.subr.mxu0 0.0
        %1675 = vmatpush1.msra.mxu0 0.0
        %1676 = vmatprep.subr.mxu0 0.0
        %1677 = vmatpush1.msra.mxu0 0.0
        %1678 = vmatprep.subr.mxu0 0.0
        %1679 = vmatpush1.msra.mxu0 0.0
        %1680 = vmatprep.subr.mxu0 0.0
        %1681 = vmatpush1.msra.mxu0 0.0
        %1682 = vmatprep.mubr.f32.mxu0 0.0
        %1683 = vmatmul.mubr.f32.gmra.mrb[0].mxu0 %v637
        %v1684 = vpop.f32.mrb[0].mxu0
        %v1685 = vadd.f32 0.0, %v1684
        %v1686 = vpop.f32.mrb[0].mxu0
        %1687 = vdwg.mxu0
        %v1688 = vadd.f32 %v611, %v1685
        %v1689 = vmax.f32 %v1688, 0.0
        %s1690 = scalar_lea.vmem %s456, 20 [#allocation7]
        %v1691 = vld [vmem:[%s1690] sm:$0xf]
        %v1692 = vunpack.c.l.bf16 %v1691
        %1693 = vmatprep.subr.mxu0 0.0
        %1694 = vmatpush1.msra.mxu0 %v1689
        %1695 = vmatprep.subr.mxu0 0.0
        %1696 = vmatpush1.msra.mxu0 %v1692
        %1697 = vmatprep.subr.mxu0 0.0
        %1698 = vmatpush1.msra.mxu0 0.0
        %1699 = vmatprep.subr.mxu0 0.0
        %1700 = vmatpush1.msra.mxu0 0.0
        %1701 = vmatprep.subr.mxu0 0.0
        %1702 = vmatpush1.msra.mxu0 0.0
        %1703 = vmatprep.subr.mxu0 0.0
        %1704 = vmatpush1.msra.mxu0 0.0
        %1705 = vmatprep.subr.mxu0 0.0
        %1706 = vmatpush1.msra.mxu0 0.0
        %1707 = vmatprep.subr.mxu0 0.0
        %1708 = vmatpush1.msra.mxu0 0.0
        %1709 = vmatprep.subr.mxu0 0.0
        %1710 = vmatpush1.msra.mxu0 0.0
        %1711 = vmatprep.subr.mxu0 0.0
        %1712 = vmatpush1.msra.mxu0 0.0
        %1713 = vmatprep.subr.mxu0 0.0
        %1714 = vmatpush1.msra.mxu0 0.0
        %1715 = vmatprep.subr.mxu0 0.0
        %1716 = vmatpush1.msra.mxu0 0.0
        %1717 = vmatprep.subr.mxu0 0.0
        %1718 = vmatpush1.msra.mxu0 0.0
        %1719 = vmatprep.subr.mxu0 0.0
        %1720 = vmatpush1.msra.mxu0 0.0
        %1721 = vmatprep.subr.mxu0 0.0
        %1722 = vmatpush1.msra.mxu0 0.0
        %1723 = vmatprep.subr.mxu0 0.0
        %1724 = vmatpush1.msra.mxu0 0.0
        %1725 = vmatprep.subr.mxu0 0.0
        %1726 = vmatpush1.msra.mxu0 0.0
        %1727 = vmatprep.subr.mxu0 0.0
        %1728 = vmatpush1.msra.mxu0 0.0
        %1729 = vmatprep.subr.mxu0 0.0
        %1730 = vmatpush1.msra.mxu0 0.0
        %1731 = vmatprep.subr.mxu0 0.0
        %1732 = vmatpush1.msra.mxu0 0.0
        %1733 = vmatprep.subr.mxu0 0.0
        %1734 = vmatpush1.msra.mxu0 0.0
        %1735 = vmatprep.subr.mxu0 0.0
        %1736 = vmatpush1.msra.mxu0 0.0
        %1737 = vmatprep.subr.mxu0 0.0
        %1738 = vmatpush1.msra.mxu0 0.0
        %1739 = vmatprep.subr.mxu0 0.0
        %1740 = vmatpush1.msra.mxu0 0.0
        %1741 = vmatprep.subr.mxu0 0.0
        %1742 = vmatpush1.msra.mxu0 0.0
        %1743 = vmatprep.subr.mxu0 0.0
        %1744 = vmatpush1.msra.mxu0 0.0
        %1745 = vmatprep.subr.mxu0 0.0
        %1746 = vmatpush1.msra.mxu0 0.0
        %1747 = vmatprep.subr.mxu0 0.0
        %1748 = vmatpush1.msra.mxu0 0.0
        %1749 = vmatprep.subr.mxu0 0.0
        %1750 = vmatpush1.msra.mxu0 0.0
        %1751 = vmatprep.subr.mxu0 0.0
        %1752 = vmatpush1.msra.mxu0 0.0
        %1753 = vmatprep.subr.mxu0 0.0
        %1754 = vmatpush1.msra.mxu0 0.0
        %1755 = vmatprep.subr.mxu0 0.0
        %1756 = vmatpush1.msra.mxu0 0.0
        %1757 = vmatprep.mubr.f32.mxu0 0.0
        %1758 = vmatmul.mubr.f32.gmra.mrb[0].mxu0 %v719
        %v1759 = vpop.f32.mrb[0].mxu0
        %v1760 = vadd.f32 0.0, %v1759
        %v1761 = vpop.f32.mrb[0].mxu0
        %1762 = vmatprep.mubr.f32.mxu0 0.0
        %1763 = vmatmul.mubr.f32.gmra.mrb[0].mxu0 %v722
        %v1764 = vpop.f32.mrb[0].mxu0
        %v1765 = vadd.f32 0.0, %v1764
        %v1766 = vpop.f32.mrb[0].mxu0
        %1767 = vdwg.mxu0
        %v1768 = vmax.f32 %v1569, %v1760
        %v1769 = vmax.f32 %v1570, %v1765
        %v1770 = vsub.f32 %v1569, %v1768
        %v1771 = vsub.f32 %v1570, %v1769
        %v1772 = vmul.f32 %v1770, 1.442695
        %v1773 = vpow.pop %v1772
        %v1774 = vmul.f32 %v1771, 1.442695
        %v1775 = vpow.pop %v1774
        %v1776 = vsub.f32 %v1760, %v1768
        %v1777 = vsub.f32 %v1765, %v1769
        %v1778 = vmul.f32 %v1776, 1.442695
        %v1779 = vpow.pop %v1778
        %v1780 = vmul.f32 %v1777, 1.442695
        %v1781 = vpow.pop %v1780
        %v1782 = vmul.f32 %v1585, %v1773
        %v1783 = vmul.f32 %v1586, %v1775
        %v1784 = vadd.f32 %v1782, %v1779
        %v1785 = vadd.f32 %v1783, %v1781
        %v1786 = vmul.f32 %v1591, %v1773
        %v1787 = vmul.f32 %v1592, %v1775
        %v1788 = vmul.f32 %v1779, %v1689
        %v1789 = vmul.f32 %v1781, %v1692
        %v1790 = vadd.f32 %v1786, %v1788
        %v1791 = vadd.f32 %v1787, %v1789
        %s1792 = scalar_lea.vmem %s447, 24 [#allocation5]
        %v1793 = vld [vmem:[%s1792] sm:$0x7]
        %v1794 = vsub.f32 %v525, %v1793
        %v1795 = vmul.f32 %v1794, %v1794
        %v1797 = vrot.slane %v1795, 1
        %v1799 = vadd.f32 %v1795, %v1797
        %v1800 = vrot.slane %v1795, 2
        %v1802 = vadd.f32 %v1799, %v1800
        %v1803 = vrsqrt.pop %v1802
        %v1804 = vmul.f32 %v1802, %v1803
        %vm1805 = vcmp.eq.f32.partialorder %v1802, inf
        %v1806 = vsel %vm1805, %v1802, %v1804
        %vm1807 = vcmp.eq.f32.partialorder %v1802, 0.0
        %v1808 = vand.u32 %v1802, 2147483648
        %v1809 = vsel %vm1807, %v1808, %v1806
        %v1811 = vrot.slane %v1809, 5
        %v1813 = vsel %vm540, %v1793, %v1811
        %v1815 = vsel %vm639, %v1813, 0
        %1817 = vmatprep.subr.mxu0 0.0
        %1818 = vmatpush1.msra.mxu0 %v1815
        %1819 = vmatprep.subr.mxu0 0.0
        %1820 = vmatpush1.msra.mxu0 0.0
        %1821 = vmatprep.subr.mxu0 0.0
        %1822 = vmatpush1.msra.mxu0 0.0
        %1823 = vmatprep.subr.mxu0 0.0
        %1824 = vmatpush1.msra.mxu0 0.0
        %1825 = vmatprep.subr.mxu0 0.0
        %1826 = vmatpush1.msra.mxu0 0.0
        %1827 = vmatprep.subr.mxu0 0.0
        %1828 = vmatpush1.msra.mxu0 0.0
        %1829 = vmatprep.subr.mxu0 0.0
        %1830 = vmatpush1.msra.mxu0 0.0
        %1831 = vmatprep.subr.mxu0 0.0
        %1832 = vmatpush1.msra.mxu0 0.0
        %1833 = vmatprep.subr.mxu0 0.0
        %1834 = vmatpush1.msra.mxu0 0.0
        %1835 = vmatprep.subr.mxu0 0.0
        %1836 = vmatpush1.msra.mxu0 0.0
        %1837 = vmatprep.subr.mxu0 0.0
        %1838 = vmatpush1.msra.mxu0 0.0
        %1839 = vmatprep.subr.mxu0 0.0
        %1840 = vmatpush1.msra.mxu0 0.0
        %1841 = vmatprep.subr.mxu0 0.0
        %1842 = vmatpush1.msra.mxu0 0.0
        %1843 = vmatprep.subr.mxu0 0.0
        %1844 = vmatpush1.msra.mxu0 0.0
        %1845 = vmatprep.subr.mxu0 0.0
        %1846 = vmatpush1.msra.mxu0 0.0
        %1847 = vmatprep.subr.mxu0 0.0
        %1848 = vmatpush1.msra.mxu0 0.0
        %1849 = vmatprep.subr.mxu0 0.0
        %1850 = vmatpush1.msra.mxu0 0.0
        %1851 = vmatprep.subr.mxu0 0.0
        %1852 = vmatpush1.msra.mxu0 0.0
        %1853 = vmatprep.subr.mxu0 0.0
        %1854 = vmatpush1.msra.mxu0 0.0
        %1855 = vmatprep.subr.mxu0 0.0
        %1856 = vmatpush1.msra.mxu0 0.0
        %1857 = vmatprep.subr.mxu0 0.0
        %1858 = vmatpush1.msra.mxu0 0.0
        %1859 = vmatprep.subr.mxu0 0.0
        %1860 = vmatpush1.msra.mxu0 0.0
        %1861 = vmatprep.subr.mxu0 0.0
        %1862 = vmatpush1.msra.mxu0 0.0
        %1863 = vmatprep.subr.mxu0 0.0
        %1864 = vmatpush1.msra.mxu0 0.0
        %1865 = vmatprep.subr.mxu0 0.0
        %1866 = vmatpush1.msra.mxu0 0.0
        %1867 = vmatprep.subr.mxu0 0.0
        %1868 = vmatpush1.msra.mxu0 0.0
        %1869 = vmatprep.subr.mxu0 0.0
        %1870 = vmatpush1.msra.mxu0 0.0
        %1871 = vmatprep.subr.mxu0 0.0
        %1872 = vmatpush1.msra.mxu0 0.0
        %1873 = vmatprep.subr.mxu0 0.0
        %1874 = vmatpush1.msra.mxu0 0.0
        %1875 = vmatprep.subr.mxu0 0.0
        %1876 = vmatpush1.msra.mxu0 0.0
        %1877 = vmatprep.subr.mxu0 0.0
        %1878 = vmatpush1.msra.mxu0 0.0
        %1879 = vmatprep.subr.mxu0 0.0
        %1880 = vmatpush1.msra.mxu0 0.0
        %1881 = vmatprep.mubr.f32.mxu0 0.0
        %1882 = vmatmul.mubr.f32.gmra.mrb[0].mxu0 %v637
        %v1883 = vpop.f32.mrb[0].mxu0
        %v1884 = vadd.f32 0.0, %v1883
        %v1885 = vpop.f32.mrb[0].mxu0
        %1886 = vdwg.mxu0
        %v1887 = vadd.f32 %v611, %v1884
        %v1888 = vmax.f32 %v1887, 0.0
        %s1889 = scalar_lea.vmem %s456, 24 [#allocation7]
        %v1890 = vld [vmem:[%s1889] sm:$0xf]
        %v1891 = vunpack.c.l.bf16 %v1890
        %1892 = vmatprep.subr.mxu0 0.0
        %1893 = vmatpush1.msra.mxu0 %v1888
        %1894 = vmatprep.subr.mxu0 0.0
        %1895 = vmatpush1.msra.mxu0 %v1891
        %1896 = vmatprep.subr.mxu0 0.0
        %1897 = vmatpush1.msra.mxu0 0.0
        %1898 = vmatprep.subr.mxu0 0.0
        %1899 = vmatpush1.msra.mxu0 0.0
        %1900 = vmatprep.subr.mxu0 0.0
        %1901 = vmatpush1.msra.mxu0 0.0
        %1902 = vmatprep.subr.mxu0 0.0
        %1903 = vmatpush1.msra.mxu0 0.0
        %1904 = vmatprep.subr.mxu0 0.0
        %1905 = vmatpush1.msra.mxu0 0.0
        %1906 = vmatprep.subr.mxu0 0.0
        %1907 = vmatpush1.msra.mxu0 0.0
        %1908 = vmatprep.subr.mxu0 0.0
        %1909 = vmatpush1.msra.mxu0 0.0
        %1910 = vmatprep.subr.mxu0 0.0
        %1911 = vmatpush1.msra.mxu0 0.0
        %1912 = vmatprep.subr.mxu0 0.0
        %1913 = vmatpush1.msra.mxu0 0.0
        %1914 = vmatprep.subr.mxu0 0.0
        %1915 = vmatpush1.msra.mxu0 0.0
        %1916 = vmatprep.subr.mxu0 0.0
        %1917 = vmatpush1.msra.mxu0 0.0
        %1918 = vmatprep.subr.mxu0 0.0
        %1919 = vmatpush1.msra.mxu0 0.0
        %1920 = vmatprep.subr.mxu0 0.0
        %1921 = vmatpush1.msra.mxu0 0.0
        %1922 = vmatprep.subr.mxu0 0.0
        %1923 = vmatpush1.msra.mxu0 0.0
        %1924 = vmatprep.subr.mxu0 0.0
        %1925 = vmatpush1.msra.mxu0 0.0
        %1926 = vmatprep.subr.mxu0 0.0
        %1927 = vmatpush1.msra.mxu0 0.0
        %1928 = vmatprep.subr.mxu0 0.0
        %1929 = vmatpush1.msra.mxu0 0.0
        %1930 = vmatprep.subr.mxu0 0.0
        %1931 = vmatpush1.msra.mxu0 0.0
        %1932 = vmatprep.subr.mxu0 0.0
        %1933 = vmatpush1.msra.mxu0 0.0
        %1934 = vmatprep.subr.mxu0 0.0
        %1935 = vmatpush1.msra.mxu0 0.0
        %1936 = vmatprep.subr.mxu0 0.0
        %1937 = vmatpush1.msra.mxu0 0.0
        %1938 = vmatprep.subr.mxu0 0.0
        %1939 = vmatpush1.msra.mxu0 0.0
        %1940 = vmatprep.subr.mxu0 0.0
        %1941 = vmatpush1.msra.mxu0 0.0
        %1942 = vmatprep.subr.mxu0 0.0
        %1943 = vmatpush1.msra.mxu0 0.0
        %1944 = vmatprep.subr.mxu0 0.0
        %1945 = vmatpush1.msra.mxu0 0.0
        %1946 = vmatprep.subr.mxu0 0.0
        %1947 = vmatpush1.msra.mxu0 0.0
        %1948 = vmatprep.subr.mxu0 0.0
        %1949 = vmatpush1.msra.mxu0 0.0
        %1950 = vmatprep.subr.mxu0 0.0
        %1951 = vmatpush1.msra.mxu0 0.0
        %1952 = vmatprep.subr.mxu0 0.0
        %1953 = vmatpush1.msra.mxu0 0.0
        %1954 = vmatprep.subr.mxu0 0.0
        %1955 = vmatpush1.msra.mxu0 0.0
        %1956 = vmatprep.mubr.f32.mxu0 0.0
        %1957 = vmatmul.mubr.f32.gmra.mrb[0].mxu0 %v719
        %v1958 = vpop.f32.mrb[0].mxu0
        %v1959 = vadd.f32 0.0, %v1958
        %v1960 = vpop.f32.mrb[0].mxu0
        %1961 = vmatprep.mubr.f32.mxu0 0.0
        %1962 = vmatmul.mubr.f32.gmra.mrb[0].mxu0 %v722
        %v1963 = vpop.f32.mrb[0].mxu0
        %v1964 = vadd.f32 0.0, %v1963
        %v1965 = vpop.f32.mrb[0].mxu0
        %1966 = vdwg.mxu0
        %v1967 = vmax.f32 %v1768, %v1959
        %v1968 = vmax.f32 %v1769, %v1964
        %v1969 = vsub.f32 %v1768, %v1967
        %v1970 = vsub.f32 %v1769, %v1968
        %v1971 = vmul.f32 %v1969, 1.442695
        %v1972 = vpow.pop %v1971
        %v1973 = vmul.f32 %v1970, 1.442695
        %v1974 = vpow.pop %v1973
        %v1975 = vsub.f32 %v1959, %v1967
        %v1976 = vsub.f32 %v1964, %v1968
        %v1977 = vmul.f32 %v1975, 1.442695
        %v1978 = vpow.pop %v1977
        %v1979 = vmul.f32 %v1976, 1.442695
        %v1980 = vpow.pop %v1979
        %v1981 = vmul.f32 %v1784, %v1972
        %v1982 = vmul.f32 %v1785, %v1974
        %v1983 = vadd.f32 %v1981, %v1978
        %v1984 = vadd.f32 %v1982, %v1980
        %v1985 = vmul.f32 %v1790, %v1972
        %v1986 = vmul.f32 %v1791, %v1974
        %v1987 = vmul.f32 %v1978, %v1888
        %v1988 = vmul.f32 %v1980, %v1891
        %v1989 = vadd.f32 %v1985, %v1987
        %v1990 = vadd.f32 %v1986, %v1988
        %s1991 = scalar_lea.vmem %s447, 28 [#allocation5]
        %v1992 = vld [vmem:[%s1991] sm:$0x7]
        %v1993 = vsub.f32 %v525, %v1992
        %v1994 = vmul.f32 %v1993, %v1993
        %v1996 = vrot.slane %v1994, 1
        %v1998 = vadd.f32 %v1994, %v1996
        %v1999 = vrot.slane %v1994, 2
        %v2001 = vadd.f32 %v1998, %v1999
        %v2002 = vrsqrt.pop %v2001
        %v2003 = vmul.f32 %v2001, %v2002
        %vm2004 = vcmp.eq.f32.partialorder %v2001, inf
        %v2005 = vsel %vm2004, %v2001, %v2003
        %vm2006 = vcmp.eq.f32.partialorder %v2001, 0.0
        %v2007 = vand.u32 %v2001, 2147483648
        %v2008 = vsel %vm2006, %v2007, %v2005
        %v2010 = vrot.slane %v2008, 5
        %v2012 = vsel %vm540, %v1992, %v2010
        %v2014 = vsel %vm639, %v2012, 0
        %2016 = vmatprep.subr.mxu0 0.0
        %2017 = vmatpush1.msra.mxu0 %v2014
        %2018 = vmatprep.subr.mxu0 0.0
        %2019 = vmatpush1.msra.mxu0 0.0
        %2020 = vmatprep.subr.mxu0 0.0
        %2021 = vmatpush1.msra.mxu0 0.0
        %2022 = vmatprep.subr.mxu0 0.0
        %2023 = vmatpush1.msra.mxu0 0.0
        %2024 = vmatprep.subr.mxu0 0.0
        %2025 = vmatpush1.msra.mxu0 0.0
        %2026 = vmatprep.subr.mxu0 0.0
        %2027 = vmatpush1.msra.mxu0 0.0
        %2028 = vmatprep.subr.mxu0 0.0
        %2029 = vmatpush1.msra.mxu0 0.0
        %2030 = vmatprep.subr.mxu0 0.0
        %2031 = vmatpush1.msra.mxu0 0.0
        %2032 = vmatprep.subr.mxu0 0.0
        %2033 = vmatpush1.msra.mxu0 0.0
        %2034 = vmatprep.subr.mxu0 0.0
        %2035 = vmatpush1.msra.mxu0 0.0
        %2036 = vmatprep.subr.mxu0 0.0
        %2037 = vmatpush1.msra.mxu0 0.0
        %2038 = vmatprep.subr.mxu0 0.0
        %2039 = vmatpush1.msra.mxu0 0.0
        %2040 = vmatprep.subr.mxu0 0.0
        %2041 = vmatpush1.msra.mxu0 0.0
        %2042 = vmatprep.subr.mxu0 0.0
        %2043 = vmatpush1.msra.mxu0 0.0
        %2044 = vmatprep.subr.mxu0 0.0
        %2045 = vmatpush1.msra.mxu0 0.0
        %2046 = vmatprep.subr.mxu0 0.0
        %2047 = vmatpush1.msra.mxu0 0.0
        %2048 = vmatprep.subr.mxu0 0.0
        %2049 = vmatpush1.msra.mxu0 0.0
        %2050 = vmatprep.subr.mxu0 0.0
        %2051 = vmatpush1.msra.mxu0 0.0
        %2052 = vmatprep.subr.mxu0 0.0
        %2053 = vmatpush1.msra.mxu0 0.0
        %2054 = vmatprep.subr.mxu0 0.0
        %2055 = vmatpush1.msra.mxu0 0.0
        %2056 = vmatprep.subr.mxu0 0.0
        %2057 = vmatpush1.msra.mxu0 0.0
        %2058 = vmatprep.subr.mxu0 0.0
        %2059 = vmatpush1.msra.mxu0 0.0
        %2060 = vmatprep.subr.mxu0 0.0
        %2061 = vmatpush1.msra.mxu0 0.0
        %2062 = vmatprep.subr.mxu0 0.0
        %2063 = vmatpush1.msra.mxu0 0.0
        %2064 = vmatprep.subr.mxu0 0.0
        %2065 = vmatpush1.msra.mxu0 0.0
        %2066 = vmatprep.subr.mxu0 0.0
        %2067 = vmatpush1.msra.mxu0 0.0
        %2068 = vmatprep.subr.mxu0 0.0
        %2069 = vmatpush1.msra.mxu0 0.0
        %2070 = vmatprep.subr.mxu0 0.0
        %2071 = vmatpush1.msra.mxu0 0.0
        %2072 = vmatprep.subr.mxu0 0.0
        %2073 = vmatpush1.msra.mxu0 0.0
        %2074 = vmatprep.subr.mxu0 0.0
        %2075 = vmatpush1.msra.mxu0 0.0
        %2076 = vmatprep.subr.mxu0 0.0
        %2077 = vmatpush1.msra.mxu0 0.0
        %2078 = vmatprep.subr.mxu0 0.0
        %2079 = vmatpush1.msra.mxu0 0.0
        %2080 = vmatprep.mubr.f32.mxu0 0.0
        %2081 = vmatmul.mubr.f32.gmra.mrb[0].mxu0 %v637
        %v2082 = vpop.f32.mrb[0].mxu0
        %v2083 = vadd.f32 0.0, %v2082
        %v2084 = vpop.f32.mrb[0].mxu0
        %2085 = vdwg.mxu0
        %v2086 = vadd.f32 %v611, %v2083
        %v2087 = vmax.f32 %v2086, 0.0
        %s2088 = scalar_lea.vmem %s456, 28 [#allocation7]
        %v2089 = vld [vmem:[%s2088] sm:$0xf]
        %v2090 = vunpack.c.l.bf16 %v2089
        %2091 = vmatprep.subr.mxu0 0.0
        %2092 = vmatpush1.msra.mxu0 %v2087
        %2093 = vmatprep.subr.mxu0 0.0
        %2094 = vmatpush1.msra.mxu0 %v2090
        %2095 = vmatprep.subr.mxu0 0.0
        %2096 = vmatpush1.msra.mxu0 0.0
        %2097 = vmatprep.subr.mxu0 0.0
        %2098 = vmatpush1.msra.mxu0 0.0
        %2099 = vmatprep.subr.mxu0 0.0
        %2100 = vmatpush1.msra.mxu0 0.0
        %2101 = vmatprep.subr.mxu0 0.0
        %2102 = vmatpush1.msra.mxu0 0.0
        %2103 = vmatprep.subr.mxu0 0.0
        %2104 = vmatpush1.msra.mxu0 0.0
        %2105 = vmatprep.subr.mxu0 0.0
        %2106 = vmatpush1.msra.mxu0 0.0
        %2107 = vmatprep.subr.mxu0 0.0
        %2108 = vmatpush1.msra.mxu0 0.0
        %2109 = vmatprep.subr.mxu0 0.0
        %2110 = vmatpush1.msra.mxu0 0.0
        %2111 = vmatprep.subr.mxu0 0.0
        %2112 = vmatpush1.msra.mxu0 0.0
        %2113 = vmatprep.subr.mxu0 0.0
        %2114 = vmatpush1.msra.mxu0 0.0
        %2115 = vmatprep.subr.mxu0 0.0
        %2116 = vmatpush1.msra.mxu0 0.0
        %2117 = vmatprep.subr.mxu0 0.0
        %2118 = vmatpush1.msra.mxu0 0.0
        %2119 = vmatprep.subr.mxu0 0.0
        %2120 = vmatpush1.msra.mxu0 0.0
        %2121 = vmatprep.subr.mxu0 0.0
        %2122 = vmatpush1.msra.mxu0 0.0
        %2123 = vmatprep.subr.mxu0 0.0
        %2124 = vmatpush1.msra.mxu0 0.0
        %2125 = vmatprep.subr.mxu0 0.0
        %2126 = vmatpush1.msra.mxu0 0.0
        %2127 = vmatprep.subr.mxu0 0.0
        %2128 = vmatpush1.msra.mxu0 0.0
        %2129 = vmatprep.subr.mxu0 0.0
        %2130 = vmatpush1.msra.mxu0 0.0
        %2131 = vmatprep.subr.mxu0 0.0
        %2132 = vmatpush1.msra.mxu0 0.0
        %2133 = vmatprep.subr.mxu0 0.0
        %2134 = vmatpush1.msra.mxu0 0.0
        %2135 = vmatprep.subr.mxu0 0.0
        %2136 = vmatpush1.msra.mxu0 0.0
        %2137 = vmatprep.subr.mxu0 0.0
        %2138 = vmatpush1.msra.mxu0 0.0
        %2139 = vmatprep.subr.mxu0 0.0
        %2140 = vmatpush1.msra.mxu0 0.0
        %2141 = vmatprep.subr.mxu0 0.0
        %2142 = vmatpush1.msra.mxu0 0.0
        %2143 = vmatprep.subr.mxu0 0.0
        %2144 = vmatpush1.msra.mxu0 0.0
        %2145 = vmatprep.subr.mxu0 0.0
        %2146 = vmatpush1.msra.mxu0 0.0
        %2147 = vmatprep.subr.mxu0 0.0
        %2148 = vmatpush1.msra.mxu0 0.0
        %2149 = vmatprep.subr.mxu0 0.0
        %2150 = vmatpush1.msra.mxu0 0.0
        %2151 = vmatprep.subr.mxu0 0.0
        %2152 = vmatpush1.msra.mxu0 0.0
        %2153 = vmatprep.subr.mxu0 0.0
        %2154 = vmatpush1.msra.mxu0 0.0
        %2155 = vmatprep.mubr.f32.mxu0 0.0
        %2156 = vmatmul.mubr.f32.gmra.mrb[0].mxu0 %v719
        %v2157 = vpop.f32.mrb[0].mxu0
        %v2158 = vadd.f32 0.0, %v2157
        %v2159 = vpop.f32.mrb[0].mxu0
        %2160 = vmatprep.mubr.f32.mxu0 0.0
        %2161 = vmatmul.mubr.f32.gmra.mrb[0].mxu0 %v722
        %v2162 = vpop.f32.mrb[0].mxu0
        %v2163 = vadd.f32 0.0, %v2162
        %v2164 = vpop.f32.mrb[0].mxu0
        %2165 = vdwg.mxu0
        %v2166 = vmax.f32 %v1967, %v2158
        %v2167 = vmax.f32 %v1968, %v2163
        %v2168 = vsub.f32 %v1967, %v2166
        %v2169 = vsub.f32 %v1968, %v2167
        %v2170 = vmul.f32 %v2168, 1.442695
        %v2171 = vpow.pop %v2170
        %v2172 = vmul.f32 %v2169, 1.442695
        %v2173 = vpow.pop %v2172
        %v2174 = vsub.f32 %v2158, %v2166
        %v2175 = vsub.f32 %v2163, %v2167
        %v2176 = vmul.f32 %v2174, 1.442695
        %v2177 = vpow.pop %v2176
        %v2178 = vmul.f32 %v2175, 1.442695
        %v2179 = vpow.pop %v2178
        %v2180 = vmul.f32 %v1983, %v2171
        %v2181 = vmul.f32 %v1984, %v2173
        %v2182 = vadd.f32 %v2180, %v2177
        %v2183 = vadd.f32 %v2181, %v2179
        %v2184 = vmul.f32 %v1989, %v2171
        %v2185 = vmul.f32 %v1990, %v2173
        %v2186 = vmul.f32 %v2177, %v2087
        %v2187 = vmul.f32 %v2179, %v2090
        %v2188 = vadd.f32 %v2184, %v2186
        %v2189 = vadd.f32 %v2185, %v2187
        %v2190 = vrcp.pop %v2182
        %v2191 = vmul.f32 %v2188, %v2190
        %v2192 = vrcp.pop %v2183
        %v2193 = vmul.f32 %v2189, %v2192
        %v2194 = vld [vmem:[#allocation14] sm:$0xff]
        %v2195 = vld [vmem:[#allocation16] sm:$0xff]
        %2197 = vset.pattern.permute.xlu0 0
        %2198 = vperm.xlu0 %2197, %v2195
        %v2199 = vpop.permute.xlu0 %2198
        %v2202 = vsel %vm717, %v2194, 0
        %2204 = vmatprep.subr.mxu0 0.0
        %2205 = vmatpush1.msra.mxu0 %v2191
        %2206 = vmatprep.subr.mxu0 0.0
        %2207 = vmatpush1.msra.mxu0 %v2193
        %2208 = vmatprep.subr.mxu0 0.0
        %2209 = vmatpush1.msra.mxu0 0.0
        %2210 = vmatprep.subr.mxu0 0.0
        %2211 = vmatpush1.msra.mxu0 0.0
        %2212 = vmatprep.subr.mxu0 0.0
        %2213 = vmatpush1.msra.mxu0 0.0
        %2214 = vmatprep.subr.mxu0 0.0
        %2215 = vmatpush1.msra.mxu0 0.0
        %2216 = vmatprep.subr.mxu0 0.0
        %2217 = vmatpush1.msra.mxu0 0.0
        %2218 = vmatprep.subr.mxu0 0.0
        %2219 = vmatpush1.msra.mxu0 0.0
        %2220 = vmatprep.subr.mxu0 0.0
        %2221 = vmatpush1.msra.mxu0 0.0
        %2222 = vmatprep.subr.mxu0 0.0
        %2223 = vmatpush1.msra.mxu0 0.0
        %2224 = vmatprep.subr.mxu0 0.0
        %2225 = vmatpush1.msra.mxu0 0.0
        %2226 = vmatprep.subr.mxu0 0.0
        %2227 = vmatpush1.msra.mxu0 0.0
        %2228 = vmatprep.subr.mxu0 0.0
        %2229 = vmatpush1.msra.mxu0 0.0
        %2230 = vmatprep.subr.mxu0 0.0
        %2231 = vmatpush1.msra.mxu0 0.0
        %2232 = vmatprep.subr.mxu0 0.0
        %2233 = vmatpush1.msra.mxu0 0.0
        %2234 = vmatprep.subr.mxu0 0.0
        %2235 = vmatpush1.msra.mxu0 0.0
        %2236 = vmatprep.subr.mxu0 0.0
        %2237 = vmatpush1.msra.mxu0 0.0
        %2238 = vmatprep.subr.mxu0 0.0
        %2239 = vmatpush1.msra.mxu0 0.0
        %2240 = vmatprep.subr.mxu0 0.0
        %2241 = vmatpush1.msra.mxu0 0.0
        %2242 = vmatprep.subr.mxu0 0.0
        %2243 = vmatpush1.msra.mxu0 0.0
        %2244 = vmatprep.subr.mxu0 0.0
        %2245 = vmatpush1.msra.mxu0 0.0
        %2246 = vmatprep.subr.mxu0 0.0
        %2247 = vmatpush1.msra.mxu0 0.0
        %2248 = vmatprep.subr.mxu0 0.0
        %2249 = vmatpush1.msra.mxu0 0.0
        %2250 = vmatprep.subr.mxu0 0.0
        %2251 = vmatpush1.msra.mxu0 0.0
        %2252 = vmatprep.subr.mxu0 0.0
        %2253 = vmatpush1.msra.mxu0 0.0
        %2254 = vmatprep.subr.mxu0 0.0
        %2255 = vmatpush1.msra.mxu0 0.0
        %2256 = vmatprep.subr.mxu0 0.0
        %2257 = vmatpush1.msra.mxu0 0.0
        %2258 = vmatprep.subr.mxu0 0.0
        %2259 = vmatpush1.msra.mxu0 0.0
        %2260 = vmatprep.subr.mxu0 0.0
        %2261 = vmatpush1.msra.mxu0 0.0
        %2262 = vmatprep.subr.mxu0 0.0
        %2263 = vmatpush1.msra.mxu0 0.0
        %2264 = vmatprep.subr.mxu0 0.0
        %2265 = vmatpush1.msra.mxu0 0.0
        %2266 = vmatprep.subr.mxu0 0.0
        %2267 = vmatpush1.msra.mxu0 0.0
        %2268 = vmatprep.mubr.f32.mxu0 0.0
        %2269 = vmatmul.mubr.f32.gmra.mrb[0].mxu0 %v2202
        %v2270 = vpop.f32.mrb[0].mxu0
        %v2271 = vadd.f32 %v2199, %v2270
        %v2272 = vpop.f32.mrb[0].mxu0
        %2273 = vdwg.mxu0
        %v2274 = vmax.f32 %v2271, 0.0
        %2275 = vst [vmem:[%s524] sm:$0xff] %v2274
        %s2276 = sand.u32 %s264, 1
        %s2277 = scalar_lea.sflag [#allocation4], %s2276
        %s2278 = sand.u32 %s264, 1
        %s2279 = smul.addr %s2278, 8
        %s2280 = scalar_lea.vmem [#allocation17], %s2279
        // Predicated region
        $region93: #{local_feature_aggregation.6} parent=55 // pred_check
          %p2281 = pneg %p274
        $region94: #{local_feature_aggregation.6} parent=55 // pred_check_branch
          %2283 = sbr.rel (%p2281) target = $region96
        $region95: #{local_feature_aggregation.6} parent=55 // pred_region
          %s2285 = ssub.s32 128, 128
          %2286 = vsyncadd %s2277, %s2285
          %s2287 = sadd.s32 %s36, %s37
          %s2288 = smul.addr %s2287, 128
          %s2289 = scalar_lea.hbm %s9, %s2288
          %s2291 = sshll.u32 %s2280, 4
          %s2292 = int_to_ptr.vmem [resolvable:$true] %s2291
          %2294 = dma.vmem_to_hbm [thread:$0]  %s2292, 128, %s2289, %s2277
        $region96: #{local_feature_aggregation.6} parent=55 // pred_fallthru
          _
      $region56: #{local_feature_aggregation.6} parent=5 // pred_fallthru
        _
      %p2295 = scmp.le.s32.totalorder 2, %s27
      // Predicated region
      $region97: #{local_feature_aggregation.6} parent=5 // pred_check
        %p2296 = pneg %p2295
      $region98: #{local_feature_aggregation.6} parent=5 // pred_check_branch
        %2298 = sbr.rel (%p2296) target = $region100
      $region99: #{local_feature_aggregation.6} parent=5 // pred_region
        %s2299 = ssub.s32 %s27, 2
        // Predicated region
        $region101: #{local_feature_aggregation.6} parent=99 // pred_check
          %p2300 = pneg %p280
        $region102: #{local_feature_aggregation.6} parent=99 // pred_check_branch
          %2302 = sbr.rel (%p2300) target = $region104
        $region103: #{local_feature_aggregation.6} parent=99 // pred_region
          %s2303 = sand.u32 %s265, 1
          %s2304 = scalar_lea.sflag [#allocation4], %s2303
          %s2305 = sand.u32 %s265, 1
          %s2306 = smul.addr %s2305, 8
          %s2307 = scalar_lea.vmem [#allocation17], %s2306
          %2308 = dma.done %s2304, 128
        $region104: #{local_feature_aggregation.6} parent=99 // pred_fallthru
          _
      $region100: #{local_feature_aggregation.6} parent=5 // pred_fallthru
        _
    $region6: #{local_feature_aggregation.6} parent=1 // loop_footer
      %s31 = sadd.s32 1, %s27
    $region7: #{local_feature_aggregation.6} parent=1 // loop_footer_branch
      %26 = sbr.rel target = $region3
    $region8: #{local_feature_aggregation.6} parent=1 // loop_exit
      _
    %2309 = vsyncpa [#allocation3], 1
    %s2310 = scalar_lea.sflag [#allocation3], 1
    %2311 = vsyncpa %s2310, 1
    %2312 = vsyncpa [#allocation6], 1
    %s2313 = scalar_lea.sflag [#allocation6], 1
    %2314 = vsyncpa %s2313, 1
    %2315 = vsyncpa [#allocation9], 1
    %2316 = vsyncpa [#allocation12], 1
    %2317 = vsyncpa [#allocation15], 1
    %2318 = vsyncpa [#allocation4], 1
    %s2319 = scalar_lea.sflag [#allocation4], 1
    %2320 = vsyncpa %s2319, 1

// kernel: local_feature_aggregation.7
$region0: #{local_feature_aggregation.7}
  #allocation0 [shape = 'u32[]', space=smem, size = 0x4, offset = 0x4, fixed_abs, tag = 'smem constant byte address 0x4 - core index']
  #allocation1 [shape = 'u32[144,128]{1,0:T(1,128)}', space=vmem, size = 0x12000, scoped, tag = 'internal scratch']
  %s0 = inlined_call_operand.hbm [shape: f32[2,3,128], index: 0, kind: input, shape index: {}]
  %s1 = inlined_call_operand.hbm [shape: f32[2,8,3,128], index: 1, kind: input, shape index: {}]
  %s2 = inlined_call_operand.hbm [shape: bf16[2,8,8,128], index: 2, kind: input, shape index: {}]
  %s3 = inlined_call_operand.hbm [shape: f32[8,3], index: 3, kind: input, shape index: {}]
  %s4 = inlined_call_operand.hbm [shape: f32[8,4], index: 4, kind: input, shape index: {}]
  %s5 = inlined_call_operand.hbm [shape: f32[8,1], index: 5, kind: input, shape index: {}]
  %s6 = inlined_call_operand.hbm [shape: f32[16,16], index: 6, kind: input, shape index: {}]
  %s7 = inlined_call_operand.hbm [shape: f32[16,16], index: 7, kind: input, shape index: {}]
  %s8 = inlined_call_operand.hbm [shape: f32[16,1], index: 8, kind: input, shape index: {}]
  %s9 = inlined_call_operand.hbm [shape: f32[2,8,128], index: 9, kind: input, shape index: {}]
  %s10 = inlined_call_operand.hbm [shape: f32[32,16], index: 10, kind: input, shape index: {}]
  %s11 = inlined_call_operand.hbm [shape: f32[32,1], index: 11, kind: input, shape index: {}]
  %s12 = inlined_call_operand.hbm [shape: f32[32,8], index: 12, kind: input, shape index: {}]
  %s13 = inlined_call_operand.hbm [shape: f32[32,1], index: 13, kind: input, shape index: {}]
  %s14 = inlined_call_operand.hbm [shape: f32[2,32,128], index: 14, kind: output, shape index: {}]
  %s15 = sld [smem:[#allocation0]]
  $region145: #{local_feature_aggregation.7} parent=0
    _
  %s17 = ssub.s32 1, %s15
  %s18 = scalar_select 0, %s17, %s15
  $region1: #{local_feature_aggregation.7} parent=0
    #allocation2 [shape = 'u8[4096]{0}', space=vmem, size = 0x1000, scoped, tag = 'input window, operand 0']
    #allocation3 [shape = 's32[2]{0}', space=sflag, size = 0x8, scoped, tag = 'scoped memory for local_feature_aggregation.7']
    #allocation4 [shape = 's32[2]{0}', space=sflag, size = 0x8, scoped, tag = 'scoped memory for local_feature_aggregation.7']
    #allocation5 [shape = 'u8[32768]{0}', space=vmem, size = 0x8000, scoped, tag = 'input window, operand 1']
    #allocation6 [shape = 's32[2]{0}', space=sflag, size = 0x8, scoped, tag = 'scoped memory for local_feature_aggregation.7']
    #allocation7 [shape = 'u8[32768]{0}', space=vmem, size = 0x8000, scoped, tag = 'input window, operand 2']
    #allocation8 [shape = 'u8[4096]{0}', space=vmem, size = 0x1000, scoped, tag = 'input window, operand 3, single buffered']
    #allocation9 [shape = 's32[1]{0}', space=sflag, size = 0x4, scoped, tag = 'scoped memory for local_feature_aggregation.7']
    #allocation10 [shape = 'u8[4096]{0}', space=vmem, size = 0x1000, scoped, tag = 'input window, operand 4, single buffered']
    #allocation11 [shape = 'u8[4096]{0}', space=vmem, size = 0x1000, scoped, tag = 'input window, operand 5, single buffered']
    #allocation12 [shape = 's32[1]{0}', space=sflag, size = 0x4, scoped, tag = 'scoped memory for local_feature_aggregation.7']
    #allocation13 [shape = 'u8[8192]{0}', space=vmem, size = 0x2000, scoped, tag = 'input window, operand 6, single buffered']
    #allocation14 [shape = 'u8[8192]{0}', space=vmem, size = 0x2000, scoped, tag = 'input window, operand 7, single buffered']
    #allocation15 [shape = 's32[1]{0}', space=sflag, size = 0x4, scoped, tag = 'scoped memory for local_feature_aggregation.7']
    #allocation16 [shape = 'u8[8192]{0}', space=vmem, size = 0x2000, scoped, tag = 'input window, operand 8, single buffered']
    #allocation17 [shape = 'u8[8192]{0}', space=vmem, size = 0x2000, scoped, tag = 'input window, operand 9']
    #allocation18 [shape = 's32[2]{0}', space=sflag, size = 0x8, scoped, tag = 'scoped memory for local_feature_aggregation.7']
    #allocation19 [shape = 'u8[16384]{0}', space=vmem, size = 0x4000, scoped, tag = 'input window, operand 10, single buffered']
    #allocation20 [shape = 'u8[16384]{0}', space=vmem, size = 0x4000, scoped, tag = 'input window, operand 11, single buffered']
    #allocation21 [shape = 's32[1]{0}', space=sflag, size = 0x4, scoped, tag = 'scoped memory for local_feature_aggregation.7']
    #allocation22 [shape = 'u8[16384]{0}', space=vmem, size = 0x4000, scoped, tag = 'input window, operand 12, single buffered']
    #allocation23 [shape = 'u8[16384]{0}', space=vmem, size = 0x4000, scoped, tag = 'input window, operand 13, single buffered']
    #allocation24 [shape = 's32[1]{0}', space=sflag, size = 0x4, scoped, tag = 'scoped memory for local_feature_aggregation.7']
    #allocation25 [shape = 'u8[32768]{0}', space=vmem, size = 0x8000, scoped, tag = 'output window, operand 0']
    %19 = vsyncpa [#allocation3], 0
    %s20 = scalar_lea.sflag [#allocation3], 1
    %21 = vsyncpa %s20, 0
    %22 = vsyncpa [#allocation6], 0
    %s23 = scalar_lea.sflag [#allocation6], 1
    %24 = vsyncpa %s23, 0
    %25 = vsyncpa [#allocation9], 0
    %26 = vsyncpa [#allocation12], 0
    %27 = vsyncpa [#allocation15], 0
    %28 = vsyncpa [#allocation18], 0
    %s29 = scalar_lea.sflag [#allocation18], 1
    %30 = vsyncpa %s29, 0
    %31 = vsyncpa [#allocation21], 0
    %32 = vsyncpa [#allocation24], 0
    %33 = vsyncpa [#allocation4], 0
    %s34 = scalar_lea.sflag [#allocation4], 1
    %35 = vsyncpa %s34, 0
    loop: start=0, step=1, limit=4
    $region2: #{local_feature_aggregation.7} parent=1 // loop_pre_header
      _
    $region3: #{local_feature_aggregation.7} parent=1 // loop_header
      %s37 = sphi 0, %s41
      %p38 = scmp.ge.s32.totalorder %s37, 4
      %s44 = sphi 0, %s56
      %s45 = sphi 0, %s52
      %s46 = sphi 0, %s44
      %s47 = sphi 0, %s45
      %s48 = sphi 0, %s46
      %s49 = sphi 0, %s47
      %s61 = sphi 0, %s63
      %s64 = sphi 0, %s61
      %s65 = sphi 0, %s64
      %s81 = sphi 0, %s65
      %s89 = sphi 0, %s91
      %s92 = sphi 0, %s89
      %s93 = sphi 0, %s92
      %s109 = sphi 0, %s93
      %s117 = sphi 0, %s119
      %s120 = sphi 0, %s117
      %s121 = sphi 0, %s120
      %s137 = sphi 0, %s121
      %s141 = sphi 0, %s141
      %s143 = sphi 0, %s141
      %s144 = sphi 0, %s143
      %s158 = sphi 0, %s144
      %s162 = sphi 0, %s162
      %s164 = sphi 0, %s162
      %s165 = sphi 0, %s164
      %s179 = sphi 0, %s165
      %s183 = sphi 0, %s183
      %s185 = sphi 0, %s183
      %s186 = sphi 0, %s185
      %s200 = sphi 0, %s186
      %s204 = sphi 0, %s204
      %s206 = sphi 0, %s204
      %s207 = sphi 0, %s206
      %s221 = sphi 0, %s207
      %s225 = sphi 0, %s225
      %s227 = sphi 0, %s225
      %s228 = sphi 0, %s227
      %s242 = sphi 0, %s228
      %s246 = sphi 0, %s246
      %s248 = sphi 0, %s246
      %s249 = sphi 0, %s248
      %s263 = sphi 0, %s249
      %s271 = sphi 0, %s273
      %s274 = sphi 0, %s271
      %s275 = sphi 0, %s274
      %s291 = sphi 0, %s275
      %s295 = sphi 0, %s295
      %s297 = sphi 0, %s295
      %s298 = sphi 0, %s297
      %s312 = sphi 0, %s298
      %s316 = sphi 0, %s316
      %s318 = sphi 0, %s316
      %s319 = sphi 0, %s318
      %s333 = sphi 0, %s319
      %s337 = sphi 0, %s337
      %s339 = sphi 0, %s337
      %s340 = sphi 0, %s339
      %s354 = sphi 0, %s340
      %s358 = sphi 0, %s358
      %s360 = sphi 0, %s358
      %s361 = sphi 0, %s360
      %s375 = sphi 0, %s361
      %s383 = sphi 0, %s385
      %s386 = sphi 0, %s383
      %s387 = sphi 0, %s386
      %s403 = sphi 0, %s387
    $region4: #{local_feature_aggregation.7} parent=1 // loop_header_branch
      %40 = sbr.rel (%p38) target = $region8
    $region5: #{local_feature_aggregation.7} parent=1 // loop_body
      %s42 = ssub.s32 %s37, 1
      %s43 = ssub.s32 %s37, 2
      %s50 = sadd.s32 1, %s45
      %p51 = scmp.ge.s32.totalorder %s50, 2
      %s52 = scalar_select %p51, 0, %s50
      %s53 = sadd.s32 1, %s44
      %s54 = scalar_select %p51, %s53, %s44
      %p55 = scmp.ge.s32.totalorder %s54, 1
      %s56 = scalar_select %p55, 0, %s54
      %s57 = ssub.s32 %s45, %s52
      %s58 = ssub.s32 %s44, %s56
      %s59 = sor.u32 %s57, %s58
      %p60 = scmp.eq.s32.totalorder %s59, 0
      %s62 = sadd.s32 %s61, 1
      %s63 = scalar_select %p60, %s61, %s62
      %p66 = pneg %p60
      %p67 = scmp.eq.s32.totalorder %s37, 1
      %p68 = por %p66, %p67
      %p69 = scmp.ne.s32.totalorder %s61, %s64
      %p70 = scmp.eq.s32.totalorder %s37, 0
      %p71 = por %p69, %p70
      %p72 = scmp.ne.s32.totalorder %s61, %s64
      %p73 = scmp.eq.s32.totalorder %s42, 1
      %p74 = por %p72, %p73
      %p75 = scmp.ne.s32.totalorder %s64, %s65
      %p76 = scmp.eq.s32.totalorder %s42, 0
      %p77 = por %p75, %p76
      %p78 = scmp.ne.s32.totalorder %s64, %s65
      %p79 = scmp.eq.s32.totalorder %s43, 1
      %p80 = por %p78, %p79
      %p82 = scmp.ne.s32.totalorder %s65, %s81
      %p83 = scmp.eq.s32.totalorder %s43, 0
      %p84 = por %p82, %p83
      %s85 = ssub.s32 %s45, %s52
      %s86 = ssub.s32 %s44, %s56
      %s87 = sor.u32 %s85, %s86
      %p88 = scmp.eq.s32.totalorder %s87, 0
      %s90 = sadd.s32 %s89, 1
      %s91 = scalar_select %p88, %s89, %s90
      %p94 = pneg %p88
      %p95 = scmp.eq.s32.totalorder %s37, 1
      %p96 = por %p94, %p95
      %p97 = scmp.ne.s32.totalorder %s89, %s92
      %p98 = scmp.eq.s32.totalorder %s37, 0
      %p99 = por %p97, %p98
      %p100 = scmp.ne.s32.totalorder %s89, %s92
      %p101 = scmp.eq.s32.totalorder %s42, 1
      %p102 = por %p100, %p101
      %p103 = scmp.ne.s32.totalorder %s92, %s93
      %p104 = scmp.eq.s32.totalorder %s42, 0
      %p105 = por %p103, %p104
      %p106 = scmp.ne.s32.totalorder %s92, %s93
      %p107 = scmp.eq.s32.totalorder %s43, 1
      %p108 = por %p106, %p107
      %p110 = scmp.ne.s32.totalorder %s93, %s109
      %p111 = scmp.eq.s32.totalorder %s43, 0
      %p112 = por %p110, %p111
      %s113 = ssub.s32 %s45, %s52
      %s114 = ssub.s32 %s44, %s56
      %s115 = sor.u32 %s113, %s114
      %p116 = scmp.eq.s32.totalorder %s115, 0
      %s118 = sadd.s32 %s117, 1
      %s119 = scalar_select %p116, %s117, %s118
      %p122 = pneg %p116
      %p123 = scmp.eq.s32.totalorder %s37, 1
      %p124 = por %p122, %p123
      %p125 = scmp.ne.s32.totalorder %s117, %s120
      %p126 = scmp.eq.s32.totalorder %s37, 0
      %p127 = por %p125, %p126
      %p128 = scmp.ne.s32.totalorder %s117, %s120
      %p129 = scmp.eq.s32.totalorder %s42, 1
      %p130 = por %p128, %p129
      %p131 = scmp.ne.s32.totalorder %s120, %s121
      %p132 = scmp.eq.s32.totalorder %s42, 0
      %p133 = por %p131, %p132
      %p134 = scmp.ne.s32.totalorder %s120, %s121
      %p135 = scmp.eq.s32.totalorder %s43, 1
      %p136 = por %p134, %p135
      %p138 = scmp.ne.s32.totalorder %s121, %s137
      %p139 = scmp.eq.s32.totalorder %s43, 0
      %p140 = por %p138, %p139
      %s142 = sadd.s32 %s141, 1
      %p145 = scmp.eq.s32.totalorder %s37, 1
      %p146 = scmp.ne.s32.totalorder %s141, %s143
      %p147 = scmp.eq.s32.totalorder %s37, 0
      %p148 = por %p146, %p147
      %p149 = scmp.ne.s32.totalorder %s141, %s143
      %p150 = scmp.eq.s32.totalorder %s42, 1
      %p151 = por %p149, %p150
      %p152 = scmp.ne.s32.totalorder %s143, %s144
      %p153 = scmp.eq.s32.totalorder %s42, 0
      %p154 = por %p152, %p153
      %p155 = scmp.ne.s32.totalorder %s143, %s144
      %p156 = scmp.eq.s32.totalorder %s43, 1
      %p157 = por %p155, %p156
      %p159 = scmp.ne.s32.totalorder %s144, %s158
      %p160 = scmp.eq.s32.totalorder %s43, 0
      %p161 = por %p159, %p160
      %s163 = sadd.s32 %s162, 1
      %p166 = scmp.eq.s32.totalorder %s37, 1
      %p167 = scmp.ne.s32.totalorder %s162, %s164
      %p168 = scmp.eq.s32.totalorder %s37, 0
      %p169 = por %p167, %p168
      %p170 = scmp.ne.s32.totalorder %s162, %s164
      %p171 = scmp.eq.s32.totalorder %s42, 1
      %p172 = por %p170, %p171
      %p173 = scmp.ne.s32.totalorder %s164, %s165
      %p174 = scmp.eq.s32.totalorder %s42, 0
      %p175 = por %p173, %p174
      %p176 = scmp.ne.s32.totalorder %s164, %s165
      %p177 = scmp.eq.s32.totalorder %s43, 1
      %p178 = por %p176, %p177
      %p180 = scmp.ne.s32.totalorder %s165, %s179
      %p181 = scmp.eq.s32.totalorder %s43, 0
      %p182 = por %p180, %p181
      %s184 = sadd.s32 %s183, 1
      %p187 = scmp.eq.s32.totalorder %s37, 1
      %p188 = scmp.ne.s32.totalorder %s183, %s185
      %p189 = scmp.eq.s32.totalorder %s37, 0
      %p190 = por %p188, %p189
      %p191 = scmp.ne.s32.totalorder %s183, %s185
      %p192 = scmp.eq.s32.totalorder %s42, 1
      %p193 = por %p191, %p192
      %p194 = scmp.ne.s32.totalorder %s185, %s186
      %p195 = scmp.eq.s32.totalorder %s42, 0
      %p196 = por %p194, %p195
      %p197 = scmp.ne.s32.totalorder %s185, %s186
      %p198 = scmp.eq.s32.totalorder %s43, 1
      %p199 = por %p197, %p198
      %p201 = scmp.ne.s32.totalorder %s186, %s200
      %p202 = scmp.eq.s32.totalorder %s43, 0
      %p203 = por %p201, %p202
      %s205 = sadd.s32 %s204, 1
      %p208 = scmp.eq.s32.totalorder %s37, 1
      %p209 = scmp.ne.s32.totalorder %s204, %s206
      %p210 = scmp.eq.s32.totalorder %s37, 0
      %p211 = por %p209, %p210
      %p212 = scmp.ne.s32.totalorder %s204, %s206
      %p213 = scmp.eq.s32.totalorder %s42, 1
      %p214 = por %p212, %p213
      %p215 = scmp.ne.s32.totalorder %s206, %s207
      %p216 = scmp.eq.s32.totalorder %s42, 0
      %p217 = por %p215, %p216
      %p218 = scmp.ne.s32.totalorder %s206, %s207
      %p219 = scmp.eq.s32.totalorder %s43, 1
      %p220 = por %p218, %p219
      %p222 = scmp.ne.s32.totalorder %s207, %s221
      %p223 = scmp.eq.s32.totalorder %s43, 0
      %p224 = por %p222, %p223
      %s226 = sadd.s32 %s225, 1
      %p229 = scmp.eq.s32.totalorder %s37, 1
      %p230 = scmp.ne.s32.totalorder %s225, %s227
      %p231 = scmp.eq.s32.totalorder %s37, 0
      %p232 = por %p230, %p231
      %p233 = scmp.ne.s32.totalorder %s225, %s227
      %p234 = scmp.eq.s32.totalorder %s42, 1
      %p235 = por %p233, %p234
      %p236 = scmp.ne.s32.totalorder %s227, %s228
      %p237 = scmp.eq.s32.totalorder %s42, 0
      %p238 = por %p236, %p237
      %p239 = scmp.ne.s32.totalorder %s227, %s228
      %p240 = scmp.eq.s32.totalorder %s43, 1
      %p241 = por %p239, %p240
      %p243 = scmp.ne.s32.totalorder %s228, %s242
      %p244 = scmp.eq.s32.totalorder %s43, 0
      %p245 = por %p243, %p244
      %s247 = sadd.s32 %s246, 1
      %p250 = scmp.eq.s32.totalorder %s37, 1
      %p251 = scmp.ne.s32.totalorder %s246, %s248
      %p252 = scmp.eq.s32.totalorder %s37, 0
      %p253 = por %p251, %p252
      %p254 = scmp.ne.s32.totalorder %s246, %s248
      %p255 = scmp.eq.s32.totalorder %s42, 1
      %p256 = por %p254, %p255
      %p257 = scmp.ne.s32.totalorder %s248, %s249
      %p258 = scmp.eq.s32.totalorder %s42, 0
      %p259 = por %p257, %p258
      %p260 = scmp.ne.s32.totalorder %s248, %s249
      %p261 = scmp.eq.s32.totalorder %s43, 1
      %p262 = por %p260, %p261
      %p264 = scmp.ne.s32.totalorder %s249, %s263
      %p265 = scmp.eq.s32.totalorder %s43, 0
      %p266 = por %p264, %p265
      %s267 = ssub.s32 %s45, %s52
      %s268 = ssub.s32 %s44, %s56
      %s269 = sor.u32 %s267, %s268
      %p270 = scmp.eq.s32.totalorder %s269, 0
      %s272 = sadd.s32 %s271, 1
      %s273 = scalar_select %p270, %s271, %s272
      %p276 = pneg %p270
      %p277 = scmp.eq.s32.totalorder %s37, 1
      %p278 = por %p276, %p277
      %p279 = scmp.ne.s32.totalorder %s271, %s274
      %p280 = scmp.eq.s32.totalorder %s37, 0
      %p281 = por %p279, %p280
      %p282 = scmp.ne.s32.totalorder %s271, %s274
      %p283 = scmp.eq.s32.totalorder %s42, 1
      %p284 = por %p282, %p283
      %p285 = scmp.ne.s32.totalorder %s274, %s275
      %p286 = scmp.eq.s32.totalorder %s42, 0
      %p287 = por %p285, %p286
      %p288 = scmp.ne.s32.totalorder %s274, %s275
      %p289 = scmp.eq.s32.totalorder %s43, 1
      %p290 = por %p288, %p289
      %p292 = scmp.ne.s32.totalorder %s275, %s291
      %p293 = scmp.eq.s32.totalorder %s43, 0
      %p294 = por %p292, %p293
      %s296 = sadd.s32 %s295, 1
      %p299 = scmp.eq.s32.totalorder %s37, 1
      %p300 = scmp.ne.s32.totalorder %s295, %s297
      %p301 = scmp.eq.s32.totalorder %s37, 0
      %p302 = por %p300, %p301
      %p303 = scmp.ne.s32.totalorder %s295, %s297
      %p304 = scmp.eq.s32.totalorder %s42, 1
      %p305 = por %p303, %p304
      %p306 = scmp.ne.s32.totalorder %s297, %s298
      %p307 = scmp.eq.s32.totalorder %s42, 0
      %p308 = por %p306, %p307
      %p309 = scmp.ne.s32.totalorder %s297, %s298
      %p310 = scmp.eq.s32.totalorder %s43, 1
      %p311 = por %p309, %p310
      %p313 = scmp.ne.s32.totalorder %s298, %s312
      %p314 = scmp.eq.s32.totalorder %s43, 0
      %p315 = por %p313, %p314
      %s317 = sadd.s32 %s316, 1
      %p320 = scmp.eq.s32.totalorder %s37, 1
      %p321 = scmp.ne.s32.totalorder %s316, %s318
      %p322 = scmp.eq.s32.totalorder %s37, 0
      %p323 = por %p321, %p322
      %p324 = scmp.ne.s32.totalorder %s316, %s318
      %p325 = scmp.eq.s32.totalorder %s42, 1
      %p326 = por %p324, %p325
      %p327 = scmp.ne.s32.totalorder %s318, %s319
      %p328 = scmp.eq.s32.totalorder %s42, 0
      %p329 = por %p327, %p328
      %p330 = scmp.ne.s32.totalorder %s318, %s319
      %p331 = scmp.eq.s32.totalorder %s43, 1
      %p332 = por %p330, %p331
      %p334 = scmp.ne.s32.totalorder %s319, %s333
      %p335 = scmp.eq.s32.totalorder %s43, 0
      %p336 = por %p334, %p335
      %s338 = sadd.s32 %s337, 1
      %p341 = scmp.eq.s32.totalorder %s37, 1
      %p342 = scmp.ne.s32.totalorder %s337, %s339
      %p343 = scmp.eq.s32.totalorder %s37, 0
      %p344 = por %p342, %p343
      %p345 = scmp.ne.s32.totalorder %s337, %s339
      %p346 = scmp.eq.s32.totalorder %s42, 1
      %p347 = por %p345, %p346
      %p348 = scmp.ne.s32.totalorder %s339, %s340
      %p349 = scmp.eq.s32.totalorder %s42, 0
      %p350 = por %p348, %p349
      %p351 = scmp.ne.s32.totalorder %s339, %s340
      %p352 = scmp.eq.s32.totalorder %s43, 1
      %p353 = por %p351, %p352
      %p355 = scmp.ne.s32.totalorder %s340, %s354
      %p356 = scmp.eq.s32.totalorder %s43, 0
      %p357 = por %p355, %p356
      %s359 = sadd.s32 %s358, 1
      %p362 = scmp.eq.s32.totalorder %s37, 1
      %p363 = scmp.ne.s32.totalorder %s358, %s360
      %p364 = scmp.eq.s32.totalorder %s37, 0
      %p365 = por %p363, %p364
      %p366 = scmp.ne.s32.totalorder %s358, %s360
      %p367 = scmp.eq.s32.totalorder %s42, 1
      %p368 = por %p366, %p367
      %p369 = scmp.ne.s32.totalorder %s360, %s361
      %p370 = scmp.eq.s32.totalorder %s42, 0
      %p371 = por %p369, %p370
      %p372 = scmp.ne.s32.totalorder %s360, %s361
      %p373 = scmp.eq.s32.totalorder %s43, 1
      %p374 = por %p372, %p373
      %p376 = scmp.ne.s32.totalorder %s361, %s375
      %p377 = scmp.eq.s32.totalorder %s43, 0
      %p378 = por %p376, %p377
      %s379 = ssub.s32 %s45, %s52
      %s380 = ssub.s32 %s44, %s56
      %s381 = sor.u32 %s379, %s380
      %p382 = scmp.eq.s32.totalorder %s381, 0
      %s384 = sadd.s32 %s383, 1
      %s385 = scalar_select %p382, %s383, %s384
      %p388 = pneg %p382
      %p389 = scmp.eq.s32.totalorder %s37, 1
      %p390 = por %p388, %p389
      %p391 = scmp.ne.s32.totalorder %s383, %s386
      %p392 = scmp.eq.s32.totalorder %s37, 0
      %p393 = por %p391, %p392
      %p394 = scmp.ne.s32.totalorder %s383, %s386
      %p395 = scmp.eq.s32.totalorder %s42, 1
      %p396 = por %p394, %p395
      %p397 = scmp.ne.s32.totalorder %s386, %s387
      %p398 = scmp.eq.s32.totalorder %s42, 0
      %p399 = por %p397, %p398
      %p400 = scmp.ne.s32.totalorder %s386, %s387
      %p401 = scmp.eq.s32.totalorder %s43, 1
      %p402 = por %p400, %p401
      %p404 = scmp.ne.s32.totalorder %s387, %s403
      %p405 = scmp.eq.s32.totalorder %s43, 0
      %p406 = por %p404, %p405
      %p407 = scmp.le.s32.totalorder 1, %s37
      %p408 = scmp.lt.s32.totalorder %s37, 3
      %p409 = pnand %p407, %p408
      %p410 = pneg %p409
      // Predicated region
      $region9: #{local_feature_aggregation.7} parent=5 // pred_check
        _
      $region10: #{local_feature_aggregation.7} parent=5 // pred_check_branch
        %412 = sbr.rel (%p409) target = $region12
      $region11: #{local_feature_aggregation.7} parent=5 // pred_region
        %s413 = ssub.s32 %s37, 1
        // Predicated region
        $region13: #{local_feature_aggregation.7} parent=11 // pred_check
          %p414 = pneg %p154
        $region14: #{local_feature_aggregation.7} parent=11 // pred_check_branch
          %416 = sbr.rel (%p414) target = $region16
        $region15: #{local_feature_aggregation.7} parent=11 // pred_region
          %s418 = ssub.s32 128, 128
          %419 = vsyncadd [#allocation9], %s418
          %s421 = sshll.u32 [#allocation8], 4
          %s422 = int_to_ptr.vmem [resolvable:$true] %s421
          %424 = dma.hbm_to_vmem [thread:$0]  %s3, 128, %s422, [#allocation9]
        $region16: #{local_feature_aggregation.7} parent=11 // pred_fallthru
          _
        // Predicated region
        $region17: #{local_feature_aggregation.7} parent=11 // pred_check
          %p425 = pneg %p175
        $region18: #{local_feature_aggregation.7} parent=11 // pred_check_branch
          %427 = sbr.rel (%p425) target = $region20
        $region19: #{local_feature_aggregation.7} parent=11 // pred_region
          %s429 = ssub.s32 128, 128
          %430 = vsyncadd [#allocation9], %s429
          %s432 = sshll.u32 [#allocation10], 4
          %s433 = int_to_ptr.vmem [resolvable:$true] %s432
          %435 = dma.hbm_to_vmem [thread:$0]  %s4, 128, %s433, [#allocation9]
        $region20: #{local_feature_aggregation.7} parent=11 // pred_fallthru
          _
        // Predicated region
        $region21: #{local_feature_aggregation.7} parent=11 // pred_check
          %p436 = pneg %p196
        $region22: #{local_feature_aggregation.7} parent=11 // pred_check_branch
          %438 = sbr.rel (%p436) target = $region24
        $region23: #{local_feature_aggregation.7} parent=11 // pred_region
          %s440 = ssub.s32 128, 128
          %441 = vsyncadd [#allocation12], %s440
          %s443 = sshll.u32 [#allocation11], 4
          %s444 = int_to_ptr.vmem [resolvable:$true] %s443
          %446 = dma.hbm_to_vmem [thread:$0]  %s5, 128, %s444, [#allocation12]
        $region24: #{local_feature_aggregation.7} parent=11 // pred_fallthru
          _
        // Predicated region
        $region25: #{local_feature_aggregation.7} parent=11 // pred_check
          %p447 = pneg %p217
        $region26: #{local_feature_aggregation.7} parent=11 // pred_check_branch
          %449 = sbr.rel (%p447) target = $region28
        $region27: #{local_feature_aggregation.7} parent=11 // pred_region
          %s451 = ssub.s32 256, 256
          %452 = vsyncadd [#allocation12], %s451
          %s453 = sshll.u32 [#allocation13], 4
          %s454 = int_to_ptr.vmem [resolvable:$true] %s453
          %459 = dma.hbm_to_vmem [thread:$0]  %s6, 256, %s454, [#allocation12], 128, 128, 8
        $region28: #{local_feature_aggregation.7} parent=11 // pred_fallthru
          _
        // Predicated region
        $region29: #{local_feature_aggregation.7} parent=11 // pred_check
          %p460 = pneg %p238
        $region30: #{local_feature_aggregation.7} parent=11 // pred_check_branch
          %462 = sbr.rel (%p460) target = $region32
        $region31: #{local_feature_aggregation.7} parent=11 // pred_region
          %s464 = ssub.s32 256, 256
          %465 = vsyncadd [#allocation15], %s464
          %s466 = sshll.u32 [#allocation14], 4
          %s467 = int_to_ptr.vmem [resolvable:$true] %s466
          %472 = dma.hbm_to_vmem [thread:$0]  %s7, 256, %s467, [#allocation15], 128, 128, 8
        $region32: #{local_feature_aggregation.7} parent=11 // pred_fallthru
          _
        // Predicated region
        $region33: #{local_feature_aggregation.7} parent=11 // pred_check
          %p473 = pneg %p259
        $region34: #{local_feature_aggregation.7} parent=11 // pred_check_branch
          %475 = sbr.rel (%p473) target = $region36
        $region35: #{local_feature_aggregation.7} parent=11 // pred_region
          %s477 = ssub.s32 256, 256
          %478 = vsyncadd [#allocation15], %s477
          %s479 = sshll.u32 [#allocation16], 4
          %s480 = int_to_ptr.vmem [resolvable:$true] %s479
          %485 = dma.hbm_to_vmem [thread:$0]  %s8, 256, %s480, [#allocation15], 128, 128, 8
        $region36: #{local_feature_aggregation.7} parent=11 // pred_fallthru
          _
        // Predicated region
        $region37: #{local_feature_aggregation.7} parent=11 // pred_check
          %p486 = pneg %p308
        $region38: #{local_feature_aggregation.7} parent=11 // pred_check_branch
          %488 = sbr.rel (%p486) target = $region40
        $region39: #{local_feature_aggregation.7} parent=11 // pred_region
          %s490 = ssub.s32 512, 512
          %491 = vsyncadd [#allocation18], %s490
          %s492 = sshll.u32 [#allocation19], 4
          %s493 = int_to_ptr.vmem [resolvable:$true] %s492
          %498 = dma.hbm_to_vmem [thread:$0]  %s10, 512, %s493, [#allocation18], 128, 128, 8
        $region40: #{local_feature_aggregation.7} parent=11 // pred_fallthru
          _
        // Predicated region
        $region41: #{local_feature_aggregation.7} parent=11 // pred_check
          %p499 = pneg %p329
        $region42: #{local_feature_aggregation.7} parent=11 // pred_check_branch
          %501 = sbr.rel (%p499) target = $region44
        $region43: #{local_feature_aggregation.7} parent=11 // pred_region
          %s503 = ssub.s32 512, 512
          %504 = vsyncadd [#allocation21], %s503
          %s505 = sshll.u32 [#allocation20], 4
          %s506 = int_to_ptr.vmem [resolvable:$true] %s505
          %511 = dma.hbm_to_vmem [thread:$0]  %s11, 512, %s506, [#allocation21], 128, 128, 8
        $region44: #{local_feature_aggregation.7} parent=11 // pred_fallthru
          _
        // Predicated region
        $region45: #{local_feature_aggregation.7} parent=11 // pred_check
          %p512 = pneg %p350
        $region46: #{local_feature_aggregation.7} parent=11 // pred_check_branch
          %514 = sbr.rel (%p512) target = $region48
        $region47: #{local_feature_aggregation.7} parent=11 // pred_region
          %s516 = ssub.s32 512, 512
          %517 = vsyncadd [#allocation21], %s516
          %s518 = sshll.u32 [#allocation22], 4
          %s519 = int_to_ptr.vmem [resolvable:$true] %s518
          %524 = dma.hbm_to_vmem [thread:$0]  %s12, 512, %s519, [#allocation21], 128, 128, 8
        $region48: #{local_feature_aggregation.7} parent=11 // pred_fallthru
          _
        // Predicated region
        $region49: #{local_feature_aggregation.7} parent=11 // pred_check
          %p525 = pneg %p371
        $region50: #{local_feature_aggregation.7} parent=11 // pred_check_branch
          %527 = sbr.rel (%p525) target = $region52
        $region51: #{local_feature_aggregation.7} parent=11 // pred_region
          %s529 = ssub.s32 512, 512
          %530 = vsyncadd [#allocation24], %s529
          %s531 = sshll.u32 [#allocation23], 4
          %s532 = int_to_ptr.vmem [resolvable:$true] %s531
          %537 = dma.hbm_to_vmem [thread:$0]  %s13, 512, %s532, [#allocation24], 128, 128, 8
        $region52: #{local_feature_aggregation.7} parent=11 // pred_fallthru
          _
      $region12: #{local_feature_aggregation.7} parent=5 // pred_fallthru
        _
      %p538 = scmp.lt.s32.totalorder %s37, 2
      // Predicated region
      $region53: #{local_feature_aggregation.7} parent=5 // pred_check
        %p539 = pneg %p538
      $region54: #{local_feature_aggregation.7} parent=5 // pred_check_branch
        %541 = sbr.rel (%p539) target = $region56
      $region55: #{local_feature_aggregation.7} parent=5 // pred_region
        // Predicated region
        $region57: #{local_feature_aggregation.7} parent=55 // pred_check
          %p542 = pneg %p71
        $region58: #{local_feature_aggregation.7} parent=55 // pred_check_branch
          %544 = sbr.rel (%p542) target = $region60
        $region59: #{local_feature_aggregation.7} parent=55 // pred_region
          %s545 = sand.u32 %s61, 1
          %s546 = scalar_lea.sflag [#allocation3], %s545
          %s547 = sand.u32 %s61, 1
          %s548 = smul.addr %s547, 4
          %s549 = scalar_lea.vmem [#allocation2], %s548
          %s551 = ssub.s32 64, 64
          %552 = vsyncadd %s546, %s551
          %s553 = sadd.s32 %s44, %s45
          %s554 = smul.addr %s553, 64
          %s555 = scalar_lea.hbm %s0, %s554
          %s557 = sshll.u32 %s549, 4
          %s558 = int_to_ptr.vmem [resolvable:$true] %s557
          %560 = dma.hbm_to_vmem [thread:$0]  %s555, 64, %s558, %s546
        $region60: #{local_feature_aggregation.7} parent=55 // pred_fallthru
          _
        // Predicated region
        $region61: #{local_feature_aggregation.7} parent=55 // pred_check
          %p561 = pneg %p99
        $region62: #{local_feature_aggregation.7} parent=55 // pred_check_branch
          %563 = sbr.rel (%p561) target = $region64
        $region63: #{local_feature_aggregation.7} parent=55 // pred_region
          %s564 = sand.u32 %s37, 1
          %s565 = scalar_lea.sflag [#allocation6], %s564
          %s566 = sand.u32 %s89, 1
          %s567 = smul.addr %s566, 32
          %s568 = scalar_lea.vmem [#allocation5], %s567
          %s570 = ssub.s32 512, 512
          %571 = vsyncadd %s565, %s570
          %s572 = smul.addr %s45, 8
          %s573 = sadd.s32 %s44, %s572
          %s574 = smul.addr %s573, 64
          %s575 = scalar_lea.hbm %s1, %s574
          %s576 = sshll.u32 %s568, 4
          %s577 = int_to_ptr.vmem [resolvable:$true] %s576
          %582 = dma.hbm_to_vmem [thread:$0]  %s575, 512, %s577, %s565, 64, 64, 4
        $region64: #{local_feature_aggregation.7} parent=55 // pred_fallthru
          _
        // Predicated region
        $region65: #{local_feature_aggregation.7} parent=55 // pred_check
          %p583 = pneg %p127
        $region66: #{local_feature_aggregation.7} parent=55 // pred_check_branch
          %585 = sbr.rel (%p583) target = $region68
        $region67: #{local_feature_aggregation.7} parent=55 // pred_region
          %s586 = sand.u32 %s37, 1
          %s587 = scalar_lea.sflag [#allocation6], %s586
          %s588 = sand.u32 %s117, 1
          %s589 = smul.addr %s588, 32
          %s590 = scalar_lea.vmem [#allocation7], %s589
          %s592 = ssub.s32 512, 512
          %593 = vsyncadd %s587, %s592
          %s594 = smul.addr %s45, 8
          %s595 = sadd.s32 %s44, %s594
          %s596 = smul.addr %s595, 64
          %s597 = scalar_lea.hbm %s2, %s596
          %s598 = sshll.u32 %s590, 4
          %s599 = int_to_ptr.vmem [resolvable:$true] %s598
          %604 = dma.hbm_to_vmem [thread:$0]  %s597, 512, %s599, %s587, 64, 64, 4
        $region68: #{local_feature_aggregation.7} parent=55 // pred_fallthru
          _
        // Predicated region
        $region69: #{local_feature_aggregation.7} parent=55 // pred_check
          %p605 = pneg %p281
        $region70: #{local_feature_aggregation.7} parent=55 // pred_check_branch
          %607 = sbr.rel (%p605) target = $region72
        $region71: #{local_feature_aggregation.7} parent=55 // pred_region
          %s608 = sand.u32 %s37, 1
          %s609 = scalar_lea.sflag [#allocation18], %s608
          %s610 = sand.u32 %s271, 1
          %s611 = smul.addr %s610, 8
          %s612 = scalar_lea.vmem [#allocation17], %s611
          %s614 = ssub.s32 128, 128
          %615 = vsyncadd %s609, %s614
          %s616 = sadd.s32 %s44, %s45
          %s617 = smul.addr %s616, 128
          %s618 = scalar_lea.hbm %s9, %s617
          %s620 = sshll.u32 %s612, 4
          %s621 = int_to_ptr.vmem [resolvable:$true] %s620
          %623 = dma.hbm_to_vmem [thread:$0]  %s618, 128, %s621, %s609
        $region72: #{local_feature_aggregation.7} parent=55 // pred_fallthru
          _
      $region56: #{local_feature_aggregation.7} parent=5 // pred_fallthru
        _
      %p624 = scmp.le.s32.totalorder 1, %s37
      %p625 = scmp.lt.s32.totalorder %s37, 3
      %p626 = pnand %p624, %p625
      %p627 = pneg %p626
      // Predicated region
      $region73: #{local_feature_aggregation.7} parent=5 // pred_check
        _
      $region74: #{local_feature_aggregation.7} parent=5 // pred_check_branch
        %629 = sbr.rel (%p626) target = $region76
      $region75: #{local_feature_aggregation.7} parent=5 // pred_region
        %s630 = ssub.s32 %s37, 1
        %s631 = sand.u32 %s64, 1
        %s632 = scalar_lea.sflag [#allocation3], %s631
        %s633 = sand.u32 %s64, 1
        %s634 = smul.addr %s633, 4
        %s635 = scalar_lea.vmem [#allocation2], %s634
        // Predicated region
        $region77: #{local_feature_aggregation.7} parent=75 // pred_check
          %p636 = pneg %p77
        $region78: #{local_feature_aggregation.7} parent=75 // pred_check_branch
          %638 = sbr.rel (%p636) target = $region80
        $region79: #{local_feature_aggregation.7} parent=75 // pred_region
          %639 = dma.done %s632, 64
        $region80: #{local_feature_aggregation.7} parent=75 // pred_fallthru
          _
        %s640 = sand.u32 %s42, 1
        %s641 = scalar_lea.sflag [#allocation6], %s640
        %s642 = sand.u32 %s92, 1
        %s643 = smul.addr %s642, 32
        %s644 = scalar_lea.vmem [#allocation5], %s643
        // Predicated region
        $region81: #{local_feature_aggregation.7} parent=75 // pred_check
          %p645 = pneg %p105
        $region82: #{local_feature_aggregation.7} parent=75 // pred_check_branch
          %647 = sbr.rel (%p645) target = $region84
        $region83: #{local_feature_aggregation.7} parent=75 // pred_region
          %648 = dma.done %s641, 512
        $region84: #{local_feature_aggregation.7} parent=75 // pred_fallthru
          _
        %s649 = sand.u32 %s42, 1
        %s650 = scalar_lea.sflag [#allocation6], %s649
        %s651 = sand.u32 %s120, 1
        %s652 = smul.addr %s651, 32
        %s653 = scalar_lea.vmem [#allocation7], %s652
        // Predicated region
        $region85: #{local_feature_aggregation.7} parent=75 // pred_check
          %p654 = pneg %p133
        $region86: #{local_feature_aggregation.7} parent=75 // pred_check_branch
          %656 = sbr.rel (%p654) target = $region88
        $region87: #{local_feature_aggregation.7} parent=75 // pred_region
          %657 = dma.done %s650, 512
        $region88: #{local_feature_aggregation.7} parent=75 // pred_fallthru
          _
        // Predicated region
        $region89: #{local_feature_aggregation.7} parent=75 // pred_check
          %p658 = pneg %p154
        $region90: #{local_feature_aggregation.7} parent=75 // pred_check_branch
          %660 = sbr.rel (%p658) target = $region92
        $region91: #{local_feature_aggregation.7} parent=75 // pred_region
          %661 = dma.done [#allocation9], 128
        $region92: #{local_feature_aggregation.7} parent=75 // pred_fallthru
          _
        // Predicated region
        $region93: #{local_feature_aggregation.7} parent=75 // pred_check
          %p662 = pneg %p175
        $region94: #{local_feature_aggregation.7} parent=75 // pred_check_branch
          %664 = sbr.rel (%p662) target = $region96
        $region95: #{local_feature_aggregation.7} parent=75 // pred_region
          %665 = dma.done [#allocation9], 128
        $region96: #{local_feature_aggregation.7} parent=75 // pred_fallthru
          _
        // Predicated region
        $region97: #{local_feature_aggregation.7} parent=75 // pred_check
          %p666 = pneg %p196
        $region98: #{local_feature_aggregation.7} parent=75 // pred_check_branch
          %668 = sbr.rel (%p666) target = $region100
        $region99: #{local_feature_aggregation.7} parent=75 // pred_region
          %669 = dma.done [#allocation12], 128
        $region100: #{local_feature_aggregation.7} parent=75 // pred_fallthru
          _
        // Predicated region
        $region101: #{local_feature_aggregation.7} parent=75 // pred_check
          %p670 = pneg %p217
        $region102: #{local_feature_aggregation.7} parent=75 // pred_check_branch
          %672 = sbr.rel (%p670) target = $region104
        $region103: #{local_feature_aggregation.7} parent=75 // pred_region
          %673 = dma.done [#allocation12], 256
        $region104: #{local_feature_aggregation.7} parent=75 // pred_fallthru
          _
        // Predicated region
        $region105: #{local_feature_aggregation.7} parent=75 // pred_check
          %p674 = pneg %p238
        $region106: #{local_feature_aggregation.7} parent=75 // pred_check_branch
          %676 = sbr.rel (%p674) target = $region108
        $region107: #{local_feature_aggregation.7} parent=75 // pred_region
          %677 = dma.done [#allocation15], 256
        $region108: #{local_feature_aggregation.7} parent=75 // pred_fallthru
          _
        // Predicated region
        $region109: #{local_feature_aggregation.7} parent=75 // pred_check
          %p678 = pneg %p259
        $region110: #{local_feature_aggregation.7} parent=75 // pred_check_branch
          %680 = sbr.rel (%p678) target = $region112
        $region111: #{local_feature_aggregation.7} parent=75 // pred_region
          %681 = dma.done [#allocation15], 256
        $region112: #{local_feature_aggregation.7} parent=75 // pred_fallthru
          _
        %s682 = sand.u32 %s42, 1
        %s683 = scalar_lea.sflag [#allocation18], %s682
        %s684 = sand.u32 %s274, 1
        %s685 = smul.addr %s684, 8
        %s686 = scalar_lea.vmem [#allocation17], %s685
        // Predicated region
        $region113: #{local_feature_aggregation.7} parent=75 // pred_check
          %p687 = pneg %p287
        $region114: #{local_feature_aggregation.7} parent=75 // pred_check_branch
          %689 = sbr.rel (%p687) target = $region116
        $region115: #{local_feature_aggregation.7} parent=75 // pred_region
          %690 = dma.done %s683, 128
        $region116: #{local_feature_aggregation.7} parent=75 // pred_fallthru
          _
        // Predicated region
        $region117: #{local_feature_aggregation.7} parent=75 // pred_check
          %p691 = pneg %p308
        $region118: #{local_feature_aggregation.7} parent=75 // pred_check_branch
          %693 = sbr.rel (%p691) target = $region120
        $region119: #{local_feature_aggregation.7} parent=75 // pred_region
          %694 = dma.done [#allocation18], 512
        $region120: #{local_feature_aggregation.7} parent=75 // pred_fallthru
          _
        // Predicated region
        $region121: #{local_feature_aggregation.7} parent=75 // pred_check
          %p695 = pneg %p329
        $region122: #{local_feature_aggregation.7} parent=75 // pred_check_branch
          %697 = sbr.rel (%p695) target = $region124
        $region123: #{local_feature_aggregation.7} parent=75 // pred_region
          %698 = dma.done [#allocation21], 512
        $region124: #{local_feature_aggregation.7} parent=75 // pred_fallthru
          _
        // Predicated region
        $region125: #{local_feature_aggregation.7} parent=75 // pred_check
          %p699 = pneg %p350
        $region126: #{local_feature_aggregation.7} parent=75 // pred_check_branch
          %701 = sbr.rel (%p699) target = $region128
        $region127: #{local_feature_aggregation.7} parent=75 // pred_region
          %702 = dma.done [#allocation21], 512
        $region128: #{local_feature_aggregation.7} parent=75 // pred_fallthru
          _
        // Predicated region
        $region129: #{local_feature_aggregation.7} parent=75 // pred_check
          %p703 = pneg %p371
        $region130: #{local_feature_aggregation.7} parent=75 // pred_check_branch
          %705 = sbr.rel (%p703) target = $region132
        $region131: #{local_feature_aggregation.7} parent=75 // pred_region
          %706 = dma.done [#allocation24], 512
        $region132: #{local_feature_aggregation.7} parent=75 // pred_fallthru
          _
        %s707 = sand.u32 %s64, 1
        %s708 = scalar_lea.sflag [#allocation3], %s707
        %s709 = sand.u32 %s64, 1
        %s710 = smul.addr %s709, 4
        %s711 = scalar_lea.vmem [#allocation2], %s710
        %p712 = pneg %p77
        %p713 = pneg %p74
        %s714 = sand.u32 %s42, 1
        %s715 = scalar_lea.sflag [#allocation6], %s714
        %s716 = sand.u32 %s92, 1
        %s717 = smul.addr %s716, 32
        %s718 = scalar_lea.vmem [#allocation5], %s717
        %p719 = pneg %p105
        %p720 = pneg %p102
        %s721 = sand.u32 %s42, 1
        %s722 = scalar_lea.sflag [#allocation6], %s721
        %s723 = sand.u32 %s120, 1
        %s724 = smul.addr %s723, 32
        %s725 = scalar_lea.vmem [#allocation7], %s724
        %p726 = pneg %p133
        %p727 = pneg %p130
        %p728 = pneg %p154
        %p729 = pneg %p151
        %p730 = pneg %p175
        %p731 = pneg %p172
        %p732 = pneg %p196
        %p733 = pneg %p193
        %p734 = pneg %p217
        %p735 = pneg %p214
        %p736 = pneg %p238
        %p737 = pneg %p235
        %p738 = pneg %p259
        %p739 = pneg %p256
        %s740 = sand.u32 %s42, 1
        %s741 = scalar_lea.sflag [#allocation18], %s740
        %s742 = sand.u32 %s274, 1
        %s743 = smul.addr %s742, 8
        %s744 = scalar_lea.vmem [#allocation17], %s743
        %p745 = pneg %p287
        %p746 = pneg %p284
        %p747 = pneg %p308
        %p748 = pneg %p305
        %p749 = pneg %p329
        %p750 = pneg %p326
        %p751 = pneg %p350
        %p752 = pneg %p347
        %p753 = pneg %p371
        %p754 = pneg %p368
        %p755 = pneg %p399
        %p756 = pneg %p396
        %s757 = sand.u32 %s386, 1
        %s758 = scalar_lea.sflag [#allocation4], %s757
        %s759 = sand.u32 %s386, 1
        %s760 = smul.addr %s759, 32
        %s761 = scalar_lea.vmem [#allocation25], %s760
        %v762 = vld [vmem:[%s635] sm:$0x7]
        %v763 = vld [vmem:[#allocation8] sm:$0xff]
        %v764 = vld [vmem:[#allocation10] sm:$0xff]
        %v765 = vld [vmem:[#allocation13] sm:$0xff]
        %v766 = vld [vmem:[#allocation13 + $0x8] sm:$0xff]
        %v767 = vld [vmem:[#allocation11] sm:$0xff]
        %769 = vset.pattern.permute.xlu0 0
        %770 = vperm.xlu0 %769, %v767
        %v771 = vpop.permute.xlu0 %770
        %vm773 = vcmask 23552
        %v775 = vsel %vm773, %v763, 0
        %vm777 = vcmask 1042432
        %v779 = vsel %vm777, %v762, 0
        %781 = vmatprep.subr.mxu0 0.0
        %782 = vmatpush1.msra.mxu0 %v779
        %783 = vmatprep.subr.mxu0 0.0
        %784 = vmatpush1.msra.mxu0 0.0
        %785 = vmatprep.subr.mxu0 0.0
        %786 = vmatpush1.msra.mxu0 0.0
        %787 = vmatprep.subr.mxu0 0.0
        %788 = vmatpush1.msra.mxu0 0.0
        %789 = vmatprep.subr.mxu0 0.0
        %790 = vmatpush1.msra.mxu0 0.0
        %791 = vmatprep.subr.mxu0 0.0
        %792 = vmatpush1.msra.mxu0 0.0
        %793 = vmatprep.subr.mxu0 0.0
        %794 = vmatpush1.msra.mxu0 0.0
        %795 = vmatprep.subr.mxu0 0.0
        %796 = vmatpush1.msra.mxu0 0.0
        %797 = vmatprep.subr.mxu0 0.0
        %798 = vmatpush1.msra.mxu0 0.0
        %799 = vmatprep.subr.mxu0 0.0
        %800 = vmatpush1.msra.mxu0 0.0
        %801 = vmatprep.subr.mxu0 0.0
        %802 = vmatpush1.msra.mxu0 0.0
        %803 = vmatprep.subr.mxu0 0.0
        %804 = vmatpush1.msra.mxu0 0.0
        %805 = vmatprep.subr.mxu0 0.0
        %806 = vmatpush1.msra.mxu0 0.0
        %807 = vmatprep.subr.mxu0 0.0
        %808 = vmatpush1.msra.mxu0 0.0
        %809 = vmatprep.subr.mxu0 0.0
        %810 = vmatpush1.msra.mxu0 0.0
        %811 = vmatprep.subr.mxu0 0.0
        %812 = vmatpush1.msra.mxu0 0.0
        %813 = vmatprep.subr.mxu0 0.0
        %814 = vmatpush1.msra.mxu0 0.0
        %815 = vmatprep.subr.mxu0 0.0
        %816 = vmatpush1.msra.mxu0 0.0
        %817 = vmatprep.subr.mxu0 0.0
        %818 = vmatpush1.msra.mxu0 0.0
        %819 = vmatprep.subr.mxu0 0.0
        %820 = vmatpush1.msra.mxu0 0.0
        %821 = vmatprep.subr.mxu0 0.0
        %822 = vmatpush1.msra.mxu0 0.0
        %823 = vmatprep.subr.mxu0 0.0
        %824 = vmatpush1.msra.mxu0 0.0
        %825 = vmatprep.subr.mxu0 0.0
        %826 = vmatpush1.msra.mxu0 0.0
        %827 = vmatprep.subr.mxu0 0.0
        %828 = vmatpush1.msra.mxu0 0.0
        %829 = vmatprep.subr.mxu0 0.0
        %830 = vmatpush1.msra.mxu0 0.0
        %831 = vmatprep.subr.mxu0 0.0
        %832 = vmatpush1.msra.mxu0 0.0
        %833 = vmatprep.subr.mxu0 0.0
        %834 = vmatpush1.msra.mxu0 0.0
        %835 = vmatprep.subr.mxu0 0.0
        %836 = vmatpush1.msra.mxu0 0.0
        %837 = vmatprep.subr.mxu0 0.0
        %838 = vmatpush1.msra.mxu0 0.0
        %839 = vmatprep.subr.mxu0 0.0
        %840 = vmatpush1.msra.mxu0 0.0
        %841 = vmatprep.subr.mxu0 0.0
        %842 = vmatpush1.msra.mxu0 0.0
        %843 = vmatprep.subr.mxu0 0.0
        %844 = vmatpush1.msra.mxu0 0.0
        %845 = vmatprep.mubr.f32.mxu0 0.0
        %846 = vmatmul.mubr.f32.gmra.mrb[0].mxu0 %v775
        %v847 = vpop.f32.mrb[0].mxu0
        %v848 = vadd.f32 %v771, %v847
        %v849 = vpop.f32.mrb[0].mxu0
        %850 = vdwg.mxu0
        %v851 = vld [vmem:[%s644] sm:$0x7]
        %v852 = vsub.f32 %v762, %v851
        %v853 = vmul.f32 %v852, %v852
        %v855 = vrot.slane %v853, 1
        %v857 = vadd.f32 %v853, %v855
        %v858 = vrot.slane %v853, 2
        %v860 = vadd.f32 %v857, %v858
        %v861 = vrsqrt.pop %v860
        %v862 = vmul.f32 %v860, %v861
        %vm863 = vcmp.eq.f32.partialorder %v860, inf
        %v864 = vsel %vm863, %v860, %v862
        %vm865 = vcmp.eq.f32.partialorder %v860, 0.0
        %v866 = vand.u32 %v860, 2147483648
        %v867 = vsel %vm865, %v866, %v864
        %v869 = vrot.slane %v867, 5
        %v871 = vsel %vm777, %v851, %v869
        %vm872 = vcmask 31744
        %v874 = vsel %vm872, %v764, 0
        %vm876 = vcmask 1043456
        %v878 = vsel %vm876, %v871, 0
        %880 = vmatprep.subr.mxu0 0.0
        %881 = vmatpush1.msra.mxu0 %v878
        %882 = vmatprep.subr.mxu0 0.0
        %883 = vmatpush1.msra.mxu0 0.0
        %884 = vmatprep.subr.mxu0 0.0
        %885 = vmatpush1.msra.mxu0 0.0
        %886 = vmatprep.subr.mxu0 0.0
        %887 = vmatpush1.msra.mxu0 0.0
        %888 = vmatprep.subr.mxu0 0.0
        %889 = vmatpush1.msra.mxu0 0.0
        %890 = vmatprep.subr.mxu0 0.0
        %891 = vmatpush1.msra.mxu0 0.0
        %892 = vmatprep.subr.mxu0 0.0
        %893 = vmatpush1.msra.mxu0 0.0
        %894 = vmatprep.subr.mxu0 0.0
        %895 = vmatpush1.msra.mxu0 0.0
        %896 = vmatprep.subr.mxu0 0.0
        %897 = vmatpush1.msra.mxu0 0.0
        %898 = vmatprep.subr.mxu0 0.0
        %899 = vmatpush1.msra.mxu0 0.0
        %900 = vmatprep.subr.mxu0 0.0
        %901 = vmatpush1.msra.mxu0 0.0
        %902 = vmatprep.subr.mxu0 0.0
        %903 = vmatpush1.msra.mxu0 0.0
        %904 = vmatprep.subr.mxu0 0.0
        %905 = vmatpush1.msra.mxu0 0.0
        %906 = vmatprep.subr.mxu0 0.0
        %907 = vmatpush1.msra.mxu0 0.0
        %908 = vmatprep.subr.mxu0 0.0
        %909 = vmatpush1.msra.mxu0 0.0
        %910 = vmatprep.subr.mxu0 0.0
        %911 = vmatpush1.msra.mxu0 0.0
        %912 = vmatprep.subr.mxu0 0.0
        %913 = vmatpush1.msra.mxu0 0.0
        %914 = vmatprep.subr.mxu0 0.0
        %915 = vmatpush1.msra.mxu0 0.0
        %916 = vmatprep.subr.mxu0 0.0
        %917 = vmatpush1.msra.mxu0 0.0
        %918 = vmatprep.subr.mxu0 0.0
        %919 = vmatpush1.msra.mxu0 0.0
        %920 = vmatprep.subr.mxu0 0.0
        %921 = vmatpush1.msra.mxu0 0.0
        %922 = vmatprep.subr.mxu0 0.0
        %923 = vmatpush1.msra.mxu0 0.0
        %924 = vmatprep.subr.mxu0 0.0
        %925 = vmatpush1.msra.mxu0 0.0
        %926 = vmatprep.subr.mxu0 0.0
        %927 = vmatpush1.msra.mxu0 0.0
        %928 = vmatprep.subr.mxu0 0.0
        %929 = vmatpush1.msra.mxu0 0.0
        %930 = vmatprep.subr.mxu0 0.0
        %931 = vmatpush1.msra.mxu0 0.0
        %932 = vmatprep.subr.mxu0 0.0
        %933 = vmatpush1.msra.mxu0 0.0
        %934 = vmatprep.subr.mxu0 0.0
        %935 = vmatpush1.msra.mxu0 0.0
        %936 = vmatprep.subr.mxu0 0.0
        %937 = vmatpush1.msra.mxu0 0.0
        %938 = vmatprep.subr.mxu0 0.0
        %939 = vmatpush1.msra.mxu0 0.0
        %940 = vmatprep.subr.mxu0 0.0
        %941 = vmatpush1.msra.mxu0 0.0
        %942 = vmatprep.subr.mxu0 0.0
        %943 = vmatpush1.msra.mxu0 0.0
        %944 = vmatprep.mubr.f32.mxu0 0.0
        %945 = vmatmul.mubr.f32.gmra.mrb[0].mxu0 %v874
        %v946 = vpop.f32.mrb[0].mxu0
        %v947 = vadd.f32 0.0, %v946
        %v948 = vpop.f32.mrb[0].mxu0
        %949 = vdwg.mxu0
        %v950 = vadd.f32 %v848, %v947
        %v951 = vmax.f32 %v950, 0.0
        %v952 = vld [vmem:[%s653] sm:$0xf]
        %v953 = vunpack.c.l.bf16 %v952
        %vm954 = vcmask 130048
        %v956 = vsel %vm954, %v765, 0
        %v959 = vsel %vm954, %v766, 0
        %961 = vmatprep.subr.mxu0 0.0
        %962 = vmatpush1.msra.mxu0 %v951
        %963 = vmatprep.subr.mxu0 0.0
        %964 = vmatpush1.msra.mxu0 %v953
        %965 = vmatprep.subr.mxu0 0.0
        %966 = vmatpush1.msra.mxu0 0.0
        %967 = vmatprep.subr.mxu0 0.0
        %968 = vmatpush1.msra.mxu0 0.0
        %969 = vmatprep.subr.mxu0 0.0
        %970 = vmatpush1.msra.mxu0 0.0
        %971 = vmatprep.subr.mxu0 0.0
        %972 = vmatpush1.msra.mxu0 0.0
        %973 = vmatprep.subr.mxu0 0.0
        %974 = vmatpush1.msra.mxu0 0.0
        %975 = vmatprep.subr.mxu0 0.0
        %976 = vmatpush1.msra.mxu0 0.0
        %977 = vmatprep.subr.mxu0 0.0
        %978 = vmatpush1.msra.mxu0 0.0
        %979 = vmatprep.subr.mxu0 0.0
        %980 = vmatpush1.msra.mxu0 0.0
        %981 = vmatprep.subr.mxu0 0.0
        %982 = vmatpush1.msra.mxu0 0.0
        %983 = vmatprep.subr.mxu0 0.0
        %984 = vmatpush1.msra.mxu0 0.0
        %985 = vmatprep.subr.mxu0 0.0
        %986 = vmatpush1.msra.mxu0 0.0
        %987 = vmatprep.subr.mxu0 0.0
        %988 = vmatpush1.msra.mxu0 0.0
        %989 = vmatprep.subr.mxu0 0.0
        %990 = vmatpush1.msra.mxu0 0.0
        %991 = vmatprep.subr.mxu0 0.0
        %992 = vmatpush1.msra.mxu0 0.0
        %993 = vmatprep.subr.mxu0 0.0
        %994 = vmatpush1.msra.mxu0 0.0
        %995 = vmatprep.subr.mxu0 0.0
        %996 = vmatpush1.msra.mxu0 0.0
        %997 = vmatprep.subr.mxu0 0.0
        %998 = vmatpush1.msra.mxu0 0.0
        %999 = vmatprep.subr.mxu0 0.0
        %1000 = vmatpush1.msra.mxu0 0.0
        %1001 = vmatprep.subr.mxu0 0.0
        %1002 = vmatpush1.msra.mxu0 0.0
        %1003 = vmatprep.subr.mxu0 0.0
        %1004 = vmatpush1.msra.mxu0 0.0
        %1005 = vmatprep.subr.mxu0 0.0
        %1006 = vmatpush1.msra.mxu0 0.0
        %1007 = vmatprep.subr.mxu0 0.0
        %1008 = vmatpush1.msra.mxu0 0.0
        %1009 = vmatprep.subr.mxu0 0.0
        %1010 = vmatpush1.msra.mxu0 0.0
        %1011 = vmatprep.subr.mxu0 0.0
        %1012 = vmatpush1.msra.mxu0 0.0
        %1013 = vmatprep.subr.mxu0 0.0
        %1014 = vmatpush1.msra.mxu0 0.0
        %1015 = vmatprep.subr.mxu0 0.0
        %1016 = vmatpush1.msra.mxu0 0.0
        %1017 = vmatprep.subr.mxu0 0.0
        %1018 = vmatpush1.msra.mxu0 0.0
        %1019 = vmatprep.subr.mxu0 0.0
        %1020 = vmatpush1.msra.mxu0 0.0
        %1021 = vmatprep.subr.mxu0 0.0
        %1022 = vmatpush1.msra.mxu0 0.0
        %1023 = vmatprep.subr.mxu0 0.0
        %1024 = vmatpush1.msra.mxu0 0.0
        %1025 = vmatprep.mubr.f32.mxu0 0.0
        %1026 = vmatmul.mubr.f32.gmra.mrb[0].mxu0 %v956
        %v1027 = vpop.f32.mrb[0].mxu0
        %v1028 = vadd.f32 0.0, %v1027
        %v1029 = vpop.f32.mrb[0].mxu0
        %1030 = vmatprep.mubr.f32.mxu0 0.0
        %1031 = vmatmul.mubr.f32.gmra.mrb[0].mxu0 %v959
        %v1032 = vpop.f32.mrb[0].mxu0
        %v1033 = vadd.f32 0.0, %v1032
        %v1034 = vpop.f32.mrb[0].mxu0
        %1035 = vdwg.mxu0
        %s1036 = scalar_lea.vmem %s644, 4 [#allocation5]
        %v1037 = vld [vmem:[%s1036] sm:$0x7]
        %v1038 = vsub.f32 %v762, %v1037
        %v1039 = vmul.f32 %v1038, %v1038
        %v1041 = vrot.slane %v1039, 1
        %v1043 = vadd.f32 %v1039, %v1041
        %v1044 = vrot.slane %v1039, 2
        %v1046 = vadd.f32 %v1043, %v1044
        %v1047 = vrsqrt.pop %v1046
        %v1048 = vmul.f32 %v1046, %v1047
        %vm1049 = vcmp.eq.f32.partialorder %v1046, inf
        %v1050 = vsel %vm1049, %v1046, %v1048
        %vm1051 = vcmp.eq.f32.partialorder %v1046, 0.0
        %v1052 = vand.u32 %v1046, 2147483648
        %v1053 = vsel %vm1051, %v1052, %v1050
        %v1055 = vrot.slane %v1053, 5
        %v1057 = vsel %vm777, %v1037, %v1055
        %v1059 = vsel %vm876, %v1057, 0
        %1061 = vmatprep.subr.mxu0 0.0
        %1062 = vmatpush1.msra.mxu0 %v1059
        %1063 = vmatprep.subr.mxu0 0.0
        %1064 = vmatpush1.msra.mxu0 0.0
        %1065 = vmatprep.subr.mxu0 0.0
        %1066 = vmatpush1.msra.mxu0 0.0
        %1067 = vmatprep.subr.mxu0 0.0
        %1068 = vmatpush1.msra.mxu0 0.0
        %1069 = vmatprep.subr.mxu0 0.0
        %1070 = vmatpush1.msra.mxu0 0.0
        %1071 = vmatprep.subr.mxu0 0.0
        %1072 = vmatpush1.msra.mxu0 0.0
        %1073 = vmatprep.subr.mxu0 0.0
        %1074 = vmatpush1.msra.mxu0 0.0
        %1075 = vmatprep.subr.mxu0 0.0
        %1076 = vmatpush1.msra.mxu0 0.0
        %1077 = vmatprep.subr.mxu0 0.0
        %1078 = vmatpush1.msra.mxu0 0.0
        %1079 = vmatprep.subr.mxu0 0.0
        %1080 = vmatpush1.msra.mxu0 0.0
        %1081 = vmatprep.subr.mxu0 0.0
        %1082 = vmatpush1.msra.mxu0 0.0
        %1083 = vmatprep.subr.mxu0 0.0
        %1084 = vmatpush1.msra.mxu0 0.0
        %1085 = vmatprep.subr.mxu0 0.0
        %1086 = vmatpush1.msra.mxu0 0.0
        %1087 = vmatprep.subr.mxu0 0.0
        %1088 = vmatpush1.msra.mxu0 0.0
        %1089 = vmatprep.subr.mxu0 0.0
        %1090 = vmatpush1.msra.mxu0 0.0
        %1091 = vmatprep.subr.mxu0 0.0
        %1092 = vmatpush1.msra.mxu0 0.0
        %1093 = vmatprep.subr.mxu0 0.0
        %1094 = vmatpush1.msra.mxu0 0.0
        %1095 = vmatprep.subr.mxu0 0.0
        %1096 = vmatpush1.msra.mxu0 0.0
        %1097 = vmatprep.subr.mxu0 0.0
        %1098 = vmatpush1.msra.mxu0 0.0
        %1099 = vmatprep.subr.mxu0 0.0
        %1100 = vmatpush1.msra.mxu0 0.0
        %1101 = vmatprep.subr.mxu0 0.0
        %1102 = vmatpush1.msra.mxu0 0.0
        %1103 = vmatprep.subr.mxu0 0.0
        %1104 = vmatpush1.msra.mxu0 0.0
        %1105 = vmatprep.subr.mxu0 0.0
        %1106 = vmatpush1.msra.mxu0 0.0
        %1107 = vmatprep.subr.mxu0 0.0
        %1108 = vmatpush1.msra.mxu0 0.0
        %1109 = vmatprep.subr.mxu0 0.0
        %1110 = vmatpush1.msra.mxu0 0.0
        %1111 = vmatprep.subr.mxu0 0.0
        %1112 = vmatpush1.msra.mxu0 0.0
        %1113 = vmatprep.subr.mxu0 0.0
        %1114 = vmatpush1.msra.mxu0 0.0
        %1115 = vmatprep.subr.mxu0 0.0
        %1116 = vmatpush1.msra.mxu0 0.0
        %1117 = vmatprep.subr.mxu0 0.0
        %1118 = vmatpush1.msra.mxu0 0.0
        %1119 = vmatprep.subr.mxu0 0.0
        %1120 = vmatpush1.msra.mxu0 0.0
        %1121 = vmatprep.subr.mxu0 0.0
        %1122 = vmatpush1.msra.mxu0 0.0
        %1123 = vmatprep.subr.mxu0 0.0
        %1124 = vmatpush1.msra.mxu0 0.0
        %1125 = vmatprep.mubr.f32.mxu0 0.0
        %1126 = vmatmul.mubr.f32.gmra.mrb[0].mxu0 %v874
        %v1127 = vpop.f32.mrb[0].mxu0
        %v1128 = vadd.f32 0.0, %v1127
        %v1129 = vpop.f32.mrb[0].mxu0
        %1130 = vdwg.mxu0
        %v1131 = vadd.f32 %v848, %v1128
        %v1132 = vmax.f32 %v1131, 0.0
        %s1133 = scalar_lea.vmem %s653, 4 [#allocation7]
        %v1134 = vld [vmem:[%s1133] sm:$0xf]
        %v1135 = vunpack.c.l.bf16 %v1134
        %1136 = vmatprep.subr.mxu0 0.0
        %1137 = vmatpush1.msra.mxu0 %v1132
        %1138 = vmatprep.subr.mxu0 0.0
        %1139 = vmatpush1.msra.mxu0 %v1135
        %1140 = vmatprep.subr.mxu0 0.0
        %1141 = vmatpush1.msra.mxu0 0.0
        %1142 = vmatprep.subr.mxu0 0.0
        %1143 = vmatpush1.msra.mxu0 0.0
        %1144 = vmatprep.subr.mxu0 0.0
        %1145 = vmatpush1.msra.mxu0 0.0
        %1146 = vmatprep.subr.mxu0 0.0
        %1147 = vmatpush1.msra.mxu0 0.0
        %1148 = vmatprep.subr.mxu0 0.0
        %1149 = vmatpush1.msra.mxu0 0.0
        %1150 = vmatprep.subr.mxu0 0.0
        %1151 = vmatpush1.msra.mxu0 0.0
        %1152 = vmatprep.subr.mxu0 0.0
        %1153 = vmatpush1.msra.mxu0 0.0
        %1154 = vmatprep.subr.mxu0 0.0
        %1155 = vmatpush1.msra.mxu0 0.0
        %1156 = vmatprep.subr.mxu0 0.0
        %1157 = vmatpush1.msra.mxu0 0.0
        %1158 = vmatprep.subr.mxu0 0.0
        %1159 = vmatpush1.msra.mxu0 0.0
        %1160 = vmatprep.subr.mxu0 0.0
        %1161 = vmatpush1.msra.mxu0 0.0
        %1162 = vmatprep.subr.mxu0 0.0
        %1163 = vmatpush1.msra.mxu0 0.0
        %1164 = vmatprep.subr.mxu0 0.0
        %1165 = vmatpush1.msra.mxu0 0.0
        %1166 = vmatprep.subr.mxu0 0.0
        %1167 = vmatpush1.msra.mxu0 0.0
        %1168 = vmatprep.subr.mxu0 0.0
        %1169 = vmatpush1.msra.mxu0 0.0
        %1170 = vmatprep.subr.mxu0 0.0
        %1171 = vmatpush1.msra.mxu0 0.0
        %1172 = vmatprep.subr.mxu0 0.0
        %1173 = vmatpush1.msra.mxu0 0.0
        %1174 = vmatprep.subr.mxu0 0.0
        %1175 = vmatpush1.msra.mxu0 0.0
        %1176 = vmatprep.subr.mxu0 0.0
        %1177 = vmatpush1.msra.mxu0 0.0
        %1178 = vmatprep.subr.mxu0 0.0
        %1179 = vmatpush1.msra.mxu0 0.0
        %1180 = vmatprep.subr.mxu0 0.0
        %1181 = vmatpush1.msra.mxu0 0.0
        %1182 = vmatprep.subr.mxu0 0.0
        %1183 = vmatpush1.msra.mxu0 0.0
        %1184 = vmatprep.subr.mxu0 0.0
        %1185 = vmatpush1.msra.mxu0 0.0
        %1186 = vmatprep.subr.mxu0 0.0
        %1187 = vmatpush1.msra.mxu0 0.0
        %1188 = vmatprep.subr.mxu0 0.0
        %1189 = vmatpush1.msra.mxu0 0.0
        %1190 = vmatprep.subr.mxu0 0.0
        %1191 = vmatpush1.msra.mxu0 0.0
        %1192 = vmatprep.subr.mxu0 0.0
        %1193 = vmatpush1.msra.mxu0 0.0
        %1194 = vmatprep.subr.mxu0 0.0
        %1195 = vmatpush1.msra.mxu0 0.0
        %1196 = vmatprep.subr.mxu0 0.0
        %1197 = vmatpush1.msra.mxu0 0.0
        %1198 = vmatprep.subr.mxu0 0.0
        %1199 = vmatpush1.msra.mxu0 0.0
        %1200 = vmatprep.mubr.f32.mxu0 0.0
        %1201 = vmatmul.mubr.f32.gmra.mrb[0].mxu0 %v956
        %v1202 = vpop.f32.mrb[0].mxu0
        %v1203 = vadd.f32 0.0, %v1202
        %v1204 = vpop.f32.mrb[0].mxu0
        %1205 = vmatprep.mubr.f32.mxu0 0.0
        %1206 = vmatmul.mubr.f32.gmra.mrb[0].mxu0 %v959
        %v1207 = vpop.f32.mrb[0].mxu0
        %v1208 = vadd.f32 0.0, %v1207
        %v1209 = vpop.f32.mrb[0].mxu0
        %1210 = vdwg.mxu0
        %v1211 = vmax.f32 %v1028, %v1203
        %v1212 = vmax.f32 %v1033, %v1208
        %v1213 = vsub.f32 %v1028, %v1211
        %v1214 = vsub.f32 %v1033, %v1212
        %v1215 = vmul.f32 %v1213, 1.442695
        %v1216 = vpow.pop %v1215
        %v1217 = vmul.f32 %v1214, 1.442695
        %v1218 = vpow.pop %v1217
        %v1219 = vsub.f32 %v1203, %v1211
        %v1220 = vsub.f32 %v1208, %v1212
        %v1221 = vmul.f32 %v1219, 1.442695
        %v1222 = vpow.pop %v1221
        %v1223 = vmul.f32 %v1220, 1.442695
        %v1224 = vpow.pop %v1223
        %v1225 = vadd.f32 %v1216, %v1222
        %v1226 = vadd.f32 %v1218, %v1224
        %v1227 = vmul.f32 %v951, %v1216
        %v1228 = vmul.f32 %v953, %v1218
        %v1229 = vmul.f32 %v1222, %v1132
        %v1230 = vmul.f32 %v1224, %v1135
        %v1231 = vadd.f32 %v1227, %v1229
        %v1232 = vadd.f32 %v1228, %v1230
        %s1233 = scalar_lea.vmem %s644, 8 [#allocation5]
        %v1234 = vld [vmem:[%s1233] sm:$0x7]
        %v1235 = vsub.f32 %v762, %v1234
        %v1236 = vmul.f32 %v1235, %v1235
        %v1238 = vrot.slane %v1236, 1
        %v1240 = vadd.f32 %v1236, %v1238
        %v1241 = vrot.slane %v1236, 2
        %v1243 = vadd.f32 %v1240, %v1241
        %v1244 = vrsqrt.pop %v1243
        %v1245 = vmul.f32 %v1243, %v1244
        %vm1246 = vcmp.eq.f32.partialorder %v1243, inf
        %v1247 = vsel %vm1246, %v1243, %v1245
        %vm1248 = vcmp.eq.f32.partialorder %v1243, 0.0
        %v1249 = vand.u32 %v1243, 2147483648
        %v1250 = vsel %vm1248, %v1249, %v1247
        %v1252 = vrot.slane %v1250, 5
        %v1254 = vsel %vm777, %v1234, %v1252
        %v1256 = vsel %vm876, %v1254, 0
        %1258 = vmatprep.subr.mxu0 0.0
        %1259 = vmatpush1.msra.mxu0 %v1256
        %1260 = vmatprep.subr.mxu0 0.0
        %1261 = vmatpush1.msra.mxu0 0.0
        %1262 = vmatprep.subr.mxu0 0.0
        %1263 = vmatpush1.msra.mxu0 0.0
        %1264 = vmatprep.subr.mxu0 0.0
        %1265 = vmatpush1.msra.mxu0 0.0
        %1266 = vmatprep.subr.mxu0 0.0
        %1267 = vmatpush1.msra.mxu0 0.0
        %1268 = vmatprep.subr.mxu0 0.0
        %1269 = vmatpush1.msra.mxu0 0.0
        %1270 = vmatprep.subr.mxu0 0.0
        %1271 = vmatpush1.msra.mxu0 0.0
        %1272 = vmatprep.subr.mxu0 0.0
        %1273 = vmatpush1.msra.mxu0 0.0
        %1274 = vmatprep.subr.mxu0 0.0
        %1275 = vmatpush1.msra.mxu0 0.0
        %1276 = vmatprep.subr.mxu0 0.0
        %1277 = vmatpush1.msra.mxu0 0.0
        %1278 = vmatprep.subr.mxu0 0.0
        %1279 = vmatpush1.msra.mxu0 0.0
        %1280 = vmatprep.subr.mxu0 0.0
        %1281 = vmatpush1.msra.mxu0 0.0
        %1282 = vmatprep.subr.mxu0 0.0
        %1283 = vmatpush1.msra.mxu0 0.0
        %1284 = vmatprep.subr.mxu0 0.0
        %1285 = vmatpush1.msra.mxu0 0.0
        %1286 = vmatprep.subr.mxu0 0.0
        %1287 = vmatpush1.msra.mxu0 0.0
        %1288 = vmatprep.subr.mxu0 0.0
        %1289 = vmatpush1.msra.mxu0 0.0
        %1290 = vmatprep.subr.mxu0 0.0
        %1291 = vmatpush1.msra.mxu0 0.0
        %1292 = vmatprep.subr.mxu0 0.0
        %1293 = vmatpush1.msra.mxu0 0.0
        %1294 = vmatprep.subr.mxu0 0.0
        %1295 = vmatpush1.msra.mxu0 0.0
        %1296 = vmatprep.subr.mxu0 0.0
        %1297 = vmatpush1.msra.mxu0 0.0
        %1298 = vmatprep.subr.mxu0 0.0
        %1299 = vmatpush1.msra.mxu0 0.0
        %1300 = vmatprep.subr.mxu0 0.0
        %1301 = vmatpush1.msra.mxu0 0.0
        %1302 = vmatprep.subr.mxu0 0.0
        %1303 = vmatpush1.msra.mxu0 0.0
        %1304 = vmatprep.subr.mxu0 0.0
        %1305 = vmatpush1.msra.mxu0 0.0
        %1306 = vmatprep.subr.mxu0 0.0
        %1307 = vmatpush1.msra.mxu0 0.0
        %1308 = vmatprep.subr.mxu0 0.0
        %1309 = vmatpush1.msra.mxu0 0.0
        %1310 = vmatprep.subr.mxu0 0.0
        %1311 = vmatpush1.msra.mxu0 0.0
        %1312 = vmatprep.subr.mxu0 0.0
        %1313 = vmatpush1.msra.mxu0 0.0
        %1314 = vmatprep.subr.mxu0 0.0
        %1315 = vmatpush1.msra.mxu0 0.0
        %1316 = vmatprep.subr.mxu0 0.0
        %1317 = vmatpush1.msra.mxu0 0.0
        %1318 = vmatprep.subr.mxu0 0.0
        %1319 = vmatpush1.msra.mxu0 0.0
        %1320 = vmatprep.subr.mxu0 0.0
        %1321 = vmatpush1.msra.mxu0 0.0
        %1322 = vmatprep.mubr.f32.mxu0 0.0
        %1323 = vmatmul.mubr.f32.gmra.mrb[0].mxu0 %v874
        %v1324 = vpop.f32.mrb[0].mxu0
        %v1325 = vadd.f32 0.0, %v1324
        %v1326 = vpop.f32.mrb[0].mxu0
        %1327 = vdwg.mxu0
        %v1328 = vadd.f32 %v848, %v1325
        %v1329 = vmax.f32 %v1328, 0.0
        %s1330 = scalar_lea.vmem %s653, 8 [#allocation7]
        %v1331 = vld [vmem:[%s1330] sm:$0xf]
        %v1332 = vunpack.c.l.bf16 %v1331
        %1333 = vmatprep.subr.mxu0 0.0
        %1334 = vmatpush1.msra.mxu0 %v1329
        %1335 = vmatprep.subr.mxu0 0.0
        %1336 = vmatpush1.msra.mxu0 %v1332
        %1337 = vmatprep.subr.mxu0 0.0
        %1338 = vmatpush1.msra.mxu0 0.0
        %1339 = vmatprep.subr.mxu0 0.0
        %1340 = vmatpush1.msra.mxu0 0.0
        %1341 = vmatprep.subr.mxu0 0.0
        %1342 = vmatpush1.msra.mxu0 0.0
        %1343 = vmatprep.subr.mxu0 0.0
        %1344 = vmatpush1.msra.mxu0 0.0
        %1345 = vmatprep.subr.mxu0 0.0
        %1346 = vmatpush1.msra.mxu0 0.0
        %1347 = vmatprep.subr.mxu0 0.0
        %1348 = vmatpush1.msra.mxu0 0.0
        %1349 = vmatprep.subr.mxu0 0.0
        %1350 = vmatpush1.msra.mxu0 0.0
        %1351 = vmatprep.subr.mxu0 0.0
        %1352 = vmatpush1.msra.mxu0 0.0
        %1353 = vmatprep.subr.mxu0 0.0
        %1354 = vmatpush1.msra.mxu0 0.0
        %1355 = vmatprep.subr.mxu0 0.0
        %1356 = vmatpush1.msra.mxu0 0.0
        %1357 = vmatprep.subr.mxu0 0.0
        %1358 = vmatpush1.msra.mxu0 0.0
        %1359 = vmatprep.subr.mxu0 0.0
        %1360 = vmatpush1.msra.mxu0 0.0
        %1361 = vmatprep.subr.mxu0 0.0
        %1362 = vmatpush1.msra.mxu0 0.0
        %1363 = vmatprep.subr.mxu0 0.0
        %1364 = vmatpush1.msra.mxu0 0.0
        %1365 = vmatprep.subr.mxu0 0.0
        %1366 = vmatpush1.msra.mxu0 0.0
        %1367 = vmatprep.subr.mxu0 0.0
        %1368 = vmatpush1.msra.mxu0 0.0
        %1369 = vmatprep.subr.mxu0 0.0
        %1370 = vmatpush1.msra.mxu0 0.0
        %1371 = vmatprep.subr.mxu0 0.0
        %1372 = vmatpush1.msra.mxu0 0.0
        %1373 = vmatprep.subr.mxu0 0.0
        %1374 = vmatpush1.msra.mxu0 0.0
        %1375 = vmatprep.subr.mxu0 0.0
        %1376 = vmatpush1.msra.mxu0 0.0
        %1377 = vmatprep.subr.mxu0 0.0
        %1378 = vmatpush1.msra.mxu0 0.0
        %1379 = vmatprep.subr.mxu0 0.0
        %1380 = vmatpush1.msra.mxu0 0.0
        %1381 = vmatprep.subr.mxu0 0.0
        %1382 = vmatpush1.msra.mxu0 0.0
        %1383 = vmatprep.subr.mxu0 0.0
        %1384 = vmatpush1.msra.mxu0 0.0
        %1385 = vmatprep.subr.mxu0 0.0
        %1386 = vmatpush1.msra.mxu0 0.0
        %1387 = vmatprep.subr.mxu0 0.0
        %1388 = vmatpush1.msra.mxu0 0.0
        %1389 = vmatprep.subr.mxu0 0.0
        %1390 = vmatpush1.msra.mxu0 0.0
        %1391 = vmatprep.subr.mxu0 0.0
        %1392 = vmatpush1.msra.mxu0 0.0
        %1393 = vmatprep.subr.mxu0 0.0
        %1394 = vmatpush1.msra.mxu0 0.0
        %1395 = vmatprep.subr.mxu0 0.0
        %1396 = vmatpush1.msra.mxu0 0.0
        %1397 = vmatprep.mubr.f32.mxu0 0.0
        %1398 = vmatmul.mubr.f32.gmra.mrb[0].mxu0 %v956
        %v1399 = vpop.f32.mrb[0].mxu0
        %v1400 = vadd.f32 0.0, %v1399
        %v1401 = vpop.f32.mrb[0].mxu0
        %1402 = vmatprep.mubr.f32.mxu0 0.0
        %1403 = vmatmul.mubr.f32.gmra.mrb[0].mxu0 %v959
        %v1404 = vpop.f32.mrb[0].mxu0
        %v1405 = vadd.f32 0.0, %v1404
        %v1406 = vpop.f32.mrb[0].mxu0
        %1407 = vdwg.mxu0
        %v1408 = vmax.f32 %v1211, %v1400
        %v1409 = vmax.f32 %v1212, %v1405
        %v1410 = vsub.f32 %v1211, %v1408
        %v1411 = vsub.f32 %v1212, %v1409
        %v1412 = vmul.f32 %v1410, 1.442695
        %v1413 = vpow.pop %v1412
        %v1414 = vmul.f32 %v1411, 1.442695
        %v1415 = vpow.pop %v1414
        %v1416 = vsub.f32 %v1400, %v1408
        %v1417 = vsub.f32 %v1405, %v1409
        %v1418 = vmul.f32 %v1416, 1.442695
        %v1419 = vpow.pop %v1418
        %v1420 = vmul.f32 %v1417, 1.442695
        %v1421 = vpow.pop %v1420
        %v1422 = vmul.f32 %v1225, %v1413
        %v1423 = vmul.f32 %v1226, %v1415
        %v1424 = vadd.f32 %v1422, %v1419
        %v1425 = vadd.f32 %v1423, %v1421
        %v1426 = vmul.f32 %v1231, %v1413
        %v1427 = vmul.f32 %v1232, %v1415
        %v1428 = vmul.f32 %v1419, %v1329
        %v1429 = vmul.f32 %v1421, %v1332
        %v1430 = vadd.f32 %v1426, %v1428
        %v1431 = vadd.f32 %v1427, %v1429
        %s1432 = scalar_lea.vmem %s644, 12 [#allocation5]
        %v1433 = vld [vmem:[%s1432] sm:$0x7]
        %v1434 = vsub.f32 %v762, %v1433
        %v1435 = vmul.f32 %v1434, %v1434
        %v1437 = vrot.slane %v1435, 1
        %v1439 = vadd.f32 %v1435, %v1437
        %v1440 = vrot.slane %v1435, 2
        %v1442 = vadd.f32 %v1439, %v1440
        %v1443 = vrsqrt.pop %v1442
        %v1444 = vmul.f32 %v1442, %v1443
        %vm1445 = vcmp.eq.f32.partialorder %v1442, inf
        %v1446 = vsel %vm1445, %v1442, %v1444
        %vm1447 = vcmp.eq.f32.partialorder %v1442, 0.0
        %v1448 = vand.u32 %v1442, 2147483648
        %v1449 = vsel %vm1447, %v1448, %v1446
        %v1451 = vrot.slane %v1449, 5
        %v1453 = vsel %vm777, %v1433, %v1451
        %v1455 = vsel %vm876, %v1453, 0
        %1457 = vmatprep.subr.mxu0 0.0
        %1458 = vmatpush1.msra.mxu0 %v1455
        %1459 = vmatprep.subr.mxu0 0.0
        %1460 = vmatpush1.msra.mxu0 0.0
        %1461 = vmatprep.subr.mxu0 0.0
        %1462 = vmatpush1.msra.mxu0 0.0
        %1463 = vmatprep.subr.mxu0 0.0
        %1464 = vmatpush1.msra.mxu0 0.0
        %1465 = vmatprep.subr.mxu0 0.0
        %1466 = vmatpush1.msra.mxu0 0.0
        %1467 = vmatprep.subr.mxu0 0.0
        %1468 = vmatpush1.msra.mxu0 0.0
        %1469 = vmatprep.subr.mxu0 0.0
        %1470 = vmatpush1.msra.mxu0 0.0
        %1471 = vmatprep.subr.mxu0 0.0
        %1472 = vmatpush1.msra.mxu0 0.0
        %1473 = vmatprep.subr.mxu0 0.0
        %1474 = vmatpush1.msra.mxu0 0.0
        %1475 = vmatprep.subr.mxu0 0.0
        %1476 = vmatpush1.msra.mxu0 0.0
        %1477 = vmatprep.subr.mxu0 0.0
        %1478 = vmatpush1.msra.mxu0 0.0
        %1479 = vmatprep.subr.mxu0 0.0
        %1480 = vmatpush1.msra.mxu0 0.0
        %1481 = vmatprep.subr.mxu0 0.0
        %1482 = vmatpush1.msra.mxu0 0.0
        %1483 = vmatprep.subr.mxu0 0.0
        %1484 = vmatpush1.msra.mxu0 0.0
        %1485 = vmatprep.subr.mxu0 0.0
        %1486 = vmatpush1.msra.mxu0 0.0
        %1487 = vmatprep.subr.mxu0 0.0
        %1488 = vmatpush1.msra.mxu0 0.0
        %1489 = vmatprep.subr.mxu0 0.0
        %1490 = vmatpush1.msra.mxu0 0.0
        %1491 = vmatprep.subr.mxu0 0.0
        %1492 = vmatpush1.msra.mxu0 0.0
        %1493 = vmatprep.subr.mxu0 0.0
        %1494 = vmatpush1.msra.mxu0 0.0
        %1495 = vmatprep.subr.mxu0 0.0
        %1496 = vmatpush1.msra.mxu0 0.0
        %1497 = vmatprep.subr.mxu0 0.0
        %1498 = vmatpush1.msra.mxu0 0.0
        %1499 = vmatprep.subr.mxu0 0.0
        %1500 = vmatpush1.msra.mxu0 0.0
        %1501 = vmatprep.subr.mxu0 0.0
        %1502 = vmatpush1.msra.mxu0 0.0
        %1503 = vmatprep.subr.mxu0 0.0
        %1504 = vmatpush1.msra.mxu0 0.0
        %1505 = vmatprep.subr.mxu0 0.0
        %1506 = vmatpush1.msra.mxu0 0.0
        %1507 = vmatprep.subr.mxu0 0.0
        %1508 = vmatpush1.msra.mxu0 0.0
        %1509 = vmatprep.subr.mxu0 0.0
        %1510 = vmatpush1.msra.mxu0 0.0
        %1511 = vmatprep.subr.mxu0 0.0
        %1512 = vmatpush1.msra.mxu0 0.0
        %1513 = vmatprep.subr.mxu0 0.0
        %1514 = vmatpush1.msra.mxu0 0.0
        %1515 = vmatprep.subr.mxu0 0.0
        %1516 = vmatpush1.msra.mxu0 0.0
        %1517 = vmatprep.subr.mxu0 0.0
        %1518 = vmatpush1.msra.mxu0 0.0
        %1519 = vmatprep.subr.mxu0 0.0
        %1520 = vmatpush1.msra.mxu0 0.0
        %1521 = vmatprep.mubr.f32.mxu0 0.0
        %1522 = vmatmul.mubr.f32.gmra.mrb[0].mxu0 %v874
        %v1523 = vpop.f32.mrb[0].mxu0
        %v1524 = vadd.f32 0.0, %v1523
        %v1525 = vpop.f32.mrb[0].mxu0
        %1526 = vdwg.mxu0
        %v1527 = vadd.f32 %v848, %v1524
        %v1528 = vmax.f32 %v1527, 0.0
        %s1529 = scalar_lea.vmem %s653, 12 [#allocation7]
        %v1530 = vld [vmem:[%s1529] sm:$0xf]
        %v1531 = vunpack.c.l.bf16 %v1530
        %1532 = vmatprep.subr.mxu0 0.0
        %1533 = vmatpush1.msra.mxu0 %v1528
        %1534 = vmatprep.subr.mxu0 0.0
        %1535 = vmatpush1.msra.mxu0 %v1531
        %1536 = vmatprep.subr.mxu0 0.0
        %1537 = vmatpush1.msra.mxu0 0.0
        %1538 = vmatprep.subr.mxu0 0.0
        %1539 = vmatpush1.msra.mxu0 0.0
        %1540 = vmatprep.subr.mxu0 0.0
        %1541 = vmatpush1.msra.mxu0 0.0
        %1542 = vmatprep.subr.mxu0 0.0
        %1543 = vmatpush1.msra.mxu0 0.0
        %1544 = vmatprep.subr.mxu0 0.0
        %1545 = vmatpush1.msra.mxu0 0.0
        %1546 = vmatprep.subr.mxu0 0.0
        %1547 = vmatpush1.msra.mxu0 0.0
        %1548 = vmatprep.subr.mxu0 0.0
        %1549 = vmatpush1.msra.mxu0 0.0
        %1550 = vmatprep.subr.mxu0 0.0
        %1551 = vmatpush1.msra.mxu0 0.0
        %1552 = vmatprep.subr.mxu0 0.0
        %1553 = vmatpush1.msra.mxu0 0.0
        %1554 = vmatprep.subr.mxu0 0.0
        %1555 = vmatpush1.msra.mxu0 0.0
        %1556 = vmatprep.subr.mxu0 0.0
        %1557 = vmatpush1.msra.mxu0 0.0
        %1558 = vmatprep.subr.mxu0 0.0
        %1559 = vmatpush1.msra.mxu0 0.0
        %1560 = vmatprep.subr.mxu0 0.0
        %1561 = vmatpush1.msra.mxu0 0.0
        %1562 = vmatprep.subr.mxu0 0.0
        %1563 = vmatpush1.msra.mxu0 0.0
        %1564 = vmatprep.subr.mxu0 0.0
        %1565 = vmatpush1.msra.mxu0 0.0
        %1566 = vmatprep.subr.mxu0 0.0
        %1567 = vmatpush1.msra.mxu0 0.0
        %1568 = vmatprep.subr.mxu0 0.0
        %1569 = vmatpush1.msra.mxu0 0.0
        %1570 = vmatprep.subr.mxu0 0.0
        %1571 = vmatpush1.msra.mxu0 0.0
        %1572 = vmatprep.subr.mxu0 0.0
        %1573 = vmatpush1.msra.mxu0 0.0
        %1574 = vmatprep.subr.mxu0 0.0
        %1575 = vmatpush1.msra.mxu0 0.0
        %1576 = vmatprep.subr.mxu0 0.0
        %1577 = vmatpush1.msra.mxu0 0.0
        %1578 = vmatprep.subr.mxu0 0.0
        %1579 = vmatpush1.msra.mxu0 0.0
        %1580 = vmatprep.subr.mxu0 0.0
        %1581 = vmatpush1.msra.mxu0 0.0
        %1582 = vmatprep.subr.mxu0 0.0
        %1583 = vmatpush1.msra.mxu0 0.0
        %1584 = vmatprep.subr.mxu0 0.0
        %1585 = vmatpush1.msra.mxu0 0.0
        %1586 = vmatprep.subr.mxu0 0.0
        %1587 = vmatpush1.msra.mxu0 0.0
        %1588 = vmatprep.subr.mxu0 0.0
        %1589 = vmatpush1.msra.mxu0 0.0
        %1590 = vmatprep.subr.mxu0 0.0
        %1591 = vmatpush1.msra.mxu0 0.0
        %1592 = vmatprep.subr.mxu0 0.0
        %1593 = vmatpush1.msra.mxu0 0.0
        %1594 = vmatprep.subr.mxu0 0.0
        %1595 = vmatpush1.msra.mxu0 0.0
        %1596 = vmatprep.mubr.f32.mxu0 0.0
        %1597 = vmatmul.mubr.f32.gmra.mrb[0].mxu0 %v956
        %v1598 = vpop.f32.mrb[0].mxu0
        %v1599 = vadd.f32 0.0, %v1598
        %v1600 = vpop.f32.mrb[0].mxu0
        %1601 = vmatprep.mubr.f32.mxu0 0.0
        %1602 = vmatmul.mubr.f32.gmra.mrb[0].mxu0 %v959
        %v1603 = vpop.f32.mrb[0].mxu0
        %v1604 = vadd.f32 0.0, %v1603
        %v1605 = vpop.f32.mrb[0].mxu0
        %1606 = vdwg.mxu0
        %v1607 = vmax.f32 %v1408, %v1599
        %v1608 = vmax.f32 %v1409, %v1604
        %v1609 = vsub.f32 %v1408, %v1607
        %v1610 = vsub.f32 %v1409, %v1608
        %v1611 = vmul.f32 %v1609, 1.442695
        %v1612 = vpow.pop %v1611
        %v1613 = vmul.f32 %v1610, 1.442695
        %v1614 = vpow.pop %v1613
        %v1615 = vsub.f32 %v1599, %v1607
        %v1616 = vsub.f32 %v1604, %v1608
        %v1617 = vmul.f32 %v1615, 1.442695
        %v1618 = vpow.pop %v1617
        %v1619 = vmul.f32 %v1616, 1.442695
        %v1620 = vpow.pop %v1619
        %v1621 = vmul.f32 %v1424, %v1612
        %v1622 = vmul.f32 %v1425, %v1614
        %v1623 = vadd.f32 %v1621, %v1618
        %v1624 = vadd.f32 %v1622, %v1620
        %v1625 = vmul.f32 %v1430, %v1612
        %v1626 = vmul.f32 %v1431, %v1614
        %v1627 = vmul.f32 %v1618, %v1528
        %v1628 = vmul.f32 %v1620, %v1531
        %v1629 = vadd.f32 %v1625, %v1627
        %v1630 = vadd.f32 %v1626, %v1628
        %s1631 = scalar_lea.vmem %s644, 16 [#allocation5]
        %v1632 = vld [vmem:[%s1631] sm:$0x7]
        %v1633 = vsub.f32 %v762, %v1632
        %v1634 = vmul.f32 %v1633, %v1633
        %v1636 = vrot.slane %v1634, 1
        %v1638 = vadd.f32 %v1634, %v1636
        %v1639 = vrot.slane %v1634, 2
        %v1641 = vadd.f32 %v1638, %v1639
        %v1642 = vrsqrt.pop %v1641
        %v1643 = vmul.f32 %v1641, %v1642
        %vm1644 = vcmp.eq.f32.partialorder %v1641, inf
        %v1645 = vsel %vm1644, %v1641, %v1643
        %vm1646 = vcmp.eq.f32.partialorder %v1641, 0.0
        %v1647 = vand.u32 %v1641, 2147483648
        %v1648 = vsel %vm1646, %v1647, %v1645
        %v1650 = vrot.slane %v1648, 5
        %v1652 = vsel %vm777, %v1632, %v1650
        %v1654 = vsel %vm876, %v1652, 0
        %1656 = vmatprep.subr.mxu0 0.0
        %1657 = vmatpush1.msra.mxu0 %v1654
        %1658 = vmatprep.subr.mxu0 0.0
        %1659 = vmatpush1.msra.mxu0 0.0
        %1660 = vmatprep.subr.mxu0 0.0
        %1661 = vmatpush1.msra.mxu0 0.0
        %1662 = vmatprep.subr.mxu0 0.0
        %1663 = vmatpush1.msra.mxu0 0.0
        %1664 = vmatprep.subr.mxu0 0.0
        %1665 = vmatpush1.msra.mxu0 0.0
        %1666 = vmatprep.subr.mxu0 0.0
        %1667 = vmatpush1.msra.mxu0 0.0
        %1668 = vmatprep.subr.mxu0 0.0
        %1669 = vmatpush1.msra.mxu0 0.0
        %1670 = vmatprep.subr.mxu0 0.0
        %1671 = vmatpush1.msra.mxu0 0.0
        %1672 = vmatprep.subr.mxu0 0.0
        %1673 = vmatpush1.msra.mxu0 0.0
        %1674 = vmatprep.subr.mxu0 0.0
        %1675 = vmatpush1.msra.mxu0 0.0
        %1676 = vmatprep.subr.mxu0 0.0
        %1677 = vmatpush1.msra.mxu0 0.0
        %1678 = vmatprep.subr.mxu0 0.0
        %1679 = vmatpush1.msra.mxu0 0.0
        %1680 = vmatprep.subr.mxu0 0.0
        %1681 = vmatpush1.msra.mxu0 0.0
        %1682 = vmatprep.subr.mxu0 0.0
        %1683 = vmatpush1.msra.mxu0 0.0
        %1684 = vmatprep.subr.mxu0 0.0
        %1685 = vmatpush1.msra.mxu0 0.0
        %1686 = vmatprep.subr.mxu0 0.0
        %1687 = vmatpush1.msra.mxu0 0.0
        %1688 = vmatprep.subr.mxu0 0.0
        %1689 = vmatpush1.msra.mxu0 0.0
        %1690 = vmatprep.subr.mxu0 0.0
        %1691 = vmatpush1.msra.mxu0 0.0
        %1692 = vmatprep.subr.mxu0 0.0
        %1693 = vmatpush1.msra.mxu0 0.0
        %1694 = vmatprep.subr.mxu0 0.0
        %1695 = vmatpush1.msra.mxu0 0.0
        %1696 = vmatprep.subr.mxu0 0.0
        %1697 = vmatpush1.msra.mxu0 0.0
        %1698 = vmatprep.subr.mxu0 0.0
        %1699 = vmatpush1.msra.mxu0 0.0
        %1700 = vmatprep.subr.mxu0 0.0
        %1701 = vmatpush1.msra.mxu0 0.0
        %1702 = vmatprep.subr.mxu0 0.0
        %1703 = vmatpush1.msra.mxu0 0.0
        %1704 = vmatprep.subr.mxu0 0.0
        %1705 = vmatpush1.msra.mxu0 0.0
        %1706 = vmatprep.subr.mxu0 0.0
        %1707 = vmatpush1.msra.mxu0 0.0
        %1708 = vmatprep.subr.mxu0 0.0
        %1709 = vmatpush1.msra.mxu0 0.0
        %1710 = vmatprep.subr.mxu0 0.0
        %1711 = vmatpush1.msra.mxu0 0.0
        %1712 = vmatprep.subr.mxu0 0.0
        %1713 = vmatpush1.msra.mxu0 0.0
        %1714 = vmatprep.subr.mxu0 0.0
        %1715 = vmatpush1.msra.mxu0 0.0
        %1716 = vmatprep.subr.mxu0 0.0
        %1717 = vmatpush1.msra.mxu0 0.0
        %1718 = vmatprep.subr.mxu0 0.0
        %1719 = vmatpush1.msra.mxu0 0.0
        %1720 = vmatprep.mubr.f32.mxu0 0.0
        %1721 = vmatmul.mubr.f32.gmra.mrb[0].mxu0 %v874
        %v1722 = vpop.f32.mrb[0].mxu0
        %v1723 = vadd.f32 0.0, %v1722
        %v1724 = vpop.f32.mrb[0].mxu0
        %1725 = vdwg.mxu0
        %v1726 = vadd.f32 %v848, %v1723
        %v1727 = vmax.f32 %v1726, 0.0
        %s1728 = scalar_lea.vmem %s653, 16 [#allocation7]
        %v1729 = vld [vmem:[%s1728] sm:$0xf]
        %v1730 = vunpack.c.l.bf16 %v1729
        %1731 = vmatprep.subr.mxu0 0.0
        %1732 = vmatpush1.msra.mxu0 %v1727
        %1733 = vmatprep.subr.mxu0 0.0
        %1734 = vmatpush1.msra.mxu0 %v1730
        %1735 = vmatprep.subr.mxu0 0.0
        %1736 = vmatpush1.msra.mxu0 0.0
        %1737 = vmatprep.subr.mxu0 0.0
        %1738 = vmatpush1.msra.mxu0 0.0
        %1739 = vmatprep.subr.mxu0 0.0
        %1740 = vmatpush1.msra.mxu0 0.0
        %1741 = vmatprep.subr.mxu0 0.0
        %1742 = vmatpush1.msra.mxu0 0.0
        %1743 = vmatprep.subr.mxu0 0.0
        %1744 = vmatpush1.msra.mxu0 0.0
        %1745 = vmatprep.subr.mxu0 0.0
        %1746 = vmatpush1.msra.mxu0 0.0
        %1747 = vmatprep.subr.mxu0 0.0
        %1748 = vmatpush1.msra.mxu0 0.0
        %1749 = vmatprep.subr.mxu0 0.0
        %1750 = vmatpush1.msra.mxu0 0.0
        %1751 = vmatprep.subr.mxu0 0.0
        %1752 = vmatpush1.msra.mxu0 0.0
        %1753 = vmatprep.subr.mxu0 0.0
        %1754 = vmatpush1.msra.mxu0 0.0
        %1755 = vmatprep.subr.mxu0 0.0
        %1756 = vmatpush1.msra.mxu0 0.0
        %1757 = vmatprep.subr.mxu0 0.0
        %1758 = vmatpush1.msra.mxu0 0.0
        %1759 = vmatprep.subr.mxu0 0.0
        %1760 = vmatpush1.msra.mxu0 0.0
        %1761 = vmatprep.subr.mxu0 0.0
        %1762 = vmatpush1.msra.mxu0 0.0
        %1763 = vmatprep.subr.mxu0 0.0
        %1764 = vmatpush1.msra.mxu0 0.0
        %1765 = vmatprep.subr.mxu0 0.0
        %1766 = vmatpush1.msra.mxu0 0.0
        %1767 = vmatprep.subr.mxu0 0.0
        %1768 = vmatpush1.msra.mxu0 0.0
        %1769 = vmatprep.subr.mxu0 0.0
        %1770 = vmatpush1.msra.mxu0 0.0
        %1771 = vmatprep.subr.mxu0 0.0
        %1772 = vmatpush1.msra.mxu0 0.0
        %1773 = vmatprep.subr.mxu0 0.0
        %1774 = vmatpush1.msra.mxu0 0.0
        %1775 = vmatprep.subr.mxu0 0.0
        %1776 = vmatpush1.msra.mxu0 0.0
        %1777 = vmatprep.subr.mxu0 0.0
        %1778 = vmatpush1.msra.mxu0 0.0
        %1779 = vmatprep.subr.mxu0 0.0
        %1780 = vmatpush1.msra.mxu0 0.0
        %1781 = vmatprep.subr.mxu0 0.0
        %1782 = vmatpush1.msra.mxu0 0.0
        %1783 = vmatprep.subr.mxu0 0.0
        %1784 = vmatpush1.msra.mxu0 0.0
        %1785 = vmatprep.subr.mxu0 0.0
        %1786 = vmatpush1.msra.mxu0 0.0
        %1787 = vmatprep.subr.mxu0 0.0
        %1788 = vmatpush1.msra.mxu0 0.0
        %1789 = vmatprep.subr.mxu0 0.0
        %1790 = vmatpush1.msra.mxu0 0.0
        %1791 = vmatprep.subr.mxu0 0.0
        %1792 = vmatpush1.msra.mxu0 0.0
        %1793 = vmatprep.subr.mxu0 0.0
        %1794 = vmatpush1.msra.mxu0 0.0
        %1795 = vmatprep.mubr.f32.mxu0 0.0
        %1796 = vmatmul.mubr.f32.gmra.mrb[0].mxu0 %v956
        %v1797 = vpop.f32.mrb[0].mxu0
        %v1798 = vadd.f32 0.0, %v1797
        %v1799 = vpop.f32.mrb[0].mxu0
        %1800 = vmatprep.mubr.f32.mxu0 0.0
        %1801 = vmatmul.mubr.f32.gmra.mrb[0].mxu0 %v959
        %v1802 = vpop.f32.mrb[0].mxu0
        %v1803 = vadd.f32 0.0, %v1802
        %v1804 = vpop.f32.mrb[0].mxu0
        %1805 = vdwg.mxu0
        %v1806 = vmax.f32 %v1607, %v1798
        %v1807 = vmax.f32 %v1608, %v1803
        %v1808 = vsub.f32 %v1607, %v1806
        %v1809 = vsub.f32 %v1608, %v1807
        %v1810 = vmul.f32 %v1808, 1.442695
        %v1811 = vpow.pop %v1810
        %v1812 = vmul.f32 %v1809, 1.442695
        %v1813 = vpow.pop %v1812
        %v1814 = vsub.f32 %v1798, %v1806
        %v1815 = vsub.f32 %v1803, %v1807
        %v1816 = vmul.f32 %v1814, 1.442695
        %v1817 = vpow.pop %v1816
        %v1818 = vmul.f32 %v1815, 1.442695
        %v1819 = vpow.pop %v1818
        %v1820 = vmul.f32 %v1623, %v1811
        %v1821 = vmul.f32 %v1624, %v1813
        %v1822 = vadd.f32 %v1820, %v1817
        %v1823 = vadd.f32 %v1821, %v1819
        %v1824 = vmul.f32 %v1629, %v1811
        %v1825 = vmul.f32 %v1630, %v1813
        %v1826 = vmul.f32 %v1817, %v1727
        %v1827 = vmul.f32 %v1819, %v1730
        %v1828 = vadd.f32 %v1824, %v1826
        %v1829 = vadd.f32 %v1825, %v1827
        %s1830 = scalar_lea.vmem %s644, 20 [#allocation5]
        %v1831 = vld [vmem:[%s1830] sm:$0x7]
        %v1832 = vsub.f32 %v762, %v1831
        %v1833 = vmul.f32 %v1832, %v1832
        %v1835 = vrot.slane %v1833, 1
        %v1837 = vadd.f32 %v1833, %v1835
        %v1838 = vrot.slane %v1833, 2
        %v1840 = vadd.f32 %v1837, %v1838
        %v1841 = vrsqrt.pop %v1840
        %v1842 = vmul.f32 %v1840, %v1841
        %vm1843 = vcmp.eq.f32.partialorder %v1840, inf
        %v1844 = vsel %vm1843, %v1840, %v1842
        %vm1845 = vcmp.eq.f32.partialorder %v1840, 0.0
        %v1846 = vand.u32 %v1840, 2147483648
        %v1847 = vsel %vm1845, %v1846, %v1844
        %v1849 = vrot.slane %v1847, 5
        %v1851 = vsel %vm777, %v1831, %v1849
        %v1853 = vsel %vm876, %v1851, 0
        %1855 = vmatprep.subr.mxu0 0.0
        %1856 = vmatpush1.msra.mxu0 %v1853
        %1857 = vmatprep.subr.mxu0 0.0
        %1858 = vmatpush1.msra.mxu0 0.0
        %1859 = vmatprep.subr.mxu0 0.0
        %1860 = vmatpush1.msra.mxu0 0.0
        %1861 = vmatprep.subr.mxu0 0.0
        %1862 = vmatpush1.msra.mxu0 0.0
        %1863 = vmatprep.subr.mxu0 0.0
        %1864 = vmatpush1.msra.mxu0 0.0
        %1865 = vmatprep.subr.mxu0 0.0
        %1866 = vmatpush1.msra.mxu0 0.0
        %1867 = vmatprep.subr.mxu0 0.0
        %1868 = vmatpush1.msra.mxu0 0.0
        %1869 = vmatprep.subr.mxu0 0.0
        %1870 = vmatpush1.msra.mxu0 0.0
        %1871 = vmatprep.subr.mxu0 0.0
        %1872 = vmatpush1.msra.mxu0 0.0
        %1873 = vmatprep.subr.mxu0 0.0
        %1874 = vmatpush1.msra.mxu0 0.0
        %1875 = vmatprep.subr.mxu0 0.0
        %1876 = vmatpush1.msra.mxu0 0.0
        %1877 = vmatprep.subr.mxu0 0.0
        %1878 = vmatpush1.msra.mxu0 0.0
        %1879 = vmatprep.subr.mxu0 0.0
        %1880 = vmatpush1.msra.mxu0 0.0
        %1881 = vmatprep.subr.mxu0 0.0
        %1882 = vmatpush1.msra.mxu0 0.0
        %1883 = vmatprep.subr.mxu0 0.0
        %1884 = vmatpush1.msra.mxu0 0.0
        %1885 = vmatprep.subr.mxu0 0.0
        %1886 = vmatpush1.msra.mxu0 0.0
        %1887 = vmatprep.subr.mxu0 0.0
        %1888 = vmatpush1.msra.mxu0 0.0
        %1889 = vmatprep.subr.mxu0 0.0
        %1890 = vmatpush1.msra.mxu0 0.0
        %1891 = vmatprep.subr.mxu0 0.0
        %1892 = vmatpush1.msra.mxu0 0.0
        %1893 = vmatprep.subr.mxu0 0.0
        %1894 = vmatpush1.msra.mxu0 0.0
        %1895 = vmatprep.subr.mxu0 0.0
        %1896 = vmatpush1.msra.mxu0 0.0
        %1897 = vmatprep.subr.mxu0 0.0
        %1898 = vmatpush1.msra.mxu0 0.0
        %1899 = vmatprep.subr.mxu0 0.0
        %1900 = vmatpush1.msra.mxu0 0.0
        %1901 = vmatprep.subr.mxu0 0.0
        %1902 = vmatpush1.msra.mxu0 0.0
        %1903 = vmatprep.subr.mxu0 0.0
        %1904 = vmatpush1.msra.mxu0 0.0
        %1905 = vmatprep.subr.mxu0 0.0
        %1906 = vmatpush1.msra.mxu0 0.0
        %1907 = vmatprep.subr.mxu0 0.0
        %1908 = vmatpush1.msra.mxu0 0.0
        %1909 = vmatprep.subr.mxu0 0.0
        %1910 = vmatpush1.msra.mxu0 0.0
        %1911 = vmatprep.subr.mxu0 0.0
        %1912 = vmatpush1.msra.mxu0 0.0
        %1913 = vmatprep.subr.mxu0 0.0
        %1914 = vmatpush1.msra.mxu0 0.0
        %1915 = vmatprep.subr.mxu0 0.0
        %1916 = vmatpush1.msra.mxu0 0.0
        %1917 = vmatprep.subr.mxu0 0.0
        %1918 = vmatpush1.msra.mxu0 0.0
        %1919 = vmatprep.mubr.f32.mxu0 0.0
        %1920 = vmatmul.mubr.f32.gmra.mrb[0].mxu0 %v874
        %v1921 = vpop.f32.mrb[0].mxu0
        %v1922 = vadd.f32 0.0, %v1921
        %v1923 = vpop.f32.mrb[0].mxu0
        %1924 = vdwg.mxu0
        %v1925 = vadd.f32 %v848, %v1922
        %v1926 = vmax.f32 %v1925, 0.0
        %s1927 = scalar_lea.vmem %s653, 20 [#allocation7]
        %v1928 = vld [vmem:[%s1927] sm:$0xf]
        %v1929 = vunpack.c.l.bf16 %v1928
        %1930 = vmatprep.subr.mxu0 0.0
        %1931 = vmatpush1.msra.mxu0 %v1926
        %1932 = vmatprep.subr.mxu0 0.0
        %1933 = vmatpush1.msra.mxu0 %v1929
        %1934 = vmatprep.subr.mxu0 0.0
        %1935 = vmatpush1.msra.mxu0 0.0
        %1936 = vmatprep.subr.mxu0 0.0
        %1937 = vmatpush1.msra.mxu0 0.0
        %1938 = vmatprep.subr.mxu0 0.0
        %1939 = vmatpush1.msra.mxu0 0.0
        %1940 = vmatprep.subr.mxu0 0.0
        %1941 = vmatpush1.msra.mxu0 0.0
        %1942 = vmatprep.subr.mxu0 0.0
        %1943 = vmatpush1.msra.mxu0 0.0
        %1944 = vmatprep.subr.mxu0 0.0
        %1945 = vmatpush1.msra.mxu0 0.0
        %1946 = vmatprep.subr.mxu0 0.0
        %1947 = vmatpush1.msra.mxu0 0.0
        %1948 = vmatprep.subr.mxu0 0.0
        %1949 = vmatpush1.msra.mxu0 0.0
        %1950 = vmatprep.subr.mxu0 0.0
        %1951 = vmatpush1.msra.mxu0 0.0
        %1952 = vmatprep.subr.mxu0 0.0
        %1953 = vmatpush1.msra.mxu0 0.0
        %1954 = vmatprep.subr.mxu0 0.0
        %1955 = vmatpush1.msra.mxu0 0.0
        %1956 = vmatprep.subr.mxu0 0.0
        %1957 = vmatpush1.msra.mxu0 0.0
        %1958 = vmatprep.subr.mxu0 0.0
        %1959 = vmatpush1.msra.mxu0 0.0
        %1960 = vmatprep.subr.mxu0 0.0
        %1961 = vmatpush1.msra.mxu0 0.0
        %1962 = vmatprep.subr.mxu0 0.0
        %1963 = vmatpush1.msra.mxu0 0.0
        %1964 = vmatprep.subr.mxu0 0.0
        %1965 = vmatpush1.msra.mxu0 0.0
        %1966 = vmatprep.subr.mxu0 0.0
        %1967 = vmatpush1.msra.mxu0 0.0
        %1968 = vmatprep.subr.mxu0 0.0
        %1969 = vmatpush1.msra.mxu0 0.0
        %1970 = vmatprep.subr.mxu0 0.0
        %1971 = vmatpush1.msra.mxu0 0.0
        %1972 = vmatprep.subr.mxu0 0.0
        %1973 = vmatpush1.msra.mxu0 0.0
        %1974 = vmatprep.subr.mxu0 0.0
        %1975 = vmatpush1.msra.mxu0 0.0
        %1976 = vmatprep.subr.mxu0 0.0
        %1977 = vmatpush1.msra.mxu0 0.0
        %1978 = vmatprep.subr.mxu0 0.0
        %1979 = vmatpush1.msra.mxu0 0.0
        %1980 = vmatprep.subr.mxu0 0.0
        %1981 = vmatpush1.msra.mxu0 0.0
        %1982 = vmatprep.subr.mxu0 0.0
        %1983 = vmatpush1.msra.mxu0 0.0
        %1984 = vmatprep.subr.mxu0 0.0
        %1985 = vmatpush1.msra.mxu0 0.0
        %1986 = vmatprep.subr.mxu0 0.0
        %1987 = vmatpush1.msra.mxu0 0.0
        %1988 = vmatprep.subr.mxu0 0.0
        %1989 = vmatpush1.msra.mxu0 0.0
        %1990 = vmatprep.subr.mxu0 0.0
        %1991 = vmatpush1.msra.mxu0 0.0
        %1992 = vmatprep.subr.mxu0 0.0
        %1993 = vmatpush1.msra.mxu0 0.0
        %1994 = vmatprep.mubr.f32.mxu0 0.0
        %1995 = vmatmul.mubr.f32.gmra.mrb[0].mxu0 %v956
        %v1996 = vpop.f32.mrb[0].mxu0
        %v1997 = vadd.f32 0.0, %v1996
        %v1998 = vpop.f32.mrb[0].mxu0
        %1999 = vmatprep.mubr.f32.mxu0 0.0
        %2000 = vmatmul.mubr.f32.gmra.mrb[0].mxu0 %v959
        %v2001 = vpop.f32.mrb[0].mxu0
        %v2002 = vadd.f32 0.0, %v2001
        %v2003 = vpop.f32.mrb[0].mxu0
        %2004 = vdwg.mxu0
        %v2005 = vmax.f32 %v1806, %v1997
        %v2006 = vmax.f32 %v1807, %v2002
        %v2007 = vsub.f32 %v1806, %v2005
        %v2008 = vsub.f32 %v1807, %v2006
        %v2009 = vmul.f32 %v2007, 1.442695
        %v2010 = vpow.pop %v2009
        %v2011 = vmul.f32 %v2008, 1.442695
        %v2012 = vpow.pop %v2011
        %v2013 = vsub.f32 %v1997, %v2005
        %v2014 = vsub.f32 %v2002, %v2006
        %v2015 = vmul.f32 %v2013, 1.442695
        %v2016 = vpow.pop %v2015
        %v2017 = vmul.f32 %v2014, 1.442695
        %v2018 = vpow.pop %v2017
        %v2019 = vmul.f32 %v1822, %v2010
        %v2020 = vmul.f32 %v1823, %v2012
        %v2021 = vadd.f32 %v2019, %v2016
        %v2022 = vadd.f32 %v2020, %v2018
        %v2023 = vmul.f32 %v1828, %v2010
        %v2024 = vmul.f32 %v1829, %v2012
        %v2025 = vmul.f32 %v2016, %v1926
        %v2026 = vmul.f32 %v2018, %v1929
        %v2027 = vadd.f32 %v2023, %v2025
        %v2028 = vadd.f32 %v2024, %v2026
        %s2029 = scalar_lea.vmem %s644, 24 [#allocation5]
        %v2030 = vld [vmem:[%s2029] sm:$0x7]
        %v2031 = vsub.f32 %v762, %v2030
        %v2032 = vmul.f32 %v2031, %v2031
        %v2034 = vrot.slane %v2032, 1
        %v2036 = vadd.f32 %v2032, %v2034
        %v2037 = vrot.slane %v2032, 2
        %v2039 = vadd.f32 %v2036, %v2037
        %v2040 = vrsqrt.pop %v2039
        %v2041 = vmul.f32 %v2039, %v2040
        %vm2042 = vcmp.eq.f32.partialorder %v2039, inf
        %v2043 = vsel %vm2042, %v2039, %v2041
        %vm2044 = vcmp.eq.f32.partialorder %v2039, 0.0
        %v2045 = vand.u32 %v2039, 2147483648
        %v2046 = vsel %vm2044, %v2045, %v2043
        %v2048 = vrot.slane %v2046, 5
        %v2050 = vsel %vm777, %v2030, %v2048
        %v2052 = vsel %vm876, %v2050, 0
        %2054 = vmatprep.subr.mxu0 0.0
        %2055 = vmatpush1.msra.mxu0 %v2052
        %2056 = vmatprep.subr.mxu0 0.0
        %2057 = vmatpush1.msra.mxu0 0.0
        %2058 = vmatprep.subr.mxu0 0.0
        %2059 = vmatpush1.msra.mxu0 0.0
        %2060 = vmatprep.subr.mxu0 0.0
        %2061 = vmatpush1.msra.mxu0 0.0
        %2062 = vmatprep.subr.mxu0 0.0
        %2063 = vmatpush1.msra.mxu0 0.0
        %2064 = vmatprep.subr.mxu0 0.0
        %2065 = vmatpush1.msra.mxu0 0.0
        %2066 = vmatprep.subr.mxu0 0.0
        %2067 = vmatpush1.msra.mxu0 0.0
        %2068 = vmatprep.subr.mxu0 0.0
        %2069 = vmatpush1.msra.mxu0 0.0
        %2070 = vmatprep.subr.mxu0 0.0
        %2071 = vmatpush1.msra.mxu0 0.0
        %2072 = vmatprep.subr.mxu0 0.0
        %2073 = vmatpush1.msra.mxu0 0.0
        %2074 = vmatprep.subr.mxu0 0.0
        %2075 = vmatpush1.msra.mxu0 0.0
        %2076 = vmatprep.subr.mxu0 0.0
        %2077 = vmatpush1.msra.mxu0 0.0
        %2078 = vmatprep.subr.mxu0 0.0
        %2079 = vmatpush1.msra.mxu0 0.0
        %2080 = vmatprep.subr.mxu0 0.0
        %2081 = vmatpush1.msra.mxu0 0.0
        %2082 = vmatprep.subr.mxu0 0.0
        %2083 = vmatpush1.msra.mxu0 0.0
        %2084 = vmatprep.subr.mxu0 0.0
        %2085 = vmatpush1.msra.mxu0 0.0
        %2086 = vmatprep.subr.mxu0 0.0
        %2087 = vmatpush1.msra.mxu0 0.0
        %2088 = vmatprep.subr.mxu0 0.0
        %2089 = vmatpush1.msra.mxu0 0.0
        %2090 = vmatprep.subr.mxu0 0.0
        %2091 = vmatpush1.msra.mxu0 0.0
        %2092 = vmatprep.subr.mxu0 0.0
        %2093 = vmatpush1.msra.mxu0 0.0
        %2094 = vmatprep.subr.mxu0 0.0
        %2095 = vmatpush1.msra.mxu0 0.0
        %2096 = vmatprep.subr.mxu0 0.0
        %2097 = vmatpush1.msra.mxu0 0.0
        %2098 = vmatprep.subr.mxu0 0.0
        %2099 = vmatpush1.msra.mxu0 0.0
        %2100 = vmatprep.subr.mxu0 0.0
        %2101 = vmatpush1.msra.mxu0 0.0
        %2102 = vmatprep.subr.mxu0 0.0
        %2103 = vmatpush1.msra.mxu0 0.0
        %2104 = vmatprep.subr.mxu0 0.0
        %2105 = vmatpush1.msra.mxu0 0.0
        %2106 = vmatprep.subr.mxu0 0.0
        %2107 = vmatpush1.msra.mxu0 0.0
        %2108 = vmatprep.subr.mxu0 0.0
        %2109 = vmatpush1.msra.mxu0 0.0
        %2110 = vmatprep.subr.mxu0 0.0
        %2111 = vmatpush1.msra.mxu0 0.0
        %2112 = vmatprep.subr.mxu0 0.0
        %2113 = vmatpush1.msra.mxu0 0.0
        %2114 = vmatprep.subr.mxu0 0.0
        %2115 = vmatpush1.msra.mxu0 0.0
        %2116 = vmatprep.subr.mxu0 0.0
        %2117 = vmatpush1.msra.mxu0 0.0
        %2118 = vmatprep.mubr.f32.mxu0 0.0
        %2119 = vmatmul.mubr.f32.gmra.mrb[0].mxu0 %v874
        %v2120 = vpop.f32.mrb[0].mxu0
        %v2121 = vadd.f32 0.0, %v2120
        %v2122 = vpop.f32.mrb[0].mxu0
        %2123 = vdwg.mxu0
        %v2124 = vadd.f32 %v848, %v2121
        %v2125 = vmax.f32 %v2124, 0.0
        %s2126 = scalar_lea.vmem %s653, 24 [#allocation7]
        %v2127 = vld [vmem:[%s2126] sm:$0xf]
        %v2128 = vunpack.c.l.bf16 %v2127
        %2129 = vmatprep.subr.mxu0 0.0
        %2130 = vmatpush1.msra.mxu0 %v2125
        %2131 = vmatprep.subr.mxu0 0.0
        %2132 = vmatpush1.msra.mxu0 %v2128
        %2133 = vmatprep.subr.mxu0 0.0
        %2134 = vmatpush1.msra.mxu0 0.0
        %2135 = vmatprep.subr.mxu0 0.0
        %2136 = vmatpush1.msra.mxu0 0.0
        %2137 = vmatprep.subr.mxu0 0.0
        %2138 = vmatpush1.msra.mxu0 0.0
        %2139 = vmatprep.subr.mxu0 0.0
        %2140 = vmatpush1.msra.mxu0 0.0
        %2141 = vmatprep.subr.mxu0 0.0
        %2142 = vmatpush1.msra.mxu0 0.0
        %2143 = vmatprep.subr.mxu0 0.0
        %2144 = vmatpush1.msra.mxu0 0.0
        %2145 = vmatprep.subr.mxu0 0.0
        %2146 = vmatpush1.msra.mxu0 0.0
        %2147 = vmatprep.subr.mxu0 0.0
        %2148 = vmatpush1.msra.mxu0 0.0
        %2149 = vmatprep.subr.mxu0 0.0
        %2150 = vmatpush1.msra.mxu0 0.0
        %2151 = vmatprep.subr.mxu0 0.0
        %2152 = vmatpush1.msra.mxu0 0.0
        %2153 = vmatprep.subr.mxu0 0.0
        %2154 = vmatpush1.msra.mxu0 0.0
        %2155 = vmatprep.subr.mxu0 0.0
        %2156 = vmatpush1.msra.mxu0 0.0
        %2157 = vmatprep.subr.mxu0 0.0
        %2158 = vmatpush1.msra.mxu0 0.0
        %2159 = vmatprep.subr.mxu0 0.0
        %2160 = vmatpush1.msra.mxu0 0.0
        %2161 = vmatprep.subr.mxu0 0.0
        %2162 = vmatpush1.msra.mxu0 0.0
        %2163 = vmatprep.subr.mxu0 0.0
        %2164 = vmatpush1.msra.mxu0 0.0
        %2165 = vmatprep.subr.mxu0 0.0
        %2166 = vmatpush1.msra.mxu0 0.0
        %2167 = vmatprep.subr.mxu0 0.0
        %2168 = vmatpush1.msra.mxu0 0.0
        %2169 = vmatprep.subr.mxu0 0.0
        %2170 = vmatpush1.msra.mxu0 0.0
        %2171 = vmatprep.subr.mxu0 0.0
        %2172 = vmatpush1.msra.mxu0 0.0
        %2173 = vmatprep.subr.mxu0 0.0
        %2174 = vmatpush1.msra.mxu0 0.0
        %2175 = vmatprep.subr.mxu0 0.0
        %2176 = vmatpush1.msra.mxu0 0.0
        %2177 = vmatprep.subr.mxu0 0.0
        %2178 = vmatpush1.msra.mxu0 0.0
        %2179 = vmatprep.subr.mxu0 0.0
        %2180 = vmatpush1.msra.mxu0 0.0
        %2181 = vmatprep.subr.mxu0 0.0
        %2182 = vmatpush1.msra.mxu0 0.0
        %2183 = vmatprep.subr.mxu0 0.0
        %2184 = vmatpush1.msra.mxu0 0.0
        %2185 = vmatprep.subr.mxu0 0.0
        %2186 = vmatpush1.msra.mxu0 0.0
        %2187 = vmatprep.subr.mxu0 0.0
        %2188 = vmatpush1.msra.mxu0 0.0
        %2189 = vmatprep.subr.mxu0 0.0
        %2190 = vmatpush1.msra.mxu0 0.0
        %2191 = vmatprep.subr.mxu0 0.0
        %2192 = vmatpush1.msra.mxu0 0.0
        %2193 = vmatprep.mubr.f32.mxu0 0.0
        %2194 = vmatmul.mubr.f32.gmra.mrb[0].mxu0 %v956
        %v2195 = vpop.f32.mrb[0].mxu0
        %v2196 = vadd.f32 0.0, %v2195
        %v2197 = vpop.f32.mrb[0].mxu0
        %2198 = vmatprep.mubr.f32.mxu0 0.0
        %2199 = vmatmul.mubr.f32.gmra.mrb[0].mxu0 %v959
        %v2200 = vpop.f32.mrb[0].mxu0
        %v2201 = vadd.f32 0.0, %v2200
        %v2202 = vpop.f32.mrb[0].mxu0
        %2203 = vdwg.mxu0
        %v2204 = vmax.f32 %v2005, %v2196
        %v2205 = vmax.f32 %v2006, %v2201
        %v2206 = vsub.f32 %v2005, %v2204
        %v2207 = vsub.f32 %v2006, %v2205
        %v2208 = vmul.f32 %v2206, 1.442695
        %v2209 = vpow.pop %v2208
        %v2210 = vmul.f32 %v2207, 1.442695
        %v2211 = vpow.pop %v2210
        %v2212 = vsub.f32 %v2196, %v2204
        %v2213 = vsub.f32 %v2201, %v2205
        %v2214 = vmul.f32 %v2212, 1.442695
        %v2215 = vpow.pop %v2214
        %v2216 = vmul.f32 %v2213, 1.442695
        %v2217 = vpow.pop %v2216
        %v2218 = vmul.f32 %v2021, %v2209
        %v2219 = vmul.f32 %v2022, %v2211
        %v2220 = vadd.f32 %v2218, %v2215
        %v2221 = vadd.f32 %v2219, %v2217
        %v2222 = vmul.f32 %v2027, %v2209
        %v2223 = vmul.f32 %v2028, %v2211
        %v2224 = vmul.f32 %v2215, %v2125
        %v2225 = vmul.f32 %v2217, %v2128
        %v2226 = vadd.f32 %v2222, %v2224
        %v2227 = vadd.f32 %v2223, %v2225
        %s2228 = scalar_lea.vmem %s644, 28 [#allocation5]
        %v2229 = vld [vmem:[%s2228] sm:$0x7]
        %v2230 = vsub.f32 %v762, %v2229
        %v2231 = vmul.f32 %v2230, %v2230
        %v2233 = vrot.slane %v2231, 1
        %v2235 = vadd.f32 %v2231, %v2233
        %v2236 = vrot.slane %v2231, 2
        %v2238 = vadd.f32 %v2235, %v2236
        %v2239 = vrsqrt.pop %v2238
        %v2240 = vmul.f32 %v2238, %v2239
        %vm2241 = vcmp.eq.f32.partialorder %v2238, inf
        %v2242 = vsel %vm2241, %v2238, %v2240
        %vm2243 = vcmp.eq.f32.partialorder %v2238, 0.0
        %v2244 = vand.u32 %v2238, 2147483648
        %v2245 = vsel %vm2243, %v2244, %v2242
        %v2247 = vrot.slane %v2245, 5
        %v2249 = vsel %vm777, %v2229, %v2247
        %v2251 = vsel %vm876, %v2249, 0
        %2253 = vmatprep.subr.mxu0 0.0
        %2254 = vmatpush1.msra.mxu0 %v2251
        %2255 = vmatprep.subr.mxu0 0.0
        %2256 = vmatpush1.msra.mxu0 0.0
        %2257 = vmatprep.subr.mxu0 0.0
        %2258 = vmatpush1.msra.mxu0 0.0
        %2259 = vmatprep.subr.mxu0 0.0
        %2260 = vmatpush1.msra.mxu0 0.0
        %2261 = vmatprep.subr.mxu0 0.0
        %2262 = vmatpush1.msra.mxu0 0.0
        %2263 = vmatprep.subr.mxu0 0.0
        %2264 = vmatpush1.msra.mxu0 0.0
        %2265 = vmatprep.subr.mxu0 0.0
        %2266 = vmatpush1.msra.mxu0 0.0
        %2267 = vmatprep.subr.mxu0 0.0
        %2268 = vmatpush1.msra.mxu0 0.0
        %2269 = vmatprep.subr.mxu0 0.0
        %2270 = vmatpush1.msra.mxu0 0.0
        %2271 = vmatprep.subr.mxu0 0.0
        %2272 = vmatpush1.msra.mxu0 0.0
        %2273 = vmatprep.subr.mxu0 0.0
        %2274 = vmatpush1.msra.mxu0 0.0
        %2275 = vmatprep.subr.mxu0 0.0
        %2276 = vmatpush1.msra.mxu0 0.0
        %2277 = vmatprep.subr.mxu0 0.0
        %2278 = vmatpush1.msra.mxu0 0.0
        %2279 = vmatprep.subr.mxu0 0.0
        %2280 = vmatpush1.msra.mxu0 0.0
        %2281 = vmatprep.subr.mxu0 0.0
        %2282 = vmatpush1.msra.mxu0 0.0
        %2283 = vmatprep.subr.mxu0 0.0
        %2284 = vmatpush1.msra.mxu0 0.0
        %2285 = vmatprep.subr.mxu0 0.0
        %2286 = vmatpush1.msra.mxu0 0.0
        %2287 = vmatprep.subr.mxu0 0.0
        %2288 = vmatpush1.msra.mxu0 0.0
        %2289 = vmatprep.subr.mxu0 0.0
        %2290 = vmatpush1.msra.mxu0 0.0
        %2291 = vmatprep.subr.mxu0 0.0
        %2292 = vmatpush1.msra.mxu0 0.0
        %2293 = vmatprep.subr.mxu0 0.0
        %2294 = vmatpush1.msra.mxu0 0.0
        %2295 = vmatprep.subr.mxu0 0.0
        %2296 = vmatpush1.msra.mxu0 0.0
        %2297 = vmatprep.subr.mxu0 0.0
        %2298 = vmatpush1.msra.mxu0 0.0
        %2299 = vmatprep.subr.mxu0 0.0
        %2300 = vmatpush1.msra.mxu0 0.0
        %2301 = vmatprep.subr.mxu0 0.0
        %2302 = vmatpush1.msra.mxu0 0.0
        %2303 = vmatprep.subr.mxu0 0.0
        %2304 = vmatpush1.msra.mxu0 0.0
        %2305 = vmatprep.subr.mxu0 0.0
        %2306 = vmatpush1.msra.mxu0 0.0
        %2307 = vmatprep.subr.mxu0 0.0
        %2308 = vmatpush1.msra.mxu0 0.0
        %2309 = vmatprep.subr.mxu0 0.0
        %2310 = vmatpush1.msra.mxu0 0.0
        %2311 = vmatprep.subr.mxu0 0.0
        %2312 = vmatpush1.msra.mxu0 0.0
        %2313 = vmatprep.subr.mxu0 0.0
        %2314 = vmatpush1.msra.mxu0 0.0
        %2315 = vmatprep.subr.mxu0 0.0
        %2316 = vmatpush1.msra.mxu0 0.0
        %2317 = vmatprep.mubr.f32.mxu0 0.0
        %2318 = vmatmul.mubr.f32.gmra.mrb[0].mxu0 %v874
        %v2319 = vpop.f32.mrb[0].mxu0
        %v2320 = vadd.f32 0.0, %v2319
        %v2321 = vpop.f32.mrb[0].mxu0
        %2322 = vdwg.mxu0
        %v2323 = vadd.f32 %v848, %v2320
        %v2324 = vmax.f32 %v2323, 0.0
        %s2325 = scalar_lea.vmem %s653, 28 [#allocation7]
        %v2326 = vld [vmem:[%s2325] sm:$0xf]
        %v2327 = vunpack.c.l.bf16 %v2326
        %2328 = vmatprep.subr.mxu0 0.0
        %2329 = vmatpush1.msra.mxu0 %v2324
        %2330 = vmatprep.subr.mxu0 0.0
        %2331 = vmatpush1.msra.mxu0 %v2327
        %2332 = vmatprep.subr.mxu0 0.0
        %2333 = vmatpush1.msra.mxu0 0.0
        %2334 = vmatprep.subr.mxu0 0.0
        %2335 = vmatpush1.msra.mxu0 0.0
        %2336 = vmatprep.subr.mxu0 0.0
        %2337 = vmatpush1.msra.mxu0 0.0
        %2338 = vmatprep.subr.mxu0 0.0
        %2339 = vmatpush1.msra.mxu0 0.0
        %2340 = vmatprep.subr.mxu0 0.0
        %2341 = vmatpush1.msra.mxu0 0.0
        %2342 = vmatprep.subr.mxu0 0.0
        %2343 = vmatpush1.msra.mxu0 0.0
        %2344 = vmatprep.subr.mxu0 0.0
        %2345 = vmatpush1.msra.mxu0 0.0
        %2346 = vmatprep.subr.mxu0 0.0
        %2347 = vmatpush1.msra.mxu0 0.0
        %2348 = vmatprep.subr.mxu0 0.0
        %2349 = vmatpush1.msra.mxu0 0.0
        %2350 = vmatprep.subr.mxu0 0.0
        %2351 = vmatpush1.msra.mxu0 0.0
        %2352 = vmatprep.subr.mxu0 0.0
        %2353 = vmatpush1.msra.mxu0 0.0
        %2354 = vmatprep.subr.mxu0 0.0
        %2355 = vmatpush1.msra.mxu0 0.0
        %2356 = vmatprep.subr.mxu0 0.0
        %2357 = vmatpush1.msra.mxu0 0.0
        %2358 = vmatprep.subr.mxu0 0.0
        %2359 = vmatpush1.msra.mxu0 0.0
        %2360 = vmatprep.subr.mxu0 0.0
        %2361 = vmatpush1.msra.mxu0 0.0
        %2362 = vmatprep.subr.mxu0 0.0
        %2363 = vmatpush1.msra.mxu0 0.0
        %2364 = vmatprep.subr.mxu0 0.0
        %2365 = vmatpush1.msra.mxu0 0.0
        %2366 = vmatprep.subr.mxu0 0.0
        %2367 = vmatpush1.msra.mxu0 0.0
        %2368 = vmatprep.subr.mxu0 0.0
        %2369 = vmatpush1.msra.mxu0 0.0
        %2370 = vmatprep.subr.mxu0 0.0
        %2371 = vmatpush1.msra.mxu0 0.0
        %2372 = vmatprep.subr.mxu0 0.0
        %2373 = vmatpush1.msra.mxu0 0.0
        %2374 = vmatprep.subr.mxu0 0.0
        %2375 = vmatpush1.msra.mxu0 0.0
        %2376 = vmatprep.subr.mxu0 0.0
        %2377 = vmatpush1.msra.mxu0 0.0
        %2378 = vmatprep.subr.mxu0 0.0
        %2379 = vmatpush1.msra.mxu0 0.0
        %2380 = vmatprep.subr.mxu0 0.0
        %2381 = vmatpush1.msra.mxu0 0.0
        %2382 = vmatprep.subr.mxu0 0.0
        %2383 = vmatpush1.msra.mxu0 0.0
        %2384 = vmatprep.subr.mxu0 0.0
        %2385 = vmatpush1.msra.mxu0 0.0
        %2386 = vmatprep.subr.mxu0 0.0
        %2387 = vmatpush1.msra.mxu0 0.0
        %2388 = vmatprep.subr.mxu0 0.0
        %2389 = vmatpush1.msra.mxu0 0.0
        %2390 = vmatprep.subr.mxu0 0.0
        %2391 = vmatpush1.msra.mxu0 0.0
        %2392 = vmatprep.mubr.f32.mxu0 0.0
        %2393 = vmatmul.mubr.f32.gmra.mrb[0].mxu0 %v956
        %v2394 = vpop.f32.mrb[0].mxu0
        %v2395 = vadd.f32 0.0, %v2394
        %v2396 = vpop.f32.mrb[0].mxu0
        %2397 = vmatprep.mubr.f32.mxu0 0.0
        %2398 = vmatmul.mubr.f32.gmra.mrb[0].mxu0 %v959
        %v2399 = vpop.f32.mrb[0].mxu0
        %v2400 = vadd.f32 0.0, %v2399
        %v2401 = vpop.f32.mrb[0].mxu0
        %2402 = vdwg.mxu0
        %v2403 = vmax.f32 %v2204, %v2395
        %v2404 = vmax.f32 %v2205, %v2400
        %v2405 = vsub.f32 %v2204, %v2403
        %v2406 = vsub.f32 %v2205, %v2404
        %v2407 = vmul.f32 %v2405, 1.442695
        %v2408 = vpow.pop %v2407
        %v2409 = vmul.f32 %v2406, 1.442695
        %v2410 = vpow.pop %v2409
        %v2411 = vsub.f32 %v2395, %v2403
        %v2412 = vsub.f32 %v2400, %v2404
        %v2413 = vmul.f32 %v2411, 1.442695
        %v2414 = vpow.pop %v2413
        %v2415 = vmul.f32 %v2412, 1.442695
        %v2416 = vpow.pop %v2415
        %v2417 = vmul.f32 %v2220, %v2408
        %v2418 = vmul.f32 %v2221, %v2410
        %v2419 = vadd.f32 %v2417, %v2414
        %v2420 = vadd.f32 %v2418, %v2416
        %v2421 = vmul.f32 %v2226, %v2408
        %v2422 = vmul.f32 %v2227, %v2410
        %v2423 = vmul.f32 %v2414, %v2324
        %v2424 = vmul.f32 %v2416, %v2327
        %v2425 = vadd.f32 %v2421, %v2423
        %v2426 = vadd.f32 %v2422, %v2424
        %v2427 = vrcp.pop %v2419
        %v2428 = vmul.f32 %v2425, %v2427
        %v2429 = vrcp.pop %v2420
        %v2430 = vmul.f32 %v2426, %v2429
        %v2431 = vld [vmem:[#allocation14] sm:$0xff]
        %v2432 = vld [vmem:[#allocation14 + $0x8] sm:$0xff]
        %v2433 = vld [vmem:[#allocation16] sm:$0xff]
        %v2434 = vld [vmem:[#allocation16 + $0x8] sm:$0xff]
        %2436 = vset.pattern.permute.xlu0 0
        %2437 = vperm.xlu0 %2436, %v2433
        %v2438 = vpop.permute.xlu0 %2437
        %2441 = vset.pattern.permute.xlu0 0
        %2442 = vperm.xlu0 %2441, %v2434
        %v2443 = vpop.permute.xlu0 %2442
        %v2446 = vsel %vm954, %v2431, 0
        %v2449 = vsel %vm954, %v2432, 0
        %2451 = vmatprep.subr.mxu0 0.0
        %2452 = vmatpush1.msra.mxu0 %v2428
        %2453 = vmatprep.subr.mxu0 0.0
        %2454 = vmatpush1.msra.mxu0 %v2430
        %2455 = vmatprep.subr.mxu0 0.0
        %2456 = vmatpush1.msra.mxu0 0.0
        %2457 = vmatprep.subr.mxu0 0.0
        %2458 = vmatpush1.msra.mxu0 0.0
        %2459 = vmatprep.subr.mxu0 0.0
        %2460 = vmatpush1.msra.mxu0 0.0
        %2461 = vmatprep.subr.mxu0 0.0
        %2462 = vmatpush1.msra.mxu0 0.0
        %2463 = vmatprep.subr.mxu0 0.0
        %2464 = vmatpush1.msra.mxu0 0.0
        %2465 = vmatprep.subr.mxu0 0.0
        %2466 = vmatpush1.msra.mxu0 0.0
        %2467 = vmatprep.subr.mxu0 0.0
        %2468 = vmatpush1.msra.mxu0 0.0
        %2469 = vmatprep.subr.mxu0 0.0
        %2470 = vmatpush1.msra.mxu0 0.0
        %2471 = vmatprep.subr.mxu0 0.0
        %2472 = vmatpush1.msra.mxu0 0.0
        %2473 = vmatprep.subr.mxu0 0.0
        %2474 = vmatpush1.msra.mxu0 0.0
        %2475 = vmatprep.subr.mxu0 0.0
        %2476 = vmatpush1.msra.mxu0 0.0
        %2477 = vmatprep.subr.mxu0 0.0
        %2478 = vmatpush1.msra.mxu0 0.0
        %2479 = vmatprep.subr.mxu0 0.0
        %2480 = vmatpush1.msra.mxu0 0.0
        %2481 = vmatprep.subr.mxu0 0.0
        %2482 = vmatpush1.msra.mxu0 0.0
        %2483 = vmatprep.subr.mxu0 0.0
        %2484 = vmatpush1.msra.mxu0 0.0
        %2485 = vmatprep.subr.mxu0 0.0
        %2486 = vmatpush1.msra.mxu0 0.0
        %2487 = vmatprep.subr.mxu0 0.0
        %2488 = vmatpush1.msra.mxu0 0.0
        %2489 = vmatprep.subr.mxu0 0.0
        %2490 = vmatpush1.msra.mxu0 0.0
        %2491 = vmatprep.subr.mxu0 0.0
        %2492 = vmatpush1.msra.mxu0 0.0
        %2493 = vmatprep.subr.mxu0 0.0
        %2494 = vmatpush1.msra.mxu0 0.0
        %2495 = vmatprep.subr.mxu0 0.0
        %2496 = vmatpush1.msra.mxu0 0.0
        %2497 = vmatprep.subr.mxu0 0.0
        %2498 = vmatpush1.msra.mxu0 0.0
        %2499 = vmatprep.subr.mxu0 0.0
        %2500 = vmatpush1.msra.mxu0 0.0
        %2501 = vmatprep.subr.mxu0 0.0
        %2502 = vmatpush1.msra.mxu0 0.0
        %2503 = vmatprep.subr.mxu0 0.0
        %2504 = vmatpush1.msra.mxu0 0.0
        %2505 = vmatprep.subr.mxu0 0.0
        %2506 = vmatpush1.msra.mxu0 0.0
        %2507 = vmatprep.subr.mxu0 0.0
        %2508 = vmatpush1.msra.mxu0 0.0
        %2509 = vmatprep.subr.mxu0 0.0
        %2510 = vmatpush1.msra.mxu0 0.0
        %2511 = vmatprep.subr.mxu0 0.0
        %2512 = vmatpush1.msra.mxu0 0.0
        %2513 = vmatprep.subr.mxu0 0.0
        %2514 = vmatpush1.msra.mxu0 0.0
        %2515 = vmatprep.mubr.f32.mxu0 0.0
        %2516 = vmatmul.mubr.f32.gmra.mrb[0].mxu0 %v2446
        %v2517 = vpop.f32.mrb[0].mxu0
        %v2518 = vadd.f32 %v2438, %v2517
        %v2519 = vpop.f32.mrb[0].mxu0
        %2520 = vmatprep.mubr.f32.mxu0 0.0
        %2521 = vmatmul.mubr.f32.gmra.mrb[0].mxu0 %v2449
        %v2522 = vpop.f32.mrb[0].mxu0
        %v2523 = vadd.f32 %v2443, %v2522
        %v2524 = vpop.f32.mrb[0].mxu0
        %2525 = vdwg.mxu0
        %v2526 = vmax.f32 %v2518, 0.0
        %v2527 = vmax.f32 %v2523, 0.0
        %v2528 = vld [vmem:[#allocation19] sm:$0xff]
        %v2529 = vld [vmem:[#allocation19 + $0x8] sm:$0xff]
        %v2530 = vld [vmem:[#allocation19 + $0x10] sm:$0xff]
        %v2531 = vld [vmem:[#allocation19 + $0x18] sm:$0xff]
        %v2532 = vld [vmem:[#allocation20] sm:$0xff]
        %v2533 = vld [vmem:[#allocation20 + $0x8] sm:$0xff]
        %v2534 = vld [vmem:[#allocation20 + $0x10] sm:$0xff]
        %v2535 = vld [vmem:[#allocation20 + $0x18] sm:$0xff]
        %2537 = vset.pattern.permute.xlu0 0
        %2538 = vperm.xlu0 %2537, %v2532
        %v2539 = vpop.permute.xlu0 %2538
        %2542 = vset.pattern.permute.xlu0 0
        %2543 = vperm.xlu0 %2542, %v2533
        %v2544 = vpop.permute.xlu0 %2543
        %2547 = vset.pattern.permute.xlu0 0
        %2548 = vperm.xlu0 %2547, %v2534
        %v2549 = vpop.permute.xlu0 %2548
        %2552 = vset.pattern.permute.xlu0 0
        %2553 = vperm.xlu0 %2552, %v2535
        %v2554 = vpop.permute.xlu0 %2553
        %v2557 = vsel %vm954, %v2528, 0
        %v2560 = vsel %vm954, %v2529, 0
        %v2563 = vsel %vm954, %v2530, 0
        %v2566 = vsel %vm954, %v2531, 0
        %2568 = vmatprep.subr.mxu0 0.0
        %2569 = vmatpush1.msra.mxu0 %v2526
        %2570 = vmatprep.subr.mxu0 0.0
        %2571 = vmatpush1.msra.mxu0 %v2527
        %2572 = vmatprep.subr.mxu0 0.0
        %2573 = vmatpush1.msra.mxu0 0.0
        %2574 = vmatprep.subr.mxu0 0.0
        %2575 = vmatpush1.msra.mxu0 0.0
        %2576 = vmatprep.subr.mxu0 0.0
        %2577 = vmatpush1.msra.mxu0 0.0
        %2578 = vmatprep.subr.mxu0 0.0
        %2579 = vmatpush1.msra.mxu0 0.0
        %2580 = vmatprep.subr.mxu0 0.0
        %2581 = vmatpush1.msra.mxu0 0.0
        %2582 = vmatprep.subr.mxu0 0.0
        %2583 = vmatpush1.msra.mxu0 0.0
        %2584 = vmatprep.subr.mxu0 0.0
        %2585 = vmatpush1.msra.mxu0 0.0
        %2586 = vmatprep.subr.mxu0 0.0
        %2587 = vmatpush1.msra.mxu0 0.0
        %2588 = vmatprep.subr.mxu0 0.0
        %2589 = vmatpush1.msra.mxu0 0.0
        %2590 = vmatprep.subr.mxu0 0.0
        %2591 = vmatpush1.msra.mxu0 0.0
        %2592 = vmatprep.subr.mxu0 0.0
        %2593 = vmatpush1.msra.mxu0 0.0
        %2594 = vmatprep.subr.mxu0 0.0
        %2595 = vmatpush1.msra.mxu0 0.0
        %2596 = vmatprep.subr.mxu0 0.0
        %2597 = vmatpush1.msra.mxu0 0.0
        %2598 = vmatprep.subr.mxu0 0.0
        %2599 = vmatpush1.msra.mxu0 0.0
        %2600 = vmatprep.subr.mxu0 0.0
        %2601 = vmatpush1.msra.mxu0 0.0
        %2602 = vmatprep.subr.mxu0 0.0
        %2603 = vmatpush1.msra.mxu0 0.0
        %2604 = vmatprep.subr.mxu0 0.0
        %2605 = vmatpush1.msra.mxu0 0.0
        %2606 = vmatprep.subr.mxu0 0.0
        %2607 = vmatpush1.msra.mxu0 0.0
        %2608 = vmatprep.subr.mxu0 0.0
        %2609 = vmatpush1.msra.mxu0 0.0
        %2610 = vmatprep.subr.mxu0 0.0
        %2611 = vmatpush1.msra.mxu0 0.0
        %2612 = vmatprep.subr.mxu0 0.0
        %2613 = vmatpush1.msra.mxu0 0.0
        %2614 = vmatprep.subr.mxu0 0.0
        %2615 = vmatpush1.msra.mxu0 0.0
        %2616 = vmatprep.subr.mxu0 0.0
        %2617 = vmatpush1.msra.mxu0 0.0
        %2618 = vmatprep.subr.mxu0 0.0
        %2619 = vmatpush1.msra.mxu0 0.0
        %2620 = vmatprep.subr.mxu0 0.0
        %2621 = vmatpush1.msra.mxu0 0.0
        %2622 = vmatprep.subr.mxu0 0.0
        %2623 = vmatpush1.msra.mxu0 0.0
        %2624 = vmatprep.subr.mxu0 0.0
        %2625 = vmatpush1.msra.mxu0 0.0
        %2626 = vmatprep.subr.mxu0 0.0
        %2627 = vmatpush1.msra.mxu0 0.0
        %2628 = vmatprep.subr.mxu0 0.0
        %2629 = vmatpush1.msra.mxu0 0.0
        %2630 = vmatprep.subr.mxu0 0.0
        %2631 = vmatpush1.msra.mxu0 0.0
        %2632 = vmatprep.mubr.f32.mxu0 0.0
        %2633 = vmatmul.mubr.f32.gmra.mrb[0].mxu0 %v2557
        %v2634 = vpop.f32.mrb[0].mxu0
        %v2635 = vadd.f32 %v2539, %v2634
        %v2636 = vpop.f32.mrb[0].mxu0
        %2637 = vmatprep.mubr.f32.mxu0 0.0
        %2638 = vmatmul.mubr.f32.gmra.mrb[0].mxu0 %v2560
        %v2639 = vpop.f32.mrb[0].mxu0
        %v2640 = vadd.f32 %v2544, %v2639
        %v2641 = vpop.f32.mrb[0].mxu0
        %2642 = vmatprep.mubr.f32.mxu0 0.0
        %2643 = vmatmul.mubr.f32.gmra.mrb[0].mxu0 %v2563
        %v2644 = vpop.f32.mrb[0].mxu0
        %v2645 = vadd.f32 %v2549, %v2644
        %v2646 = vpop.f32.mrb[0].mxu0
        %2647 = vmatprep.mubr.f32.mxu0 0.0
        %2648 = vmatmul.mubr.f32.gmra.mrb[0].mxu0 %v2566
        %v2649 = vpop.f32.mrb[0].mxu0
        %v2650 = vadd.f32 %v2554, %v2649
        %v2651 = vpop.f32.mrb[0].mxu0
        %2652 = vdwg.mxu0
        %v2653 = vld [vmem:[#allocation22] sm:$0xff]
        %v2654 = vld [vmem:[#allocation22 + $0x8] sm:$0xff]
        %v2655 = vld [vmem:[#allocation22 + $0x10] sm:$0xff]
        %v2656 = vld [vmem:[#allocation22 + $0x18] sm:$0xff]
        %v2657 = vld [vmem:[%s686] sm:$0xff]
        %vm2658 = vcmask 64512
        %v2660 = vsel %vm2658, %v2653, 0
        %v2663 = vsel %vm2658, %v2654, 0
        %v2666 = vsel %vm2658, %v2655, 0
        %v2669 = vsel %vm2658, %v2656, 0
        %2671 = vmatprep.subr.mxu0 0.0
        %2672 = vmatpush1.msra.mxu0 %v2657
        %2673 = vmatprep.subr.mxu0 0.0
        %2674 = vmatpush1.msra.mxu0 0.0
        %2675 = vmatprep.subr.mxu0 0.0
        %2676 = vmatpush1.msra.mxu0 0.0
        %2677 = vmatprep.subr.mxu0 0.0
        %2678 = vmatpush1.msra.mxu0 0.0
        %2679 = vmatprep.subr.mxu0 0.0
        %2680 = vmatpush1.msra.mxu0 0.0
        %2681 = vmatprep.subr.mxu0 0.0
        %2682 = vmatpush1.msra.mxu0 0.0
        %2683 = vmatprep.subr.mxu0 0.0
        %2684 = vmatpush1.msra.mxu0 0.0
        %2685 = vmatprep.subr.mxu0 0.0
        %2686 = vmatpush1.msra.mxu0 0.0
        %2687 = vmatprep.subr.mxu0 0.0
        %2688 = vmatpush1.msra.mxu0 0.0
        %2689 = vmatprep.subr.mxu0 0.0
        %2690 = vmatpush1.msra.mxu0 0.0
        %2691 = vmatprep.subr.mxu0 0.0
        %2692 = vmatpush1.msra.mxu0 0.0
        %2693 = vmatprep.subr.mxu0 0.0
        %2694 = vmatpush1.msra.mxu0 0.0
        %2695 = vmatprep.subr.mxu0 0.0
        %2696 = vmatpush1.msra.mxu0 0.0
        %2697 = vmatprep.subr.mxu0 0.0
        %2698 = vmatpush1.msra.mxu0 0.0
        %2699 = vmatprep.subr.mxu0 0.0
        %2700 = vmatpush1.msra.mxu0 0.0
        %2701 = vmatprep.subr.mxu0 0.0
        %2702 = vmatpush1.msra.mxu0 0.0
        %2703 = vmatprep.subr.mxu0 0.0
        %2704 = vmatpush1.msra.mxu0 0.0
        %2705 = vmatprep.subr.mxu0 0.0
        %2706 = vmatpush1.msra.mxu0 0.0
        %2707 = vmatprep.subr.mxu0 0.0
        %2708 = vmatpush1.msra.mxu0 0.0
        %2709 = vmatprep.subr.mxu0 0.0
        %2710 = vmatpush1.msra.mxu0 0.0
        %2711 = vmatprep.subr.mxu0 0.0
        %2712 = vmatpush1.msra.mxu0 0.0
        %2713 = vmatprep.subr.mxu0 0.0
        %2714 = vmatpush1.msra.mxu0 0.0
        %2715 = vmatprep.subr.mxu0 0.0
        %2716 = vmatpush1.msra.mxu0 0.0
        %2717 = vmatprep.subr.mxu0 0.0
        %2718 = vmatpush1.msra.mxu0 0.0
        %2719 = vmatprep.subr.mxu0 0.0
        %2720 = vmatpush1.msra.mxu0 0.0
        %2721 = vmatprep.subr.mxu0 0.0
        %2722 = vmatpush1.msra.mxu0 0.0
        %2723 = vmatprep.subr.mxu0 0.0
        %2724 = vmatpush1.msra.mxu0 0.0
        %2725 = vmatprep.subr.mxu0 0.0
        %2726 = vmatpush1.msra.mxu0 0.0
        %2727 = vmatprep.subr.mxu0 0.0
        %2728 = vmatpush1.msra.mxu0 0.0
        %2729 = vmatprep.subr.mxu0 0.0
        %2730 = vmatpush1.msra.mxu0 0.0
        %2731 = vmatprep.subr.mxu0 0.0
        %2732 = vmatpush1.msra.mxu0 0.0
        %2733 = vmatprep.subr.mxu0 0.0
        %2734 = vmatpush1.msra.mxu0 0.0
        %2735 = vmatprep.mubr.f32.mxu0 0.0
        %2736 = vmatmul.mubr.f32.gmra.mrb[0].mxu0 %v2660
        %v2737 = vpop.f32.mrb[0].mxu0
        %v2738 = vadd.f32 0.0, %v2737
        %v2739 = vpop.f32.mrb[0].mxu0
        %2740 = vmatprep.mubr.f32.mxu0 0.0
        %2741 = vmatmul.mubr.f32.gmra.mrb[0].mxu0 %v2663
        %v2742 = vpop.f32.mrb[0].mxu0
        %v2743 = vadd.f32 0.0, %v2742
        %v2744 = vpop.f32.mrb[0].mxu0
        %2745 = vmatprep.mubr.f32.mxu0 0.0
        %2746 = vmatmul.mubr.f32.gmra.mrb[0].mxu0 %v2666
        %v2747 = vpop.f32.mrb[0].mxu0
        %v2748 = vadd.f32 0.0, %v2747
        %v2749 = vpop.f32.mrb[0].mxu0
        %2750 = vmatprep.mubr.f32.mxu0 0.0
        %2751 = vmatmul.mubr.f32.gmra.mrb[0].mxu0 %v2669
        %v2752 = vpop.f32.mrb[0].mxu0
        %v2753 = vadd.f32 0.0, %v2752
        %v2754 = vpop.f32.mrb[0].mxu0
        %2755 = vdwg.mxu0
        %v2756 = vadd.f32 %v2635, %v2738
        %v2757 = vadd.f32 %v2640, %v2743
        %v2758 = vadd.f32 %v2645, %v2748
        %v2759 = vadd.f32 %v2650, %v2753
        %v2760 = vld [vmem:[#allocation23] sm:$0xff]
        %v2761 = vld [vmem:[#allocation23 + $0x8] sm:$0xff]
        %v2762 = vld [vmem:[#allocation23 + $0x10] sm:$0xff]
        %v2763 = vld [vmem:[#allocation23 + $0x18] sm:$0xff]
        %2765 = vset.pattern.permute.xlu0 0
        %2766 = vperm.xlu0 %2765, %v2760
        %v2767 = vpop.permute.xlu0 %2766
        %2770 = vset.pattern.permute.xlu0 0
        %2771 = vperm.xlu0 %2770, %v2761
        %v2772 = vpop.permute.xlu0 %2771
        %2775 = vset.pattern.permute.xlu0 0
        %2776 = vperm.xlu0 %2775, %v2762
        %v2777 = vpop.permute.xlu0 %2776
        %2780 = vset.pattern.permute.xlu0 0
        %2781 = vperm.xlu0 %2780, %v2763
        %v2782 = vpop.permute.xlu0 %2781
        %v2784 = vadd.f32 %v2756, %v2767
        %v2785 = vadd.f32 %v2757, %v2772
        %v2786 = vadd.f32 %v2758, %v2777
        %v2787 = vadd.f32 %v2759, %v2782
        %vm2788 = vcmp.gt.f32.partialorder %v2784, 0.0
        %vm2789 = vcmp.gt.f32.partialorder %v2785, 0.0
        %vm2790 = vcmp.gt.f32.partialorder %v2786, 0.0
        %vm2791 = vcmp.gt.f32.partialorder %v2787, 0.0
        %v2792 = vmul.f32 %v2784, 0.01
        %v2793 = vmul.f32 %v2785, 0.01
        %v2794 = vmul.f32 %v2786, 0.01
        %v2795 = vmul.f32 %v2787, 0.01
        %v2796 = vsel %vm2788, %v2784, %v2792
        %v2797 = vsel %vm2789, %v2785, %v2793
        %v2798 = vsel %vm2790, %v2786, %v2794
        %v2799 = vsel %vm2791, %v2787, %v2795
        %2800 = vst [vmem:[%s761] sm:$0xff] %v2796
        %2801 = vst [vmem:[%s761 + $0x8] sm:$0xff] %v2797
        %2802 = vst [vmem:[%s761 + $0x10] sm:$0xff] %v2798
        %2803 = vst [vmem:[%s761 + $0x18] sm:$0xff] %v2799
        %s2804 = sand.u32 %s386, 1
        %s2805 = scalar_lea.sflag [#allocation4], %s2804
        %s2806 = sand.u32 %s386, 1
        %s2807 = smul.addr %s2806, 32
        %s2808 = scalar_lea.vmem [#allocation25], %s2807
        // Predicated region
        $region133: #{local_feature_aggregation.7} parent=75 // pred_check
          %p2809 = pneg %p396
        $region134: #{local_feature_aggregation.7} parent=75 // pred_check_branch
          %2811 = sbr.rel (%p2809) target = $region136
        $region135: #{local_feature_aggregation.7} parent=75 // pred_region
          %s2813 = ssub.s32 512, 512
          %2814 = vsyncadd %s2805, %s2813
          %s2815 = smul.addr %s47, 4
          %s2816 = sadd.s32 %s46, %s2815
          %s2817 = smul.addr %s2816, 128
          %s2818 = scalar_lea.hbm %s14, %s2817
          %s2819 = sshll.u32 %s2808, 4
          %s2820 = int_to_ptr.vmem [resolvable:$true] %s2819
          %2825 = dma.vmem_to_hbm [thread:$0]  %s2820, 512, %s2818, %s2805, 128, 128, 8
        $region136: #{local_feature_aggregation.7} parent=75 // pred_fallthru
          _
      $region76: #{local_feature_aggregation.7} parent=5 // pred_fallthru
        _
      %p2826 = scmp.le.s32.totalorder 2, %s37
      // Predicated region
      $region137: #{local_feature_aggregation.7} parent=5 // pred_check
        %p2827 = pneg %p2826
      $region138: #{local_feature_aggregation.7} parent=5 // pred_check_branch
        %2829 = sbr.rel (%p2827) target = $region140
      $region139: #{local_feature_aggregation.7} parent=5 // pred_region
        %s2830 = ssub.s32 %s37, 2
        // Predicated region
        $region141: #{local_feature_aggregation.7} parent=139 // pred_check
          %p2831 = pneg %p402
        $region142: #{local_feature_aggregation.7} parent=139 // pred_check_branch
          %2833 = sbr.rel (%p2831) target = $region144
        $region143: #{local_feature_aggregation.7} parent=139 // pred_region
          %s2834 = sand.u32 %s387, 1
          %s2835 = scalar_lea.sflag [#allocation4], %s2834
          %s2836 = sand.u32 %s387, 1
          %s2837 = smul.addr %s2836, 32
          %s2838 = scalar_lea.vmem [#allocation25], %s2837
          %2839 = dma.done %s2835, 512
        $region144: #{local_feature_aggregation.7} parent=139 // pred_fallthru
          _
      $region140: #{local_feature_aggregation.7} parent=5 // pred_fallthru
        _
    $region6: #{local_feature_aggregation.7} parent=1 // loop_footer
      %s41 = sadd.s32 1, %s37
    $region7: #{local_feature_aggregation.7} parent=1 // loop_footer_branch
      %36 = sbr.rel target = $region3
    $region8: #{local_feature_aggregation.7} parent=1 // loop_exit
      _
    %2840 = vsyncpa [#allocation3], 1
    %s2841 = scalar_lea.sflag [#allocation3], 1
    %2842 = vsyncpa %s2841, 1
    %2843 = vsyncpa [#allocation6], 1
    %s2844 = scalar_lea.sflag [#allocation6], 1
    %2845 = vsyncpa %s2844, 1
    %2846 = vsyncpa [#allocation9], 1
    %2847 = vsyncpa [#allocation12], 1
    %2848 = vsyncpa [#allocation15], 1
    %2849 = vsyncpa [#allocation18], 1
    %s2850 = scalar_lea.sflag [#allocation18], 1
    %2851 = vsyncpa %s2850, 1
    %2852 = vsyncpa [#allocation21], 1
    %2853 = vsyncpa [#allocation24], 1
    %2854 = vsyncpa [#allocation4], 1
    %s2855 = scalar_lea.sflag [#allocation4], 1
    %2856 = vsyncpa %s2855, 1

</llo_original>
